<compile_context>
chip_gen: v7x
topology: tpu7x:2x2x1
jax: 0.10.0
libtpu: 0.0.40
codegen_flags: <defaults>
</compile_context>

<pallas_src>
import functools

import jax
import jax.numpy as jnp
from jax.experimental import pallas as pl
from jax.experimental.pallas import tpu as pltpu


# ---------------------------------------------------------------------------
# Kernel
# ---------------------------------------------------------------------------

def _layernorm(x, gamma, beta, eps=1e-6):
    mu = jnp.mean(x, axis=-1, keepdims=True)
    var = jnp.mean(jnp.square(x - mu), axis=-1, keepdims=True)
    return (x - mu) * jax.lax.rsqrt(var + eps) * gamma + beta


def _encoder_kernel(patches_ref, cw_ref, cb_ref, pos_ref,
                    ln1g_ref, ln1b_ref, wqkv_ref, bqkv_ref, wo_ref, bo_ref,
                    ln2g_ref, ln2b_ref, w1_ref, b1_ref, w2_ref, b2_ref,
                    o_ref, h_ref, *, num_heads, head_dim, ff_chunk):
    """Grid point (b, l): run transformer layer l on batch element b.

    h_ref (VMEM scratch) carries the residual stream across the layer axis; at l==0
    it is (re)initialized from the fused patch-embedding matmul.
    """
    layer = pl.program_id(1)

    # ---- patch embedding (only at the first layer of each batch element) ----
    @pl.when(layer == 0)
    def _():
        emb = jnp.dot(patches_ref[...], cw_ref[...],
                      preferred_element_type=jnp.float32)          # (S, E) f32
        h_ref[...] = emb + cb_ref[...] + pos_ref[...]

    x = h_ref[...]                                                 # (S, E) f32
    S, E = x.shape

    # ---------------- attention branch ----------------
    xn = _layernorm(x, ln1g_ref[...], ln1b_ref[...]).astype(jnp.bfloat16)
    qkv = jnp.dot(xn, wqkv_ref[...],
                  preferred_element_type=jnp.float32) + bqkv_ref[...]   # (S, 3E)
    q = qkv[:, 0:E]                 # lane-aligned 128-column slices (free)
    k = qkv[:, E:2 * E]
    v = qkv[:, 2 * E:3 * E]

    def to_heads(t):                # (S, E) -> (nh, S, hd) bf16
        return t.reshape(S, num_heads, head_dim).transpose(1, 0, 2).astype(jnp.bfloat16)

    qh, kh, vh = to_heads(q), to_heads(k), to_heads(v)

    scale = head_dim ** -0.5
    scores = jax.lax.dot_general(                                  # (nh, S, S) f32
        qh, kh, (((2,), (2,)), ((0,), (0,))),
        preferred_element_type=jnp.float32) * scale
    scores = scores - jnp.max(scores, axis=-1, keepdims=True)
    p = jnp.exp(scores)
    p = p * pl.reciprocal(jnp.sum(p, axis=-1, keepdims=True), approx=True)
    ctx = jax.lax.dot_general(                                     # (nh, S, hd) f32
        p.astype(jnp.bfloat16), vh, (((2,), (1,)), ((0,), (0,))),
        preferred_element_type=jnp.float32)
    ctx = ctx.transpose(1, 0, 2).reshape(S, E).astype(jnp.bfloat16)
    attn = jnp.dot(ctx, wo_ref[...],
                   preferred_element_type=jnp.float32) + bo_ref[...]
    x = x + attn                                                   # residual

    # ---------------- MLP branch (d_ff chunked) ----------------
    xn2 = _layernorm(x, ln2g_ref[...], ln2b_ref[...]).astype(jnp.bfloat16)
    d_ff = w1_ref.shape[1]
    mlp = jnp.zeros((S, E), jnp.float32)
    for c0 in range(0, d_ff, ff_chunk):                            # static unroll
        h1 = jnp.maximum(
            jnp.dot(xn2, w1_ref[:, c0:c0 + ff_chunk],
                    preferred_element_type=jnp.float32)
            + b1_ref[:, c0:c0 + ff_chunk], 0.0).astype(jnp.bfloat16)
        mlp = mlp + jnp.dot(h1, w2_ref[c0:c0 + ff_chunk, :],
                            preferred_element_type=jnp.float32)
    x = x + mlp + b2_ref[...]                                      # residual

    h_ref[...] = x                                                 # carry to next layer
    o_ref[...] = x.astype(o_ref.dtype)                             # per-layer output


# ---------------------------------------------------------------------------
# Pallas wrapper
# ---------------------------------------------------------------------------

def _im2col_patches(x, patch_size):
    """Strided Conv3d patchify as layout glue (no FLOPs): (B,Cin,D,H,W) -> (B,S,P)."""
    B, Cin, D, H, W = x.shape
    p = patch_size
    nD, nH, nW = D // p, H // p, W // p
    patches = x.reshape(B, Cin, nD, p, nH, p, nW, p)
    patches = patches.transpose(0, 2, 4, 6, 1, 3, 5, 7)
    return patches.reshape(B, nD * nH * nW, Cin * p * p * p)


def encoder_forward(patches, kp, *, num_heads, ff_chunk=256):
    B, S, P = patches.shape
    E = kp["conv_w"].shape[1]
    L = kp["wqkv"].shape[0]
    d_ff = kp["w1"].shape[2]
    ff_chunk = min(ff_chunk, d_ff)

    def batch_spec(shape):   # per-batch activations, constant across the layer axis
        return pl.BlockSpec((None,) + shape, lambda b, l: (b,) + (0,) * len(shape))

    def const_spec(shape):   # shared arrays (patch-embed weights / position embeddings)
        return pl.BlockSpec(shape, lambda b, l: (0,) * len(shape))

    def layer_spec(shape):   # per-layer stacked weights, streamed along the layer axis
        return pl.BlockSpec((None,) + shape, lambda b, l: (l,) + (0,) * len(shape))

    in_specs = [
        batch_spec((S, P)),                                  # patches (bf16)
        const_spec((P, E)), const_spec((1, E)), const_spec((S, E)),   # conv_w, conv_b, pos
        layer_spec((1, E)), layer_spec((1, E)),              # ln1 gamma / beta
        layer_spec((E, 3 * E)), layer_spec((1, 3 * E)),      # fused Wqkv, bqkv
        layer_spec((E, E)), layer_spec((1, E)),              # Wo, bo
        layer_spec((1, E)), layer_spec((1, E)),              # ln2 gamma / beta
        layer_spec((E, d_ff)), layer_spec((1, d_ff)),        # W1, b1
        layer_spec((d_ff, E)), layer_spec((1, E)),           # W2, b2
    ]
    # One (S, E) output block per (layer, batch); the wrapper slices out extract_layers.
    out_spec = pl.BlockSpec((None, None, S, E), lambda b, l: (l, b, 0, 0))

    kernel = functools.partial(_encoder_kernel, num_heads=num_heads,
                               head_dim=E // num_heads, ff_chunk=ff_chunk)

    return pl.pallas_call(
        kernel,
        out_shape=jax.ShapeDtypeStruct((L, B, S, E), jnp.float32),
        grid=(B, L),
        in_specs=in_specs,
        out_specs=out_spec,
        scratch_shapes=[pltpu.VMEM((S, E), jnp.float32)],    # resident hidden state
        compiler_params=pltpu.CompilerParams(
            dimension_semantics=("parallel", "arbitrary")),
    )(patches, kp["conv_w"], kp["conv_b"], kp["pos"],
      kp["ln1_g"], kp["ln1_b"], kp["wqkv"], kp["bqkv"], kp["wo"], kp["bo"],
      kp["ln2_g"], kp["ln2_b"], kp["w1"], kp["b1"], kp["w2"], kp["b2"])


def transformer_forward(x, kparams, *, patch_size, num_heads, extract_layers):
    # TODO(synk): at large cube sizes, fold the im2col relayout into the kernel DMA path.
    patches = _im2col_patches(x, patch_size).astype(jnp.bfloat16)
    all_hidden = encoder_forward(patches, kparams, num_heads=num_heads)  # (L, B, S, E)
    return [all_hidden[d - 1] for d in extract_layers]


# ---------------------------------------------------------------------------
# Parameter construction / packing
# ---------------------------------------------------------------------------

def init_params(key, *, input_dim, embed_dim, cube_size, patch_size, num_layers,
                d_ff=1024):
    E, p = embed_dim, patch_size
    n_patches = (cube_size[0] // p) * (cube_size[1] // p) * (cube_size[2] // p)
    P = input_dim * p ** 3

    def linear(k, fan_in, fan_out):
        kw, kb = jax.random.split(k)
        bound = fan_in ** -0.5
        w = jax.random.uniform(kw, (fan_in, fan_out), jnp.float32, -bound, bound)
        b = jax.random.uniform(kb, (fan_out,), jnp.float32, -bound, bound)
        return w, b

    keys = jax.random.split(key, 2 + num_layers)
    kw, kb = jax.random.split(keys[0])
    bound = P ** -0.5
    conv_w = jax.random.uniform(kw, (E, input_dim, p, p, p), jnp.float32, -bound, bound)
    conv_b = jax.random.uniform(kb, (E,), jnp.float32, -bound, bound)
    # Module inits position_embeddings to zeros; use small noise so the add is exercised.
    pos = 0.02 * jax.random.normal(keys[1], (1, n_patches, E), jnp.float32)

    layers = []
    for li in range(num_layers):
        ks = jax.random.split(keys[2 + li], 6)
        wq, bq = linear(ks[0], E, E)
        wk, bk = linear(ks[1], E, E)
        wv, bv = linear(ks[2], E, E)
        wo, bo = linear(ks[3], E, E)
        w1, b1 = linear(ks[4], E, d_ff)
        w2, b2 = linear(ks[5], d_ff, E)
        layers.append(dict(
            ln1_g=jnp.ones((E,), jnp.float32), ln1_b=jnp.zeros((E,), jnp.float32),
            wq=wq, bq=bq, wk=wk, bk=bk, wv=wv, bv=bv, wo=wo, bo=bo,
            ln2_g=jnp.ones((E,), jnp.float32), ln2_b=jnp.zeros((E,), jnp.float32),
            w1=w1, b1=b1, w2=w2, b2=b2))
    return dict(conv_w=conv_w, conv_b=conv_b, pos=pos, layers=layers)


def prepare_params(params):
    """One-time repack for the fused kernel: conv weight -> im2col (P, E); Wq/Wk/Wv
    fused to (E, 3E); all matmul weights bf16 (MXU native); per-layer tensors stacked
    along a leading layer axis; biases / LN params kept f32 with a broadcastable row."""
    E = params["conv_w"].shape[0]
    S = params["pos"].shape[1]
    layers = params["layers"]

    kp = {
        "conv_w": jnp.transpose(params["conv_w"].reshape(E, -1)).astype(jnp.bfloat16),
        "conv_b": params["conv_b"].reshape(1, E).astype(jnp.float32),
        "pos": params["pos"].reshape(S, E).astype(jnp.float32),
        "ln1_g": jnp.stack([lp["ln1_g"].reshape(1, E) for lp in layers]),
        "ln1_b": jnp.stack([lp["ln1_b"].reshape(1, E) for lp in layers]),
        "wqkv": jnp.stack([jnp.concatenate([lp["wq"], lp["wk"], lp["wv"]], axis=1)
                           for lp in layers]).astype(jnp.bfloat16),
        "bqkv": jnp.stack([jnp.concatenate([lp["bq"], lp["bk"], lp["bv"]]).reshape(1, 3 * E)
                           for lp in layers]).astype(jnp.float32),
        "wo": jnp.stack([lp["wo"] for lp in layers]).astype(jnp.bfloat16),
        "bo": jnp.stack([lp["bo"].reshape(1, E) for lp in layers]).astype(jnp.float32),
        "ln2_g": jnp.stack([lp["ln2_g"].reshape(1, E) for lp in layers]),
        "ln2_b": jnp.stack([lp["ln2_b"].reshape(1, E) for lp in layers]),
        "w1": jnp.stack([lp["w1"] for lp in layers]).astype(jnp.bfloat16),
        "b1": jnp.stack([lp["b1"].reshape(1, -1) for lp in layers]).astype(jnp.float32),
        "w2": jnp.stack([lp["w2"] for lp in layers]).astype(jnp.bfloat16),
        "b2": jnp.stack([lp["b2"].reshape(1, E) for lp in layers]).astype(jnp.float32),
    }
    return kp


# ---------------------------------------------------------------------------
# Pure-JAX reference (f32), mirroring the PyTorch module exactly
# ---------------------------------------------------------------------------

def reference_forward(x, params, *, patch_size, num_heads, extract_layers):
    B = x.shape[0]
    E = params["conv_w"].shape[0]
    conv = jax.lax.conv_general_dilated(
        x, params["conv_w"], window_strides=(patch_size,) * 3, padding="VALID",
        dimension_numbers=("NCDHW", "OIDHW", "NCDHW"))
    conv = conv + params["conv_b"].reshape(1, E, 1, 1, 1)
    hidden = conv.reshape(B, E, -1).transpose(0, 2, 1) + params["pos"]    # (B, S, E)
    S = hidden.shape[1]
    hd = E // num_heads

    def ln(z, g, b):
        mu = z.mean(-1, keepdims=True)
        var = ((z - mu) ** 2).mean(-1, keepdims=True)
        return (z - mu) / jnp.sqrt(var + 1e-6) * g + b

    def split_heads(t):
        return t.reshape(B, S, num_heads, hd).transpose(0, 2, 1, 3)

    outs = []
    for depth, lp in enumerate(params["layers"], start=1):
        h0 = hidden
        xn = ln(hidden, lp["ln1_g"], lp["ln1_b"])
        q = xn @ lp["wq"] + lp["bq"]
        k = xn @ lp["wk"] + lp["bk"]
        v = xn @ lp["wv"] + lp["bv"]
        qh, kh, vh = split_heads(q), split_heads(k), split_heads(v)
        scores = jnp.einsum("bhsd,bhtd->bhst", qh, kh) / (hd ** 0.5)
        probs = jax.nn.softmax(scores, axis=-1)
        ctx = jnp.einsum("bhst,bhtd->bhsd", probs, vh)
        ctx = ctx.transpose(0, 2, 1, 3).reshape(B, S, E)
        hidden = h0 + ctx @ lp["wo"] + lp["bo"]
        h1 = hidden
        xn2 = ln(hidden, lp["ln2_g"], lp["ln2_b"])
        mlp = jnp.maximum(xn2 @ lp["w1"] + lp["b1"], 0.0) @ lp["w2"] + lp["b2"]
        hidden = h1 + mlp
        if depth in extract_layers:
            outs.append(hidden)
    return outs


# ---------------------------------------------------------------------------
# Demo / correctness check
# ---------------------------------------------------------------------------

if __name__ == "__main__":
    # Transformer(input_dim=4, embed_dim=128, cube_size=(16,16,16), patch_size=4,
    #             num_heads=4, num_layers=2, dropout=0.1, extract_layers=[1, 2])
    B = 2
    input_dim, embed_dim = 4, 128
    cube_size = (16, 16, 16)
    patch_size = 4
    num_heads, num_layers = 4, 2
    extract_layers = (1, 2)
    n_patches = (cube_size[0] // patch_size) * (cube_size[1] // patch_size) \
        * (cube_size[2] // patch_size)                                  # 64 tokens

    key = jax.random.PRNGKey(0)
    kx, kp_key = jax.random.split(key)
    x = jax.random.normal(kx, (B, input_dim) + cube_size, dtype=jnp.float32)
    params = init_params(kp_key, input_dim=input_dim, embed_dim=embed_dim,
                         cube_size=cube_size, patch_size=patch_size,
                         num_layers=num_layers)
    kparams = prepare_params(params)

    fwd = jax.jit(functools.partial(transformer_forward, patch_size=patch_size,
                                    num_heads=num_heads,
                                    extract_layers=extract_layers))
    outs = fwd(x, kparams)
    outs = jax.block_until_ready(outs)

    refs = reference_forward(x, params, patch_size=patch_size,
                             num_heads=num_heads, extract_layers=extract_layers)

    assert len(outs) == len(extract_layers)
    for o, r in zip(outs, refs):
        assert o.shape == (B, n_patches, embed_dim)
        err = float(jnp.max(jnp.abs(o - r)))
        assert jnp.allclose(o, r, atol=2e-2, rtol=2e-2), f"max abs err {err}"

    print("KERNEL_OK")
</pallas_src>

<mosaic_0001>
module attributes {stable_mosaic.version = 11 : i64} {
  func.func @_encoder_kernel(%arg0: i32, %arg1: i32, %arg2: memref<1x64x256xbf16, #tpu.memory_space<vmem>>, %arg3: memref<256x128xbf16, #tpu.memory_space<vmem>>, %arg4: memref<1x128xf32, #tpu.memory_space<vmem>>, %arg5: memref<64x128xf32, #tpu.memory_space<vmem>>, %arg6: memref<1x1x128xf32, #tpu.memory_space<vmem>>, %arg7: memref<1x1x128xf32, #tpu.memory_space<vmem>>, %arg8: memref<1x128x384xbf16, #tpu.memory_space<vmem>>, %arg9: memref<1x1x384xf32, #tpu.memory_space<vmem>>, %arg10: memref<1x128x128xbf16, #tpu.memory_space<vmem>>, %arg11: memref<1x1x128xf32, #tpu.memory_space<vmem>>, %arg12: memref<1x1x128xf32, #tpu.memory_space<vmem>>, %arg13: memref<1x1x128xf32, #tpu.memory_space<vmem>>, %arg14: memref<1x128x1024xbf16, #tpu.memory_space<vmem>>, %arg15: memref<1x1x1024xf32, #tpu.memory_space<vmem>>, %arg16: memref<1x1024x128xbf16, #tpu.memory_space<vmem>>, %arg17: memref<1x1x128xf32, #tpu.memory_space<vmem>>, %arg18: memref<1x1x64x128xf32, #tpu.memory_space<vmem>>, %arg19: memref<64x128xf32, #tpu.memory_space<vmem>>) attributes {dimension_semantics = [#tpu.dimension_semantics<parallel>, #tpu.dimension_semantics<arbitrary>], iteration_bounds = array<i64: 2, 2>, scalar_prefetch = 0 : i64, scratch_operands = 1 : i64, tpu.core_type = #tpu.core_type<tc>, window_params = [{transform_indices = @transform_0, window_bounds = array<i64: 1, 64, 256>}, {pipeline_mode = #tpu.pipeline_mode<synchronous>, transform_indices = @transform_1, window_bounds = array<i64: 256, 128>}, {pipeline_mode = #tpu.pipeline_mode<synchronous>, transform_indices = @transform_2, window_bounds = array<i64: 1, 128>}, {pipeline_mode = #tpu.pipeline_mode<synchronous>, transform_indices = @transform_3, window_bounds = array<i64: 64, 128>}, {transform_indices = @transform_4, window_bounds = array<i64: 1, 1, 128>}, {transform_indices = @transform_5, window_bounds = array<i64: 1, 1, 128>}, {transform_indices = @transform_6, window_bounds = array<i64: 1, 128, 384>}, {transform_indices = @transform_7, window_bounds = array<i64: 1, 1, 384>}, {transform_indices = @transform_8, window_bounds = array<i64: 1, 128, 128>}, {transform_indices = @transform_9, window_bounds = array<i64: 1, 1, 128>}, {transform_indices = @transform_10, window_bounds = array<i64: 1, 1, 128>}, {transform_indices = @transform_11, window_bounds = array<i64: 1, 1, 128>}, {transform_indices = @transform_12, window_bounds = array<i64: 1, 128, 1024>}, {transform_indices = @transform_13, window_bounds = array<i64: 1, 1, 1024>}, {transform_indices = @transform_14, window_bounds = array<i64: 1, 1024, 128>}, {transform_indices = @transform_15, window_bounds = array<i64: 1, 1, 128>}, {transform_indices = @transform_16, window_bounds = array<i64: 1, 1, 64, 128>}]} {
    %c0_i32 = arith.constant 0 : i32
    %0 = arith.cmpi eq, %arg1, %c0_i32 : i32
    %1 = arith.extui %0 : i1 to i32
    %c0_i32_0 = arith.constant 0 : i32
    %2 = arith.cmpi ne, %1, %c0_i32_0 : i32
    scf.if %2 {
      %c0_97 = arith.constant 0 : index
      %c0_98 = arith.constant 0 : index
      %c0_99 = arith.constant 0 : index
      %169 = vector.load %arg2[%c0_97, %c0_98, %c0_99] : memref<1x64x256xbf16, #tpu.memory_space<vmem>>, vector<1x64x256xbf16>
      %170 = vector.shape_cast %169 : vector<1x64x256xbf16> to vector<64x256xbf16>
      %c0_100 = arith.constant 0 : index
      %c0_101 = arith.constant 0 : index
      %171 = vector.load %arg3[%c0_100, %c0_101] : memref<256x128xbf16, #tpu.memory_space<vmem>>, vector<256x128xbf16>
      %cst_102 = arith.constant dense<0.000000e+00> : vector<64x128xf32>
      %172 = tpu.matmul %170, %171, %cst_102 {dimension_numbers = #tpu.dot_dimension_numbers<[1], [0], [0], [1], [0, 0, 1, 1], [], []>} : vector<64x256xbf16>, vector<256x128xbf16>, vector<64x128xf32> -> vector<64x128xf32>
      %c0_103 = arith.constant 0 : index
      %c0_104 = arith.constant 0 : index
      %173 = vector.load %arg4[%c0_103, %c0_104] : memref<1x128xf32, #tpu.memory_space<vmem>>, vector<1x128xf32>
      %174 = vector.broadcast %173 : vector<1x128xf32> to vector<64x128xf32>
      %175 = arith.addf %172, %174 : vector<64x128xf32>
      %c0_105 = arith.constant 0 : index
      %c0_106 = arith.constant 0 : index
      %176 = vector.load %arg5[%c0_105, %c0_106] : memref<64x128xf32, #tpu.memory_space<vmem>>, vector<64x128xf32>
      %177 = arith.addf %175, %176 : vector<64x128xf32>
      %c0_107 = arith.constant 0 : index
      %c0_108 = arith.constant 0 : index
      %178 = vector.load %arg19[%c0_107, %c0_108] : memref<64x128xf32, #tpu.memory_space<vmem>>, vector<64x128xf32>
      tpu.vector_store %arg19[%c0_107, %c0_108], %177 {strides = array<i32>} : memref<64x128xf32, #tpu.memory_space<vmem>>, vector<64x128xf32>,
    } else {
    }
    %c0 = arith.constant 0 : index
    %c0_1 = arith.constant 0 : index
    %3 = vector.load %arg19[%c0, %c0_1] : memref<64x128xf32, #tpu.memory_space<vmem>>, vector<64x128xf32>
    %c0_2 = arith.constant 0 : index
    %c0_3 = arith.constant 0 : index
    %c0_4 = arith.constant 0 : index
    %4 = vector.load %arg6[%c0_2, %c0_3, %c0_4] : memref<1x1x128xf32, #tpu.memory_space<vmem>>, vector<1x1x128xf32>
    %5 = vector.shape_cast %4 : vector<1x1x128xf32> to vector<1x128xf32>
    %c0_5 = arith.constant 0 : index
    %c0_6 = arith.constant 0 : index
    %c0_7 = arith.constant 0 : index
    %6 = vector.load %arg7[%c0_5, %c0_6, %c0_7] : memref<1x1x128xf32, #tpu.memory_space<vmem>>, vector<1x1x128xf32>
    %7 = vector.shape_cast %6 : vector<1x1x128xf32> to vector<1x128xf32>
    %cst = arith.constant dense<0.000000e+00> : vector<64xf32>
    %8 = vector.multi_reduction <add>, %3, %cst [1] : vector<64x128xf32> to vector<64xf32>
    %9 = vector.shape_cast %8 : vector<64xf32> to vector<64x1xf32>
    %cst_8 = arith.constant 1.280000e+02 : f32
    %10 = vector.broadcast %cst_8 : f32 to vector<64x1xf32>
    %11 = arith.divf %9, %10 : vector<64x1xf32>
    %12 = vector.broadcast %11 : vector<64x1xf32> to vector<64x128xf32>
    %13 = arith.subf %3, %12 : vector<64x128xf32>
    %14 = arith.mulf %13, %13 : vector<64x128xf32>
    %cst_9 = arith.constant dense<0.000000e+00> : vector<64xf32>
    %15 = vector.multi_reduction <add>, %14, %cst_9 [1] : vector<64x128xf32> to vector<64xf32>
    %16 = vector.shape_cast %15 : vector<64xf32> to vector<64x1xf32>
    %cst_10 = arith.constant 1.280000e+02 : f32
    %17 = vector.broadcast %cst_10 : f32 to vector<64x1xf32>
    %18 = arith.divf %16, %17 : vector<64x1xf32>
    %19 = vector.broadcast %11 : vector<64x1xf32> to vector<64x128xf32>
    %20 = arith.subf %3, %19 : vector<64x128xf32>
    %cst_11 = arith.constant 9.99999997E-7 : f32
    %21 = vector.broadcast %cst_11 : f32 to vector<64x1xf32>
    %22 = arith.addf %18, %21 : vector<64x1xf32>
    %23 = math.rsqrt %22 : vector<64x1xf32>
    %24 = vector.broadcast %23 : vector<64x1xf32> to vector<64x128xf32>
    %25 = arith.mulf %20, %24 : vector<64x128xf32>
    %26 = vector.broadcast %5 : vector<1x128xf32> to vector<64x128xf32>
    %27 = arith.mulf %25, %26 : vector<64x128xf32>
    %28 = vector.broadcast %7 : vector<1x128xf32> to vector<64x128xf32>
    %29 = arith.addf %27, %28 : vector<64x128xf32>
    %30 = arith.truncf %29 : vector<64x128xf32> to vector<64x128xbf16>
    %c0_12 = arith.constant 0 : index
    %c0_13 = arith.constant 0 : index
    %c0_14 = arith.constant 0 : index
    %31 = vector.load %arg8[%c0_12, %c0_13, %c0_14] : memref<1x128x384xbf16, #tpu.memory_space<vmem>>, vector<1x128x384xbf16>
    %32 = vector.shape_cast %31 : vector<1x128x384xbf16> to vector<128x384xbf16>
    %cst_15 = arith.constant dense<0.000000e+00> : vector<64x384xf32>
    %33 = tpu.matmul %30, %32, %cst_15 {dimension_numbers = #tpu.dot_dimension_numbers<[1], [0], [0], [1], [0, 0, 1, 1], [], []>} : vector<64x128xbf16>, vector<128x384xbf16>, vector<64x384xf32> -> vector<64x384xf32>
    %c0_16 = arith.constant 0 : index
    %c0_17 = arith.constant 0 : index
    %c0_18 = arith.constant 0 : index
    %34 = vector.load %arg9[%c0_16, %c0_17, %c0_18] : memref<1x1x384xf32, #tpu.memory_space<vmem>>, vector<1x1x384xf32>
    %35 = vector.shape_cast %34 : vector<1x1x384xf32> to vector<1x384xf32>
    %36 = vector.broadcast %35 : vector<1x384xf32> to vector<64x384xf32>
    %37 = arith.addf %33, %36 : vector<64x384xf32>
    %38 = vector.extract_strided_slice %37 {offsets = [0, 0], sizes = [64, 128], strides = [1, 1]} : vector<64x384xf32> to vector<64x128xf32>
    %39 = vector.extract_strided_slice %37 {offsets = [0, 128], sizes = [64, 128], strides = [1, 1]} : vector<64x384xf32> to vector<64x128xf32>
    %40 = vector.extract_strided_slice %37 {offsets = [0, 256], sizes = [64, 128], strides = [1, 1]} : vector<64x384xf32> to vector<64x128xf32>
    %41 = vector.shape_cast %38 : vector<64x128xf32> to vector<64x4x32xf32>
    %42 = tpu.transpose %41, [1, 0, 2] : vector<64x4x32xf32> -> vector<4x64x32xf32>
    %43 = arith.truncf %42 : vector<4x64x32xf32> to vector<4x64x32xbf16>
    %44 = vector.shape_cast %39 : vector<64x128xf32> to vector<64x4x32xf32>
    %45 = tpu.transpose %44, [1, 0, 2] : vector<64x4x32xf32> -> vector<4x64x32xf32>
    %46 = arith.truncf %45 : vector<4x64x32xf32> to vector<4x64x32xbf16>
    %47 = vector.shape_cast %40 : vector<64x128xf32> to vector<64x4x32xf32>
    %48 = tpu.transpose %47, [1, 0, 2] : vector<64x4x32xf32> -> vector<4x64x32xf32>
    %49 = arith.truncf %48 : vector<4x64x32xf32> to vector<4x64x32xbf16>
    %cst_19 = arith.constant dense<0.000000e+00> : vector<4x64x64xf32>
    %50 = tpu.matmul %43, %46, %cst_19 {dimension_numbers = #tpu.dot_dimension_numbers<[2], [2], [1], [1], [0, 0, 0, 1, 1, 1], [0], [0]>} : vector<4x64x32xbf16>, vector<4x64x32xbf16>, vector<4x64x64xf32> -> vector<4x64x64xf32>
    %cst_20 = arith.constant 0.176776692 : f32
    %51 = vector.broadcast %cst_20 : f32 to vector<4x64x64xf32>
    %52 = arith.mulf %50, %51 : vector<4x64x64xf32>
    %cst_21 = arith.constant dense<0xFF800000> : vector<4x64xf32>
    %53 = vector.multi_reduction <maximumf>, %52, %cst_21 [2] : vector<4x64x64xf32> to vector<4x64xf32>
    %54 = vector.shape_cast %53 : vector<4x64xf32> to vector<4x64x1xf32>
    %55 = vector.broadcast %54 : vector<4x64x1xf32> to vector<4x64x64xf32>
    %56 = arith.subf %52, %55 : vector<4x64x64xf32>
    %57 = math.exp %56 : vector<4x64x64xf32>
    %cst_22 = arith.constant dense<0.000000e+00> : vector<4x64xf32>
    %58 = vector.multi_reduction <add>, %57, %cst_22 [2] : vector<4x64x64xf32> to vector<4x64xf32>
    %59 = vector.shape_cast %58 : vector<4x64xf32> to vector<4x64x1xf32>
    %60 = tpu.reciprocal %59 {approx = true} : vector<4x64x1xf32> -> vector<4x64x1xf32>
    %61 = vector.broadcast %60 : vector<4x64x1xf32> to vector<4x64x64xf32>
    %62 = arith.mulf %57, %61 : vector<4x64x64xf32>
    %63 = arith.truncf %62 : vector<4x64x64xf32> to vector<4x64x64xbf16>
    %cst_23 = arith.constant dense<0.000000e+00> : vector<4x64x32xf32>
    %64 = tpu.matmul %63, %49, %cst_23 {dimension_numbers = #tpu.dot_dimension_numbers<[2], [1], [1], [2], [0, 0, 0, 1, 1, 2], [0], [0]>} : vector<4x64x64xbf16>, vector<4x64x32xbf16>, vector<4x64x32xf32> -> vector<4x64x32xf32>
    %65 = tpu.transpose %64, [1, 0, 2] : vector<4x64x32xf32> -> vector<64x4x32xf32>
    %66 = vector.shape_cast %65 : vector<64x4x32xf32> to vector<64x128xf32>
    %67 = arith.truncf %66 : vector<64x128xf32> to vector<64x128xbf16>
    %c0_24 = arith.constant 0 : index
    %c0_25 = arith.constant 0 : index
    %c0_26 = arith.constant 0 : index
    %68 = vector.load %arg10[%c0_24, %c0_25, %c0_26] : memref<1x128x128xbf16, #tpu.memory_space<vmem>>, vector<1x128x128xbf16>
    %69 = vector.shape_cast %68 : vector<1x128x128xbf16> to vector<128x128xbf16>
    %cst_27 = arith.constant dense<0.000000e+00> : vector<64x128xf32>
    %70 = tpu.matmul %67, %69, %cst_27 {dimension_numbers = #tpu.dot_dimension_numbers<[1], [0], [0], [1], [0, 0, 1, 1], [], []>} : vector<64x128xbf16>, vector<128x128xbf16>, vector<64x128xf32> -> vector<64x128xf32>
    %c0_28 = arith.constant 0 : index
    %c0_29 = arith.constant 0 : index
    %c0_30 = arith.constant 0 : index
    %71 = vector.load %arg11[%c0_28, %c0_29, %c0_30] : memref<1x1x128xf32, #tpu.memory_space<vmem>>, vector<1x1x128xf32>
    %72 = vector.shape_cast %71 : vector<1x1x128xf32> to vector<1x128xf32>
    %73 = vector.broadcast %72 : vector<1x128xf32> to vector<64x128xf32>
    %74 = arith.addf %70, %73 : vector<64x128xf32>
    %75 = arith.addf %3, %74 : vector<64x128xf32>
    %c0_31 = arith.constant 0 : index
    %c0_32 = arith.constant 0 : index
    %c0_33 = arith.constant 0 : index
    %76 = vector.load %arg12[%c0_31, %c0_32, %c0_33] : memref<1x1x128xf32, #tpu.memory_space<vmem>>, vector<1x1x128xf32>
    %77 = vector.shape_cast %76 : vector<1x1x128xf32> to vector<1x128xf32>
    %c0_34 = arith.constant 0 : index
    %c0_35 = arith.constant 0 : index
    %c0_36 = arith.constant 0 : index
    %78 = vector.load %arg13[%c0_34, %c0_35, %c0_36] : memref<1x1x128xf32, #tpu.memory_space<vmem>>, vector<1x1x128xf32>
    %79 = vector.shape_cast %78 : vector<1x1x128xf32> to vector<1x128xf32>
    %cst_37 = arith.constant dense<0.000000e+00> : vector<64xf32>
    %80 = vector.multi_reduction <add>, %75, %cst_37 [1] : vector<64x128xf32> to vector<64xf32>
    %81 = vector.shape_cast %80 : vector<64xf32> to vector<64x1xf32>
    %cst_38 = arith.constant 1.280000e+02 : f32
    %82 = vector.broadcast %cst_38 : f32 to vector<64x1xf32>
    %83 = arith.divf %81, %82 : vector<64x1xf32>
    %84 = vector.broadcast %83 : vector<64x1xf32> to vector<64x128xf32>
    %85 = arith.subf %75, %84 : vector<64x128xf32>
    %86 = arith.mulf %85, %85 : vector<64x128xf32>
    %cst_39 = arith.constant dense<0.000000e+00> : vector<64xf32>
    %87 = vector.multi_reduction <add>, %86, %cst_39 [1] : vector<64x128xf32> to vector<64xf32>
    %88 = vector.shape_cast %87 : vector<64xf32> to vector<64x1xf32>
    %cst_40 = arith.constant 1.280000e+02 : f32
    %89 = vector.broadcast %cst_40 : f32 to vector<64x1xf32>
    %90 = arith.divf %88, %89 : vector<64x1xf32>
    %91 = vector.broadcast %83 : vector<64x1xf32> to vector<64x128xf32>
    %92 = arith.subf %75, %91 : vector<64x128xf32>
    %cst_41 = arith.constant 9.99999997E-7 : f32
    %93 = vector.broadcast %cst_41 : f32 to vector<64x1xf32>
    %94 = arith.addf %90, %93 : vector<64x1xf32>
    %95 = math.rsqrt %94 : vector<64x1xf32>
    %96 = vector.broadcast %95 : vector<64x1xf32> to vector<64x128xf32>
    %97 = arith.mulf %92, %96 : vector<64x128xf32>
    %98 = vector.broadcast %77 : vector<1x128xf32> to vector<64x128xf32>
    %99 = arith.mulf %97, %98 : vector<64x128xf32>
    %100 = vector.broadcast %79 : vector<1x128xf32> to vector<64x128xf32>
    %101 = arith.addf %99, %100 : vector<64x128xf32>
    %102 = arith.truncf %101 : vector<64x128xf32> to vector<64x128xbf16>
    %cst_42 = arith.constant 0.000000e+00 : f32
    %103 = vector.broadcast %cst_42 : f32 to vector<64x128xf32>
    %c0_43 = arith.constant 0 : index
    %c0_44 = arith.constant 0 : index
    %c0_45 = arith.constant 0 : index
    %104 = vector.load %arg14[%c0_43, %c0_44, %c0_45] : memref<1x128x1024xbf16, #tpu.memory_space<vmem>>, vector<1x128x256xbf16>
    %105 = vector.shape_cast %104 : vector<1x128x256xbf16> to vector<128x256xbf16>
    %cst_46 = arith.constant dense<0.000000e+00> : vector<64x256xf32>
    %106 = tpu.matmul %102, %105, %cst_46 {dimension_numbers = #tpu.dot_dimension_numbers<[1], [0], [0], [1], [0, 0, 1, 1], [], []>} : vector<64x128xbf16>, vector<128x256xbf16>, vector<64x256xf32> -> vector<64x256xf32>
    %c0_47 = arith.constant 0 : index
    %c0_48 = arith.constant 0 : index
    %c0_49 = arith.constant 0 : index
    %107 = vector.load %arg15[%c0_47, %c0_48, %c0_49] : memref<1x1x1024xf32, #tpu.memory_space<vmem>>, vector<1x1x256xf32>
    %108 = vector.shape_cast %107 : vector<1x1x256xf32> to vector<1x256xf32>
    %109 = vector.broadcast %108 : vector<1x256xf32> to vector<64x256xf32>
    %110 = arith.addf %106, %109 : vector<64x256xf32>
    %cst_50 = arith.constant 0.000000e+00 : f32
    %111 = vector.broadcast %cst_50 : f32 to vector<64x256xf32>
    %112 = arith.maximumf %110, %111 : vector<64x256xf32>
    %113 = arith.truncf %112 : vector<64x256xf32> to vector<64x256xbf16>
    %c0_51 = arith.constant 0 : index
    %c0_52 = arith.constant 0 : index
    %c0_53 = arith.constant 0 : index
    %114 = vector.load %arg16[%c0_51, %c0_52, %c0_53] : memref<1x1024x128xbf16, #tpu.memory_space<vmem>>, vector<1x256x128xbf16>
    %115 = vector.shape_cast %114 : vector<1x256x128xbf16> to vector<256x128xbf16>
    %cst_54 = arith.constant dense<0.000000e+00> : vector<64x128xf32>
    %116 = tpu.matmul %113, %115, %cst_54 {dimension_numbers = #tpu.dot_dimension_numbers<[1], [0], [0], [1], [0, 0, 1, 1], [], []>} : vector<64x256xbf16>, vector<256x128xbf16>, vector<64x128xf32> -> vector<64x128xf32>
    %117 = arith.addf %103, %116 : vector<64x128xf32>
    %c0_55 = arith.constant 0 : index
    %c0_56 = arith.constant 0 : index
    %c256 = arith.constant 256 : index
    %118 = vector.load %arg14[%c0_55, %c0_56, %c256] : memref<1x128x1024xbf16, #tpu.memory_space<vmem>>, vector<1x128x256xbf16>
    %119 = vector.shape_cast %118 : vector<1x128x256xbf16> to vector<128x256xbf16>
    %cst_57 = arith.constant dense<0.000000e+00> : vector<64x256xf32>
    %120 = tpu.matmul %102, %119, %cst_57 {dimension_numbers = #tpu.dot_dimension_numbers<[1], [0], [0], [1], [0, 0, 1, 1], [], []>} : vector<64x128xbf16>, vector<128x256xbf16>, vector<64x256xf32> -> vector<64x256xf32>
    %c0_58 = arith.constant 0 : index
    %c0_59 = arith.constant 0 : index
    %c256_60 = arith.constant 256 : index
    %121 = vector.load %arg15[%c0_58, %c0_59, %c256_60] : memref<1x1x1024xf32, #tpu.memory_space<vmem>>, vector<1x1x256xf32>
    %122 = vector.shape_cast %121 : vector<1x1x256xf32> to vector<1x256xf32>
    %123 = vector.broadcast %122 : vector<1x256xf32> to vector<64x256xf32>
    %124 = arith.addf %120, %123 : vector<64x256xf32>
    %cst_61 = arith.constant 0.000000e+00 : f32
    %125 = vector.broadcast %cst_61 : f32 to vector<64x256xf32>
    %126 = arith.maximumf %124, %125 : vector<64x256xf32>
    %127 = arith.truncf %126 : vector<64x256xf32> to vector<64x256xbf16>
    %c0_62 = arith.constant 0 : index
    %c256_63 = arith.constant 256 : index
    %c0_64 = arith.constant 0 : index
    %128 = vector.load %arg16[%c0_62, %c256_63, %c0_64] : memref<1x1024x128xbf16, #tpu.memory_space<vmem>>, vector<1x256x128xbf16>
    %129 = vector.shape_cast %128 : vector<1x256x128xbf16> to vector<256x128xbf16>
    %cst_65 = arith.constant dense<0.000000e+00> : vector<64x128xf32>
    %130 = tpu.matmul %127, %129, %cst_65 {dimension_numbers = #tpu.dot_dimension_numbers<[1], [0], [0], [1], [0, 0, 1, 1], [], []>} : vector<64x256xbf16>, vector<256x128xbf16>, vector<64x128xf32> -> vector<64x128xf32>
    %131 = arith.addf %117, %130 : vector<64x128xf32>
    %c0_66 = arith.constant 0 : index
    %c0_67 = arith.constant 0 : index
    %c512 = arith.constant 512 : index
    %132 = vector.load %arg14[%c0_66, %c0_67, %c512] : memref<1x128x1024xbf16, #tpu.memory_space<vmem>>, vector<1x128x256xbf16>
    %133 = vector.shape_cast %132 : vector<1x128x256xbf16> to vector<128x256xbf16>
    %cst_68 = arith.constant dense<0.000000e+00> : vector<64x256xf32>
    %134 = tpu.matmul %102, %133, %cst_68 {dimension_numbers = #tpu.dot_dimension_numbers<[1], [0], [0], [1], [0, 0, 1, 1], [], []>} : vector<64x128xbf16>, vector<128x256xbf16>, vector<64x256xf32> -> vector<64x256xf32>
    %c0_69 = arith.constant 0 : index
    %c0_70 = arith.constant 0 : index
    %c512_71 = arith.constant 512 : index
    %135 = vector.load %arg15[%c0_69, %c0_70, %c512_71] : memref<1x1x1024xf32, #tpu.memory_space<vmem>>, vector<1x1x256xf32>
    %136 = vector.shape_cast %135 : vector<1x1x256xf32> to vector<1x256xf32>
    %137 = vector.broadcast %136 : vector<1x256xf32> to vector<64x256xf32>
    %138 = arith.addf %134, %137 : vector<64x256xf32>
    %cst_72 = arith.constant 0.000000e+00 : f32
    %139 = vector.broadcast %cst_72 : f32 to vector<64x256xf32>
    %140 = arith.maximumf %138, %139 : vector<64x256xf32>
    %141 = arith.truncf %140 : vector<64x256xf32> to vector<64x256xbf16>
    %c0_73 = arith.constant 0 : index
    %c512_74 = arith.constant 512 : index
    %c0_75 = arith.constant 0 : index
    %142 = vector.load %arg16[%c0_73, %c512_74, %c0_75] : memref<1x1024x128xbf16, #tpu.memory_space<vmem>>, vector<1x256x128xbf16>
    %143 = vector.shape_cast %142 : vector<1x256x128xbf16> to vector<256x128xbf16>
    %cst_76 = arith.constant dense<0.000000e+00> : vector<64x128xf32>
    %144 = tpu.matmul %141, %143, %cst_76 {dimension_numbers = #tpu.dot_dimension_numbers<[1], [0], [0], [1], [0, 0, 1, 1], [], []>} : vector<64x256xbf16>, vector<256x128xbf16>, vector<64x128xf32> -> vector<64x128xf32>
    %145 = arith.addf %131, %144 : vector<64x128xf32>
    %c0_77 = arith.constant 0 : index
    %c0_78 = arith.constant 0 : index
    %c768 = arith.constant 768 : index
    %146 = vector.load %arg14[%c0_77, %c0_78, %c768] : memref<1x128x1024xbf16, #tpu.memory_space<vmem>>, vector<1x128x256xbf16>
    %147 = vector.shape_cast %146 : vector<1x128x256xbf16> to vector<128x256xbf16>
    %cst_79 = arith.constant dense<0.000000e+00> : vector<64x256xf32>
    %148 = tpu.matmul %102, %147, %cst_79 {dimension_numbers = #tpu.dot_dimension_numbers<[1], [0], [0], [1], [0, 0, 1, 1], [], []>} : vector<64x128xbf16>, vector<128x256xbf16>, vector<64x256xf32> -> vector<64x256xf32>
    %c0_80 = arith.constant 0 : index
    %c0_81 = arith.constant 0 : index
    %c768_82 = arith.constant 768 : index
    %149 = vector.load %arg15[%c0_80, %c0_81, %c768_82] : memref<1x1x1024xf32, #tpu.memory_space<vmem>>, vector<1x1x256xf32>
    %150 = vector.shape_cast %149 : vector<1x1x256xf32> to vector<1x256xf32>
    %151 = vector.broadcast %150 : vector<1x256xf32> to vector<64x256xf32>
    %152 = arith.addf %148, %151 : vector<64x256xf32>
    %cst_83 = arith.constant 0.000000e+00 : f32
    %153 = vector.broadcast %cst_83 : f32 to vector<64x256xf32>
    %154 = arith.maximumf %152, %153 : vector<64x256xf32>
    %155 = arith.truncf %154 : vector<64x256xf32> to vector<64x256xbf16>
    %c0_84 = arith.constant 0 : index
    %c768_85 = arith.constant 768 : index
    %c0_86 = arith.constant 0 : index
    %156 = vector.load %arg16[%c0_84, %c768_85, %c0_86] : memref<1x1024x128xbf16, #tpu.memory_space<vmem>>, vector<1x256x128xbf16>
    %157 = vector.shape_cast %156 : vector<1x256x128xbf16> to vector<256x128xbf16>
    %cst_87 = arith.constant dense<0.000000e+00> : vector<64x128xf32>
    %158 = tpu.matmul %155, %157, %cst_87 {dimension_numbers = #tpu.dot_dimension_numbers<[1], [0], [0], [1], [0, 0, 1, 1], [], []>} : vector<64x256xbf16>, vector<256x128xbf16>, vector<64x128xf32> -> vector<64x128xf32>
    %159 = arith.addf %145, %158 : vector<64x128xf32>
    %160 = arith.addf %75, %159 : vector<64x128xf32>
    %c0_88 = arith.constant 0 : index
    %c0_89 = arith.constant 0 : index
    %c0_90 = arith.constant 0 : index
    %161 = vector.load %arg17[%c0_88, %c0_89, %c0_90] : memref<1x1x128xf32, #tpu.memory_space<vmem>>, vector<1x1x128xf32>
    %162 = vector.shape_cast %161 : vector<1x1x128xf32> to vector<1x128xf32>
    %163 = vector.broadcast %162 : vector<1x128xf32> to vector<64x128xf32>
    %164 = arith.addf %160, %163 : vector<64x128xf32>
    %c0_91 = arith.constant 0 : index
    %c0_92 = arith.constant 0 : index
    %165 = vector.load %arg19[%c0_91, %c0_92] : memref<64x128xf32, #tpu.memory_space<vmem>>, vector<64x128xf32>
    tpu.vector_store %arg19[%c0_91, %c0_92], %164 {strides = array<i32>} : memref<64x128xf32, #tpu.memory_space<vmem>>, vector<64x128xf32>,
    %c0_93 = arith.constant 0 : index
    %c0_94 = arith.constant 0 : index
    %c0_95 = arith.constant 0 : index
    %c0_96 = arith.constant 0 : index
    %166 = vector.load %arg18[%c0_93, %c0_94, %c0_95, %c0_96] : memref<1x1x64x128xf32, #tpu.memory_space<vmem>>, vector<1x1x64x128xf32>
    %167 = vector.shape_cast %166 : vector<1x1x64x128xf32> to vector<64x128xf32>
    %168 = vector.shape_cast %164 : vector<64x128xf32> to vector<1x1x64x128xf32>
    tpu.vector_store %arg18[%c0_93, %c0_94, %c0_95, %c0_96], %168 {strides = array<i32>} : memref<1x1x64x128xf32, #tpu.memory_space<vmem>>, vector<1x1x64x128xf32>,
    return
  }
  func.func @transform_0(%arg0: i32, %arg1: i32) -> (i32, i32, i32) {
    %c0_i32 = arith.constant 0 : i32
    %c0_i32_0 = arith.constant 0 : i32
    %c0_i32_1 = arith.constant 0 : i32
    return %arg0, %c0_i32, %c0_i32_0 : i32, i32, i32
  }
  func.func @transform_1(%arg0: i32, %arg1: i32) -> (i32, i32) {
    %c0_i32 = arith.constant 0 : i32
    %c0_i32_0 = arith.constant 0 : i32
    %c0_i32_1 = arith.constant 0 : i32
    return %c0_i32, %c0_i32_0 : i32, i32
  }
  func.func @transform_2(%arg0: i32, %arg1: i32) -> (i32, i32) {
    %c0_i32 = arith.constant 0 : i32
    %c0_i32_0 = arith.constant 0 : i32
    %c0_i32_1 = arith.constant 0 : i32
    return %c0_i32, %c0_i32_0 : i32, i32
  }
  func.func @transform_3(%arg0: i32, %arg1: i32) -> (i32, i32) {
    %c0_i32 = arith.constant 0 : i32
    %c0_i32_0 = arith.constant 0 : i32
    %c0_i32_1 = arith.constant 0 : i32
    return %c0_i32, %c0_i32_0 : i32, i32
  }
  func.func @transform_4(%arg0: i32, %arg1: i32) -> (i32, i32, i32) {
    %c0_i32 = arith.constant 0 : i32
    %c0_i32_0 = arith.constant 0 : i32
    %c0_i32_1 = arith.constant 0 : i32
    return %arg1, %c0_i32, %c0_i32_0 : i32, i32, i32
  }
  func.func @transform_5(%arg0: i32, %arg1: i32) -> (i32, i32, i32) {
    %c0_i32 = arith.constant 0 : i32
    %c0_i32_0 = arith.constant 0 : i32
    %c0_i32_1 = arith.constant 0 : i32
    return %arg1, %c0_i32, %c0_i32_0 : i32, i32, i32
  }
  func.func @transform_6(%arg0: i32, %arg1: i32) -> (i32, i32, i32) {
    %c0_i32 = arith.constant 0 : i32
    %c0_i32_0 = arith.constant 0 : i32
    %c0_i32_1 = arith.constant 0 : i32
    return %arg1, %c0_i32, %c0_i32_0 : i32, i32, i32
  }
  func.func @transform_7(%arg0: i32, %arg1: i32) -> (i32, i32, i32) {
    %c0_i32 = arith.constant 0 : i32
    %c0_i32_0 = arith.constant 0 : i32
    %c0_i32_1 = arith.constant 0 : i32
    return %arg1, %c0_i32, %c0_i32_0 : i32, i32, i32
  }
  func.func @transform_8(%arg0: i32, %arg1: i32) -> (i32, i32, i32) {
    %c0_i32 = arith.constant 0 : i32
    %c0_i32_0 = arith.constant 0 : i32
    %c0_i32_1 = arith.constant 0 : i32
    return %arg1, %c0_i32, %c0_i32_0 : i32, i32, i32
  }
  func.func @transform_9(%arg0: i32, %arg1: i32) -> (i32, i32, i32) {
    %c0_i32 = arith.constant 0 : i32
    %c0_i32_0 = arith.constant 0 : i32
    %c0_i32_1 = arith.constant 0 : i32
    return %arg1, %c0_i32, %c0_i32_0 : i32, i32, i32
  }
  func.func @transform_10(%arg0: i32, %arg1: i32) -> (i32, i32, i32) {
    %c0_i32 = arith.constant 0 : i32
    %c0_i32_0 = arith.constant 0 : i32
    %c0_i32_1 = arith.constant 0 : i32
    return %arg1, %c0_i32, %c0_i32_0 : i32, i32, i32
  }
  func.func @transform_11(%arg0: i32, %arg1: i32) -> (i32, i32, i32) {
    %c0_i32 = arith.constant 0 : i32
    %c0_i32_0 = arith.constant 0 : i32
    %c0_i32_1 = arith.constant 0 : i32
    return %arg1, %c0_i32, %c0_i32_0 : i32, i32, i32
  }
  func.func @transform_12(%arg0: i32, %arg1: i32) -> (i32, i32, i32) {
    %c0_i32 = arith.constant 0 : i32
    %c0_i32_0 = arith.constant 0 : i32
    %c0_i32_1 = arith.constant 0 : i32
    return %arg1, %c0_i32, %c0_i32_0 : i32, i32, i32
  }
  func.func @transform_13(%arg0: i32, %arg1: i32) -> (i32, i32, i32) {
    %c0_i32 = arith.constant 0 : i32
    %c0_i32_0 = arith.constant 0 : i32
    %c0_i32_1 = arith.constant 0 : i32
    return %arg1, %c0_i32, %c0_i32_0 : i32, i32, i32
  }
  func.func @transform_14(%arg0: i32, %arg1: i32) -> (i32, i32, i32) {
    %c0_i32 = arith.constant 0 : i32
    %c0_i32_0 = arith.constant 0 : i32
    %c0_i32_1 = arith.constant 0 : i32
    return %arg1, %c0_i32, %c0_i32_0 : i32, i32, i32
  }
  func.func @transform_15(%arg0: i32, %arg1: i32) -> (i32, i32, i32) {
    %c0_i32 = arith.constant 0 : i32
    %c0_i32_0 = arith.constant 0 : i32
    %c0_i32_1 = arith.constant 0 : i32
    return %arg1, %c0_i32, %c0_i32_0 : i32, i32, i32
  }
  func.func @transform_16(%arg0: i32, %arg1: i32) -> (i32, i32, i32, i32) {
    %c0_i32 = arith.constant 0 : i32
    %c0_i32_0 = arith.constant 0 : i32
    %c0_i32_1 = arith.constant 0 : i32
    return %arg1, %arg0, %c0_i32, %c0_i32_0 : i32, i32, i32, i32
  }
}

</mosaic_0001>

<llo_original>
// kernel: transformer_forward.1
$region0: #{transformer_forward.1}
  #allocation0 [shape = 'u32[]', space=smem, size = 0x4, offset = 0x4, fixed_abs, tag = 'smem constant byte address 0x4 - core index']
  #allocation1 [shape = 'u32[144,128]{1,0:T(1,128)}', space=vmem, size = 0x12000, scoped, tag = 'internal scratch']
  #allocation2 [shape = 'f32[64,128]{1,0:T(8,128)}', space=vmem, size = 0x8000, scoped, tag = 'scratch operand']
  %s0 = inlined_call_operand.vmem [shape: bf16[2,64,256], index: 0, kind: input, shape index: {}]
  %s1 = inlined_call_operand.vmem [shape: bf16[256,128], index: 1, kind: input, shape index: {}]
  %s2 = inlined_call_operand.vmem [shape: f32[1,128], index: 2, kind: input, shape index: {}]
  %s3 = inlined_call_operand.vmem [shape: f32[64,128], index: 3, kind: input, shape index: {}]
  %s4 = inlined_call_operand.vmem [shape: f32[2,1,128], index: 4, kind: input, shape index: {}]
  %s5 = inlined_call_operand.vmem [shape: f32[2,1,128], index: 5, kind: input, shape index: {}]
  %s6 = inlined_call_operand.vmem [shape: bf16[2,128,384], index: 6, kind: input, shape index: {}]
  %s7 = inlined_call_operand.vmem [shape: f32[2,1,384], index: 7, kind: input, shape index: {}]
  %s8 = inlined_call_operand.vmem [shape: bf16[2,128,128], index: 8, kind: input, shape index: {}]
  %s9 = inlined_call_operand.vmem [shape: f32[2,1,128], index: 9, kind: input, shape index: {}]
  %s10 = inlined_call_operand.vmem [shape: f32[2,1,128], index: 10, kind: input, shape index: {}]
  %s11 = inlined_call_operand.vmem [shape: f32[2,1,128], index: 11, kind: input, shape index: {}]
  %s12 = inlined_call_operand.vmem [shape: bf16[2,128,1024], index: 12, kind: input, shape index: {}]
  %s13 = inlined_call_operand.vmem [shape: f32[2,1,1024], index: 13, kind: input, shape index: {}]
  %s14 = inlined_call_operand.vmem [shape: bf16[2,1024,128], index: 14, kind: input, shape index: {}]
  %s15 = inlined_call_operand.vmem [shape: f32[2,1,128], index: 15, kind: input, shape index: {}]
  %s16 = inlined_call_operand.vmem [shape: f32[2,2,64,128], index: 16, kind: output, shape index: {}]
  %s17 = sld [smem:[#allocation0]]
  $region101: #{transformer_forward.1} parent=0
    _
  %s19 = ssub.s32 1, %s17
  %s20 = scalar_select 0, %s19, %s17
  loop: start=0, step=1, limit=6
  $region2: #{transformer_forward.1} parent=0 // loop_pre_header
    _
  $region3: #{transformer_forward.1} parent=0 // loop_header
    %s22 = sphi 0, %s26
    %p23 = scmp.ge.s32.totalorder %s22, 6
    %s29 = sphi 0, %s41
    %s30 = sphi 0, %s37
    %s31 = sphi 0, %s29
    %s32 = sphi 0, %s30
    %s33 = sphi 0, %s31
    %s34 = sphi 0, %s32
    %s44 = sphi 0, %s46
    %s47 = sphi 0, %s44
    %s48 = sphi 0, %s47
    %s64 = sphi 0, %s48
    %s68 = sphi 0, %s68
    %s70 = sphi 0, %s68
    %s71 = sphi 0, %s70
    %s85 = sphi 0, %s71
    %s89 = sphi 0, %s89
    %s91 = sphi 0, %s89
    %s92 = sphi 0, %s91
    %s106 = sphi 0, %s92
    %s110 = sphi 0, %s110
    %s112 = sphi 0, %s110
    %s113 = sphi 0, %s112
    %s127 = sphi 0, %s113
    %s133 = sphi 0, %s135
    %s136 = sphi 0, %s133
    %s137 = sphi 0, %s136
    %s153 = sphi 0, %s137
    %s159 = sphi 0, %s161
    %s162 = sphi 0, %s159
    %s163 = sphi 0, %s162
    %s179 = sphi 0, %s163
    %s185 = sphi 0, %s187
    %s188 = sphi 0, %s185
    %s189 = sphi 0, %s188
    %s205 = sphi 0, %s189
    %s211 = sphi 0, %s213
    %s214 = sphi 0, %s211
    %s215 = sphi 0, %s214
    %s231 = sphi 0, %s215
    %s237 = sphi 0, %s239
    %s240 = sphi 0, %s237
    %s241 = sphi 0, %s240
    %s257 = sphi 0, %s241
    %s263 = sphi 0, %s265
    %s266 = sphi 0, %s263
    %s267 = sphi 0, %s266
    %s283 = sphi 0, %s267
    %s289 = sphi 0, %s291
    %s292 = sphi 0, %s289
    %s293 = sphi 0, %s292
    %s309 = sphi 0, %s293
    %s315 = sphi 0, %s317
    %s318 = sphi 0, %s315
    %s319 = sphi 0, %s318
    %s335 = sphi 0, %s319
    %s341 = sphi 0, %s343
    %s344 = sphi 0, %s341
    %s345 = sphi 0, %s344
    %s361 = sphi 0, %s345
    %s367 = sphi 0, %s369
    %s370 = sphi 0, %s367
    %s371 = sphi 0, %s370
    %s387 = sphi 0, %s371
    %s393 = sphi 0, %s395
    %s396 = sphi 0, %s393
    %s397 = sphi 0, %s396
    %s413 = sphi 0, %s397
    %s419 = sphi 0, %s421
    %s422 = sphi 0, %s419
    %s423 = sphi 0, %s422
    %s439 = sphi 0, %s423
    %s447 = sphi 0, %s449
    %s450 = sphi 0, %s447
    %s451 = sphi 0, %s450
    %s467 = sphi 0, %s451
  $region4: #{transformer_forward.1} parent=0 // loop_header_branch
    %25 = sbr.rel (%p23) target = $region8
  $region5: #{transformer_forward.1} parent=0 // loop_body
    %s27 = ssub.s32 %s22, 1
    %s28 = ssub.s32 %s22, 2
    %s35 = sadd.s32 1, %s30
    %p36 = scmp.ge.s32.totalorder %s35, 2
    %s37 = scalar_select %p36, 0, %s35
    %s38 = sadd.s32 1, %s29
    %s39 = scalar_select %p36, %s38, %s29
    %p40 = scmp.ge.s32.totalorder %s39, 2
    %s41 = scalar_select %p40, 0, %s39
    %s42 = ssub.s32 %s29, %s41
    %p43 = scmp.eq.s32.totalorder %s42, 0
    %s45 = sadd.s32 %s44, 1
    %s46 = scalar_select %p43, %s44, %s45
    %p49 = pneg %p43
    %p50 = scmp.eq.s32.totalorder %s22, 3
    %p51 = por %p49, %p50
    %p52 = scmp.ne.s32.totalorder %s44, %s47
    %p53 = scmp.eq.s32.totalorder %s22, 0
    %p54 = por %p52, %p53
    %p55 = scmp.ne.s32.totalorder %s44, %s47
    %p56 = scmp.eq.s32.totalorder %s27, 3
    %p57 = por %p55, %p56
    %p58 = scmp.ne.s32.totalorder %s47, %s48
    %p59 = scmp.eq.s32.totalorder %s27, 0
    %p60 = por %p58, %p59
    %p61 = scmp.ne.s32.totalorder %s47, %s48
    %p62 = scmp.eq.s32.totalorder %s28, 3
    %p63 = por %p61, %p62
    %p65 = scmp.ne.s32.totalorder %s48, %s64
    %p66 = scmp.eq.s32.totalorder %s28, 0
    %p67 = por %p65, %p66
    %s69 = sadd.s32 %s68, 1
    %p72 = scmp.eq.s32.totalorder %s22, 3
    %p73 = scmp.ne.s32.totalorder %s68, %s70
    %p74 = scmp.eq.s32.totalorder %s22, 0
    %p75 = por %p73, %p74
    %p76 = scmp.ne.s32.totalorder %s68, %s70
    %p77 = scmp.eq.s32.totalorder %s27, 3
    %p78 = por %p76, %p77
    %p79 = scmp.ne.s32.totalorder %s70, %s71
    %p80 = scmp.eq.s32.totalorder %s27, 0
    %p81 = por %p79, %p80
    %p82 = scmp.ne.s32.totalorder %s70, %s71
    %p83 = scmp.eq.s32.totalorder %s28, 3
    %p84 = por %p82, %p83
    %p86 = scmp.ne.s32.totalorder %s71, %s85
    %p87 = scmp.eq.s32.totalorder %s28, 0
    %p88 = por %p86, %p87
    %s90 = sadd.s32 %s89, 1
    %p93 = scmp.eq.s32.totalorder %s22, 3
    %p94 = scmp.ne.s32.totalorder %s89, %s91
    %p95 = scmp.eq.s32.totalorder %s22, 0
    %p96 = por %p94, %p95
    %p97 = scmp.ne.s32.totalorder %s89, %s91
    %p98 = scmp.eq.s32.totalorder %s27, 3
    %p99 = por %p97, %p98
    %p100 = scmp.ne.s32.totalorder %s91, %s92
    %p101 = scmp.eq.s32.totalorder %s27, 0
    %p102 = por %p100, %p101
    %p103 = scmp.ne.s32.totalorder %s91, %s92
    %p104 = scmp.eq.s32.totalorder %s28, 3
    %p105 = por %p103, %p104
    %p107 = scmp.ne.s32.totalorder %s92, %s106
    %p108 = scmp.eq.s32.totalorder %s28, 0
    %p109 = por %p107, %p108
    %s111 = sadd.s32 %s110, 1
    %p114 = scmp.eq.s32.totalorder %s22, 3
    %p115 = scmp.ne.s32.totalorder %s110, %s112
    %p116 = scmp.eq.s32.totalorder %s22, 0
    %p117 = por %p115, %p116
    %p118 = scmp.ne.s32.totalorder %s110, %s112
    %p119 = scmp.eq.s32.totalorder %s27, 3
    %p120 = por %p118, %p119
    %p121 = scmp.ne.s32.totalorder %s112, %s113
    %p122 = scmp.eq.s32.totalorder %s27, 0
    %p123 = por %p121, %p122
    %p124 = scmp.ne.s32.totalorder %s112, %s113
    %p125 = scmp.eq.s32.totalorder %s28, 3
    %p126 = por %p124, %p125
    %p128 = scmp.ne.s32.totalorder %s113, %s127
    %p129 = scmp.eq.s32.totalorder %s28, 0
    %p130 = por %p128, %p129
    %s131 = ssub.s32 %s30, %s37
    %p132 = scmp.eq.s32.totalorder %s131, 0
    %s134 = sadd.s32 %s133, 1
    %s135 = scalar_select %p132, %s133, %s134
    %p138 = pneg %p132
    %p139 = scmp.eq.s32.totalorder %s22, 3
    %p140 = por %p138, %p139
    %p141 = scmp.ne.s32.totalorder %s133, %s136
    %p142 = scmp.eq.s32.totalorder %s22, 0
    %p143 = por %p141, %p142
    %p144 = scmp.ne.s32.totalorder %s133, %s136
    %p145 = scmp.eq.s32.totalorder %s27, 3
    %p146 = por %p144, %p145
    %p147 = scmp.ne.s32.totalorder %s136, %s137
    %p148 = scmp.eq.s32.totalorder %s27, 0
    %p149 = por %p147, %p148
    %p150 = scmp.ne.s32.totalorder %s136, %s137
    %p151 = scmp.eq.s32.totalorder %s28, 3
    %p152 = por %p150, %p151
    %p154 = scmp.ne.s32.totalorder %s137, %s153
    %p155 = scmp.eq.s32.totalorder %s28, 0
    %p156 = por %p154, %p155
    %s157 = ssub.s32 %s30, %s37
    %p158 = scmp.eq.s32.totalorder %s157, 0
    %s160 = sadd.s32 %s159, 1
    %s161 = scalar_select %p158, %s159, %s160
    %p164 = pneg %p158
    %p165 = scmp.eq.s32.totalorder %s22, 3
    %p166 = por %p164, %p165
    %p167 = scmp.ne.s32.totalorder %s159, %s162
    %p168 = scmp.eq.s32.totalorder %s22, 0
    %p169 = por %p167, %p168
    %p170 = scmp.ne.s32.totalorder %s159, %s162
    %p171 = scmp.eq.s32.totalorder %s27, 3
    %p172 = por %p170, %p171
    %p173 = scmp.ne.s32.totalorder %s162, %s163
    %p174 = scmp.eq.s32.totalorder %s27, 0
    %p175 = por %p173, %p174
    %p176 = scmp.ne.s32.totalorder %s162, %s163
    %p177 = scmp.eq.s32.totalorder %s28, 3
    %p178 = por %p176, %p177
    %p180 = scmp.ne.s32.totalorder %s163, %s179
    %p181 = scmp.eq.s32.totalorder %s28, 0
    %p182 = por %p180, %p181
    %s183 = ssub.s32 %s30, %s37
    %p184 = scmp.eq.s32.totalorder %s183, 0
    %s186 = sadd.s32 %s185, 1
    %s187 = scalar_select %p184, %s185, %s186
    %p190 = pneg %p184
    %p191 = scmp.eq.s32.totalorder %s22, 3
    %p192 = por %p190, %p191
    %p193 = scmp.ne.s32.totalorder %s185, %s188
    %p194 = scmp.eq.s32.totalorder %s22, 0
    %p195 = por %p193, %p194
    %p196 = scmp.ne.s32.totalorder %s185, %s188
    %p197 = scmp.eq.s32.totalorder %s27, 3
    %p198 = por %p196, %p197
    %p199 = scmp.ne.s32.totalorder %s188, %s189
    %p200 = scmp.eq.s32.totalorder %s27, 0
    %p201 = por %p199, %p200
    %p202 = scmp.ne.s32.totalorder %s188, %s189
    %p203 = scmp.eq.s32.totalorder %s28, 3
    %p204 = por %p202, %p203
    %p206 = scmp.ne.s32.totalorder %s189, %s205
    %p207 = scmp.eq.s32.totalorder %s28, 0
    %p208 = por %p206, %p207
    %s209 = ssub.s32 %s30, %s37
    %p210 = scmp.eq.s32.totalorder %s209, 0
    %s212 = sadd.s32 %s211, 1
    %s213 = scalar_select %p210, %s211, %s212
    %p216 = pneg %p210
    %p217 = scmp.eq.s32.totalorder %s22, 3
    %p218 = por %p216, %p217
    %p219 = scmp.ne.s32.totalorder %s211, %s214
    %p220 = scmp.eq.s32.totalorder %s22, 0
    %p221 = por %p219, %p220
    %p222 = scmp.ne.s32.totalorder %s211, %s214
    %p223 = scmp.eq.s32.totalorder %s27, 3
    %p224 = por %p222, %p223
    %p225 = scmp.ne.s32.totalorder %s214, %s215
    %p226 = scmp.eq.s32.totalorder %s27, 0
    %p227 = por %p225, %p226
    %p228 = scmp.ne.s32.totalorder %s214, %s215
    %p229 = scmp.eq.s32.totalorder %s28, 3
    %p230 = por %p228, %p229
    %p232 = scmp.ne.s32.totalorder %s215, %s231
    %p233 = scmp.eq.s32.totalorder %s28, 0
    %p234 = por %p232, %p233
    %s235 = ssub.s32 %s30, %s37
    %p236 = scmp.eq.s32.totalorder %s235, 0
    %s238 = sadd.s32 %s237, 1
    %s239 = scalar_select %p236, %s237, %s238
    %p242 = pneg %p236
    %p243 = scmp.eq.s32.totalorder %s22, 3
    %p244 = por %p242, %p243
    %p245 = scmp.ne.s32.totalorder %s237, %s240
    %p246 = scmp.eq.s32.totalorder %s22, 0
    %p247 = por %p245, %p246
    %p248 = scmp.ne.s32.totalorder %s237, %s240
    %p249 = scmp.eq.s32.totalorder %s27, 3
    %p250 = por %p248, %p249
    %p251 = scmp.ne.s32.totalorder %s240, %s241
    %p252 = scmp.eq.s32.totalorder %s27, 0
    %p253 = por %p251, %p252
    %p254 = scmp.ne.s32.totalorder %s240, %s241
    %p255 = scmp.eq.s32.totalorder %s28, 3
    %p256 = por %p254, %p255
    %p258 = scmp.ne.s32.totalorder %s241, %s257
    %p259 = scmp.eq.s32.totalorder %s28, 0
    %p260 = por %p258, %p259
    %s261 = ssub.s32 %s30, %s37
    %p262 = scmp.eq.s32.totalorder %s261, 0
    %s264 = sadd.s32 %s263, 1
    %s265 = scalar_select %p262, %s263, %s264
    %p268 = pneg %p262
    %p269 = scmp.eq.s32.totalorder %s22, 3
    %p270 = por %p268, %p269
    %p271 = scmp.ne.s32.totalorder %s263, %s266
    %p272 = scmp.eq.s32.totalorder %s22, 0
    %p273 = por %p271, %p272
    %p274 = scmp.ne.s32.totalorder %s263, %s266
    %p275 = scmp.eq.s32.totalorder %s27, 3
    %p276 = por %p274, %p275
    %p277 = scmp.ne.s32.totalorder %s266, %s267
    %p278 = scmp.eq.s32.totalorder %s27, 0
    %p279 = por %p277, %p278
    %p280 = scmp.ne.s32.totalorder %s266, %s267
    %p281 = scmp.eq.s32.totalorder %s28, 3
    %p282 = por %p280, %p281
    %p284 = scmp.ne.s32.totalorder %s267, %s283
    %p285 = scmp.eq.s32.totalorder %s28, 0
    %p286 = por %p284, %p285
    %s287 = ssub.s32 %s30, %s37
    %p288 = scmp.eq.s32.totalorder %s287, 0
    %s290 = sadd.s32 %s289, 1
    %s291 = scalar_select %p288, %s289, %s290
    %p294 = pneg %p288
    %p295 = scmp.eq.s32.totalorder %s22, 3
    %p296 = por %p294, %p295
    %p297 = scmp.ne.s32.totalorder %s289, %s292
    %p298 = scmp.eq.s32.totalorder %s22, 0
    %p299 = por %p297, %p298
    %p300 = scmp.ne.s32.totalorder %s289, %s292
    %p301 = scmp.eq.s32.totalorder %s27, 3
    %p302 = por %p300, %p301
    %p303 = scmp.ne.s32.totalorder %s292, %s293
    %p304 = scmp.eq.s32.totalorder %s27, 0
    %p305 = por %p303, %p304
    %p306 = scmp.ne.s32.totalorder %s292, %s293
    %p307 = scmp.eq.s32.totalorder %s28, 3
    %p308 = por %p306, %p307
    %p310 = scmp.ne.s32.totalorder %s293, %s309
    %p311 = scmp.eq.s32.totalorder %s28, 0
    %p312 = por %p310, %p311
    %s313 = ssub.s32 %s30, %s37
    %p314 = scmp.eq.s32.totalorder %s313, 0
    %s316 = sadd.s32 %s315, 1
    %s317 = scalar_select %p314, %s315, %s316
    %p320 = pneg %p314
    %p321 = scmp.eq.s32.totalorder %s22, 3
    %p322 = por %p320, %p321
    %p323 = scmp.ne.s32.totalorder %s315, %s318
    %p324 = scmp.eq.s32.totalorder %s22, 0
    %p325 = por %p323, %p324
    %p326 = scmp.ne.s32.totalorder %s315, %s318
    %p327 = scmp.eq.s32.totalorder %s27, 3
    %p328 = por %p326, %p327
    %p329 = scmp.ne.s32.totalorder %s318, %s319
    %p330 = scmp.eq.s32.totalorder %s27, 0
    %p331 = por %p329, %p330
    %p332 = scmp.ne.s32.totalorder %s318, %s319
    %p333 = scmp.eq.s32.totalorder %s28, 3
    %p334 = por %p332, %p333
    %p336 = scmp.ne.s32.totalorder %s319, %s335
    %p337 = scmp.eq.s32.totalorder %s28, 0
    %p338 = por %p336, %p337
    %s339 = ssub.s32 %s30, %s37
    %p340 = scmp.eq.s32.totalorder %s339, 0
    %s342 = sadd.s32 %s341, 1
    %s343 = scalar_select %p340, %s341, %s342
    %p346 = pneg %p340
    %p347 = scmp.eq.s32.totalorder %s22, 3
    %p348 = por %p346, %p347
    %p349 = scmp.ne.s32.totalorder %s341, %s344
    %p350 = scmp.eq.s32.totalorder %s22, 0
    %p351 = por %p349, %p350
    %p352 = scmp.ne.s32.totalorder %s341, %s344
    %p353 = scmp.eq.s32.totalorder %s27, 3
    %p354 = por %p352, %p353
    %p355 = scmp.ne.s32.totalorder %s344, %s345
    %p356 = scmp.eq.s32.totalorder %s27, 0
    %p357 = por %p355, %p356
    %p358 = scmp.ne.s32.totalorder %s344, %s345
    %p359 = scmp.eq.s32.totalorder %s28, 3
    %p360 = por %p358, %p359
    %p362 = scmp.ne.s32.totalorder %s345, %s361
    %p363 = scmp.eq.s32.totalorder %s28, 0
    %p364 = por %p362, %p363
    %s365 = ssub.s32 %s30, %s37
    %p366 = scmp.eq.s32.totalorder %s365, 0
    %s368 = sadd.s32 %s367, 1
    %s369 = scalar_select %p366, %s367, %s368
    %p372 = pneg %p366
    %p373 = scmp.eq.s32.totalorder %s22, 3
    %p374 = por %p372, %p373
    %p375 = scmp.ne.s32.totalorder %s367, %s370
    %p376 = scmp.eq.s32.totalorder %s22, 0
    %p377 = por %p375, %p376
    %p378 = scmp.ne.s32.totalorder %s367, %s370
    %p379 = scmp.eq.s32.totalorder %s27, 3
    %p380 = por %p378, %p379
    %p381 = scmp.ne.s32.totalorder %s370, %s371
    %p382 = scmp.eq.s32.totalorder %s27, 0
    %p383 = por %p381, %p382
    %p384 = scmp.ne.s32.totalorder %s370, %s371
    %p385 = scmp.eq.s32.totalorder %s28, 3
    %p386 = por %p384, %p385
    %p388 = scmp.ne.s32.totalorder %s371, %s387
    %p389 = scmp.eq.s32.totalorder %s28, 0
    %p390 = por %p388, %p389
    %s391 = ssub.s32 %s30, %s37
    %p392 = scmp.eq.s32.totalorder %s391, 0
    %s394 = sadd.s32 %s393, 1
    %s395 = scalar_select %p392, %s393, %s394
    %p398 = pneg %p392
    %p399 = scmp.eq.s32.totalorder %s22, 3
    %p400 = por %p398, %p399
    %p401 = scmp.ne.s32.totalorder %s393, %s396
    %p402 = scmp.eq.s32.totalorder %s22, 0
    %p403 = por %p401, %p402
    %p404 = scmp.ne.s32.totalorder %s393, %s396
    %p405 = scmp.eq.s32.totalorder %s27, 3
    %p406 = por %p404, %p405
    %p407 = scmp.ne.s32.totalorder %s396, %s397
    %p408 = scmp.eq.s32.totalorder %s27, 0
    %p409 = por %p407, %p408
    %p410 = scmp.ne.s32.totalorder %s396, %s397
    %p411 = scmp.eq.s32.totalorder %s28, 3
    %p412 = por %p410, %p411
    %p414 = scmp.ne.s32.totalorder %s397, %s413
    %p415 = scmp.eq.s32.totalorder %s28, 0
    %p416 = por %p414, %p415
    %s417 = ssub.s32 %s30, %s37
    %p418 = scmp.eq.s32.totalorder %s417, 0
    %s420 = sadd.s32 %s419, 1
    %s421 = scalar_select %p418, %s419, %s420
    %p424 = pneg %p418
    %p425 = scmp.eq.s32.totalorder %s22, 3
    %p426 = por %p424, %p425
    %p427 = scmp.ne.s32.totalorder %s419, %s422
    %p428 = scmp.eq.s32.totalorder %s22, 0
    %p429 = por %p427, %p428
    %p430 = scmp.ne.s32.totalorder %s419, %s422
    %p431 = scmp.eq.s32.totalorder %s27, 3
    %p432 = por %p430, %p431
    %p433 = scmp.ne.s32.totalorder %s422, %s423
    %p434 = scmp.eq.s32.totalorder %s27, 0
    %p435 = por %p433, %p434
    %p436 = scmp.ne.s32.totalorder %s422, %s423
    %p437 = scmp.eq.s32.totalorder %s28, 3
    %p438 = por %p436, %p437
    %p440 = scmp.ne.s32.totalorder %s423, %s439
    %p441 = scmp.eq.s32.totalorder %s28, 0
    %p442 = por %p440, %p441
    %s443 = ssub.s32 %s30, %s37
    %s444 = ssub.s32 %s29, %s41
    %s445 = sor.u32 %s443, %s444
    %p446 = scmp.eq.s32.totalorder %s445, 0
    %s448 = sadd.s32 %s447, 1
    %s449 = scalar_select %p446, %s447, %s448
    %p452 = pneg %p446
    %p453 = scmp.eq.s32.totalorder %s22, 3
    %p454 = por %p452, %p453
    %p455 = scmp.ne.s32.totalorder %s447, %s450
    %p456 = scmp.eq.s32.totalorder %s22, 0
    %p457 = por %p455, %p456
    %p458 = scmp.ne.s32.totalorder %s447, %s450
    %p459 = scmp.eq.s32.totalorder %s27, 3
    %p460 = por %p458, %p459
    %p461 = scmp.ne.s32.totalorder %s450, %s451
    %p462 = scmp.eq.s32.totalorder %s27, 0
    %p463 = por %p461, %p462
    %p464 = scmp.ne.s32.totalorder %s450, %s451
    %p465 = scmp.eq.s32.totalorder %s28, 3
    %p466 = por %p464, %p465
    %p468 = scmp.ne.s32.totalorder %s451, %s467
    %p469 = scmp.eq.s32.totalorder %s28, 0
    %p470 = por %p468, %p469
    %p471 = scmp.le.s32.totalorder 1, %s22
    %p472 = scmp.lt.s32.totalorder %s22, 5
    %p473 = pnand %p471, %p472
    %p474 = pneg %p473
    // Predicated region
    $region9: #{transformer_forward.1} parent=5 // pred_check
      _
    $region10: #{transformer_forward.1} parent=5 // pred_check_branch
      %476 = sbr.rel (%p473) target = $region12
    $region11: #{transformer_forward.1} parent=5 // pred_region
      %s477 = ssub.s32 %s22, 1
      // Predicated region
      $region13: #{transformer_forward.1} parent=11 // pred_check
        %p478 = pneg %p81
      $region14: #{transformer_forward.1} parent=11 // pred_check_branch
        %480 = sbr.rel (%p478) target = $region16
      $region15: #{transformer_forward.1} parent=11 // pred_region
        _
      $region16: #{transformer_forward.1} parent=11 // pred_fallthru
        _
      // Predicated region
      $region17: #{transformer_forward.1} parent=11 // pred_check
        %p481 = pneg %p102
      $region18: #{transformer_forward.1} parent=11 // pred_check_branch
        %483 = sbr.rel (%p481) target = $region20
      $region19: #{transformer_forward.1} parent=11 // pred_region
        _
      $region20: #{transformer_forward.1} parent=11 // pred_fallthru
        _
      // Predicated region
      $region21: #{transformer_forward.1} parent=11 // pred_check
        %p484 = pneg %p123
      $region22: #{transformer_forward.1} parent=11 // pred_check_branch
        %486 = sbr.rel (%p484) target = $region24
      $region23: #{transformer_forward.1} parent=11 // pred_region
        _
      $region24: #{transformer_forward.1} parent=11 // pred_fallthru
        _
    $region12: #{transformer_forward.1} parent=5 // pred_fallthru
      _
    %p487 = scmp.lt.s32.totalorder %s22, 4
    // Predicated region
    $region25: #{transformer_forward.1} parent=5 // pred_check
      %p488 = pneg %p487
    $region26: #{transformer_forward.1} parent=5 // pred_check_branch
      %490 = sbr.rel (%p488) target = $region28
    $region27: #{transformer_forward.1} parent=5 // pred_region
      // Predicated region
      $region29: #{transformer_forward.1} parent=27 // pred_check
        %p491 = pneg %p54
      $region30: #{transformer_forward.1} parent=27 // pred_check_branch
        %493 = sbr.rel (%p491) target = $region32
      $region31: #{transformer_forward.1} parent=27 // pred_region
        %p494 = scmp.lt.s32.totalorder %s29, 1
        %s495 = scalar_select %p494, %s29, 1
        %s496 = smul.addr %s495, 16
        %s497 = smul.addr %s496, 4
        %s498 = scalar_lea.vmem %s0, %s497
      $region32: #{transformer_forward.1} parent=27 // pred_fallthru
        _
      // Predicated region
      $region33: #{transformer_forward.1} parent=27 // pred_check
        %p499 = pneg %p143
      $region34: #{transformer_forward.1} parent=27 // pred_check_branch
        %501 = sbr.rel (%p499) target = $region36
      $region35: #{transformer_forward.1} parent=27 // pred_region
        %p502 = scmp.lt.s32.totalorder %s30, 1
        %s503 = scalar_select %p502, %s30, 1
        %s504 = scalar_lea.vmem %s4, %s503
      $region36: #{transformer_forward.1} parent=27 // pred_fallthru
        _
      // Predicated region
      $region37: #{transformer_forward.1} parent=27 // pred_check
        %p505 = pneg %p169
      $region38: #{transformer_forward.1} parent=27 // pred_check_branch
        %507 = sbr.rel (%p505) target = $region40
      $region39: #{transformer_forward.1} parent=27 // pred_region
        %p508 = scmp.lt.s32.totalorder %s30, 1
        %s509 = scalar_select %p508, %s30, 1
        %s510 = scalar_lea.vmem %s5, %s509
      $region40: #{transformer_forward.1} parent=27 // pred_fallthru
        _
      // Predicated region
      $region41: #{transformer_forward.1} parent=27 // pred_check
        %p511 = pneg %p195
      $region42: #{transformer_forward.1} parent=27 // pred_check_branch
        %513 = sbr.rel (%p511) target = $region44
      $region43: #{transformer_forward.1} parent=27 // pred_region
        %p514 = scmp.lt.s32.totalorder %s30, 1
        %s515 = scalar_select %p514, %s30, 1
        %s516 = smul.addr %s515, 48
        %s517 = smul.addr %s516, 4
        %s518 = scalar_lea.vmem %s6, %s517
      $region44: #{transformer_forward.1} parent=27 // pred_fallthru
        _
      // Predicated region
      $region45: #{transformer_forward.1} parent=27 // pred_check
        %p519 = pneg %p221
      $region46: #{transformer_forward.1} parent=27 // pred_check_branch
        %521 = sbr.rel (%p519) target = $region48
      $region47: #{transformer_forward.1} parent=27 // pred_region
        %p522 = scmp.lt.s32.totalorder %s30, 1
        %s523 = scalar_select %p522, %s30, 1
        %s524 = smul.addr %s523, 3
        %s525 = scalar_lea.vmem %s7, %s524
      $region48: #{transformer_forward.1} parent=27 // pred_fallthru
        _
      // Predicated region
      $region49: #{transformer_forward.1} parent=27 // pred_check
        %p526 = pneg %p247
      $region50: #{transformer_forward.1} parent=27 // pred_check_branch
        %528 = sbr.rel (%p526) target = $region52
      $region51: #{transformer_forward.1} parent=27 // pred_region
        %p529 = scmp.lt.s32.totalorder %s30, 1
        %s530 = scalar_select %p529, %s30, 1
        %s531 = smul.addr %s530, 16
        %s532 = smul.addr %s531, 4
        %s533 = scalar_lea.vmem %s8, %s532
      $region52: #{transformer_forward.1} parent=27 // pred_fallthru
        _
      // Predicated region
      $region53: #{transformer_forward.1} parent=27 // pred_check
        %p534 = pneg %p273
      $region54: #{transformer_forward.1} parent=27 // pred_check_branch
        %536 = sbr.rel (%p534) target = $region56
      $region55: #{transformer_forward.1} parent=27 // pred_region
        %p537 = scmp.lt.s32.totalorder %s30, 1
        %s538 = scalar_select %p537, %s30, 1
        %s539 = scalar_lea.vmem %s9, %s538
      $region56: #{transformer_forward.1} parent=27 // pred_fallthru
        _
      // Predicated region
      $region57: #{transformer_forward.1} parent=27 // pred_check
        %p540 = pneg %p299
      $region58: #{transformer_forward.1} parent=27 // pred_check_branch
        %542 = sbr.rel (%p540) target = $region60
      $region59: #{transformer_forward.1} parent=27 // pred_region
        %p543 = scmp.lt.s32.totalorder %s30, 1
        %s544 = scalar_select %p543, %s30, 1
        %s545 = scalar_lea.vmem %s10, %s544
      $region60: #{transformer_forward.1} parent=27 // pred_fallthru
        _
      // Predicated region
      $region61: #{transformer_forward.1} parent=27 // pred_check
        %p546 = pneg %p325
      $region62: #{transformer_forward.1} parent=27 // pred_check_branch
        %548 = sbr.rel (%p546) target = $region64
      $region63: #{transformer_forward.1} parent=27 // pred_region
        %p549 = scmp.lt.s32.totalorder %s30, 1
        %s550 = scalar_select %p549, %s30, 1
        %s551 = scalar_lea.vmem %s11, %s550
      $region64: #{transformer_forward.1} parent=27 // pred_fallthru
        _
      // Predicated region
      $region65: #{transformer_forward.1} parent=27 // pred_check
        %p552 = pneg %p351
      $region66: #{transformer_forward.1} parent=27 // pred_check_branch
        %554 = sbr.rel (%p552) target = $region68
      $region67: #{transformer_forward.1} parent=27 // pred_region
        %p555 = scmp.lt.s32.totalorder %s30, 1
        %s556 = scalar_select %p555, %s30, 1
        %s557 = smul.addr %s556, 128
        %s558 = smul.addr %s557, 4
        %s559 = scalar_lea.vmem %s12, %s558
      $region68: #{transformer_forward.1} parent=27 // pred_fallthru
        _
      // Predicated region
      $region69: #{transformer_forward.1} parent=27 // pred_check
        %p560 = pneg %p377
      $region70: #{transformer_forward.1} parent=27 // pred_check_branch
        %562 = sbr.rel (%p560) target = $region72
      $region71: #{transformer_forward.1} parent=27 // pred_region
        %p563 = scmp.lt.s32.totalorder %s30, 1
        %s564 = scalar_select %p563, %s30, 1
        %s565 = smul.addr %s564, 8
        %s566 = scalar_lea.vmem %s13, %s565
      $region72: #{transformer_forward.1} parent=27 // pred_fallthru
        _
      // Predicated region
      $region73: #{transformer_forward.1} parent=27 // pred_check
        %p567 = pneg %p403
      $region74: #{transformer_forward.1} parent=27 // pred_check_branch
        %569 = sbr.rel (%p567) target = $region76
      $region75: #{transformer_forward.1} parent=27 // pred_region
        %p570 = scmp.lt.s32.totalorder %s30, 1
        %s571 = scalar_select %p570, %s30, 1
        %s572 = smul.addr %s571, 128
        %s573 = smul.addr %s572, 4
        %s574 = scalar_lea.vmem %s14, %s573
      $region76: #{transformer_forward.1} parent=27 // pred_fallthru
        _
      // Predicated region
      $region77: #{transformer_forward.1} parent=27 // pred_check
        %p575 = pneg %p429
      $region78: #{transformer_forward.1} parent=27 // pred_check_branch
        %577 = sbr.rel (%p575) target = $region80
      $region79: #{transformer_forward.1} parent=27 // pred_region
        %p578 = scmp.lt.s32.totalorder %s30, 1
        %s579 = scalar_select %p578, %s30, 1
        %s580 = scalar_lea.vmem %s15, %s579
      $region80: #{transformer_forward.1} parent=27 // pred_fallthru
        _
    $region28: #{transformer_forward.1} parent=5 // pred_fallthru
      _
    %p581 = scmp.le.s32.totalorder 1, %s22
    %p582 = scmp.lt.s32.totalorder %s22, 5
    %p583 = pnand %p581, %p582
    %p584 = pneg %p583
    // Predicated region
    $region81: #{transformer_forward.1} parent=5 // pred_check
      _
    $region82: #{transformer_forward.1} parent=5 // pred_check_branch
      %586 = sbr.rel (%p583) target = $region84
    $region83: #{transformer_forward.1} parent=5 // pred_region
      %s587 = ssub.s32 %s22, 1
      %p588 = scmp.lt.s32.totalorder %s31, 1
      %s589 = scalar_select %p588, %s31, 1
      %s590 = smul.addr %s589, 16
      %s591 = smul.addr %s590, 4
      %s592 = scalar_lea.vmem %s0, %s591
      %p593 = pneg %p60
      %p594 = pneg %p57
      %p595 = pneg %p81
      %p596 = pneg %p78
      %p597 = pneg %p102
      %p598 = pneg %p99
      %p599 = pneg %p123
      %p600 = pneg %p120
      %p601 = scmp.lt.s32.totalorder %s32, 1
      %s602 = scalar_select %p601, %s32, 1
      %s603 = scalar_lea.vmem %s4, %s602
      %p604 = pneg %p149
      %p605 = pneg %p146
      %p606 = scmp.lt.s32.totalorder %s32, 1
      %s607 = scalar_select %p606, %s32, 1
      %s608 = scalar_lea.vmem %s5, %s607
      %p609 = pneg %p175
      %p610 = pneg %p172
      %p611 = scmp.lt.s32.totalorder %s32, 1
      %s612 = scalar_select %p611, %s32, 1
      %s613 = smul.addr %s612, 48
      %s614 = smul.addr %s613, 4
      %s615 = scalar_lea.vmem %s6, %s614
      %p616 = pneg %p201
      %p617 = pneg %p198
      %p618 = scmp.lt.s32.totalorder %s32, 1
      %s619 = scalar_select %p618, %s32, 1
      %s620 = smul.addr %s619, 3
      %s621 = scalar_lea.vmem %s7, %s620
      %p622 = pneg %p227
      %p623 = pneg %p224
      %p624 = scmp.lt.s32.totalorder %s32, 1
      %s625 = scalar_select %p624, %s32, 1
      %s626 = smul.addr %s625, 16
      %s627 = smul.addr %s626, 4
      %s628 = scalar_lea.vmem %s8, %s627
      %p629 = pneg %p253
      %p630 = pneg %p250
      %p631 = scmp.lt.s32.totalorder %s32, 1
      %s632 = scalar_select %p631, %s32, 1
      %s633 = scalar_lea.vmem %s9, %s632
      %p634 = pneg %p279
      %p635 = pneg %p276
      %p636 = scmp.lt.s32.totalorder %s32, 1
      %s637 = scalar_select %p636, %s32, 1
      %s638 = scalar_lea.vmem %s10, %s637
      %p639 = pneg %p305
      %p640 = pneg %p302
      %p641 = scmp.lt.s32.totalorder %s32, 1
      %s642 = scalar_select %p641, %s32, 1
      %s643 = scalar_lea.vmem %s11, %s642
      %p644 = pneg %p331
      %p645 = pneg %p328
      %p646 = scmp.lt.s32.totalorder %s32, 1
      %s647 = scalar_select %p646, %s32, 1
      %s648 = smul.addr %s647, 128
      %s649 = smul.addr %s648, 4
      %s650 = scalar_lea.vmem %s12, %s649
      %p651 = pneg %p357
      %p652 = pneg %p354
      %p653 = scmp.lt.s32.totalorder %s32, 1
      %s654 = scalar_select %p653, %s32, 1
      %s655 = smul.addr %s654, 8
      %s656 = scalar_lea.vmem %s13, %s655
      %p657 = pneg %p383
      %p658 = pneg %p380
      %p659 = scmp.lt.s32.totalorder %s32, 1
      %s660 = scalar_select %p659, %s32, 1
      %s661 = smul.addr %s660, 128
      %s662 = smul.addr %s661, 4
      %s663 = scalar_lea.vmem %s14, %s662
      %p664 = pneg %p409
      %p665 = pneg %p406
      %p666 = scmp.lt.s32.totalorder %s32, 1
      %s667 = scalar_select %p666, %s32, 1
      %s668 = scalar_lea.vmem %s15, %s667
      %p669 = pneg %p435
      %p670 = pneg %p432
      %p671 = pneg %p463
      %p672 = pneg %p460
      %p673 = scmp.lt.s32.totalorder %s32, 1
      %s674 = scalar_select %p673, %s32, 1
      %p675 = scmp.lt.s32.totalorder %s31, 1
      %s676 = scalar_select %p675, %s31, 1
      %s677 = smul.addr %s676, 8
      %s678 = smul.addr %s674, 16
      %s679 = sadd.s32 %s677, %s678
      %s680 = smul.addr %s679, 8
      %s681 = scalar_lea.vmem %s16, %s680
      %p682 = scmp.lt.s32.totalorder %s31, 1
      %s683 = scalar_select %p682, %s31, 1
      %s684 = smul.addr %s683, 16
      %s685 = smul.addr %s684, 4
      %s686 = scalar_lea.vmem %s0, %s685
      %p687 = scmp.lt.s32.totalorder %s32, 1
      %s688 = scalar_select %p687, %s32, 1
      %s689 = scalar_lea.vmem %s4, %s688
      %p690 = scmp.lt.s32.totalorder %s32, 1
      %s691 = scalar_select %p690, %s32, 1
      %s692 = scalar_lea.vmem %s5, %s691
      %p693 = scmp.lt.s32.totalorder %s32, 1
      %s694 = scalar_select %p693, %s32, 1
      %s695 = smul.addr %s694, 48
      %s696 = smul.addr %s695, 4
      %s697 = scalar_lea.vmem %s6, %s696
      %p698 = scmp.lt.s32.totalorder %s32, 1
      %s699 = scalar_select %p698, %s32, 1
      %s700 = smul.addr %s699, 3
      %s701 = scalar_lea.vmem %s7, %s700
      %p702 = scmp.lt.s32.totalorder %s32, 1
      %s703 = scalar_select %p702, %s32, 1
      %s704 = smul.addr %s703, 16
      %s705 = smul.addr %s704, 4
      %s706 = scalar_lea.vmem %s8, %s705
      %p707 = scmp.lt.s32.totalorder %s32, 1
      %s708 = scalar_select %p707, %s32, 1
      %s709 = scalar_lea.vmem %s9, %s708
      %p710 = scmp.lt.s32.totalorder %s32, 1
      %s711 = scalar_select %p710, %s32, 1
      %s712 = scalar_lea.vmem %s10, %s711
      %p713 = scmp.lt.s32.totalorder %s32, 1
      %s714 = scalar_select %p713, %s32, 1
      %s715 = scalar_lea.vmem %s11, %s714
      %p716 = scmp.lt.s32.totalorder %s32, 1
      %s717 = scalar_select %p716, %s32, 1
      %s718 = smul.addr %s717, 128
      %s719 = smul.addr %s718, 4
      %s720 = scalar_lea.vmem %s12, %s719
      %p721 = scmp.lt.s32.totalorder %s32, 1
      %s722 = scalar_select %p721, %s32, 1
      %s723 = smul.addr %s722, 8
      %s724 = scalar_lea.vmem %s13, %s723
      %p725 = scmp.lt.s32.totalorder %s32, 1
      %s726 = scalar_select %p725, %s32, 1
      %s727 = smul.addr %s726, 128
      %s728 = smul.addr %s727, 4
      %s729 = scalar_lea.vmem %s14, %s728
      %p730 = scmp.lt.s32.totalorder %s32, 1
      %s731 = scalar_select %p730, %s32, 1
      %s732 = scalar_lea.vmem %s15, %s731
      %p733 = scmp.lt.s32.totalorder %s32, 1
      %s734 = scalar_select %p733, %s32, 1
      %p735 = scmp.lt.s32.totalorder %s31, 1
      %s736 = scalar_select %p735, %s31, 1
      %s737 = smul.addr %s736, 8
      %s738 = smul.addr %s734, 16
      %s739 = sadd.s32 %s737, %s738
      %s740 = smul.addr %s739, 8
      %s741 = scalar_lea.vmem %s16, %s740
      %p743 = scmp.eq.s32.totalorder %s32, 0
      // Predicated region
      $region85: #{transformer_forward.1} parent=83 // pred_check
        %p744 = pneg %p743
      $region86: #{transformer_forward.1} parent=83 // pred_check_branch
        %746 = sbr.rel (%p744) target = $region88
      $region87: #{transformer_forward.1} parent=83 // pred_region
        %v747 = vld [vmem:[%s686] sm:$0xff]
        %v748 = vld [vmem:[%s686 + $0x8] sm:$0xff]
        %v749 = vld [vmem:[%s686 + $0x10] sm:$0xff]
        %v750 = vld [vmem:[%s686 + $0x18] sm:$0xff]
        %v751 = vld [vmem:[%s686 + $0x20] sm:$0xff]
        %v752 = vld [vmem:[%s686 + $0x28] sm:$0xff]
        %v753 = vld [vmem:[%s686 + $0x30] sm:$0xff]
        %v754 = vld [vmem:[%s686 + $0x38] sm:$0xff]
        %v755 = vld [vmem:[%s1] sm:$0xf]
        %v756 = vld [vmem:[%s1 + $0x4] sm:$0xf]
        %v757 = vld [vmem:[%s1 + $0x8] sm:$0xf]
        %v758 = vld [vmem:[%s1 + $0xc] sm:$0xf]
        %v759 = vld [vmem:[%s1 + $0x10] sm:$0xf]
        %v760 = vld [vmem:[%s1 + $0x14] sm:$0xf]
        %v761 = vld [vmem:[%s1 + $0x18] sm:$0xf]
        %v762 = vld [vmem:[%s1 + $0x1c] sm:$0xf]
        %v763 = vld [vmem:[%s1 + $0x20] sm:$0xf]
        %v764 = vld [vmem:[%s1 + $0x24] sm:$0xf]
        %v765 = vld [vmem:[%s1 + $0x28] sm:$0xf]
        %v766 = vld [vmem:[%s1 + $0x2c] sm:$0xf]
        %v767 = vld [vmem:[%s1 + $0x30] sm:$0xf]
        %v768 = vld [vmem:[%s1 + $0x34] sm:$0xf]
        %v769 = vld [vmem:[%s1 + $0x38] sm:$0xf]
        %v770 = vld [vmem:[%s1 + $0x3c] sm:$0xf]
        %v771 = vld [vmem:[%s1 + $0x40] sm:$0xf]
        %v772 = vld [vmem:[%s1 + $0x44] sm:$0xf]
        %v773 = vld [vmem:[%s1 + $0x48] sm:$0xf]
        %v774 = vld [vmem:[%s1 + $0x4c] sm:$0xf]
        %v775 = vld [vmem:[%s1 + $0x50] sm:$0xf]
        %v776 = vld [vmem:[%s1 + $0x54] sm:$0xf]
        %v777 = vld [vmem:[%s1 + $0x58] sm:$0xf]
        %v778 = vld [vmem:[%s1 + $0x5c] sm:$0xf]
        %v779 = vld [vmem:[%s1 + $0x60] sm:$0xf]
        %v780 = vld [vmem:[%s1 + $0x64] sm:$0xf]
        %v781 = vld [vmem:[%s1 + $0x68] sm:$0xf]
        %v782 = vld [vmem:[%s1 + $0x6c] sm:$0xf]
        %v783 = vld [vmem:[%s1 + $0x70] sm:$0xf]
        %v784 = vld [vmem:[%s1 + $0x74] sm:$0xf]
        %v785 = vld [vmem:[%s1 + $0x78] sm:$0xf]
        %v786 = vld [vmem:[%s1 + $0x7c] sm:$0xf]
        %v787 = vld [vmem:[%s2] sm:$0x1]
        %v789 = vlaneseq
        %v790 = vshrl.u32 %v789, 7
        %v791 = vsub.s32 0, %v790
        %v792 = vrot.slane %v787, %v791
        %v802 = vunpack.c.l.b16 %v747
        %v803 = vunpack.c.h.b16 %v747
        %v804 = vunpack.c.l.b16 %v748
        %v805 = vunpack.c.h.b16 %v748
        %v806 = vunpack.c.l.b16 %v749
        %v807 = vunpack.c.h.b16 %v749
        %v808 = vunpack.c.l.b16 %v750
        %v809 = vunpack.c.h.b16 %v750
        %v810 = vunpack.c.l.b16 %v751
        %v811 = vunpack.c.h.b16 %v751
        %v812 = vunpack.c.l.b16 %v752
        %v813 = vunpack.c.h.b16 %v752
        %v814 = vunpack.c.l.b16 %v753
        %v815 = vunpack.c.h.b16 %v753
        %v816 = vunpack.c.l.b16 %v754
        %v817 = vunpack.c.h.b16 %v754
        %v818 = vpack.c.b16 %v804, %v802
        %v819 = vpack.c.b16 %v805, %v803
        %v820 = vpack.c.b16 %v808, %v806
        %v821 = vpack.c.b16 %v809, %v807
        %v822 = vpack.c.b16 %v812, %v810
        %v823 = vpack.c.b16 %v813, %v811
        %v824 = vpack.c.b16 %v816, %v814
        %v825 = vpack.c.b16 %v817, %v815
        %v866 = vunpack.c.l.b16 %v755
        %v867 = vunpack.c.l.b16 %v756
        %v868 = vunpack.c.l.b16 %v757
        %v869 = vunpack.c.l.b16 %v758
        %v870 = vunpack.c.l.b16 %v759
        %v871 = vunpack.c.l.b16 %v760
        %v872 = vunpack.c.l.b16 %v761
        %v873 = vunpack.c.l.b16 %v762
        %v874 = vunpack.c.l.b16 %v763
        %v875 = vunpack.c.l.b16 %v764
        %v876 = vunpack.c.l.b16 %v765
        %v877 = vunpack.c.l.b16 %v766
        %v878 = vunpack.c.l.b16 %v767
        %v879 = vunpack.c.l.b16 %v768
        %v880 = vunpack.c.l.b16 %v769
        %v881 = vunpack.c.l.b16 %v770
        %v882 = vunpack.c.l.b16 %v771
        %v883 = vunpack.c.l.b16 %v772
        %v884 = vunpack.c.l.b16 %v773
        %v885 = vunpack.c.l.b16 %v774
        %v886 = vunpack.c.l.b16 %v775
        %v887 = vunpack.c.l.b16 %v776
        %v888 = vunpack.c.l.b16 %v777
        %v889 = vunpack.c.l.b16 %v778
        %v890 = vunpack.c.l.b16 %v779
        %v891 = vunpack.c.l.b16 %v780
        %v892 = vunpack.c.l.b16 %v781
        %v893 = vunpack.c.l.b16 %v782
        %v894 = vunpack.c.l.b16 %v783
        %v895 = vunpack.c.l.b16 %v784
        %v896 = vunpack.c.l.b16 %v785
        %v897 = vunpack.c.l.b16 %v786
        %v898 = vpack.c.b16 %v867, %v866
        %v899 = vpack.c.b16 %v869, %v868
        %v900 = vpack.c.b16 %v871, %v870
        %v901 = vpack.c.b16 %v873, %v872
        %v902 = vpack.c.b16 %v875, %v874
        %v903 = vpack.c.b16 %v877, %v876
        %v904 = vpack.c.b16 %v879, %v878
        %v905 = vpack.c.b16 %v881, %v880
        %v906 = vpack.c.b16 %v883, %v882
        %v907 = vpack.c.b16 %v885, %v884
        %v908 = vpack.c.b16 %v887, %v886
        %v909 = vpack.c.b16 %v889, %v888
        %v910 = vpack.c.b16 %v891, %v890
        %v911 = vpack.c.b16 %v893, %v892
        %v912 = vpack.c.b16 %v895, %v894
        %v913 = vpack.c.b16 %v897, %v896
        %930 = vmatprep.subr.bf16.mxu0 0
        %931 = vmatpush1.bf16.msra.mxu0 %v898
        %932 = vmatprep.subr.bf16.mxu0 0
        %933 = vmatpush1.bf16.msra.mxu0 %v899
        %934 = vmatprep.subr.bf16.mxu0 0
        %935 = vmatpush1.bf16.msra.mxu0 %v900
        %936 = vmatprep.subr.bf16.mxu0 0
        %937 = vmatpush1.bf16.msra.mxu0 %v901
        %938 = vmatprep.subr.bf16.mxu0 0
        %939 = vmatpush1.bf16.msra.mxu0 %v902
        %940 = vmatprep.subr.bf16.mxu0 0
        %941 = vmatpush1.bf16.msra.mxu0 %v903
        %942 = vmatprep.subr.bf16.mxu0 0
        %943 = vmatpush1.bf16.msra.mxu0 %v904
        %944 = vmatprep.subr.bf16.mxu0 0
        %945 = vmatpush1.bf16.msra.mxu0 %v905
        %946 = vmatprep.subr.bf16.mxu0 0
        %947 = vmatpush1.bf16.msra.mxu0 %v906
        %948 = vmatprep.subr.bf16.mxu0 0
        %949 = vmatpush1.bf16.msra.mxu0 %v907
        %950 = vmatprep.subr.bf16.mxu0 0
        %951 = vmatpush1.bf16.msra.mxu0 %v908
        %952 = vmatprep.subr.bf16.mxu0 0
        %953 = vmatpush1.bf16.msra.mxu0 %v909
        %954 = vmatprep.subr.bf16.mxu0 0
        %955 = vmatpush1.bf16.msra.mxu0 %v910
        %956 = vmatprep.subr.bf16.mxu0 0
        %957 = vmatpush1.bf16.msra.mxu0 %v911
        %958 = vmatprep.subr.bf16.mxu0 0
        %959 = vmatpush1.bf16.msra.mxu0 %v912
        %960 = vmatprep.subr.bf16.mxu0 0
        %961 = vmatpush1.bf16.msra.mxu0 %v913
        %962 = vmatprep.mubr.bf16.mxu0 %v819
        %963 = vmatmul.mubr.bf16.gmra.mrb[0].mxu0 %v818
        %v964 = vpop.f32.mrb[0].mxu0
        %v965 = vadd.f32 %v792, %v964
        %v966 = vpop.f32.mrb[0].mxu0
        %v967 = vpop.f32.mrb[0].mxu0
        %v968 = vadd.f32 %v792, %v967
        %v969 = vpop.f32.mrb[0].mxu0
        %970 = vmatprep.mubr.bf16.mxu0 %v821
        %971 = vmatmul.mubr.bf16.gmra.mrb[0].mxu0 %v820
        %v972 = vpop.f32.mrb[0].mxu0
        %v973 = vadd.f32 %v792, %v972
        %v974 = vpop.f32.mrb[0].mxu0
        %v975 = vpop.f32.mrb[0].mxu0
        %v976 = vadd.f32 %v792, %v975
        %v977 = vpop.f32.mrb[0].mxu0
        %978 = vmatprep.mubr.bf16.mxu0 %v823
        %979 = vmatmul.mubr.bf16.gmra.mrb[0].mxu0 %v822
        %v980 = vpop.f32.mrb[0].mxu0
        %v981 = vadd.f32 %v792, %v980
        %v982 = vpop.f32.mrb[0].mxu0
        %v983 = vpop.f32.mrb[0].mxu0
        %v984 = vadd.f32 %v792, %v983
        %v985 = vpop.f32.mrb[0].mxu0
        %986 = vmatprep.mubr.bf16.mxu0 %v825
        %987 = vmatmul.mubr.bf16.gmra.mrb[0].mxu0 %v824
        %v988 = vpop.f32.mrb[0].mxu0
        %v989 = vadd.f32 %v792, %v988
        %v990 = vpop.f32.mrb[0].mxu0
        %v991 = vpop.f32.mrb[0].mxu0
        %v992 = vadd.f32 %v792, %v991
        %v993 = vpop.f32.mrb[0].mxu0
        %994 = vdwg.mxu0
        %v995 = vld [vmem:[%s3] sm:$0xff]
        %v996 = vld [vmem:[%s3 + $0x8] sm:$0xff]
        %v997 = vld [vmem:[%s3 + $0x10] sm:$0xff]
        %v998 = vld [vmem:[%s3 + $0x18] sm:$0xff]
        %v999 = vld [vmem:[%s3 + $0x20] sm:$0xff]
        %v1000 = vld [vmem:[%s3 + $0x28] sm:$0xff]
        %v1001 = vld [vmem:[%s3 + $0x30] sm:$0xff]
        %v1002 = vld [vmem:[%s3 + $0x38] sm:$0xff]
        %v1003 = vadd.f32 %v965, %v995
        %v1004 = vadd.f32 %v968, %v996
        %v1005 = vadd.f32 %v973, %v997
        %v1006 = vadd.f32 %v976, %v998
        %v1007 = vadd.f32 %v981, %v999
        %v1008 = vadd.f32 %v984, %v1000
        %v1009 = vadd.f32 %v989, %v1001
        %v1010 = vadd.f32 %v992, %v1002
        %1011 = vst [vmem:[#allocation2] sm:$0xff] %v1003
        %1012 = vst [vmem:[#allocation2 + $0x8] sm:$0xff] %v1004
        %1013 = vst [vmem:[#allocation2 + $0x10] sm:$0xff] %v1005
        %1014 = vst [vmem:[#allocation2 + $0x18] sm:$0xff] %v1006
        %1015 = vst [vmem:[#allocation2 + $0x20] sm:$0xff] %v1007
        %1016 = vst [vmem:[#allocation2 + $0x28] sm:$0xff] %v1008
        %1017 = vst [vmem:[#allocation2 + $0x30] sm:$0xff] %v1009
        %1018 = vst [vmem:[#allocation2 + $0x38] sm:$0xff] %v1010
      $region88: #{transformer_forward.1} parent=83 // pred_fallthru
        _
      %v1019 = vld [vmem:[#allocation2] sm:$0xff]
      %v1020 = vld [vmem:[#allocation2 + $0x8] sm:$0xff]
      %v1021 = vld [vmem:[#allocation2 + $0x10] sm:$0xff]
      %v1022 = vld [vmem:[#allocation2 + $0x18] sm:$0xff]
      %v1023 = vld [vmem:[#allocation2 + $0x20] sm:$0xff]
      %v1024 = vld [vmem:[#allocation2 + $0x28] sm:$0xff]
      %v1025 = vld [vmem:[#allocation2 + $0x30] sm:$0xff]
      %v1026 = vld [vmem:[#allocation2 + $0x38] sm:$0xff]
      %v1027 = vld [vmem:[%s689] sm:$0x1]
      %v1028 = vld [vmem:[%s692] sm:$0x1]
      %1029 = vadd.xlane.f32.xlu0 %v1019
      %v1030 = vpop.xlane.xlu0 %1029
      %1031 = vadd.xlane.f32.xlu0 %v1020
      %v1032 = vpop.xlane.xlu0 %1031
      %1033 = vadd.xlane.f32.xlu0 %v1021
      %v1034 = vpop.xlane.xlu0 %1033
      %1035 = vadd.xlane.f32.xlu0 %v1022
      %v1036 = vpop.xlane.xlu0 %1035
      %1037 = vadd.xlane.f32.xlu0 %v1023
      %v1038 = vpop.xlane.xlu0 %1037
      %1039 = vadd.xlane.f32.xlu0 %v1024
      %v1040 = vpop.xlane.xlu0 %1039
      %1041 = vadd.xlane.f32.xlu0 %v1025
      %v1042 = vpop.xlane.xlu0 %1041
      %1043 = vadd.xlane.f32.xlu0 %v1026
      %v1044 = vpop.xlane.xlu0 %1043
      %v1045 = vrcp.pop 128.0
      %v1046 = vmul.f32 %v1030, %v1045
      %v1047 = vmul.f32 %v1032, %v1045
      %v1048 = vmul.f32 %v1034, %v1045
      %v1049 = vmul.f32 %v1036, %v1045
      %v1050 = vmul.f32 %v1038, %v1045
      %v1051 = vmul.f32 %v1040, %v1045
      %v1052 = vmul.f32 %v1042, %v1045
      %v1053 = vmul.f32 %v1044, %v1045
      %v1054 = vsub.f32 %v1019, %v1046
      %v1055 = vsub.f32 %v1020, %v1047
      %v1056 = vsub.f32 %v1021, %v1048
      %v1057 = vsub.f32 %v1022, %v1049
      %v1058 = vsub.f32 %v1023, %v1050
      %v1059 = vsub.f32 %v1024, %v1051
      %v1060 = vsub.f32 %v1025, %v1052
      %v1061 = vsub.f32 %v1026, %v1053
      %v1062 = vmul.f32 %v1054, %v1054
      %v1063 = vmul.f32 %v1055, %v1055
      %v1064 = vmul.f32 %v1056, %v1056
      %v1065 = vmul.f32 %v1057, %v1057
      %v1066 = vmul.f32 %v1058, %v1058
      %v1067 = vmul.f32 %v1059, %v1059
      %v1068 = vmul.f32 %v1060, %v1060
      %v1069 = vmul.f32 %v1061, %v1061
      %1070 = vadd.xlane.f32.xlu0 %v1062
      %v1071 = vpop.xlane.xlu0 %1070
      %1072 = vadd.xlane.f32.xlu0 %v1063
      %v1073 = vpop.xlane.xlu0 %1072
      %1074 = vadd.xlane.f32.xlu0 %v1064
      %v1075 = vpop.xlane.xlu0 %1074
      %1076 = vadd.xlane.f32.xlu0 %v1065
      %v1077 = vpop.xlane.xlu0 %1076
      %1078 = vadd.xlane.f32.xlu0 %v1066
      %v1079 = vpop.xlane.xlu0 %1078
      %1080 = vadd.xlane.f32.xlu0 %v1067
      %v1081 = vpop.xlane.xlu0 %1080
      %1082 = vadd.xlane.f32.xlu0 %v1068
      %v1083 = vpop.xlane.xlu0 %1082
      %1084 = vadd.xlane.f32.xlu0 %v1069
      %v1085 = vpop.xlane.xlu0 %1084
      %v1086 = vmul.f32 %v1071, %v1045
      %v1087 = vmul.f32 %v1073, %v1045
      %v1088 = vmul.f32 %v1075, %v1045
      %v1089 = vmul.f32 %v1077, %v1045
      %v1090 = vmul.f32 %v1079, %v1045
      %v1091 = vmul.f32 %v1081, %v1045
      %v1092 = vmul.f32 %v1083, %v1045
      %v1093 = vmul.f32 %v1085, %v1045
      %v1094 = vadd.f32 %v1086, 1e-06
      %v1095 = vadd.f32 %v1087, 1e-06
      %v1096 = vadd.f32 %v1088, 1e-06
      %v1097 = vadd.f32 %v1089, 1e-06
      %v1098 = vadd.f32 %v1090, 1e-06
      %v1099 = vadd.f32 %v1091, 1e-06
      %v1100 = vadd.f32 %v1092, 1e-06
      %v1101 = vadd.f32 %v1093, 1e-06
      %v1102 = vrsqrt.pop %v1094
      %v1103 = vrsqrt.pop %v1095
      %v1104 = vrsqrt.pop %v1096
      %v1105 = vrsqrt.pop %v1097
      %v1106 = vrsqrt.pop %v1098
      %v1107 = vrsqrt.pop %v1099
      %v1108 = vrsqrt.pop %v1100
      %v1109 = vrsqrt.pop %v1101
      %v1110 = vmul.f32 %v1054, %v1102
      %v1111 = vmul.f32 %v1055, %v1103
      %v1112 = vmul.f32 %v1056, %v1104
      %v1113 = vmul.f32 %v1057, %v1105
      %v1114 = vmul.f32 %v1058, %v1106
      %v1115 = vmul.f32 %v1059, %v1107
      %v1116 = vmul.f32 %v1060, %v1108
      %v1117 = vmul.f32 %v1061, %v1109
      %v1119 = vlaneseq
      %v1120 = vshrl.u32 %v1119, 7
      %v1121 = vsub.s32 0, %v1120
      %v1122 = vrot.slane %v1027, %v1121
      %v1124 = vmul.f32 %v1110, %v1122
      %v1125 = vmul.f32 %v1111, %v1122
      %v1126 = vmul.f32 %v1112, %v1122
      %v1127 = vmul.f32 %v1113, %v1122
      %v1128 = vmul.f32 %v1114, %v1122
      %v1129 = vmul.f32 %v1115, %v1122
      %v1130 = vmul.f32 %v1116, %v1122
      %v1131 = vmul.f32 %v1117, %v1122
      %v1133 = vlaneseq
      %v1134 = vshrl.u32 %v1133, 7
      %v1135 = vsub.s32 0, %v1134
      %v1136 = vrot.slane %v1028, %v1135
      %v1138 = vadd.f32 %v1124, %v1136
      %v1139 = vadd.f32 %v1125, %v1136
      %v1140 = vadd.f32 %v1126, %v1136
      %v1141 = vadd.f32 %v1127, %v1136
      %v1142 = vadd.f32 %v1128, %v1136
      %v1143 = vadd.f32 %v1129, %v1136
      %v1144 = vadd.f32 %v1130, %v1136
      %v1145 = vadd.f32 %v1131, %v1136
      %v1146 = vpack.c.bf16 %v1139, %v1138
      %v1147 = vpack.c.bf16 %v1141, %v1140
      %v1148 = vpack.c.bf16 %v1143, %v1142
      %v1149 = vpack.c.bf16 %v1145, %v1144
      %v1150 = vld [vmem:[%s697] sm:$0xff]
      %v1151 = vld [vmem:[%s697 + $0x8] sm:$0xf]
      %v1152 = vld [vmem:[%s697 + $0xc] sm:$0xff]
      %v1153 = vld [vmem:[%s697 + $0x14] sm:$0xf]
      %v1154 = vld [vmem:[%s697 + $0x18] sm:$0xff]
      %v1155 = vld [vmem:[%s697 + $0x20] sm:$0xf]
      %v1156 = vld [vmem:[%s697 + $0x24] sm:$0xff]
      %v1157 = vld [vmem:[%s697 + $0x2c] sm:$0xf]
      %v1158 = vld [vmem:[%s697 + $0x30] sm:$0xff]
      %v1159 = vld [vmem:[%s697 + $0x38] sm:$0xf]
      %v1160 = vld [vmem:[%s697 + $0x3c] sm:$0xff]
      %v1161 = vld [vmem:[%s697 + $0x44] sm:$0xf]
      %v1162 = vld [vmem:[%s697 + $0x48] sm:$0xff]
      %v1163 = vld [vmem:[%s697 + $0x50] sm:$0xf]
      %v1164 = vld [vmem:[%s697 + $0x54] sm:$0xff]
      %v1165 = vld [vmem:[%s697 + $0x5c] sm:$0xf]
      %v1166 = vld [vmem:[%s697 + $0x60] sm:$0xff]
      %v1167 = vld [vmem:[%s697 + $0x68] sm:$0xf]
      %v1168 = vld [vmem:[%s697 + $0x6c] sm:$0xff]
      %v1169 = vld [vmem:[%s697 + $0x74] sm:$0xf]
      %v1170 = vld [vmem:[%s697 + $0x78] sm:$0xff]
      %v1171 = vld [vmem:[%s697 + $0x80] sm:$0xf]
      %v1172 = vld [vmem:[%s697 + $0x84] sm:$0xff]
      %v1173 = vld [vmem:[%s697 + $0x8c] sm:$0xf]
      %v1174 = vld [vmem:[%s697 + $0x90] sm:$0xff]
      %v1175 = vld [vmem:[%s697 + $0x98] sm:$0xf]
      %v1176 = vld [vmem:[%s697 + $0x9c] sm:$0xff]
      %v1177 = vld [vmem:[%s697 + $0xa4] sm:$0xf]
      %v1178 = vld [vmem:[%s697 + $0xa8] sm:$0xff]
      %v1179 = vld [vmem:[%s697 + $0xb0] sm:$0xf]
      %v1180 = vld [vmem:[%s697 + $0xb4] sm:$0xff]
      %v1181 = vld [vmem:[%s697 + $0xbc] sm:$0xf]
      %v1182 = vld [vmem:[%s701] sm:$0x7]
      %v1184 = vlaneseq
      %v1185 = vshrl.u32 %v1184, 7
      %v1186 = vsub.s32 0, %v1185
      %v1187 = vrot.slane %v1182, %v1186
      %v1188 = vlaneseq
      %v1189 = vshrl.u32 %v1188, 7
      %v1190 = vsub.s32 1, %v1189
      %v1191 = vrot.slane %v1182, %v1190
      %v1192 = vlaneseq
      %v1193 = vshrl.u32 %v1192, 7
      %v1194 = vsub.s32 2, %v1193
      %v1195 = vrot.slane %v1182, %v1194
      %v1231 = vunpack.c.l.b16 %v1150
      %v1232 = vunpack.c.h.b16 %v1150
      %v1233 = vunpack.c.l.b16 %v1151
      %v1234 = vunpack.c.l.b16 %v1152
      %v1235 = vunpack.c.h.b16 %v1152
      %v1236 = vunpack.c.l.b16 %v1153
      %v1237 = vunpack.c.l.b16 %v1154
      %v1238 = vunpack.c.h.b16 %v1154
      %v1239 = vunpack.c.l.b16 %v1155
      %v1240 = vunpack.c.l.b16 %v1156
      %v1241 = vunpack.c.h.b16 %v1156
      %v1242 = vunpack.c.l.b16 %v1157
      %v1243 = vunpack.c.l.b16 %v1158
      %v1244 = vunpack.c.h.b16 %v1158
      %v1245 = vunpack.c.l.b16 %v1159
      %v1246 = vunpack.c.l.b16 %v1160
      %v1247 = vunpack.c.h.b16 %v1160
      %v1248 = vunpack.c.l.b16 %v1161
      %v1249 = vunpack.c.l.b16 %v1162
      %v1250 = vunpack.c.h.b16 %v1162
      %v1251 = vunpack.c.l.b16 %v1163
      %v1252 = vunpack.c.l.b16 %v1164
      %v1253 = vunpack.c.h.b16 %v1164
      %v1254 = vunpack.c.l.b16 %v1165
      %v1255 = vunpack.c.l.b16 %v1166
      %v1256 = vunpack.c.h.b16 %v1166
      %v1257 = vunpack.c.l.b16 %v1167
      %v1258 = vunpack.c.l.b16 %v1168
      %v1259 = vunpack.c.h.b16 %v1168
      %v1260 = vunpack.c.l.b16 %v1169
      %v1261 = vunpack.c.l.b16 %v1170
      %v1262 = vunpack.c.h.b16 %v1170
      %v1263 = vunpack.c.l.b16 %v1171
      %v1264 = vunpack.c.l.b16 %v1172
      %v1265 = vunpack.c.h.b16 %v1172
      %v1266 = vunpack.c.l.b16 %v1173
      %v1267 = vunpack.c.l.b16 %v1174
      %v1268 = vunpack.c.h.b16 %v1174
      %v1269 = vunpack.c.l.b16 %v1175
      %v1270 = vunpack.c.l.b16 %v1176
      %v1271 = vunpack.c.h.b16 %v1176
      %v1272 = vunpack.c.l.b16 %v1177
      %v1273 = vunpack.c.l.b16 %v1178
      %v1274 = vunpack.c.h.b16 %v1178
      %v1275 = vunpack.c.l.b16 %v1179
      %v1276 = vunpack.c.l.b16 %v1180
      %v1277 = vunpack.c.h.b16 %v1180
      %v1278 = vunpack.c.l.b16 %v1181
      %v1279 = vpack.c.b16 %v1234, %v1231
      %v1280 = vpack.c.b16 %v1235, %v1232
      %v1281 = vpack.c.b16 %v1236, %v1233
      %v1282 = vpack.c.b16 %v1240, %v1237
      %v1283 = vpack.c.b16 %v1241, %v1238
      %v1284 = vpack.c.b16 %v1242, %v1239
      %v1285 = vpack.c.b16 %v1246, %v1243
      %v1286 = vpack.c.b16 %v1247, %v1244
      %v1287 = vpack.c.b16 %v1248, %v1245
      %v1288 = vpack.c.b16 %v1252, %v1249
      %v1289 = vpack.c.b16 %v1253, %v1250
      %v1290 = vpack.c.b16 %v1254, %v1251
      %v1291 = vpack.c.b16 %v1258, %v1255
      %v1292 = vpack.c.b16 %v1259, %v1256
      %v1293 = vpack.c.b16 %v1260, %v1257
      %v1294 = vpack.c.b16 %v1264, %v1261
      %v1295 = vpack.c.b16 %v1265, %v1262
      %v1296 = vpack.c.b16 %v1266, %v1263
      %v1297 = vpack.c.b16 %v1270, %v1267
      %v1298 = vpack.c.b16 %v1271, %v1268
      %v1299 = vpack.c.b16 %v1272, %v1269
      %v1300 = vpack.c.b16 %v1276, %v1273
      %v1301 = vpack.c.b16 %v1277, %v1274
      %v1302 = vpack.c.b16 %v1278, %v1275
      %1327 = vmatprep.subr.bf16.mxu0 %v1280
      %1328 = vmatpush1.bf16.msra.mxu0 %v1279
      %1329 = vmatprep.subr.bf16.mxu0 %v1283
      %1330 = vmatpush1.bf16.msra.mxu0 %v1282
      %1331 = vmatprep.subr.bf16.mxu0 %v1286
      %1332 = vmatpush1.bf16.msra.mxu0 %v1285
      %1333 = vmatprep.subr.bf16.mxu0 %v1289
      %1334 = vmatpush1.bf16.msra.mxu0 %v1288
      %1335 = vmatprep.subr.bf16.mxu0 %v1292
      %1336 = vmatpush1.bf16.msra.mxu0 %v1291
      %1337 = vmatprep.subr.bf16.mxu0 %v1295
      %1338 = vmatpush1.bf16.msra.mxu0 %v1294
      %1339 = vmatprep.subr.bf16.mxu0 %v1298
      %1340 = vmatpush1.bf16.msra.mxu0 %v1297
      %1341 = vmatprep.subr.bf16.mxu0 %v1301
      %1342 = vmatpush1.bf16.msra.mxu0 %v1300
      %1343 = vmatprep.subr.bf16.mxu0 0
      %1344 = vmatpush1.bf16.msra.mxu0 0
      %1345 = vmatprep.subr.bf16.mxu0 0
      %1346 = vmatpush1.bf16.msra.mxu0 0
      %1347 = vmatprep.subr.bf16.mxu0 0
      %1348 = vmatpush1.bf16.msra.mxu0 0
      %1349 = vmatprep.subr.bf16.mxu0 0
      %1350 = vmatpush1.bf16.msra.mxu0 0
      %1351 = vmatprep.subr.bf16.mxu0 0
      %1352 = vmatpush1.bf16.msra.mxu0 0
      %1353 = vmatprep.subr.bf16.mxu0 0
      %1354 = vmatpush1.bf16.msra.mxu0 0
      %1355 = vmatprep.subr.bf16.mxu0 0
      %1356 = vmatpush1.bf16.msra.mxu0 0
      %1357 = vmatprep.subr.bf16.mxu0 0
      %1358 = vmatpush1.bf16.msra.mxu0 0
      %1359 = vmatprep.mubr.bf16.mxu0 0
      %1360 = vmatmul.mubr.bf16.gmra.mrb[0].mxu0 %v1146
      %v1361 = vpop.f32.mrb[0].mxu0
      %v1362 = vadd.f32 %v1187, %v1361
      %v1363 = vpop.f32.mrb[0].mxu0
      %v1364 = vadd.f32 %v1191, %v1363
      %v1365 = vpop.f32.mrb[0].mxu0
      %v1366 = vadd.f32 %v1187, %v1365
      %v1367 = vpop.f32.mrb[0].mxu0
      %v1368 = vadd.f32 %v1191, %v1367
      %1369 = vmatprep.mubr.bf16.mxu0 0
      %1370 = vmatmul.mubr.bf16.gmra.mrb[0].mxu0 %v1147
      %v1371 = vpop.f32.mrb[0].mxu0
      %v1372 = vadd.f32 %v1187, %v1371
      %v1373 = vpop.f32.mrb[0].mxu0
      %v1374 = vadd.f32 %v1191, %v1373
      %v1375 = vpop.f32.mrb[0].mxu0
      %v1376 = vadd.f32 %v1187, %v1375
      %v1377 = vpop.f32.mrb[0].mxu0
      %v1378 = vadd.f32 %v1191, %v1377
      %1379 = vmatprep.mubr.bf16.mxu0 0
      %1380 = vmatmul.mubr.bf16.gmra.mrb[0].mxu0 %v1148
      %v1381 = vpop.f32.mrb[0].mxu0
      %v1382 = vadd.f32 %v1187, %v1381
      %v1383 = vpop.f32.mrb[0].mxu0
      %v1384 = vadd.f32 %v1191, %v1383
      %v1385 = vpop.f32.mrb[0].mxu0
      %v1386 = vadd.f32 %v1187, %v1385
      %v1387 = vpop.f32.mrb[0].mxu0
      %v1388 = vadd.f32 %v1191, %v1387
      %1389 = vmatprep.mubr.bf16.mxu0 0
      %1390 = vmatmul.mubr.bf16.gmra.mrb[0].mxu0 %v1149
      %v1391 = vpop.f32.mrb[0].mxu0
      %v1392 = vadd.f32 %v1187, %v1391
      %v1393 = vpop.f32.mrb[0].mxu0
      %v1394 = vadd.f32 %v1191, %v1393
      %v1395 = vpop.f32.mrb[0].mxu0
      %v1396 = vadd.f32 %v1187, %v1395
      %v1397 = vpop.f32.mrb[0].mxu0
      %v1398 = vadd.f32 %v1191, %v1397
      %1399 = vdwg.mxu0
      %1400 = vmatprep.subr.bf16.mxu0 0
      %1401 = vmatpush1.bf16.msra.mxu0 %v1281
      %1402 = vmatprep.subr.bf16.mxu0 0
      %1403 = vmatpush1.bf16.msra.mxu0 %v1284
      %1404 = vmatprep.subr.bf16.mxu0 0
      %1405 = vmatpush1.bf16.msra.mxu0 %v1287
      %1406 = vmatprep.subr.bf16.mxu0 0
      %1407 = vmatpush1.bf16.msra.mxu0 %v1290
      %1408 = vmatprep.subr.bf16.mxu0 0
      %1409 = vmatpush1.bf16.msra.mxu0 %v1293
      %1410 = vmatprep.subr.bf16.mxu0 0
      %1411 = vmatpush1.bf16.msra.mxu0 %v1296
      %1412 = vmatprep.subr.bf16.mxu0 0
      %1413 = vmatpush1.bf16.msra.mxu0 %v1299
      %1414 = vmatprep.subr.bf16.mxu0 0
      %1415 = vmatpush1.bf16.msra.mxu0 %v1302
      %1416 = vmatprep.subr.bf16.mxu0 0
      %1417 = vmatpush1.bf16.msra.mxu0 0
      %1418 = vmatprep.subr.bf16.mxu0 0
      %1419 = vmatpush1.bf16.msra.mxu0 0
      %1420 = vmatprep.subr.bf16.mxu0 0
      %1421 = vmatpush1.bf16.msra.mxu0 0
      %1422 = vmatprep.subr.bf16.mxu0 0
      %1423 = vmatpush1.bf16.msra.mxu0 0
      %1424 = vmatprep.subr.bf16.mxu0 0
      %1425 = vmatpush1.bf16.msra.mxu0 0
      %1426 = vmatprep.subr.bf16.mxu0 0
      %1427 = vmatpush1.bf16.msra.mxu0 0
      %1428 = vmatprep.subr.bf16.mxu0 0
      %1429 = vmatpush1.bf16.msra.mxu0 0
      %1430 = vmatprep.subr.bf16.mxu0 0
      %1431 = vmatpush1.bf16.msra.mxu0 0
      %1432 = vmatprep.mubr.bf16.mxu0 0
      %1433 = vmatmul.mubr.bf16.gmra.mrb[0].mxu0 %v1146
      %v1434 = vpop.f32.mrb[0].mxu0
      %v1435 = vadd.f32 %v1195, %v1434
      %v1436 = vpop.f32.mrb[0].mxu0
      %v1437 = vpop.f32.mrb[0].mxu0
      %v1438 = vadd.f32 %v1195, %v1437
      %v1439 = vpop.f32.mrb[0].mxu0
      %1440 = vmatprep.mubr.bf16.mxu0 0
      %1441 = vmatmul.mubr.bf16.gmra.mrb[0].mxu0 %v1147
      %v1442 = vpop.f32.mrb[0].mxu0
      %v1443 = vadd.f32 %v1195, %v1442
      %v1444 = vpop.f32.mrb[0].mxu0
      %v1445 = vpop.f32.mrb[0].mxu0
      %v1446 = vadd.f32 %v1195, %v1445
      %v1447 = vpop.f32.mrb[0].mxu0
      %1448 = vmatprep.mubr.bf16.mxu0 0
      %1449 = vmatmul.mubr.bf16.gmra.mrb[0].mxu0 %v1148
      %v1450 = vpop.f32.mrb[0].mxu0
      %v1451 = vadd.f32 %v1195, %v1450
      %v1452 = vpop.f32.mrb[0].mxu0
      %v1453 = vpop.f32.mrb[0].mxu0
      %v1454 = vadd.f32 %v1195, %v1453
      %v1455 = vpop.f32.mrb[0].mxu0
      %1456 = vmatprep.mubr.bf16.mxu0 0
      %1457 = vmatmul.mubr.bf16.gmra.mrb[0].mxu0 %v1149
      %v1458 = vpop.f32.mrb[0].mxu0
      %v1459 = vadd.f32 %v1195, %v1458
      %v1460 = vpop.f32.mrb[0].mxu0
      %v1461 = vpop.f32.mrb[0].mxu0
      %v1462 = vadd.f32 %v1195, %v1461
      %v1463 = vpop.f32.mrb[0].mxu0
      %1464 = vdwg.mxu0
      %1473 = vrot.lane.b32.xlu0 %v1362, 96
      %v1474 = vpop.permute.xlu0 %1473
      %1475 = vrot.lane.b32.xlu0 %v1366, 96
      %v1476 = vpop.permute.xlu0 %1475
      %1477 = vrot.lane.b32.xlu0 %v1372, 96
      %v1478 = vpop.permute.xlu0 %1477
      %1479 = vrot.lane.b32.xlu0 %v1376, 96
      %v1480 = vpop.permute.xlu0 %1479
      %1481 = vrot.lane.b32.xlu0 %v1382, 96
      %v1482 = vpop.permute.xlu0 %1481
      %1483 = vrot.lane.b32.xlu0 %v1386, 96
      %v1484 = vpop.permute.xlu0 %1483
      %1485 = vrot.lane.b32.xlu0 %v1392, 96
      %v1486 = vpop.permute.xlu0 %1485
      %1487 = vrot.lane.b32.xlu0 %v1396, 96
      %v1488 = vpop.permute.xlu0 %1487
      %1497 = vrot.lane.b32.xlu0 %v1362, 64
      %v1498 = vpop.permute.xlu0 %1497
      %1499 = vrot.lane.b32.xlu0 %v1366, 64
      %v1500 = vpop.permute.xlu0 %1499
      %1501 = vrot.lane.b32.xlu0 %v1372, 64
      %v1502 = vpop.permute.xlu0 %1501
      %1503 = vrot.lane.b32.xlu0 %v1376, 64
      %v1504 = vpop.permute.xlu0 %1503
      %1505 = vrot.lane.b32.xlu0 %v1382, 64
      %v1506 = vpop.permute.xlu0 %1505
      %1507 = vrot.lane.b32.xlu0 %v1386, 64
      %v1508 = vpop.permute.xlu0 %1507
      %1509 = vrot.lane.b32.xlu0 %v1392, 64
      %v1510 = vpop.permute.xlu0 %1509
      %1511 = vrot.lane.b32.xlu0 %v1396, 64
      %v1512 = vpop.permute.xlu0 %1511
      %1521 = vrot.lane.b32.xlu0 %v1362, 32
      %v1522 = vpop.permute.xlu0 %1521
      %1523 = vrot.lane.b32.xlu0 %v1366, 32
      %v1524 = vpop.permute.xlu0 %1523
      %1525 = vrot.lane.b32.xlu0 %v1372, 32
      %v1526 = vpop.permute.xlu0 %1525
      %1527 = vrot.lane.b32.xlu0 %v1376, 32
      %v1528 = vpop.permute.xlu0 %1527
      %1529 = vrot.lane.b32.xlu0 %v1382, 32
      %v1530 = vpop.permute.xlu0 %1529
      %1531 = vrot.lane.b32.xlu0 %v1386, 32
      %v1532 = vpop.permute.xlu0 %1531
      %1533 = vrot.lane.b32.xlu0 %v1392, 32
      %v1534 = vpop.permute.xlu0 %1533
      %1535 = vrot.lane.b32.xlu0 %v1396, 32
      %v1536 = vpop.permute.xlu0 %1535
      %v1545 = vcombine.low %v1362, %v1498
      %v1546 = vcombine.high %v1362, %v1498
      %v1548 = vunpack.c.l.s4 1983009808
      %v1549 = vunpack.c.0.s8 %v1548
      %v1550 = vlaneseq
      %v1551 = vshrl.u32 %v1550, 7
      %v1552 = vsub.s32 %v1549, %v1551
      %v1553 = vrot.slane %v1545, %v1552
      %v1555 = vunpack.c.l.s4 1983009808
      %v1556 = vunpack.c.0.s8 %v1555
      %v1557 = vlaneseq
      %v1558 = vshrl.u32 %v1557, 7
      %v1559 = vsub.s32 %v1556, %v1558
      %v1560 = vrot.slane %v1546, %v1559
      %v1561 = vcombine.low %v1474, %v1522
      %v1562 = vcombine.high %v1474, %v1522
      %v1564 = vunpack.c.l.s4 1983009808
      %v1565 = vunpack.c.0.s8 %v1564
      %v1566 = vlaneseq
      %v1567 = vshrl.u32 %v1566, 7
      %v1568 = vsub.s32 %v1565, %v1567
      %v1569 = vrot.slane %v1561, %v1568
      %v1571 = vunpack.c.l.s4 1983009808
      %v1572 = vunpack.c.0.s8 %v1571
      %v1573 = vlaneseq
      %v1574 = vshrl.u32 %v1573, 7
      %v1575 = vsub.s32 %v1572, %v1574
      %v1576 = vrot.slane %v1562, %v1575
      %v1577 = vcombine.low %v1553, %v1569
      %v1578 = vcombine.high %v1553, %v1569
      %v1580 = vunpack.c.l.s4 1934713408
      %v1581 = vunpack.c.0.s8 %v1580
      %v1582 = vlaneseq
      %v1583 = vshrl.u32 %v1582, 7
      %v1584 = vsub.s32 %v1581, %v1583
      %v1585 = vrot.slane %v1577, %v1584
      %v1587 = vunpack.c.l.s4 1934713408
      %v1588 = vunpack.c.0.s8 %v1587
      %v1589 = vlaneseq
      %v1590 = vshrl.u32 %v1589, 7
      %v1591 = vsub.s32 %v1588, %v1590
      %v1592 = vrot.slane %v1578, %v1591
      %v1593 = vcombine.low %v1560, %v1576
      %v1594 = vcombine.high %v1560, %v1576
      %v1596 = vunpack.c.l.s4 1934713408
      %v1597 = vunpack.c.0.s8 %v1596
      %v1598 = vlaneseq
      %v1599 = vshrl.u32 %v1598, 7
      %v1600 = vsub.s32 %v1597, %v1599
      %v1601 = vrot.slane %v1593, %v1600
      %v1603 = vunpack.c.l.s4 1934713408
      %v1604 = vunpack.c.0.s8 %v1603
      %v1605 = vlaneseq
      %v1606 = vshrl.u32 %v1605, 7
      %v1607 = vsub.s32 %v1604, %v1606
      %v1608 = vrot.slane %v1594, %v1607
      %v1609 = vcombine.high %v1585, 0.0
      %v1610 = vcombine.high %v1592, 0.0
      %v1611 = vcombine.high %v1601, 0.0
      %v1612 = vcombine.high %v1608, 0.0
      %v1613 = vcombine.low %v1366, %v1500
      %v1614 = vcombine.high %v1366, %v1500
      %v1616 = vunpack.c.l.s4 1983009808
      %v1617 = vunpack.c.0.s8 %v1616
      %v1618 = vlaneseq
      %v1619 = vshrl.u32 %v1618, 7
      %v1620 = vsub.s32 %v1617, %v1619
      %v1621 = vrot.slane %v1613, %v1620
      %v1623 = vunpack.c.l.s4 1983009808
      %v1624 = vunpack.c.0.s8 %v1623
      %v1625 = vlaneseq
      %v1626 = vshrl.u32 %v1625, 7
      %v1627 = vsub.s32 %v1624, %v1626
      %v1628 = vrot.slane %v1614, %v1627
      %v1629 = vcombine.low %v1476, %v1524
      %v1630 = vcombine.high %v1476, %v1524
      %v1632 = vunpack.c.l.s4 1983009808
      %v1633 = vunpack.c.0.s8 %v1632
      %v1634 = vlaneseq
      %v1635 = vshrl.u32 %v1634, 7
      %v1636 = vsub.s32 %v1633, %v1635
      %v1637 = vrot.slane %v1629, %v1636
      %v1639 = vunpack.c.l.s4 1983009808
      %v1640 = vunpack.c.0.s8 %v1639
      %v1641 = vlaneseq
      %v1642 = vshrl.u32 %v1641, 7
      %v1643 = vsub.s32 %v1640, %v1642
      %v1644 = vrot.slane %v1630, %v1643
      %v1645 = vcombine.low %v1621, %v1637
      %v1646 = vcombine.high %v1621, %v1637
      %v1648 = vunpack.c.l.s4 1934713408
      %v1649 = vunpack.c.0.s8 %v1648
      %v1650 = vlaneseq
      %v1651 = vshrl.u32 %v1650, 7
      %v1652 = vsub.s32 %v1649, %v1651
      %v1653 = vrot.slane %v1645, %v1652
      %v1655 = vunpack.c.l.s4 1934713408
      %v1656 = vunpack.c.0.s8 %v1655
      %v1657 = vlaneseq
      %v1658 = vshrl.u32 %v1657, 7
      %v1659 = vsub.s32 %v1656, %v1658
      %v1660 = vrot.slane %v1646, %v1659
      %v1661 = vcombine.low %v1628, %v1644
      %v1662 = vcombine.high %v1628, %v1644
      %v1664 = vunpack.c.l.s4 1934713408
      %v1665 = vunpack.c.0.s8 %v1664
      %v1666 = vlaneseq
      %v1667 = vshrl.u32 %v1666, 7
      %v1668 = vsub.s32 %v1665, %v1667
      %v1669 = vrot.slane %v1661, %v1668
      %v1671 = vunpack.c.l.s4 1934713408
      %v1672 = vunpack.c.0.s8 %v1671
      %v1673 = vlaneseq
      %v1674 = vshrl.u32 %v1673, 7
      %v1675 = vsub.s32 %v1672, %v1674
      %v1676 = vrot.slane %v1662, %v1675
      %v1677 = vcombine.high %v1653, 0.0
      %v1678 = vcombine.high %v1660, 0.0
      %v1679 = vcombine.high %v1669, 0.0
      %v1680 = vcombine.high %v1676, 0.0
      %v1681 = vcombine.low %v1372, %v1502
      %v1682 = vcombine.high %v1372, %v1502
      %v1684 = vunpack.c.l.s4 1983009808
      %v1685 = vunpack.c.0.s8 %v1684
      %v1686 = vlaneseq
      %v1687 = vshrl.u32 %v1686, 7
      %v1688 = vsub.s32 %v1685, %v1687
      %v1689 = vrot.slane %v1681, %v1688
      %v1691 = vunpack.c.l.s4 1983009808
      %v1692 = vunpack.c.0.s8 %v1691
      %v1693 = vlaneseq
      %v1694 = vshrl.u32 %v1693, 7
      %v1695 = vsub.s32 %v1692, %v1694
      %v1696 = vrot.slane %v1682, %v1695
      %v1697 = vcombine.low %v1478, %v1526
      %v1698 = vcombine.high %v1478, %v1526
      %v1700 = vunpack.c.l.s4 1983009808
      %v1701 = vunpack.c.0.s8 %v1700
      %v1702 = vlaneseq
      %v1703 = vshrl.u32 %v1702, 7
      %v1704 = vsub.s32 %v1701, %v1703
      %v1705 = vrot.slane %v1697, %v1704
      %v1707 = vunpack.c.l.s4 1983009808
      %v1708 = vunpack.c.0.s8 %v1707
      %v1709 = vlaneseq
      %v1710 = vshrl.u32 %v1709, 7
      %v1711 = vsub.s32 %v1708, %v1710
      %v1712 = vrot.slane %v1698, %v1711
      %v1713 = vcombine.low %v1689, %v1705
      %v1714 = vcombine.high %v1689, %v1705
      %v1716 = vunpack.c.l.s4 1934713408
      %v1717 = vunpack.c.0.s8 %v1716
      %v1718 = vlaneseq
      %v1719 = vshrl.u32 %v1718, 7
      %v1720 = vsub.s32 %v1717, %v1719
      %v1721 = vrot.slane %v1713, %v1720
      %v1723 = vunpack.c.l.s4 1934713408
      %v1724 = vunpack.c.0.s8 %v1723
      %v1725 = vlaneseq
      %v1726 = vshrl.u32 %v1725, 7
      %v1727 = vsub.s32 %v1724, %v1726
      %v1728 = vrot.slane %v1714, %v1727
      %v1729 = vcombine.low %v1696, %v1712
      %v1730 = vcombine.high %v1696, %v1712
      %v1732 = vunpack.c.l.s4 1934713408
      %v1733 = vunpack.c.0.s8 %v1732
      %v1734 = vlaneseq
      %v1735 = vshrl.u32 %v1734, 7
      %v1736 = vsub.s32 %v1733, %v1735
      %v1737 = vrot.slane %v1729, %v1736
      %v1739 = vunpack.c.l.s4 1934713408
      %v1740 = vunpack.c.0.s8 %v1739
      %v1741 = vlaneseq
      %v1742 = vshrl.u32 %v1741, 7
      %v1743 = vsub.s32 %v1740, %v1742
      %v1744 = vrot.slane %v1730, %v1743
      %v1745 = vcombine.high %v1721, 0.0
      %v1746 = vcombine.high %v1728, 0.0
      %v1747 = vcombine.high %v1737, 0.0
      %v1748 = vcombine.high %v1744, 0.0
      %v1749 = vcombine.low %v1376, %v1504
      %v1750 = vcombine.high %v1376, %v1504
      %v1752 = vunpack.c.l.s4 1983009808
      %v1753 = vunpack.c.0.s8 %v1752
      %v1754 = vlaneseq
      %v1755 = vshrl.u32 %v1754, 7
      %v1756 = vsub.s32 %v1753, %v1755
      %v1757 = vrot.slane %v1749, %v1756
      %v1759 = vunpack.c.l.s4 1983009808
      %v1760 = vunpack.c.0.s8 %v1759
      %v1761 = vlaneseq
      %v1762 = vshrl.u32 %v1761, 7
      %v1763 = vsub.s32 %v1760, %v1762
      %v1764 = vrot.slane %v1750, %v1763
      %v1765 = vcombine.low %v1480, %v1528
      %v1766 = vcombine.high %v1480, %v1528
      %v1768 = vunpack.c.l.s4 1983009808
      %v1769 = vunpack.c.0.s8 %v1768
      %v1770 = vlaneseq
      %v1771 = vshrl.u32 %v1770, 7
      %v1772 = vsub.s32 %v1769, %v1771
      %v1773 = vrot.slane %v1765, %v1772
      %v1775 = vunpack.c.l.s4 1983009808
      %v1776 = vunpack.c.0.s8 %v1775
      %v1777 = vlaneseq
      %v1778 = vshrl.u32 %v1777, 7
      %v1779 = vsub.s32 %v1776, %v1778
      %v1780 = vrot.slane %v1766, %v1779
      %v1781 = vcombine.low %v1757, %v1773
      %v1782 = vcombine.high %v1757, %v1773
      %v1784 = vunpack.c.l.s4 1934713408
      %v1785 = vunpack.c.0.s8 %v1784
      %v1786 = vlaneseq
      %v1787 = vshrl.u32 %v1786, 7
      %v1788 = vsub.s32 %v1785, %v1787
      %v1789 = vrot.slane %v1781, %v1788
      %v1791 = vunpack.c.l.s4 1934713408
      %v1792 = vunpack.c.0.s8 %v1791
      %v1793 = vlaneseq
      %v1794 = vshrl.u32 %v1793, 7
      %v1795 = vsub.s32 %v1792, %v1794
      %v1796 = vrot.slane %v1782, %v1795
      %v1797 = vcombine.low %v1764, %v1780
      %v1798 = vcombine.high %v1764, %v1780
      %v1800 = vunpack.c.l.s4 1934713408
      %v1801 = vunpack.c.0.s8 %v1800
      %v1802 = vlaneseq
      %v1803 = vshrl.u32 %v1802, 7
      %v1804 = vsub.s32 %v1801, %v1803
      %v1805 = vrot.slane %v1797, %v1804
      %v1807 = vunpack.c.l.s4 1934713408
      %v1808 = vunpack.c.0.s8 %v1807
      %v1809 = vlaneseq
      %v1810 = vshrl.u32 %v1809, 7
      %v1811 = vsub.s32 %v1808, %v1810
      %v1812 = vrot.slane %v1798, %v1811
      %v1813 = vcombine.high %v1789, 0.0
      %v1814 = vcombine.high %v1796, 0.0
      %v1815 = vcombine.high %v1805, 0.0
      %v1816 = vcombine.high %v1812, 0.0
      %v1817 = vcombine.low %v1382, %v1506
      %v1818 = vcombine.high %v1382, %v1506
      %v1820 = vunpack.c.l.s4 1983009808
      %v1821 = vunpack.c.0.s8 %v1820
      %v1822 = vlaneseq
      %v1823 = vshrl.u32 %v1822, 7
      %v1824 = vsub.s32 %v1821, %v1823
      %v1825 = vrot.slane %v1817, %v1824
      %v1827 = vunpack.c.l.s4 1983009808
      %v1828 = vunpack.c.0.s8 %v1827
      %v1829 = vlaneseq
      %v1830 = vshrl.u32 %v1829, 7
      %v1831 = vsub.s32 %v1828, %v1830
      %v1832 = vrot.slane %v1818, %v1831
      %v1833 = vcombine.low %v1482, %v1530
      %v1834 = vcombine.high %v1482, %v1530
      %v1836 = vunpack.c.l.s4 1983009808
      %v1837 = vunpack.c.0.s8 %v1836
      %v1838 = vlaneseq
      %v1839 = vshrl.u32 %v1838, 7
      %v1840 = vsub.s32 %v1837, %v1839
      %v1841 = vrot.slane %v1833, %v1840
      %v1843 = vunpack.c.l.s4 1983009808
      %v1844 = vunpack.c.0.s8 %v1843
      %v1845 = vlaneseq
      %v1846 = vshrl.u32 %v1845, 7
      %v1847 = vsub.s32 %v1844, %v1846
      %v1848 = vrot.slane %v1834, %v1847
      %v1849 = vcombine.low %v1825, %v1841
      %v1850 = vcombine.high %v1825, %v1841
      %v1852 = vunpack.c.l.s4 1934713408
      %v1853 = vunpack.c.0.s8 %v1852
      %v1854 = vlaneseq
      %v1855 = vshrl.u32 %v1854, 7
      %v1856 = vsub.s32 %v1853, %v1855
      %v1857 = vrot.slane %v1849, %v1856
      %v1859 = vunpack.c.l.s4 1934713408
      %v1860 = vunpack.c.0.s8 %v1859
      %v1861 = vlaneseq
      %v1862 = vshrl.u32 %v1861, 7
      %v1863 = vsub.s32 %v1860, %v1862
      %v1864 = vrot.slane %v1850, %v1863
      %v1865 = vcombine.low %v1832, %v1848
      %v1866 = vcombine.high %v1832, %v1848
      %v1868 = vunpack.c.l.s4 1934713408
      %v1869 = vunpack.c.0.s8 %v1868
      %v1870 = vlaneseq
      %v1871 = vshrl.u32 %v1870, 7
      %v1872 = vsub.s32 %v1869, %v1871
      %v1873 = vrot.slane %v1865, %v1872
      %v1875 = vunpack.c.l.s4 1934713408
      %v1876 = vunpack.c.0.s8 %v1875
      %v1877 = vlaneseq
      %v1878 = vshrl.u32 %v1877, 7
      %v1879 = vsub.s32 %v1876, %v1878
      %v1880 = vrot.slane %v1866, %v1879
      %v1881 = vcombine.high %v1857, 0.0
      %v1882 = vcombine.high %v1864, 0.0
      %v1883 = vcombine.high %v1873, 0.0
      %v1884 = vcombine.high %v1880, 0.0
      %v1885 = vcombine.low %v1386, %v1508
      %v1886 = vcombine.high %v1386, %v1508
      %v1888 = vunpack.c.l.s4 1983009808
      %v1889 = vunpack.c.0.s8 %v1888
      %v1890 = vlaneseq
      %v1891 = vshrl.u32 %v1890, 7
      %v1892 = vsub.s32 %v1889, %v1891
      %v1893 = vrot.slane %v1885, %v1892
      %v1895 = vunpack.c.l.s4 1983009808
      %v1896 = vunpack.c.0.s8 %v1895
      %v1897 = vlaneseq
      %v1898 = vshrl.u32 %v1897, 7
      %v1899 = vsub.s32 %v1896, %v1898
      %v1900 = vrot.slane %v1886, %v1899
      %v1901 = vcombine.low %v1484, %v1532
      %v1902 = vcombine.high %v1484, %v1532
      %v1904 = vunpack.c.l.s4 1983009808
      %v1905 = vunpack.c.0.s8 %v1904
      %v1906 = vlaneseq
      %v1907 = vshrl.u32 %v1906, 7
      %v1908 = vsub.s32 %v1905, %v1907
      %v1909 = vrot.slane %v1901, %v1908
      %v1911 = vunpack.c.l.s4 1983009808
      %v1912 = vunpack.c.0.s8 %v1911
      %v1913 = vlaneseq
      %v1914 = vshrl.u32 %v1913, 7
      %v1915 = vsub.s32 %v1912, %v1914
      %v1916 = vrot.slane %v1902, %v1915
      %v1917 = vcombine.low %v1893, %v1909
      %v1918 = vcombine.high %v1893, %v1909
      %v1920 = vunpack.c.l.s4 1934713408
      %v1921 = vunpack.c.0.s8 %v1920
      %v1922 = vlaneseq
      %v1923 = vshrl.u32 %v1922, 7
      %v1924 = vsub.s32 %v1921, %v1923
      %v1925 = vrot.slane %v1917, %v1924
      %v1927 = vunpack.c.l.s4 1934713408
      %v1928 = vunpack.c.0.s8 %v1927
      %v1929 = vlaneseq
      %v1930 = vshrl.u32 %v1929, 7
      %v1931 = vsub.s32 %v1928, %v1930
      %v1932 = vrot.slane %v1918, %v1931
      %v1933 = vcombine.low %v1900, %v1916
      %v1934 = vcombine.high %v1900, %v1916
      %v1936 = vunpack.c.l.s4 1934713408
      %v1937 = vunpack.c.0.s8 %v1936
      %v1938 = vlaneseq
      %v1939 = vshrl.u32 %v1938, 7
      %v1940 = vsub.s32 %v1937, %v1939
      %v1941 = vrot.slane %v1933, %v1940
      %v1943 = vunpack.c.l.s4 1934713408
      %v1944 = vunpack.c.0.s8 %v1943
      %v1945 = vlaneseq
      %v1946 = vshrl.u32 %v1945, 7
      %v1947 = vsub.s32 %v1944, %v1946
      %v1948 = vrot.slane %v1934, %v1947
      %v1949 = vcombine.high %v1925, 0.0
      %v1950 = vcombine.high %v1932, 0.0
      %v1951 = vcombine.high %v1941, 0.0
      %v1952 = vcombine.high %v1948, 0.0
      %v1953 = vcombine.low %v1392, %v1510
      %v1954 = vcombine.high %v1392, %v1510
      %v1956 = vunpack.c.l.s4 1983009808
      %v1957 = vunpack.c.0.s8 %v1956
      %v1958 = vlaneseq
      %v1959 = vshrl.u32 %v1958, 7
      %v1960 = vsub.s32 %v1957, %v1959
      %v1961 = vrot.slane %v1953, %v1960
      %v1963 = vunpack.c.l.s4 1983009808
      %v1964 = vunpack.c.0.s8 %v1963
      %v1965 = vlaneseq
      %v1966 = vshrl.u32 %v1965, 7
      %v1967 = vsub.s32 %v1964, %v1966
      %v1968 = vrot.slane %v1954, %v1967
      %v1969 = vcombine.low %v1486, %v1534
      %v1970 = vcombine.high %v1486, %v1534
      %v1972 = vunpack.c.l.s4 1983009808
      %v1973 = vunpack.c.0.s8 %v1972
      %v1974 = vlaneseq
      %v1975 = vshrl.u32 %v1974, 7
      %v1976 = vsub.s32 %v1973, %v1975
      %v1977 = vrot.slane %v1969, %v1976
      %v1979 = vunpack.c.l.s4 1983009808
      %v1980 = vunpack.c.0.s8 %v1979
      %v1981 = vlaneseq
      %v1982 = vshrl.u32 %v1981, 7
      %v1983 = vsub.s32 %v1980, %v1982
      %v1984 = vrot.slane %v1970, %v1983
      %v1985 = vcombine.low %v1961, %v1977
      %v1986 = vcombine.high %v1961, %v1977
      %v1988 = vunpack.c.l.s4 1934713408
      %v1989 = vunpack.c.0.s8 %v1988
      %v1990 = vlaneseq
      %v1991 = vshrl.u32 %v1990, 7
      %v1992 = vsub.s32 %v1989, %v1991
      %v1993 = vrot.slane %v1985, %v1992
      %v1995 = vunpack.c.l.s4 1934713408
      %v1996 = vunpack.c.0.s8 %v1995
      %v1997 = vlaneseq
      %v1998 = vshrl.u32 %v1997, 7
      %v1999 = vsub.s32 %v1996, %v1998
      %v2000 = vrot.slane %v1986, %v1999
      %v2001 = vcombine.low %v1968, %v1984
      %v2002 = vcombine.high %v1968, %v1984
      %v2004 = vunpack.c.l.s4 1934713408
      %v2005 = vunpack.c.0.s8 %v2004
      %v2006 = vlaneseq
      %v2007 = vshrl.u32 %v2006, 7
      %v2008 = vsub.s32 %v2005, %v2007
      %v2009 = vrot.slane %v2001, %v2008
      %v2011 = vunpack.c.l.s4 1934713408
      %v2012 = vunpack.c.0.s8 %v2011
      %v2013 = vlaneseq
      %v2014 = vshrl.u32 %v2013, 7
      %v2015 = vsub.s32 %v2012, %v2014
      %v2016 = vrot.slane %v2002, %v2015
      %v2017 = vcombine.high %v1993, 0.0
      %v2018 = vcombine.high %v2000, 0.0
      %v2019 = vcombine.high %v2009, 0.0
      %v2020 = vcombine.high %v2016, 0.0
      %v2021 = vcombine.low %v1396, %v1512
      %v2022 = vcombine.high %v1396, %v1512
      %v2024 = vunpack.c.l.s4 1983009808
      %v2025 = vunpack.c.0.s8 %v2024
      %v2026 = vlaneseq
      %v2027 = vshrl.u32 %v2026, 7
      %v2028 = vsub.s32 %v2025, %v2027
      %v2029 = vrot.slane %v2021, %v2028
      %v2031 = vunpack.c.l.s4 1983009808
      %v2032 = vunpack.c.0.s8 %v2031
      %v2033 = vlaneseq
      %v2034 = vshrl.u32 %v2033, 7
      %v2035 = vsub.s32 %v2032, %v2034
      %v2036 = vrot.slane %v2022, %v2035
      %v2037 = vcombine.low %v1488, %v1536
      %v2038 = vcombine.high %v1488, %v1536
      %v2040 = vunpack.c.l.s4 1983009808
      %v2041 = vunpack.c.0.s8 %v2040
      %v2042 = vlaneseq
      %v2043 = vshrl.u32 %v2042, 7
      %v2044 = vsub.s32 %v2041, %v2043
      %v2045 = vrot.slane %v2037, %v2044
      %v2047 = vunpack.c.l.s4 1983009808
      %v2048 = vunpack.c.0.s8 %v2047
      %v2049 = vlaneseq
      %v2050 = vshrl.u32 %v2049, 7
      %v2051 = vsub.s32 %v2048, %v2050
      %v2052 = vrot.slane %v2038, %v2051
      %v2053 = vcombine.low %v2029, %v2045
      %v2054 = vcombine.high %v2029, %v2045
      %v2056 = vunpack.c.l.s4 1934713408
      %v2057 = vunpack.c.0.s8 %v2056
      %v2058 = vlaneseq
      %v2059 = vshrl.u32 %v2058, 7
      %v2060 = vsub.s32 %v2057, %v2059
      %v2061 = vrot.slane %v2053, %v2060
      %v2063 = vunpack.c.l.s4 1934713408
      %v2064 = vunpack.c.0.s8 %v2063
      %v2065 = vlaneseq
      %v2066 = vshrl.u32 %v2065, 7
      %v2067 = vsub.s32 %v2064, %v2066
      %v2068 = vrot.slane %v2054, %v2067
      %v2069 = vcombine.low %v2036, %v2052
      %v2070 = vcombine.high %v2036, %v2052
      %v2072 = vunpack.c.l.s4 1934713408
      %v2073 = vunpack.c.0.s8 %v2072
      %v2074 = vlaneseq
      %v2075 = vshrl.u32 %v2074, 7
      %v2076 = vsub.s32 %v2073, %v2075
      %v2077 = vrot.slane %v2069, %v2076
      %v2079 = vunpack.c.l.s4 1934713408
      %v2080 = vunpack.c.0.s8 %v2079
      %v2081 = vlaneseq
      %v2082 = vshrl.u32 %v2081, 7
      %v2083 = vsub.s32 %v2080, %v2082
      %v2084 = vrot.slane %v2070, %v2083
      %v2085 = vcombine.high %v2061, 0.0
      %v2086 = vcombine.high %v2068, 0.0
      %v2087 = vcombine.high %v2077, 0.0
      %v2088 = vcombine.high %v2084, 0.0
      %v2089 = vcombine.low %v1585, %v1592
      %v2091 = vunpack.c.l.s4 1983009808
      %v2092 = vunpack.c.0.s8 %v2091
      %v2093 = vlaneseq
      %v2094 = vshrl.u32 %v2093, 7
      %v2095 = vsub.s32 %v2092, %v2094
      %v2096 = vrot.slane %v2089, %v2095
      %v2097 = vcombine.low %v1609, %v1610
      %v2099 = vunpack.c.l.s4 1983009808
      %v2100 = vunpack.c.0.s8 %v2099
      %v2101 = vlaneseq
      %v2102 = vshrl.u32 %v2101, 7
      %v2103 = vsub.s32 %v2100, %v2102
      %v2104 = vrot.slane %v2097, %v2103
      %v2105 = vcombine.low %v1601, %v1608
      %v2107 = vunpack.c.l.s4 1983009808
      %v2108 = vunpack.c.0.s8 %v2107
      %v2109 = vlaneseq
      %v2110 = vshrl.u32 %v2109, 7
      %v2111 = vsub.s32 %v2108, %v2110
      %v2112 = vrot.slane %v2105, %v2111
      %v2113 = vcombine.low %v1611, %v1612
      %v2115 = vunpack.c.l.s4 1983009808
      %v2116 = vunpack.c.0.s8 %v2115
      %v2117 = vlaneseq
      %v2118 = vshrl.u32 %v2117, 7
      %v2119 = vsub.s32 %v2116, %v2118
      %v2120 = vrot.slane %v2113, %v2119
      %v2121 = vcombine.low %v2096, %v2104
      %v2122 = vcombine.high %v2096, %v2104
      %v2124 = vunpack.c.l.s4 1934713408
      %v2125 = vunpack.c.0.s8 %v2124
      %v2126 = vlaneseq
      %v2127 = vshrl.u32 %v2126, 7
      %v2128 = vsub.s32 %v2125, %v2127
      %v2129 = vrot.slane %v2121, %v2128
      %v2131 = vunpack.c.l.s4 1934713408
      %v2132 = vunpack.c.0.s8 %v2131
      %v2133 = vlaneseq
      %v2134 = vshrl.u32 %v2133, 7
      %v2135 = vsub.s32 %v2132, %v2134
      %v2136 = vrot.slane %v2122, %v2135
      %v2137 = vcombine.low %v2112, %v2120
      %v2138 = vcombine.high %v2112, %v2120
      %v2140 = vunpack.c.l.s4 1934713408
      %v2141 = vunpack.c.0.s8 %v2140
      %v2142 = vlaneseq
      %v2143 = vshrl.u32 %v2142, 7
      %v2144 = vsub.s32 %v2141, %v2143
      %v2145 = vrot.slane %v2137, %v2144
      %v2147 = vunpack.c.l.s4 1934713408
      %v2148 = vunpack.c.0.s8 %v2147
      %v2149 = vlaneseq
      %v2150 = vshrl.u32 %v2149, 7
      %v2151 = vsub.s32 %v2148, %v2150
      %v2152 = vrot.slane %v2138, %v2151
      %v2153 = vcombine.low %v2129, %v2145
      %v2154 = vcombine.high %v2129, %v2145
      %v2155 = vcombine.low %v2136, %v2152
      %v2156 = vcombine.high %v2136, %v2152
      %v2157 = vcombine.low %v1653, %v1660
      %v2159 = vunpack.c.l.s4 1983009808
      %v2160 = vunpack.c.0.s8 %v2159
      %v2161 = vlaneseq
      %v2162 = vshrl.u32 %v2161, 7
      %v2163 = vsub.s32 %v2160, %v2162
      %v2164 = vrot.slane %v2157, %v2163
      %v2165 = vcombine.low %v1677, %v1678
      %v2167 = vunpack.c.l.s4 1983009808
      %v2168 = vunpack.c.0.s8 %v2167
      %v2169 = vlaneseq
      %v2170 = vshrl.u32 %v2169, 7
      %v2171 = vsub.s32 %v2168, %v2170
      %v2172 = vrot.slane %v2165, %v2171
      %v2173 = vcombine.low %v1669, %v1676
      %v2175 = vunpack.c.l.s4 1983009808
      %v2176 = vunpack.c.0.s8 %v2175
      %v2177 = vlaneseq
      %v2178 = vshrl.u32 %v2177, 7
      %v2179 = vsub.s32 %v2176, %v2178
      %v2180 = vrot.slane %v2173, %v2179
      %v2181 = vcombine.low %v1679, %v1680
      %v2183 = vunpack.c.l.s4 1983009808
      %v2184 = vunpack.c.0.s8 %v2183
      %v2185 = vlaneseq
      %v2186 = vshrl.u32 %v2185, 7
      %v2187 = vsub.s32 %v2184, %v2186
      %v2188 = vrot.slane %v2181, %v2187
      %v2189 = vcombine.low %v2164, %v2172
      %v2190 = vcombine.high %v2164, %v2172
      %v2192 = vunpack.c.l.s4 1934713408
      %v2193 = vunpack.c.0.s8 %v2192
      %v2194 = vlaneseq
      %v2195 = vshrl.u32 %v2194, 7
      %v2196 = vsub.s32 %v2193, %v2195
      %v2197 = vrot.slane %v2189, %v2196
      %v2199 = vunpack.c.l.s4 1934713408
      %v2200 = vunpack.c.0.s8 %v2199
      %v2201 = vlaneseq
      %v2202 = vshrl.u32 %v2201, 7
      %v2203 = vsub.s32 %v2200, %v2202
      %v2204 = vrot.slane %v2190, %v2203
      %v2205 = vcombine.low %v2180, %v2188
      %v2206 = vcombine.high %v2180, %v2188
      %v2208 = vunpack.c.l.s4 1934713408
      %v2209 = vunpack.c.0.s8 %v2208
      %v2210 = vlaneseq
      %v2211 = vshrl.u32 %v2210, 7
      %v2212 = vsub.s32 %v2209, %v2211
      %v2213 = vrot.slane %v2205, %v2212
      %v2215 = vunpack.c.l.s4 1934713408
      %v2216 = vunpack.c.0.s8 %v2215
      %v2217 = vlaneseq
      %v2218 = vshrl.u32 %v2217, 7
      %v2219 = vsub.s32 %v2216, %v2218
      %v2220 = vrot.slane %v2206, %v2219
      %v2221 = vcombine.low %v2197, %v2213
      %v2222 = vcombine.high %v2197, %v2213
      %v2223 = vcombine.low %v2204, %v2220
      %v2224 = vcombine.high %v2204, %v2220
      %v2225 = vcombine.low %v1721, %v1728
      %v2227 = vunpack.c.l.s4 1983009808
      %v2228 = vunpack.c.0.s8 %v2227
      %v2229 = vlaneseq
      %v2230 = vshrl.u32 %v2229, 7
      %v2231 = vsub.s32 %v2228, %v2230
      %v2232 = vrot.slane %v2225, %v2231
      %v2233 = vcombine.low %v1745, %v1746
      %v2235 = vunpack.c.l.s4 1983009808
      %v2236 = vunpack.c.0.s8 %v2235
      %v2237 = vlaneseq
      %v2238 = vshrl.u32 %v2237, 7
      %v2239 = vsub.s32 %v2236, %v2238
      %v2240 = vrot.slane %v2233, %v2239
      %v2241 = vcombine.low %v1737, %v1744
      %v2243 = vunpack.c.l.s4 1983009808
      %v2244 = vunpack.c.0.s8 %v2243
      %v2245 = vlaneseq
      %v2246 = vshrl.u32 %v2245, 7
      %v2247 = vsub.s32 %v2244, %v2246
      %v2248 = vrot.slane %v2241, %v2247
      %v2249 = vcombine.low %v1747, %v1748
      %v2251 = vunpack.c.l.s4 1983009808
      %v2252 = vunpack.c.0.s8 %v2251
      %v2253 = vlaneseq
      %v2254 = vshrl.u32 %v2253, 7
      %v2255 = vsub.s32 %v2252, %v2254
      %v2256 = vrot.slane %v2249, %v2255
      %v2257 = vcombine.low %v2232, %v2240
      %v2258 = vcombine.high %v2232, %v2240
      %v2260 = vunpack.c.l.s4 1934713408
      %v2261 = vunpack.c.0.s8 %v2260
      %v2262 = vlaneseq
      %v2263 = vshrl.u32 %v2262, 7
      %v2264 = vsub.s32 %v2261, %v2263
      %v2265 = vrot.slane %v2257, %v2264
      %v2267 = vunpack.c.l.s4 1934713408
      %v2268 = vunpack.c.0.s8 %v2267
      %v2269 = vlaneseq
      %v2270 = vshrl.u32 %v2269, 7
      %v2271 = vsub.s32 %v2268, %v2270
      %v2272 = vrot.slane %v2258, %v2271
      %v2273 = vcombine.low %v2248, %v2256
      %v2274 = vcombine.high %v2248, %v2256
      %v2276 = vunpack.c.l.s4 1934713408
      %v2277 = vunpack.c.0.s8 %v2276
      %v2278 = vlaneseq
      %v2279 = vshrl.u32 %v2278, 7
      %v2280 = vsub.s32 %v2277, %v2279
      %v2281 = vrot.slane %v2273, %v2280
      %v2283 = vunpack.c.l.s4 1934713408
      %v2284 = vunpack.c.0.s8 %v2283
      %v2285 = vlaneseq
      %v2286 = vshrl.u32 %v2285, 7
      %v2287 = vsub.s32 %v2284, %v2286
      %v2288 = vrot.slane %v2274, %v2287
      %v2289 = vcombine.low %v2265, %v2281
      %v2290 = vcombine.high %v2265, %v2281
      %v2291 = vcombine.low %v2272, %v2288
      %v2292 = vcombine.high %v2272, %v2288
      %v2293 = vcombine.low %v1789, %v1796
      %v2295 = vunpack.c.l.s4 1983009808
      %v2296 = vunpack.c.0.s8 %v2295
      %v2297 = vlaneseq
      %v2298 = vshrl.u32 %v2297, 7
      %v2299 = vsub.s32 %v2296, %v2298
      %v2300 = vrot.slane %v2293, %v2299
      %v2301 = vcombine.low %v1813, %v1814
      %v2303 = vunpack.c.l.s4 1983009808
      %v2304 = vunpack.c.0.s8 %v2303
      %v2305 = vlaneseq
      %v2306 = vshrl.u32 %v2305, 7
      %v2307 = vsub.s32 %v2304, %v2306
      %v2308 = vrot.slane %v2301, %v2307
      %v2309 = vcombine.low %v1805, %v1812
      %v2311 = vunpack.c.l.s4 1983009808
      %v2312 = vunpack.c.0.s8 %v2311
      %v2313 = vlaneseq
      %v2314 = vshrl.u32 %v2313, 7
      %v2315 = vsub.s32 %v2312, %v2314
      %v2316 = vrot.slane %v2309, %v2315
      %v2317 = vcombine.low %v1815, %v1816
      %v2319 = vunpack.c.l.s4 1983009808
      %v2320 = vunpack.c.0.s8 %v2319
      %v2321 = vlaneseq
      %v2322 = vshrl.u32 %v2321, 7
      %v2323 = vsub.s32 %v2320, %v2322
      %v2324 = vrot.slane %v2317, %v2323
      %v2325 = vcombine.low %v2300, %v2308
      %v2326 = vcombine.high %v2300, %v2308
      %v2328 = vunpack.c.l.s4 1934713408
      %v2329 = vunpack.c.0.s8 %v2328
      %v2330 = vlaneseq
      %v2331 = vshrl.u32 %v2330, 7
      %v2332 = vsub.s32 %v2329, %v2331
      %v2333 = vrot.slane %v2325, %v2332
      %v2335 = vunpack.c.l.s4 1934713408
      %v2336 = vunpack.c.0.s8 %v2335
      %v2337 = vlaneseq
      %v2338 = vshrl.u32 %v2337, 7
      %v2339 = vsub.s32 %v2336, %v2338
      %v2340 = vrot.slane %v2326, %v2339
      %v2341 = vcombine.low %v2316, %v2324
      %v2342 = vcombine.high %v2316, %v2324
      %v2344 = vunpack.c.l.s4 1934713408
      %v2345 = vunpack.c.0.s8 %v2344
      %v2346 = vlaneseq
      %v2347 = vshrl.u32 %v2346, 7
      %v2348 = vsub.s32 %v2345, %v2347
      %v2349 = vrot.slane %v2341, %v2348
      %v2351 = vunpack.c.l.s4 1934713408
      %v2352 = vunpack.c.0.s8 %v2351
      %v2353 = vlaneseq
      %v2354 = vshrl.u32 %v2353, 7
      %v2355 = vsub.s32 %v2352, %v2354
      %v2356 = vrot.slane %v2342, %v2355
      %v2357 = vcombine.low %v2333, %v2349
      %v2358 = vcombine.high %v2333, %v2349
      %v2359 = vcombine.low %v2340, %v2356
      %v2360 = vcombine.high %v2340, %v2356
      %v2361 = vcombine.low %v1857, %v1864
      %v2363 = vunpack.c.l.s4 1983009808
      %v2364 = vunpack.c.0.s8 %v2363
      %v2365 = vlaneseq
      %v2366 = vshrl.u32 %v2365, 7
      %v2367 = vsub.s32 %v2364, %v2366
      %v2368 = vrot.slane %v2361, %v2367
      %v2369 = vcombine.low %v1881, %v1882
      %v2371 = vunpack.c.l.s4 1983009808
      %v2372 = vunpack.c.0.s8 %v2371
      %v2373 = vlaneseq
      %v2374 = vshrl.u32 %v2373, 7
      %v2375 = vsub.s32 %v2372, %v2374
      %v2376 = vrot.slane %v2369, %v2375
      %v2377 = vcombine.low %v1873, %v1880
      %v2379 = vunpack.c.l.s4 1983009808
      %v2380 = vunpack.c.0.s8 %v2379
      %v2381 = vlaneseq
      %v2382 = vshrl.u32 %v2381, 7
      %v2383 = vsub.s32 %v2380, %v2382
      %v2384 = vrot.slane %v2377, %v2383
      %v2385 = vcombine.low %v1883, %v1884
      %v2387 = vunpack.c.l.s4 1983009808
      %v2388 = vunpack.c.0.s8 %v2387
      %v2389 = vlaneseq
      %v2390 = vshrl.u32 %v2389, 7
      %v2391 = vsub.s32 %v2388, %v2390
      %v2392 = vrot.slane %v2385, %v2391
      %v2393 = vcombine.low %v2368, %v2376
      %v2394 = vcombine.high %v2368, %v2376
      %v2396 = vunpack.c.l.s4 1934713408
      %v2397 = vunpack.c.0.s8 %v2396
      %v2398 = vlaneseq
      %v2399 = vshrl.u32 %v2398, 7
      %v2400 = vsub.s32 %v2397, %v2399
      %v2401 = vrot.slane %v2393, %v2400
      %v2403 = vunpack.c.l.s4 1934713408
      %v2404 = vunpack.c.0.s8 %v2403
      %v2405 = vlaneseq
      %v2406 = vshrl.u32 %v2405, 7
      %v2407 = vsub.s32 %v2404, %v2406
      %v2408 = vrot.slane %v2394, %v2407
      %v2409 = vcombine.low %v2384, %v2392
      %v2410 = vcombine.high %v2384, %v2392
      %v2412 = vunpack.c.l.s4 1934713408
      %v2413 = vunpack.c.0.s8 %v2412
      %v2414 = vlaneseq
      %v2415 = vshrl.u32 %v2414, 7
      %v2416 = vsub.s32 %v2413, %v2415
      %v2417 = vrot.slane %v2409, %v2416
      %v2419 = vunpack.c.l.s4 1934713408
      %v2420 = vunpack.c.0.s8 %v2419
      %v2421 = vlaneseq
      %v2422 = vshrl.u32 %v2421, 7
      %v2423 = vsub.s32 %v2420, %v2422
      %v2424 = vrot.slane %v2410, %v2423
      %v2425 = vcombine.low %v2401, %v2417
      %v2426 = vcombine.high %v2401, %v2417
      %v2427 = vcombine.low %v2408, %v2424
      %v2428 = vcombine.high %v2408, %v2424
      %v2429 = vcombine.low %v1925, %v1932
      %v2431 = vunpack.c.l.s4 1983009808
      %v2432 = vunpack.c.0.s8 %v2431
      %v2433 = vlaneseq
      %v2434 = vshrl.u32 %v2433, 7
      %v2435 = vsub.s32 %v2432, %v2434
      %v2436 = vrot.slane %v2429, %v2435
      %v2437 = vcombine.low %v1949, %v1950
      %v2439 = vunpack.c.l.s4 1983009808
      %v2440 = vunpack.c.0.s8 %v2439
      %v2441 = vlaneseq
      %v2442 = vshrl.u32 %v2441, 7
      %v2443 = vsub.s32 %v2440, %v2442
      %v2444 = vrot.slane %v2437, %v2443
      %v2445 = vcombine.low %v1941, %v1948
      %v2447 = vunpack.c.l.s4 1983009808
      %v2448 = vunpack.c.0.s8 %v2447
      %v2449 = vlaneseq
      %v2450 = vshrl.u32 %v2449, 7
      %v2451 = vsub.s32 %v2448, %v2450
      %v2452 = vrot.slane %v2445, %v2451
      %v2453 = vcombine.low %v1951, %v1952
      %v2455 = vunpack.c.l.s4 1983009808
      %v2456 = vunpack.c.0.s8 %v2455
      %v2457 = vlaneseq
      %v2458 = vshrl.u32 %v2457, 7
      %v2459 = vsub.s32 %v2456, %v2458
      %v2460 = vrot.slane %v2453, %v2459
      %v2461 = vcombine.low %v2436, %v2444
      %v2462 = vcombine.high %v2436, %v2444
      %v2464 = vunpack.c.l.s4 1934713408
      %v2465 = vunpack.c.0.s8 %v2464
      %v2466 = vlaneseq
      %v2467 = vshrl.u32 %v2466, 7
      %v2468 = vsub.s32 %v2465, %v2467
      %v2469 = vrot.slane %v2461, %v2468
      %v2471 = vunpack.c.l.s4 1934713408
      %v2472 = vunpack.c.0.s8 %v2471
      %v2473 = vlaneseq
      %v2474 = vshrl.u32 %v2473, 7
      %v2475 = vsub.s32 %v2472, %v2474
      %v2476 = vrot.slane %v2462, %v2475
      %v2477 = vcombine.low %v2452, %v2460
      %v2478 = vcombine.high %v2452, %v2460
      %v2480 = vunpack.c.l.s4 1934713408
      %v2481 = vunpack.c.0.s8 %v2480
      %v2482 = vlaneseq
      %v2483 = vshrl.u32 %v2482, 7
      %v2484 = vsub.s32 %v2481, %v2483
      %v2485 = vrot.slane %v2477, %v2484
      %v2487 = vunpack.c.l.s4 1934713408
      %v2488 = vunpack.c.0.s8 %v2487
      %v2489 = vlaneseq
      %v2490 = vshrl.u32 %v2489, 7
      %v2491 = vsub.s32 %v2488, %v2490
      %v2492 = vrot.slane %v2478, %v2491
      %v2493 = vcombine.low %v2469, %v2485
      %v2494 = vcombine.high %v2469, %v2485
      %v2495 = vcombine.low %v2476, %v2492
      %v2496 = vcombine.high %v2476, %v2492
      %v2497 = vcombine.low %v1993, %v2000
      %v2499 = vunpack.c.l.s4 1983009808
      %v2500 = vunpack.c.0.s8 %v2499
      %v2501 = vlaneseq
      %v2502 = vshrl.u32 %v2501, 7
      %v2503 = vsub.s32 %v2500, %v2502
      %v2504 = vrot.slane %v2497, %v2503
      %v2505 = vcombine.low %v2017, %v2018
      %v2507 = vunpack.c.l.s4 1983009808
      %v2508 = vunpack.c.0.s8 %v2507
      %v2509 = vlaneseq
      %v2510 = vshrl.u32 %v2509, 7
      %v2511 = vsub.s32 %v2508, %v2510
      %v2512 = vrot.slane %v2505, %v2511
      %v2513 = vcombine.low %v2009, %v2016
      %v2515 = vunpack.c.l.s4 1983009808
      %v2516 = vunpack.c.0.s8 %v2515
      %v2517 = vlaneseq
      %v2518 = vshrl.u32 %v2517, 7
      %v2519 = vsub.s32 %v2516, %v2518
      %v2520 = vrot.slane %v2513, %v2519
      %v2521 = vcombine.low %v2019, %v2020
      %v2523 = vunpack.c.l.s4 1983009808
      %v2524 = vunpack.c.0.s8 %v2523
      %v2525 = vlaneseq
      %v2526 = vshrl.u32 %v2525, 7
      %v2527 = vsub.s32 %v2524, %v2526
      %v2528 = vrot.slane %v2521, %v2527
      %v2529 = vcombine.low %v2504, %v2512
      %v2530 = vcombine.high %v2504, %v2512
      %v2532 = vunpack.c.l.s4 1934713408
      %v2533 = vunpack.c.0.s8 %v2532
      %v2534 = vlaneseq
      %v2535 = vshrl.u32 %v2534, 7
      %v2536 = vsub.s32 %v2533, %v2535
      %v2537 = vrot.slane %v2529, %v2536
      %v2539 = vunpack.c.l.s4 1934713408
      %v2540 = vunpack.c.0.s8 %v2539
      %v2541 = vlaneseq
      %v2542 = vshrl.u32 %v2541, 7
      %v2543 = vsub.s32 %v2540, %v2542
      %v2544 = vrot.slane %v2530, %v2543
      %v2545 = vcombine.low %v2520, %v2528
      %v2546 = vcombine.high %v2520, %v2528
      %v2548 = vunpack.c.l.s4 1934713408
      %v2549 = vunpack.c.0.s8 %v2548
      %v2550 = vlaneseq
      %v2551 = vshrl.u32 %v2550, 7
      %v2552 = vsub.s32 %v2549, %v2551
      %v2553 = vrot.slane %v2545, %v2552
      %v2555 = vunpack.c.l.s4 1934713408
      %v2556 = vunpack.c.0.s8 %v2555
      %v2557 = vlaneseq
      %v2558 = vshrl.u32 %v2557, 7
      %v2559 = vsub.s32 %v2556, %v2558
      %v2560 = vrot.slane %v2546, %v2559
      %v2561 = vcombine.low %v2537, %v2553
      %v2562 = vcombine.high %v2537, %v2553
      %v2563 = vcombine.low %v2544, %v2560
      %v2564 = vcombine.high %v2544, %v2560
      %v2565 = vcombine.low %v2061, %v2068
      %v2567 = vunpack.c.l.s4 1983009808
      %v2568 = vunpack.c.0.s8 %v2567
      %v2569 = vlaneseq
      %v2570 = vshrl.u32 %v2569, 7
      %v2571 = vsub.s32 %v2568, %v2570
      %v2572 = vrot.slane %v2565, %v2571
      %v2573 = vcombine.low %v2085, %v2086
      %v2575 = vunpack.c.l.s4 1983009808
      %v2576 = vunpack.c.0.s8 %v2575
      %v2577 = vlaneseq
      %v2578 = vshrl.u32 %v2577, 7
      %v2579 = vsub.s32 %v2576, %v2578
      %v2580 = vrot.slane %v2573, %v2579
      %v2581 = vcombine.low %v2077, %v2084
      %v2583 = vunpack.c.l.s4 1983009808
      %v2584 = vunpack.c.0.s8 %v2583
      %v2585 = vlaneseq
      %v2586 = vshrl.u32 %v2585, 7
      %v2587 = vsub.s32 %v2584, %v2586
      %v2588 = vrot.slane %v2581, %v2587
      %v2589 = vcombine.low %v2087, %v2088
      %v2591 = vunpack.c.l.s4 1983009808
      %v2592 = vunpack.c.0.s8 %v2591
      %v2593 = vlaneseq
      %v2594 = vshrl.u32 %v2593, 7
      %v2595 = vsub.s32 %v2592, %v2594
      %v2596 = vrot.slane %v2589, %v2595
      %v2597 = vcombine.low %v2572, %v2580
      %v2598 = vcombine.high %v2572, %v2580
      %v2600 = vunpack.c.l.s4 1934713408
      %v2601 = vunpack.c.0.s8 %v2600
      %v2602 = vlaneseq
      %v2603 = vshrl.u32 %v2602, 7
      %v2604 = vsub.s32 %v2601, %v2603
      %v2605 = vrot.slane %v2597, %v2604
      %v2607 = vunpack.c.l.s4 1934713408
      %v2608 = vunpack.c.0.s8 %v2607
      %v2609 = vlaneseq
      %v2610 = vshrl.u32 %v2609, 7
      %v2611 = vsub.s32 %v2608, %v2610
      %v2612 = vrot.slane %v2598, %v2611
      %v2613 = vcombine.low %v2588, %v2596
      %v2614 = vcombine.high %v2588, %v2596
      %v2616 = vunpack.c.l.s4 1934713408
      %v2617 = vunpack.c.0.s8 %v2616
      %v2618 = vlaneseq
      %v2619 = vshrl.u32 %v2618, 7
      %v2620 = vsub.s32 %v2617, %v2619
      %v2621 = vrot.slane %v2613, %v2620
      %v2623 = vunpack.c.l.s4 1934713408
      %v2624 = vunpack.c.0.s8 %v2623
      %v2625 = vlaneseq
      %v2626 = vshrl.u32 %v2625, 7
      %v2627 = vsub.s32 %v2624, %v2626
      %v2628 = vrot.slane %v2614, %v2627
      %v2629 = vcombine.low %v2605, %v2621
      %v2630 = vcombine.high %v2605, %v2621
      %v2631 = vcombine.low %v2612, %v2628
      %v2632 = vcombine.high %v2612, %v2628
      %v2633 = vpack.c.bf16 %v2221, %v2153
      %v2634 = vpack.c.bf16 %v2357, %v2289
      %v2635 = vpack.c.bf16 %v2493, %v2425
      %v2636 = vpack.c.bf16 %v2629, %v2561
      %v2637 = vpack.c.bf16 %v2222, %v2154
      %v2638 = vpack.c.bf16 %v2358, %v2290
      %v2639 = vpack.c.bf16 %v2494, %v2426
      %v2640 = vpack.c.bf16 %v2630, %v2562
      %v2641 = vpack.c.bf16 %v2223, %v2155
      %v2642 = vpack.c.bf16 %v2359, %v2291
      %v2643 = vpack.c.bf16 %v2495, %v2427
      %v2644 = vpack.c.bf16 %v2631, %v2563
      %v2645 = vpack.c.bf16 %v2224, %v2156
      %v2646 = vpack.c.bf16 %v2360, %v2292
      %v2647 = vpack.c.bf16 %v2496, %v2428
      %v2648 = vpack.c.bf16 %v2632, %v2564
      %2657 = vrot.lane.b32.xlu0 %v1364, 96
      %v2658 = vpop.permute.xlu0 %2657
      %2659 = vrot.lane.b32.xlu0 %v1368, 96
      %v2660 = vpop.permute.xlu0 %2659
      %2661 = vrot.lane.b32.xlu0 %v1374, 96
      %v2662 = vpop.permute.xlu0 %2661
      %2663 = vrot.lane.b32.xlu0 %v1378, 96
      %v2664 = vpop.permute.xlu0 %2663
      %2665 = vrot.lane.b32.xlu0 %v1384, 96
      %v2666 = vpop.permute.xlu0 %2665
      %2667 = vrot.lane.b32.xlu0 %v1388, 96
      %v2668 = vpop.permute.xlu0 %2667
      %2669 = vrot.lane.b32.xlu0 %v1394, 96
      %v2670 = vpop.permute.xlu0 %2669
      %2671 = vrot.lane.b32.xlu0 %v1398, 96
      %v2672 = vpop.permute.xlu0 %2671
      %2681 = vrot.lane.b32.xlu0 %v1364, 64
      %v2682 = vpop.permute.xlu0 %2681
      %2683 = vrot.lane.b32.xlu0 %v1368, 64
      %v2684 = vpop.permute.xlu0 %2683
      %2685 = vrot.lane.b32.xlu0 %v1374, 64
      %v2686 = vpop.permute.xlu0 %2685
      %2687 = vrot.lane.b32.xlu0 %v1378, 64
      %v2688 = vpop.permute.xlu0 %2687
      %2689 = vrot.lane.b32.xlu0 %v1384, 64
      %v2690 = vpop.permute.xlu0 %2689
      %2691 = vrot.lane.b32.xlu0 %v1388, 64
      %v2692 = vpop.permute.xlu0 %2691
      %2693 = vrot.lane.b32.xlu0 %v1394, 64
      %v2694 = vpop.permute.xlu0 %2693
      %2695 = vrot.lane.b32.xlu0 %v1398, 64
      %v2696 = vpop.permute.xlu0 %2695
      %2705 = vrot.lane.b32.xlu0 %v1364, 32
      %v2706 = vpop.permute.xlu0 %2705
      %2707 = vrot.lane.b32.xlu0 %v1368, 32
      %v2708 = vpop.permute.xlu0 %2707
      %2709 = vrot.lane.b32.xlu0 %v1374, 32
      %v2710 = vpop.permute.xlu0 %2709
      %2711 = vrot.lane.b32.xlu0 %v1378, 32
      %v2712 = vpop.permute.xlu0 %2711
      %2713 = vrot.lane.b32.xlu0 %v1384, 32
      %v2714 = vpop.permute.xlu0 %2713
      %2715 = vrot.lane.b32.xlu0 %v1388, 32
      %v2716 = vpop.permute.xlu0 %2715
      %2717 = vrot.lane.b32.xlu0 %v1394, 32
      %v2718 = vpop.permute.xlu0 %2717
      %2719 = vrot.lane.b32.xlu0 %v1398, 32
      %v2720 = vpop.permute.xlu0 %2719
      %v2729 = vcombine.low %v1364, %v2682
      %v2730 = vcombine.high %v1364, %v2682
      %v2732 = vunpack.c.l.s4 1983009808
      %v2733 = vunpack.c.0.s8 %v2732
      %v2734 = vlaneseq
      %v2735 = vshrl.u32 %v2734, 7
      %v2736 = vsub.s32 %v2733, %v2735
      %v2737 = vrot.slane %v2729, %v2736
      %v2739 = vunpack.c.l.s4 1983009808
      %v2740 = vunpack.c.0.s8 %v2739
      %v2741 = vlaneseq
      %v2742 = vshrl.u32 %v2741, 7
      %v2743 = vsub.s32 %v2740, %v2742
      %v2744 = vrot.slane %v2730, %v2743
      %v2745 = vcombine.low %v2658, %v2706
      %v2746 = vcombine.high %v2658, %v2706
      %v2748 = vunpack.c.l.s4 1983009808
      %v2749 = vunpack.c.0.s8 %v2748
      %v2750 = vlaneseq
      %v2751 = vshrl.u32 %v2750, 7
      %v2752 = vsub.s32 %v2749, %v2751
      %v2753 = vrot.slane %v2745, %v2752
      %v2755 = vunpack.c.l.s4 1983009808
      %v2756 = vunpack.c.0.s8 %v2755
      %v2757 = vlaneseq
      %v2758 = vshrl.u32 %v2757, 7
      %v2759 = vsub.s32 %v2756, %v2758
      %v2760 = vrot.slane %v2746, %v2759
      %v2761 = vcombine.low %v2737, %v2753
      %v2762 = vcombine.high %v2737, %v2753
      %v2764 = vunpack.c.l.s4 1934713408
      %v2765 = vunpack.c.0.s8 %v2764
      %v2766 = vlaneseq
      %v2767 = vshrl.u32 %v2766, 7
      %v2768 = vsub.s32 %v2765, %v2767
      %v2769 = vrot.slane %v2761, %v2768
      %v2771 = vunpack.c.l.s4 1934713408
      %v2772 = vunpack.c.0.s8 %v2771
      %v2773 = vlaneseq
      %v2774 = vshrl.u32 %v2773, 7
      %v2775 = vsub.s32 %v2772, %v2774
      %v2776 = vrot.slane %v2762, %v2775
      %v2777 = vcombine.low %v2744, %v2760
      %v2778 = vcombine.high %v2744, %v2760
      %v2780 = vunpack.c.l.s4 1934713408
      %v2781 = vunpack.c.0.s8 %v2780
      %v2782 = vlaneseq
      %v2783 = vshrl.u32 %v2782, 7
      %v2784 = vsub.s32 %v2781, %v2783
      %v2785 = vrot.slane %v2777, %v2784
      %v2787 = vunpack.c.l.s4 1934713408
      %v2788 = vunpack.c.0.s8 %v2787
      %v2789 = vlaneseq
      %v2790 = vshrl.u32 %v2789, 7
      %v2791 = vsub.s32 %v2788, %v2790
      %v2792 = vrot.slane %v2778, %v2791
      %v2793 = vcombine.high %v2769, 0.0
      %v2794 = vcombine.high %v2776, 0.0
      %v2795 = vcombine.high %v2785, 0.0
      %v2796 = vcombine.high %v2792, 0.0
      %v2797 = vcombine.low %v1368, %v2684
      %v2798 = vcombine.high %v1368, %v2684
      %v2800 = vunpack.c.l.s4 1983009808
      %v2801 = vunpack.c.0.s8 %v2800
      %v2802 = vlaneseq
      %v2803 = vshrl.u32 %v2802, 7
      %v2804 = vsub.s32 %v2801, %v2803
      %v2805 = vrot.slane %v2797, %v2804
      %v2807 = vunpack.c.l.s4 1983009808
      %v2808 = vunpack.c.0.s8 %v2807
      %v2809 = vlaneseq
      %v2810 = vshrl.u32 %v2809, 7
      %v2811 = vsub.s32 %v2808, %v2810
      %v2812 = vrot.slane %v2798, %v2811
      %v2813 = vcombine.low %v2660, %v2708
      %v2814 = vcombine.high %v2660, %v2708
      %v2816 = vunpack.c.l.s4 1983009808
      %v2817 = vunpack.c.0.s8 %v2816
      %v2818 = vlaneseq
      %v2819 = vshrl.u32 %v2818, 7
      %v2820 = vsub.s32 %v2817, %v2819
      %v2821 = vrot.slane %v2813, %v2820
      %v2823 = vunpack.c.l.s4 1983009808
      %v2824 = vunpack.c.0.s8 %v2823
      %v2825 = vlaneseq
      %v2826 = vshrl.u32 %v2825, 7
      %v2827 = vsub.s32 %v2824, %v2826
      %v2828 = vrot.slane %v2814, %v2827
      %v2829 = vcombine.low %v2805, %v2821
      %v2830 = vcombine.high %v2805, %v2821
      %v2832 = vunpack.c.l.s4 1934713408
      %v2833 = vunpack.c.0.s8 %v2832
      %v2834 = vlaneseq
      %v2835 = vshrl.u32 %v2834, 7
      %v2836 = vsub.s32 %v2833, %v2835
      %v2837 = vrot.slane %v2829, %v2836
      %v2839 = vunpack.c.l.s4 1934713408
      %v2840 = vunpack.c.0.s8 %v2839
      %v2841 = vlaneseq
      %v2842 = vshrl.u32 %v2841, 7
      %v2843 = vsub.s32 %v2840, %v2842
      %v2844 = vrot.slane %v2830, %v2843
      %v2845 = vcombine.low %v2812, %v2828
      %v2846 = vcombine.high %v2812, %v2828
      %v2848 = vunpack.c.l.s4 1934713408
      %v2849 = vunpack.c.0.s8 %v2848
      %v2850 = vlaneseq
      %v2851 = vshrl.u32 %v2850, 7
      %v2852 = vsub.s32 %v2849, %v2851
      %v2853 = vrot.slane %v2845, %v2852
      %v2855 = vunpack.c.l.s4 1934713408
      %v2856 = vunpack.c.0.s8 %v2855
      %v2857 = vlaneseq
      %v2858 = vshrl.u32 %v2857, 7
      %v2859 = vsub.s32 %v2856, %v2858
      %v2860 = vrot.slane %v2846, %v2859
      %v2861 = vcombine.high %v2837, 0.0
      %v2862 = vcombine.high %v2844, 0.0
      %v2863 = vcombine.high %v2853, 0.0
      %v2864 = vcombine.high %v2860, 0.0
      %v2865 = vcombine.low %v1374, %v2686
      %v2866 = vcombine.high %v1374, %v2686
      %v2868 = vunpack.c.l.s4 1983009808
      %v2869 = vunpack.c.0.s8 %v2868
      %v2870 = vlaneseq
      %v2871 = vshrl.u32 %v2870, 7
      %v2872 = vsub.s32 %v2869, %v2871
      %v2873 = vrot.slane %v2865, %v2872
      %v2875 = vunpack.c.l.s4 1983009808
      %v2876 = vunpack.c.0.s8 %v2875
      %v2877 = vlaneseq
      %v2878 = vshrl.u32 %v2877, 7
      %v2879 = vsub.s32 %v2876, %v2878
      %v2880 = vrot.slane %v2866, %v2879
      %v2881 = vcombine.low %v2662, %v2710
      %v2882 = vcombine.high %v2662, %v2710
      %v2884 = vunpack.c.l.s4 1983009808
      %v2885 = vunpack.c.0.s8 %v2884
      %v2886 = vlaneseq
      %v2887 = vshrl.u32 %v2886, 7
      %v2888 = vsub.s32 %v2885, %v2887
      %v2889 = vrot.slane %v2881, %v2888
      %v2891 = vunpack.c.l.s4 1983009808
      %v2892 = vunpack.c.0.s8 %v2891
      %v2893 = vlaneseq
      %v2894 = vshrl.u32 %v2893, 7
      %v2895 = vsub.s32 %v2892, %v2894
      %v2896 = vrot.slane %v2882, %v2895
      %v2897 = vcombine.low %v2873, %v2889
      %v2898 = vcombine.high %v2873, %v2889
      %v2900 = vunpack.c.l.s4 1934713408
      %v2901 = vunpack.c.0.s8 %v2900
      %v2902 = vlaneseq
      %v2903 = vshrl.u32 %v2902, 7
      %v2904 = vsub.s32 %v2901, %v2903
      %v2905 = vrot.slane %v2897, %v2904
      %v2907 = vunpack.c.l.s4 1934713408
      %v2908 = vunpack.c.0.s8 %v2907
      %v2909 = vlaneseq
      %v2910 = vshrl.u32 %v2909, 7
      %v2911 = vsub.s32 %v2908, %v2910
      %v2912 = vrot.slane %v2898, %v2911
      %v2913 = vcombine.low %v2880, %v2896
      %v2914 = vcombine.high %v2880, %v2896
      %v2916 = vunpack.c.l.s4 1934713408
      %v2917 = vunpack.c.0.s8 %v2916
      %v2918 = vlaneseq
      %v2919 = vshrl.u32 %v2918, 7
      %v2920 = vsub.s32 %v2917, %v2919
      %v2921 = vrot.slane %v2913, %v2920
      %v2923 = vunpack.c.l.s4 1934713408
      %v2924 = vunpack.c.0.s8 %v2923
      %v2925 = vlaneseq
      %v2926 = vshrl.u32 %v2925, 7
      %v2927 = vsub.s32 %v2924, %v2926
      %v2928 = vrot.slane %v2914, %v2927
      %v2929 = vcombine.high %v2905, 0.0
      %v2930 = vcombine.high %v2912, 0.0
      %v2931 = vcombine.high %v2921, 0.0
      %v2932 = vcombine.high %v2928, 0.0
      %v2933 = vcombine.low %v1378, %v2688
      %v2934 = vcombine.high %v1378, %v2688
      %v2936 = vunpack.c.l.s4 1983009808
      %v2937 = vunpack.c.0.s8 %v2936
      %v2938 = vlaneseq
      %v2939 = vshrl.u32 %v2938, 7
      %v2940 = vsub.s32 %v2937, %v2939
      %v2941 = vrot.slane %v2933, %v2940
      %v2943 = vunpack.c.l.s4 1983009808
      %v2944 = vunpack.c.0.s8 %v2943
      %v2945 = vlaneseq
      %v2946 = vshrl.u32 %v2945, 7
      %v2947 = vsub.s32 %v2944, %v2946
      %v2948 = vrot.slane %v2934, %v2947
      %v2949 = vcombine.low %v2664, %v2712
      %v2950 = vcombine.high %v2664, %v2712
      %v2952 = vunpack.c.l.s4 1983009808
      %v2953 = vunpack.c.0.s8 %v2952
      %v2954 = vlaneseq
      %v2955 = vshrl.u32 %v2954, 7
      %v2956 = vsub.s32 %v2953, %v2955
      %v2957 = vrot.slane %v2949, %v2956
      %v2959 = vunpack.c.l.s4 1983009808
      %v2960 = vunpack.c.0.s8 %v2959
      %v2961 = vlaneseq
      %v2962 = vshrl.u32 %v2961, 7
      %v2963 = vsub.s32 %v2960, %v2962
      %v2964 = vrot.slane %v2950, %v2963
      %v2965 = vcombine.low %v2941, %v2957
      %v2966 = vcombine.high %v2941, %v2957
      %v2968 = vunpack.c.l.s4 1934713408
      %v2969 = vunpack.c.0.s8 %v2968
      %v2970 = vlaneseq
      %v2971 = vshrl.u32 %v2970, 7
      %v2972 = vsub.s32 %v2969, %v2971
      %v2973 = vrot.slane %v2965, %v2972
      %v2975 = vunpack.c.l.s4 1934713408
      %v2976 = vunpack.c.0.s8 %v2975
      %v2977 = vlaneseq
      %v2978 = vshrl.u32 %v2977, 7
      %v2979 = vsub.s32 %v2976, %v2978
      %v2980 = vrot.slane %v2966, %v2979
      %v2981 = vcombine.low %v2948, %v2964
      %v2982 = vcombine.high %v2948, %v2964
      %v2984 = vunpack.c.l.s4 1934713408
      %v2985 = vunpack.c.0.s8 %v2984
      %v2986 = vlaneseq
      %v2987 = vshrl.u32 %v2986, 7
      %v2988 = vsub.s32 %v2985, %v2987
      %v2989 = vrot.slane %v2981, %v2988
      %v2991 = vunpack.c.l.s4 1934713408
      %v2992 = vunpack.c.0.s8 %v2991
      %v2993 = vlaneseq
      %v2994 = vshrl.u32 %v2993, 7
      %v2995 = vsub.s32 %v2992, %v2994
      %v2996 = vrot.slane %v2982, %v2995
      %v2997 = vcombine.high %v2973, 0.0
      %v2998 = vcombine.high %v2980, 0.0
      %v2999 = vcombine.high %v2989, 0.0
      %v3000 = vcombine.high %v2996, 0.0
      %v3001 = vcombine.low %v1384, %v2690
      %v3002 = vcombine.high %v1384, %v2690
      %v3004 = vunpack.c.l.s4 1983009808
      %v3005 = vunpack.c.0.s8 %v3004
      %v3006 = vlaneseq
      %v3007 = vshrl.u32 %v3006, 7
      %v3008 = vsub.s32 %v3005, %v3007
      %v3009 = vrot.slane %v3001, %v3008
      %v3011 = vunpack.c.l.s4 1983009808
      %v3012 = vunpack.c.0.s8 %v3011
      %v3013 = vlaneseq
      %v3014 = vshrl.u32 %v3013, 7
      %v3015 = vsub.s32 %v3012, %v3014
      %v3016 = vrot.slane %v3002, %v3015
      %v3017 = vcombine.low %v2666, %v2714
      %v3018 = vcombine.high %v2666, %v2714
      %v3020 = vunpack.c.l.s4 1983009808
      %v3021 = vunpack.c.0.s8 %v3020
      %v3022 = vlaneseq
      %v3023 = vshrl.u32 %v3022, 7
      %v3024 = vsub.s32 %v3021, %v3023
      %v3025 = vrot.slane %v3017, %v3024
      %v3027 = vunpack.c.l.s4 1983009808
      %v3028 = vunpack.c.0.s8 %v3027
      %v3029 = vlaneseq
      %v3030 = vshrl.u32 %v3029, 7
      %v3031 = vsub.s32 %v3028, %v3030
      %v3032 = vrot.slane %v3018, %v3031
      %v3033 = vcombine.low %v3009, %v3025
      %v3034 = vcombine.high %v3009, %v3025
      %v3036 = vunpack.c.l.s4 1934713408
      %v3037 = vunpack.c.0.s8 %v3036
      %v3038 = vlaneseq
      %v3039 = vshrl.u32 %v3038, 7
      %v3040 = vsub.s32 %v3037, %v3039
      %v3041 = vrot.slane %v3033, %v3040
      %v3043 = vunpack.c.l.s4 1934713408
      %v3044 = vunpack.c.0.s8 %v3043
      %v3045 = vlaneseq
      %v3046 = vshrl.u32 %v3045, 7
      %v3047 = vsub.s32 %v3044, %v3046
      %v3048 = vrot.slane %v3034, %v3047
      %v3049 = vcombine.low %v3016, %v3032
      %v3050 = vcombine.high %v3016, %v3032
      %v3052 = vunpack.c.l.s4 1934713408
      %v3053 = vunpack.c.0.s8 %v3052
      %v3054 = vlaneseq
      %v3055 = vshrl.u32 %v3054, 7
      %v3056 = vsub.s32 %v3053, %v3055
      %v3057 = vrot.slane %v3049, %v3056
      %v3059 = vunpack.c.l.s4 1934713408
      %v3060 = vunpack.c.0.s8 %v3059
      %v3061 = vlaneseq
      %v3062 = vshrl.u32 %v3061, 7
      %v3063 = vsub.s32 %v3060, %v3062
      %v3064 = vrot.slane %v3050, %v3063
      %v3065 = vcombine.high %v3041, 0.0
      %v3066 = vcombine.high %v3048, 0.0
      %v3067 = vcombine.high %v3057, 0.0
      %v3068 = vcombine.high %v3064, 0.0
      %v3069 = vcombine.low %v1388, %v2692
      %v3070 = vcombine.high %v1388, %v2692
      %v3072 = vunpack.c.l.s4 1983009808
      %v3073 = vunpack.c.0.s8 %v3072
      %v3074 = vlaneseq
      %v3075 = vshrl.u32 %v3074, 7
      %v3076 = vsub.s32 %v3073, %v3075
      %v3077 = vrot.slane %v3069, %v3076
      %v3079 = vunpack.c.l.s4 1983009808
      %v3080 = vunpack.c.0.s8 %v3079
      %v3081 = vlaneseq
      %v3082 = vshrl.u32 %v3081, 7
      %v3083 = vsub.s32 %v3080, %v3082
      %v3084 = vrot.slane %v3070, %v3083
      %v3085 = vcombine.low %v2668, %v2716
      %v3086 = vcombine.high %v2668, %v2716
      %v3088 = vunpack.c.l.s4 1983009808
      %v3089 = vunpack.c.0.s8 %v3088
      %v3090 = vlaneseq
      %v3091 = vshrl.u32 %v3090, 7
      %v3092 = vsub.s32 %v3089, %v3091
      %v3093 = vrot.slane %v3085, %v3092
      %v3095 = vunpack.c.l.s4 1983009808
      %v3096 = vunpack.c.0.s8 %v3095
      %v3097 = vlaneseq
      %v3098 = vshrl.u32 %v3097, 7
      %v3099 = vsub.s32 %v3096, %v3098
      %v3100 = vrot.slane %v3086, %v3099
      %v3101 = vcombine.low %v3077, %v3093
      %v3102 = vcombine.high %v3077, %v3093
      %v3104 = vunpack.c.l.s4 1934713408
      %v3105 = vunpack.c.0.s8 %v3104
      %v3106 = vlaneseq
      %v3107 = vshrl.u32 %v3106, 7
      %v3108 = vsub.s32 %v3105, %v3107
      %v3109 = vrot.slane %v3101, %v3108
      %v3111 = vunpack.c.l.s4 1934713408
      %v3112 = vunpack.c.0.s8 %v3111
      %v3113 = vlaneseq
      %v3114 = vshrl.u32 %v3113, 7
      %v3115 = vsub.s32 %v3112, %v3114
      %v3116 = vrot.slane %v3102, %v3115
      %v3117 = vcombine.low %v3084, %v3100
      %v3118 = vcombine.high %v3084, %v3100
      %v3120 = vunpack.c.l.s4 1934713408
      %v3121 = vunpack.c.0.s8 %v3120
      %v3122 = vlaneseq
      %v3123 = vshrl.u32 %v3122, 7
      %v3124 = vsub.s32 %v3121, %v3123
      %v3125 = vrot.slane %v3117, %v3124
      %v3127 = vunpack.c.l.s4 1934713408
      %v3128 = vunpack.c.0.s8 %v3127
      %v3129 = vlaneseq
      %v3130 = vshrl.u32 %v3129, 7
      %v3131 = vsub.s32 %v3128, %v3130
      %v3132 = vrot.slane %v3118, %v3131
      %v3133 = vcombine.high %v3109, 0.0
      %v3134 = vcombine.high %v3116, 0.0
      %v3135 = vcombine.high %v3125, 0.0
      %v3136 = vcombine.high %v3132, 0.0
      %v3137 = vcombine.low %v1394, %v2694
      %v3138 = vcombine.high %v1394, %v2694
      %v3140 = vunpack.c.l.s4 1983009808
      %v3141 = vunpack.c.0.s8 %v3140
      %v3142 = vlaneseq
      %v3143 = vshrl.u32 %v3142, 7
      %v3144 = vsub.s32 %v3141, %v3143
      %v3145 = vrot.slane %v3137, %v3144
      %v3147 = vunpack.c.l.s4 1983009808
      %v3148 = vunpack.c.0.s8 %v3147
      %v3149 = vlaneseq
      %v3150 = vshrl.u32 %v3149, 7
      %v3151 = vsub.s32 %v3148, %v3150
      %v3152 = vrot.slane %v3138, %v3151
      %v3153 = vcombine.low %v2670, %v2718
      %v3154 = vcombine.high %v2670, %v2718
      %v3156 = vunpack.c.l.s4 1983009808
      %v3157 = vunpack.c.0.s8 %v3156
      %v3158 = vlaneseq
      %v3159 = vshrl.u32 %v3158, 7
      %v3160 = vsub.s32 %v3157, %v3159
      %v3161 = vrot.slane %v3153, %v3160
      %v3163 = vunpack.c.l.s4 1983009808
      %v3164 = vunpack.c.0.s8 %v3163
      %v3165 = vlaneseq
      %v3166 = vshrl.u32 %v3165, 7
      %v3167 = vsub.s32 %v3164, %v3166
      %v3168 = vrot.slane %v3154, %v3167
      %v3169 = vcombine.low %v3145, %v3161
      %v3170 = vcombine.high %v3145, %v3161
      %v3172 = vunpack.c.l.s4 1934713408
      %v3173 = vunpack.c.0.s8 %v3172
      %v3174 = vlaneseq
      %v3175 = vshrl.u32 %v3174, 7
      %v3176 = vsub.s32 %v3173, %v3175
      %v3177 = vrot.slane %v3169, %v3176
      %v3179 = vunpack.c.l.s4 1934713408
      %v3180 = vunpack.c.0.s8 %v3179
      %v3181 = vlaneseq
      %v3182 = vshrl.u32 %v3181, 7
      %v3183 = vsub.s32 %v3180, %v3182
      %v3184 = vrot.slane %v3170, %v3183
      %v3185 = vcombine.low %v3152, %v3168
      %v3186 = vcombine.high %v3152, %v3168
      %v3188 = vunpack.c.l.s4 1934713408
      %v3189 = vunpack.c.0.s8 %v3188
      %v3190 = vlaneseq
      %v3191 = vshrl.u32 %v3190, 7
      %v3192 = vsub.s32 %v3189, %v3191
      %v3193 = vrot.slane %v3185, %v3192
      %v3195 = vunpack.c.l.s4 1934713408
      %v3196 = vunpack.c.0.s8 %v3195
      %v3197 = vlaneseq
      %v3198 = vshrl.u32 %v3197, 7
      %v3199 = vsub.s32 %v3196, %v3198
      %v3200 = vrot.slane %v3186, %v3199
      %v3201 = vcombine.high %v3177, 0.0
      %v3202 = vcombine.high %v3184, 0.0
      %v3203 = vcombine.high %v3193, 0.0
      %v3204 = vcombine.high %v3200, 0.0
      %v3205 = vcombine.low %v1398, %v2696
      %v3206 = vcombine.high %v1398, %v2696
      %v3208 = vunpack.c.l.s4 1983009808
      %v3209 = vunpack.c.0.s8 %v3208
      %v3210 = vlaneseq
      %v3211 = vshrl.u32 %v3210, 7
      %v3212 = vsub.s32 %v3209, %v3211
      %v3213 = vrot.slane %v3205, %v3212
      %v3215 = vunpack.c.l.s4 1983009808
      %v3216 = vunpack.c.0.s8 %v3215
      %v3217 = vlaneseq
      %v3218 = vshrl.u32 %v3217, 7
      %v3219 = vsub.s32 %v3216, %v3218
      %v3220 = vrot.slane %v3206, %v3219
      %v3221 = vcombine.low %v2672, %v2720
      %v3222 = vcombine.high %v2672, %v2720
      %v3224 = vunpack.c.l.s4 1983009808
      %v3225 = vunpack.c.0.s8 %v3224
      %v3226 = vlaneseq
      %v3227 = vshrl.u32 %v3226, 7
      %v3228 = vsub.s32 %v3225, %v3227
      %v3229 = vrot.slane %v3221, %v3228
      %v3231 = vunpack.c.l.s4 1983009808
      %v3232 = vunpack.c.0.s8 %v3231
      %v3233 = vlaneseq
      %v3234 = vshrl.u32 %v3233, 7
      %v3235 = vsub.s32 %v3232, %v3234
      %v3236 = vrot.slane %v3222, %v3235
      %v3237 = vcombine.low %v3213, %v3229
      %v3238 = vcombine.high %v3213, %v3229
      %v3240 = vunpack.c.l.s4 1934713408
      %v3241 = vunpack.c.0.s8 %v3240
      %v3242 = vlaneseq
      %v3243 = vshrl.u32 %v3242, 7
      %v3244 = vsub.s32 %v3241, %v3243
      %v3245 = vrot.slane %v3237, %v3244
      %v3247 = vunpack.c.l.s4 1934713408
      %v3248 = vunpack.c.0.s8 %v3247
      %v3249 = vlaneseq
      %v3250 = vshrl.u32 %v3249, 7
      %v3251 = vsub.s32 %v3248, %v3250
      %v3252 = vrot.slane %v3238, %v3251
      %v3253 = vcombine.low %v3220, %v3236
      %v3254 = vcombine.high %v3220, %v3236
      %v3256 = vunpack.c.l.s4 1934713408
      %v3257 = vunpack.c.0.s8 %v3256
      %v3258 = vlaneseq
      %v3259 = vshrl.u32 %v3258, 7
      %v3260 = vsub.s32 %v3257, %v3259
      %v3261 = vrot.slane %v3253, %v3260
      %v3263 = vunpack.c.l.s4 1934713408
      %v3264 = vunpack.c.0.s8 %v3263
      %v3265 = vlaneseq
      %v3266 = vshrl.u32 %v3265, 7
      %v3267 = vsub.s32 %v3264, %v3266
      %v3268 = vrot.slane %v3254, %v3267
      %v3269 = vcombine.high %v3245, 0.0
      %v3270 = vcombine.high %v3252, 0.0
      %v3271 = vcombine.high %v3261, 0.0
      %v3272 = vcombine.high %v3268, 0.0
      %v3273 = vcombine.low %v2769, %v2776
      %v3275 = vunpack.c.l.s4 1983009808
      %v3276 = vunpack.c.0.s8 %v3275
      %v3277 = vlaneseq
      %v3278 = vshrl.u32 %v3277, 7
      %v3279 = vsub.s32 %v3276, %v3278
      %v3280 = vrot.slane %v3273, %v3279
      %v3281 = vcombine.low %v2793, %v2794
      %v3283 = vunpack.c.l.s4 1983009808
      %v3284 = vunpack.c.0.s8 %v3283
      %v3285 = vlaneseq
      %v3286 = vshrl.u32 %v3285, 7
      %v3287 = vsub.s32 %v3284, %v3286
      %v3288 = vrot.slane %v3281, %v3287
      %v3289 = vcombine.low %v2785, %v2792
      %v3291 = vunpack.c.l.s4 1983009808
      %v3292 = vunpack.c.0.s8 %v3291
      %v3293 = vlaneseq
      %v3294 = vshrl.u32 %v3293, 7
      %v3295 = vsub.s32 %v3292, %v3294
      %v3296 = vrot.slane %v3289, %v3295
      %v3297 = vcombine.low %v2795, %v2796
      %v3299 = vunpack.c.l.s4 1983009808
      %v3300 = vunpack.c.0.s8 %v3299
      %v3301 = vlaneseq
      %v3302 = vshrl.u32 %v3301, 7
      %v3303 = vsub.s32 %v3300, %v3302
      %v3304 = vrot.slane %v3297, %v3303
      %v3305 = vcombine.low %v3280, %v3288
      %v3306 = vcombine.high %v3280, %v3288
      %v3308 = vunpack.c.l.s4 1934713408
      %v3309 = vunpack.c.0.s8 %v3308
      %v3310 = vlaneseq
      %v3311 = vshrl.u32 %v3310, 7
      %v3312 = vsub.s32 %v3309, %v3311
      %v3313 = vrot.slane %v3305, %v3312
      %v3315 = vunpack.c.l.s4 1934713408
      %v3316 = vunpack.c.0.s8 %v3315
      %v3317 = vlaneseq
      %v3318 = vshrl.u32 %v3317, 7
      %v3319 = vsub.s32 %v3316, %v3318
      %v3320 = vrot.slane %v3306, %v3319
      %v3321 = vcombine.low %v3296, %v3304
      %v3322 = vcombine.high %v3296, %v3304
      %v3324 = vunpack.c.l.s4 1934713408
      %v3325 = vunpack.c.0.s8 %v3324
      %v3326 = vlaneseq
      %v3327 = vshrl.u32 %v3326, 7
      %v3328 = vsub.s32 %v3325, %v3327
      %v3329 = vrot.slane %v3321, %v3328
      %v3331 = vunpack.c.l.s4 1934713408
      %v3332 = vunpack.c.0.s8 %v3331
      %v3333 = vlaneseq
      %v3334 = vshrl.u32 %v3333, 7
      %v3335 = vsub.s32 %v3332, %v3334
      %v3336 = vrot.slane %v3322, %v3335
      %v3337 = vcombine.low %v3313, %v3329
      %v3338 = vcombine.high %v3313, %v3329
      %v3339 = vcombine.low %v3320, %v3336
      %v3340 = vcombine.high %v3320, %v3336
      %v3341 = vcombine.low %v2837, %v2844
      %v3343 = vunpack.c.l.s4 1983009808
      %v3344 = vunpack.c.0.s8 %v3343
      %v3345 = vlaneseq
      %v3346 = vshrl.u32 %v3345, 7
      %v3347 = vsub.s32 %v3344, %v3346
      %v3348 = vrot.slane %v3341, %v3347
      %v3349 = vcombine.low %v2861, %v2862
      %v3351 = vunpack.c.l.s4 1983009808
      %v3352 = vunpack.c.0.s8 %v3351
      %v3353 = vlaneseq
      %v3354 = vshrl.u32 %v3353, 7
      %v3355 = vsub.s32 %v3352, %v3354
      %v3356 = vrot.slane %v3349, %v3355
      %v3357 = vcombine.low %v2853, %v2860
      %v3359 = vunpack.c.l.s4 1983009808
      %v3360 = vunpack.c.0.s8 %v3359
      %v3361 = vlaneseq
      %v3362 = vshrl.u32 %v3361, 7
      %v3363 = vsub.s32 %v3360, %v3362
      %v3364 = vrot.slane %v3357, %v3363
      %v3365 = vcombine.low %v2863, %v2864
      %v3367 = vunpack.c.l.s4 1983009808
      %v3368 = vunpack.c.0.s8 %v3367
      %v3369 = vlaneseq
      %v3370 = vshrl.u32 %v3369, 7
      %v3371 = vsub.s32 %v3368, %v3370
      %v3372 = vrot.slane %v3365, %v3371
      %v3373 = vcombine.low %v3348, %v3356
      %v3374 = vcombine.high %v3348, %v3356
      %v3376 = vunpack.c.l.s4 1934713408
      %v3377 = vunpack.c.0.s8 %v3376
      %v3378 = vlaneseq
      %v3379 = vshrl.u32 %v3378, 7
      %v3380 = vsub.s32 %v3377, %v3379
      %v3381 = vrot.slane %v3373, %v3380
      %v3383 = vunpack.c.l.s4 1934713408
      %v3384 = vunpack.c.0.s8 %v3383
      %v3385 = vlaneseq
      %v3386 = vshrl.u32 %v3385, 7
      %v3387 = vsub.s32 %v3384, %v3386
      %v3388 = vrot.slane %v3374, %v3387
      %v3389 = vcombine.low %v3364, %v3372
      %v3390 = vcombine.high %v3364, %v3372
      %v3392 = vunpack.c.l.s4 1934713408
      %v3393 = vunpack.c.0.s8 %v3392
      %v3394 = vlaneseq
      %v3395 = vshrl.u32 %v3394, 7
      %v3396 = vsub.s32 %v3393, %v3395
      %v3397 = vrot.slane %v3389, %v3396
      %v3399 = vunpack.c.l.s4 1934713408
      %v3400 = vunpack.c.0.s8 %v3399
      %v3401 = vlaneseq
      %v3402 = vshrl.u32 %v3401, 7
      %v3403 = vsub.s32 %v3400, %v3402
      %v3404 = vrot.slane %v3390, %v3403
      %v3405 = vcombine.low %v3381, %v3397
      %v3406 = vcombine.high %v3381, %v3397
      %v3407 = vcombine.low %v3388, %v3404
      %v3408 = vcombine.high %v3388, %v3404
      %v3409 = vcombine.low %v2905, %v2912
      %v3411 = vunpack.c.l.s4 1983009808
      %v3412 = vunpack.c.0.s8 %v3411
      %v3413 = vlaneseq
      %v3414 = vshrl.u32 %v3413, 7
      %v3415 = vsub.s32 %v3412, %v3414
      %v3416 = vrot.slane %v3409, %v3415
      %v3417 = vcombine.low %v2929, %v2930
      %v3419 = vunpack.c.l.s4 1983009808
      %v3420 = vunpack.c.0.s8 %v3419
      %v3421 = vlaneseq
      %v3422 = vshrl.u32 %v3421, 7
      %v3423 = vsub.s32 %v3420, %v3422
      %v3424 = vrot.slane %v3417, %v3423
      %v3425 = vcombine.low %v2921, %v2928
      %v3427 = vunpack.c.l.s4 1983009808
      %v3428 = vunpack.c.0.s8 %v3427
      %v3429 = vlaneseq
      %v3430 = vshrl.u32 %v3429, 7
      %v3431 = vsub.s32 %v3428, %v3430
      %v3432 = vrot.slane %v3425, %v3431
      %v3433 = vcombine.low %v2931, %v2932
      %v3435 = vunpack.c.l.s4 1983009808
      %v3436 = vunpack.c.0.s8 %v3435
      %v3437 = vlaneseq
      %v3438 = vshrl.u32 %v3437, 7
      %v3439 = vsub.s32 %v3436, %v3438
      %v3440 = vrot.slane %v3433, %v3439
      %v3441 = vcombine.low %v3416, %v3424
      %v3442 = vcombine.high %v3416, %v3424
      %v3444 = vunpack.c.l.s4 1934713408
      %v3445 = vunpack.c.0.s8 %v3444
      %v3446 = vlaneseq
      %v3447 = vshrl.u32 %v3446, 7
      %v3448 = vsub.s32 %v3445, %v3447
      %v3449 = vrot.slane %v3441, %v3448
      %v3451 = vunpack.c.l.s4 1934713408
      %v3452 = vunpack.c.0.s8 %v3451
      %v3453 = vlaneseq
      %v3454 = vshrl.u32 %v3453, 7
      %v3455 = vsub.s32 %v3452, %v3454
      %v3456 = vrot.slane %v3442, %v3455
      %v3457 = vcombine.low %v3432, %v3440
      %v3458 = vcombine.high %v3432, %v3440
      %v3460 = vunpack.c.l.s4 1934713408
      %v3461 = vunpack.c.0.s8 %v3460
      %v3462 = vlaneseq
      %v3463 = vshrl.u32 %v3462, 7
      %v3464 = vsub.s32 %v3461, %v3463
      %v3465 = vrot.slane %v3457, %v3464
      %v3467 = vunpack.c.l.s4 1934713408
      %v3468 = vunpack.c.0.s8 %v3467
      %v3469 = vlaneseq
      %v3470 = vshrl.u32 %v3469, 7
      %v3471 = vsub.s32 %v3468, %v3470
      %v3472 = vrot.slane %v3458, %v3471
      %v3473 = vcombine.low %v3449, %v3465
      %v3474 = vcombine.high %v3449, %v3465
      %v3475 = vcombine.low %v3456, %v3472
      %v3476 = vcombine.high %v3456, %v3472
      %v3477 = vcombine.low %v2973, %v2980
      %v3479 = vunpack.c.l.s4 1983009808
      %v3480 = vunpack.c.0.s8 %v3479
      %v3481 = vlaneseq
      %v3482 = vshrl.u32 %v3481, 7
      %v3483 = vsub.s32 %v3480, %v3482
      %v3484 = vrot.slane %v3477, %v3483
      %v3485 = vcombine.low %v2997, %v2998
      %v3487 = vunpack.c.l.s4 1983009808
      %v3488 = vunpack.c.0.s8 %v3487
      %v3489 = vlaneseq
      %v3490 = vshrl.u32 %v3489, 7
      %v3491 = vsub.s32 %v3488, %v3490
      %v3492 = vrot.slane %v3485, %v3491
      %v3493 = vcombine.low %v2989, %v2996
      %v3495 = vunpack.c.l.s4 1983009808
      %v3496 = vunpack.c.0.s8 %v3495
      %v3497 = vlaneseq
      %v3498 = vshrl.u32 %v3497, 7
      %v3499 = vsub.s32 %v3496, %v3498
      %v3500 = vrot.slane %v3493, %v3499
      %v3501 = vcombine.low %v2999, %v3000
      %v3503 = vunpack.c.l.s4 1983009808
      %v3504 = vunpack.c.0.s8 %v3503
      %v3505 = vlaneseq
      %v3506 = vshrl.u32 %v3505, 7
      %v3507 = vsub.s32 %v3504, %v3506
      %v3508 = vrot.slane %v3501, %v3507
      %v3509 = vcombine.low %v3484, %v3492
      %v3510 = vcombine.high %v3484, %v3492
      %v3512 = vunpack.c.l.s4 1934713408
      %v3513 = vunpack.c.0.s8 %v3512
      %v3514 = vlaneseq
      %v3515 = vshrl.u32 %v3514, 7
      %v3516 = vsub.s32 %v3513, %v3515
      %v3517 = vrot.slane %v3509, %v3516
      %v3519 = vunpack.c.l.s4 1934713408
      %v3520 = vunpack.c.0.s8 %v3519
      %v3521 = vlaneseq
      %v3522 = vshrl.u32 %v3521, 7
      %v3523 = vsub.s32 %v3520, %v3522
      %v3524 = vrot.slane %v3510, %v3523
      %v3525 = vcombine.low %v3500, %v3508
      %v3526 = vcombine.high %v3500, %v3508
      %v3528 = vunpack.c.l.s4 1934713408
      %v3529 = vunpack.c.0.s8 %v3528
      %v3530 = vlaneseq
      %v3531 = vshrl.u32 %v3530, 7
      %v3532 = vsub.s32 %v3529, %v3531
      %v3533 = vrot.slane %v3525, %v3532
      %v3535 = vunpack.c.l.s4 1934713408
      %v3536 = vunpack.c.0.s8 %v3535
      %v3537 = vlaneseq
      %v3538 = vshrl.u32 %v3537, 7
      %v3539 = vsub.s32 %v3536, %v3538
      %v3540 = vrot.slane %v3526, %v3539
      %v3541 = vcombine.low %v3517, %v3533
      %v3542 = vcombine.high %v3517, %v3533
      %v3543 = vcombine.low %v3524, %v3540
      %v3544 = vcombine.high %v3524, %v3540
      %v3545 = vcombine.low %v3041, %v3048
      %v3547 = vunpack.c.l.s4 1983009808
      %v3548 = vunpack.c.0.s8 %v3547
      %v3549 = vlaneseq
      %v3550 = vshrl.u32 %v3549, 7
      %v3551 = vsub.s32 %v3548, %v3550
      %v3552 = vrot.slane %v3545, %v3551
      %v3553 = vcombine.low %v3065, %v3066
      %v3555 = vunpack.c.l.s4 1983009808
      %v3556 = vunpack.c.0.s8 %v3555
      %v3557 = vlaneseq
      %v3558 = vshrl.u32 %v3557, 7
      %v3559 = vsub.s32 %v3556, %v3558
      %v3560 = vrot.slane %v3553, %v3559
      %v3561 = vcombine.low %v3057, %v3064
      %v3563 = vunpack.c.l.s4 1983009808
      %v3564 = vunpack.c.0.s8 %v3563
      %v3565 = vlaneseq
      %v3566 = vshrl.u32 %v3565, 7
      %v3567 = vsub.s32 %v3564, %v3566
      %v3568 = vrot.slane %v3561, %v3567
      %v3569 = vcombine.low %v3067, %v3068
      %v3571 = vunpack.c.l.s4 1983009808
      %v3572 = vunpack.c.0.s8 %v3571
      %v3573 = vlaneseq
      %v3574 = vshrl.u32 %v3573, 7
      %v3575 = vsub.s32 %v3572, %v3574
      %v3576 = vrot.slane %v3569, %v3575
      %v3577 = vcombine.low %v3552, %v3560
      %v3578 = vcombine.high %v3552, %v3560
      %v3580 = vunpack.c.l.s4 1934713408
      %v3581 = vunpack.c.0.s8 %v3580
      %v3582 = vlaneseq
      %v3583 = vshrl.u32 %v3582, 7
      %v3584 = vsub.s32 %v3581, %v3583
      %v3585 = vrot.slane %v3577, %v3584
      %v3587 = vunpack.c.l.s4 1934713408
      %v3588 = vunpack.c.0.s8 %v3587
      %v3589 = vlaneseq
      %v3590 = vshrl.u32 %v3589, 7
      %v3591 = vsub.s32 %v3588, %v3590
      %v3592 = vrot.slane %v3578, %v3591
      %v3593 = vcombine.low %v3568, %v3576
      %v3594 = vcombine.high %v3568, %v3576
      %v3596 = vunpack.c.l.s4 1934713408
      %v3597 = vunpack.c.0.s8 %v3596
      %v3598 = vlaneseq
      %v3599 = vshrl.u32 %v3598, 7
      %v3600 = vsub.s32 %v3597, %v3599
      %v3601 = vrot.slane %v3593, %v3600
      %v3603 = vunpack.c.l.s4 1934713408
      %v3604 = vunpack.c.0.s8 %v3603
      %v3605 = vlaneseq
      %v3606 = vshrl.u32 %v3605, 7
      %v3607 = vsub.s32 %v3604, %v3606
      %v3608 = vrot.slane %v3594, %v3607
      %v3609 = vcombine.low %v3585, %v3601
      %v3610 = vcombine.high %v3585, %v3601
      %v3611 = vcombine.low %v3592, %v3608
      %v3612 = vcombine.high %v3592, %v3608
      %v3613 = vcombine.low %v3109, %v3116
      %v3615 = vunpack.c.l.s4 1983009808
      %v3616 = vunpack.c.0.s8 %v3615
      %v3617 = vlaneseq
      %v3618 = vshrl.u32 %v3617, 7
      %v3619 = vsub.s32 %v3616, %v3618
      %v3620 = vrot.slane %v3613, %v3619
      %v3621 = vcombine.low %v3133, %v3134
      %v3623 = vunpack.c.l.s4 1983009808
      %v3624 = vunpack.c.0.s8 %v3623
      %v3625 = vlaneseq
      %v3626 = vshrl.u32 %v3625, 7
      %v3627 = vsub.s32 %v3624, %v3626
      %v3628 = vrot.slane %v3621, %v3627
      %v3629 = vcombine.low %v3125, %v3132
      %v3631 = vunpack.c.l.s4 1983009808
      %v3632 = vunpack.c.0.s8 %v3631
      %v3633 = vlaneseq
      %v3634 = vshrl.u32 %v3633, 7
      %v3635 = vsub.s32 %v3632, %v3634
      %v3636 = vrot.slane %v3629, %v3635
      %v3637 = vcombine.low %v3135, %v3136
      %v3639 = vunpack.c.l.s4 1983009808
      %v3640 = vunpack.c.0.s8 %v3639
      %v3641 = vlaneseq
      %v3642 = vshrl.u32 %v3641, 7
      %v3643 = vsub.s32 %v3640, %v3642
      %v3644 = vrot.slane %v3637, %v3643
      %v3645 = vcombine.low %v3620, %v3628
      %v3646 = vcombine.high %v3620, %v3628
      %v3648 = vunpack.c.l.s4 1934713408
      %v3649 = vunpack.c.0.s8 %v3648
      %v3650 = vlaneseq
      %v3651 = vshrl.u32 %v3650, 7
      %v3652 = vsub.s32 %v3649, %v3651
      %v3653 = vrot.slane %v3645, %v3652
      %v3655 = vunpack.c.l.s4 1934713408
      %v3656 = vunpack.c.0.s8 %v3655
      %v3657 = vlaneseq
      %v3658 = vshrl.u32 %v3657, 7
      %v3659 = vsub.s32 %v3656, %v3658
      %v3660 = vrot.slane %v3646, %v3659
      %v3661 = vcombine.low %v3636, %v3644
      %v3662 = vcombine.high %v3636, %v3644
      %v3664 = vunpack.c.l.s4 1934713408
      %v3665 = vunpack.c.0.s8 %v3664
      %v3666 = vlaneseq
      %v3667 = vshrl.u32 %v3666, 7
      %v3668 = vsub.s32 %v3665, %v3667
      %v3669 = vrot.slane %v3661, %v3668
      %v3671 = vunpack.c.l.s4 1934713408
      %v3672 = vunpack.c.0.s8 %v3671
      %v3673 = vlaneseq
      %v3674 = vshrl.u32 %v3673, 7
      %v3675 = vsub.s32 %v3672, %v3674
      %v3676 = vrot.slane %v3662, %v3675
      %v3677 = vcombine.low %v3653, %v3669
      %v3678 = vcombine.high %v3653, %v3669
      %v3679 = vcombine.low %v3660, %v3676
      %v3680 = vcombine.high %v3660, %v3676
      %v3681 = vcombine.low %v3177, %v3184
      %v3683 = vunpack.c.l.s4 1983009808
      %v3684 = vunpack.c.0.s8 %v3683
      %v3685 = vlaneseq
      %v3686 = vshrl.u32 %v3685, 7
      %v3687 = vsub.s32 %v3684, %v3686
      %v3688 = vrot.slane %v3681, %v3687
      %v3689 = vcombine.low %v3201, %v3202
      %v3691 = vunpack.c.l.s4 1983009808
      %v3692 = vunpack.c.0.s8 %v3691
      %v3693 = vlaneseq
      %v3694 = vshrl.u32 %v3693, 7
      %v3695 = vsub.s32 %v3692, %v3694
      %v3696 = vrot.slane %v3689, %v3695
      %v3697 = vcombine.low %v3193, %v3200
      %v3699 = vunpack.c.l.s4 1983009808
      %v3700 = vunpack.c.0.s8 %v3699
      %v3701 = vlaneseq
      %v3702 = vshrl.u32 %v3701, 7
      %v3703 = vsub.s32 %v3700, %v3702
      %v3704 = vrot.slane %v3697, %v3703
      %v3705 = vcombine.low %v3203, %v3204
      %v3707 = vunpack.c.l.s4 1983009808
      %v3708 = vunpack.c.0.s8 %v3707
      %v3709 = vlaneseq
      %v3710 = vshrl.u32 %v3709, 7
      %v3711 = vsub.s32 %v3708, %v3710
      %v3712 = vrot.slane %v3705, %v3711
      %v3713 = vcombine.low %v3688, %v3696
      %v3714 = vcombine.high %v3688, %v3696
      %v3716 = vunpack.c.l.s4 1934713408
      %v3717 = vunpack.c.0.s8 %v3716
      %v3718 = vlaneseq
      %v3719 = vshrl.u32 %v3718, 7
      %v3720 = vsub.s32 %v3717, %v3719
      %v3721 = vrot.slane %v3713, %v3720
      %v3723 = vunpack.c.l.s4 1934713408
      %v3724 = vunpack.c.0.s8 %v3723
      %v3725 = vlaneseq
      %v3726 = vshrl.u32 %v3725, 7
      %v3727 = vsub.s32 %v3724, %v3726
      %v3728 = vrot.slane %v3714, %v3727
      %v3729 = vcombine.low %v3704, %v3712
      %v3730 = vcombine.high %v3704, %v3712
      %v3732 = vunpack.c.l.s4 1934713408
      %v3733 = vunpack.c.0.s8 %v3732
      %v3734 = vlaneseq
      %v3735 = vshrl.u32 %v3734, 7
      %v3736 = vsub.s32 %v3733, %v3735
      %v3737 = vrot.slane %v3729, %v3736
      %v3739 = vunpack.c.l.s4 1934713408
      %v3740 = vunpack.c.0.s8 %v3739
      %v3741 = vlaneseq
      %v3742 = vshrl.u32 %v3741, 7
      %v3743 = vsub.s32 %v3740, %v3742
      %v3744 = vrot.slane %v3730, %v3743
      %v3745 = vcombine.low %v3721, %v3737
      %v3746 = vcombine.high %v3721, %v3737
      %v3747 = vcombine.low %v3728, %v3744
      %v3748 = vcombine.high %v3728, %v3744
      %v3749 = vcombine.low %v3245, %v3252
      %v3751 = vunpack.c.l.s4 1983009808
      %v3752 = vunpack.c.0.s8 %v3751
      %v3753 = vlaneseq
      %v3754 = vshrl.u32 %v3753, 7
      %v3755 = vsub.s32 %v3752, %v3754
      %v3756 = vrot.slane %v3749, %v3755
      %v3757 = vcombine.low %v3269, %v3270
      %v3759 = vunpack.c.l.s4 1983009808
      %v3760 = vunpack.c.0.s8 %v3759
      %v3761 = vlaneseq
      %v3762 = vshrl.u32 %v3761, 7
      %v3763 = vsub.s32 %v3760, %v3762
      %v3764 = vrot.slane %v3757, %v3763
      %v3765 = vcombine.low %v3261, %v3268
      %v3767 = vunpack.c.l.s4 1983009808
      %v3768 = vunpack.c.0.s8 %v3767
      %v3769 = vlaneseq
      %v3770 = vshrl.u32 %v3769, 7
      %v3771 = vsub.s32 %v3768, %v3770
      %v3772 = vrot.slane %v3765, %v3771
      %v3773 = vcombine.low %v3271, %v3272
      %v3775 = vunpack.c.l.s4 1983009808
      %v3776 = vunpack.c.0.s8 %v3775
      %v3777 = vlaneseq
      %v3778 = vshrl.u32 %v3777, 7
      %v3779 = vsub.s32 %v3776, %v3778
      %v3780 = vrot.slane %v3773, %v3779
      %v3781 = vcombine.low %v3756, %v3764
      %v3782 = vcombine.high %v3756, %v3764
      %v3784 = vunpack.c.l.s4 1934713408
      %v3785 = vunpack.c.0.s8 %v3784
      %v3786 = vlaneseq
      %v3787 = vshrl.u32 %v3786, 7
      %v3788 = vsub.s32 %v3785, %v3787
      %v3789 = vrot.slane %v3781, %v3788
      %v3791 = vunpack.c.l.s4 1934713408
      %v3792 = vunpack.c.0.s8 %v3791
      %v3793 = vlaneseq
      %v3794 = vshrl.u32 %v3793, 7
      %v3795 = vsub.s32 %v3792, %v3794
      %v3796 = vrot.slane %v3782, %v3795
      %v3797 = vcombine.low %v3772, %v3780
      %v3798 = vcombine.high %v3772, %v3780
      %v3800 = vunpack.c.l.s4 1934713408
      %v3801 = vunpack.c.0.s8 %v3800
      %v3802 = vlaneseq
      %v3803 = vshrl.u32 %v3802, 7
      %v3804 = vsub.s32 %v3801, %v3803
      %v3805 = vrot.slane %v3797, %v3804
      %v3807 = vunpack.c.l.s4 1934713408
      %v3808 = vunpack.c.0.s8 %v3807
      %v3809 = vlaneseq
      %v3810 = vshrl.u32 %v3809, 7
      %v3811 = vsub.s32 %v3808, %v3810
      %v3812 = vrot.slane %v3798, %v3811
      %v3813 = vcombine.low %v3789, %v3805
      %v3814 = vcombine.high %v3789, %v3805
      %v3815 = vcombine.low %v3796, %v3812
      %v3816 = vcombine.high %v3796, %v3812
      %v3817 = vpack.c.bf16 %v3405, %v3337
      %v3818 = vpack.c.bf16 %v3541, %v3473
      %v3819 = vpack.c.bf16 %v3677, %v3609
      %v3820 = vpack.c.bf16 %v3813, %v3745
      %v3821 = vpack.c.bf16 %v3406, %v3338
      %v3822 = vpack.c.bf16 %v3542, %v3474
      %v3823 = vpack.c.bf16 %v3678, %v3610
      %v3824 = vpack.c.bf16 %v3814, %v3746
      %v3825 = vpack.c.bf16 %v3407, %v3339
      %v3826 = vpack.c.bf16 %v3543, %v3475
      %v3827 = vpack.c.bf16 %v3679, %v3611
      %v3828 = vpack.c.bf16 %v3815, %v3747
      %v3829 = vpack.c.bf16 %v3408, %v3340
      %v3830 = vpack.c.bf16 %v3544, %v3476
      %v3831 = vpack.c.bf16 %v3680, %v3612
      %v3832 = vpack.c.bf16 %v3816, %v3748
      %3841 = vrot.lane.b32.xlu0 %v1435, 96
      %v3842 = vpop.permute.xlu0 %3841
      %3843 = vrot.lane.b32.xlu0 %v1438, 96
      %v3844 = vpop.permute.xlu0 %3843
      %3845 = vrot.lane.b32.xlu0 %v1443, 96
      %v3846 = vpop.permute.xlu0 %3845
      %3847 = vrot.lane.b32.xlu0 %v1446, 96
      %v3848 = vpop.permute.xlu0 %3847
      %3849 = vrot.lane.b32.xlu0 %v1451, 96
      %v3850 = vpop.permute.xlu0 %3849
      %3851 = vrot.lane.b32.xlu0 %v1454, 96
      %v3852 = vpop.permute.xlu0 %3851
      %3853 = vrot.lane.b32.xlu0 %v1459, 96
      %v3854 = vpop.permute.xlu0 %3853
      %3855 = vrot.lane.b32.xlu0 %v1462, 96
      %v3856 = vpop.permute.xlu0 %3855
      %3865 = vrot.lane.b32.xlu0 %v1435, 64
      %v3866 = vpop.permute.xlu0 %3865
      %3867 = vrot.lane.b32.xlu0 %v1438, 64
      %v3868 = vpop.permute.xlu0 %3867
      %3869 = vrot.lane.b32.xlu0 %v1443, 64
      %v3870 = vpop.permute.xlu0 %3869
      %3871 = vrot.lane.b32.xlu0 %v1446, 64
      %v3872 = vpop.permute.xlu0 %3871
      %3873 = vrot.lane.b32.xlu0 %v1451, 64
      %v3874 = vpop.permute.xlu0 %3873
      %3875 = vrot.lane.b32.xlu0 %v1454, 64
      %v3876 = vpop.permute.xlu0 %3875
      %3877 = vrot.lane.b32.xlu0 %v1459, 64
      %v3878 = vpop.permute.xlu0 %3877
      %3879 = vrot.lane.b32.xlu0 %v1462, 64
      %v3880 = vpop.permute.xlu0 %3879
      %3889 = vrot.lane.b32.xlu0 %v1435, 32
      %v3890 = vpop.permute.xlu0 %3889
      %3891 = vrot.lane.b32.xlu0 %v1438, 32
      %v3892 = vpop.permute.xlu0 %3891
      %3893 = vrot.lane.b32.xlu0 %v1443, 32
      %v3894 = vpop.permute.xlu0 %3893
      %3895 = vrot.lane.b32.xlu0 %v1446, 32
      %v3896 = vpop.permute.xlu0 %3895
      %3897 = vrot.lane.b32.xlu0 %v1451, 32
      %v3898 = vpop.permute.xlu0 %3897
      %3899 = vrot.lane.b32.xlu0 %v1454, 32
      %v3900 = vpop.permute.xlu0 %3899
      %3901 = vrot.lane.b32.xlu0 %v1459, 32
      %v3902 = vpop.permute.xlu0 %3901
      %3903 = vrot.lane.b32.xlu0 %v1462, 32
      %v3904 = vpop.permute.xlu0 %3903
      %v3913 = vcombine.low %v1435, %v3866
      %v3914 = vcombine.high %v1435, %v3866
      %v3916 = vunpack.c.l.s4 1983009808
      %v3917 = vunpack.c.0.s8 %v3916
      %v3918 = vlaneseq
      %v3919 = vshrl.u32 %v3918, 7
      %v3920 = vsub.s32 %v3917, %v3919
      %v3921 = vrot.slane %v3913, %v3920
      %v3923 = vunpack.c.l.s4 1983009808
      %v3924 = vunpack.c.0.s8 %v3923
      %v3925 = vlaneseq
      %v3926 = vshrl.u32 %v3925, 7
      %v3927 = vsub.s32 %v3924, %v3926
      %v3928 = vrot.slane %v3914, %v3927
      %v3929 = vcombine.low %v3842, %v3890
      %v3930 = vcombine.high %v3842, %v3890
      %v3932 = vunpack.c.l.s4 1983009808
      %v3933 = vunpack.c.0.s8 %v3932
      %v3934 = vlaneseq
      %v3935 = vshrl.u32 %v3934, 7
      %v3936 = vsub.s32 %v3933, %v3935
      %v3937 = vrot.slane %v3929, %v3936
      %v3939 = vunpack.c.l.s4 1983009808
      %v3940 = vunpack.c.0.s8 %v3939
      %v3941 = vlaneseq
      %v3942 = vshrl.u32 %v3941, 7
      %v3943 = vsub.s32 %v3940, %v3942
      %v3944 = vrot.slane %v3930, %v3943
      %v3945 = vcombine.low %v3921, %v3937
      %v3946 = vcombine.high %v3921, %v3937
      %v3948 = vunpack.c.l.s4 1934713408
      %v3949 = vunpack.c.0.s8 %v3948
      %v3950 = vlaneseq
      %v3951 = vshrl.u32 %v3950, 7
      %v3952 = vsub.s32 %v3949, %v3951
      %v3953 = vrot.slane %v3945, %v3952
      %v3955 = vunpack.c.l.s4 1934713408
      %v3956 = vunpack.c.0.s8 %v3955
      %v3957 = vlaneseq
      %v3958 = vshrl.u32 %v3957, 7
      %v3959 = vsub.s32 %v3956, %v3958
      %v3960 = vrot.slane %v3946, %v3959
      %v3961 = vcombine.low %v3928, %v3944
      %v3962 = vcombine.high %v3928, %v3944
      %v3964 = vunpack.c.l.s4 1934713408
      %v3965 = vunpack.c.0.s8 %v3964
      %v3966 = vlaneseq
      %v3967 = vshrl.u32 %v3966, 7
      %v3968 = vsub.s32 %v3965, %v3967
      %v3969 = vrot.slane %v3961, %v3968
      %v3971 = vunpack.c.l.s4 1934713408
      %v3972 = vunpack.c.0.s8 %v3971
      %v3973 = vlaneseq
      %v3974 = vshrl.u32 %v3973, 7
      %v3975 = vsub.s32 %v3972, %v3974
      %v3976 = vrot.slane %v3962, %v3975
      %v3977 = vcombine.high %v3953, 0.0
      %v3978 = vcombine.high %v3960, 0.0
      %v3979 = vcombine.high %v3969, 0.0
      %v3980 = vcombine.high %v3976, 0.0
      %v3981 = vcombine.low %v1438, %v3868
      %v3982 = vcombine.high %v1438, %v3868
      %v3984 = vunpack.c.l.s4 1983009808
      %v3985 = vunpack.c.0.s8 %v3984
      %v3986 = vlaneseq
      %v3987 = vshrl.u32 %v3986, 7
      %v3988 = vsub.s32 %v3985, %v3987
      %v3989 = vrot.slane %v3981, %v3988
      %v3991 = vunpack.c.l.s4 1983009808
      %v3992 = vunpack.c.0.s8 %v3991
      %v3993 = vlaneseq
      %v3994 = vshrl.u32 %v3993, 7
      %v3995 = vsub.s32 %v3992, %v3994
      %v3996 = vrot.slane %v3982, %v3995
      %v3997 = vcombine.low %v3844, %v3892
      %v3998 = vcombine.high %v3844, %v3892
      %v4000 = vunpack.c.l.s4 1983009808
      %v4001 = vunpack.c.0.s8 %v4000
      %v4002 = vlaneseq
      %v4003 = vshrl.u32 %v4002, 7
      %v4004 = vsub.s32 %v4001, %v4003
      %v4005 = vrot.slane %v3997, %v4004
      %v4007 = vunpack.c.l.s4 1983009808
      %v4008 = vunpack.c.0.s8 %v4007
      %v4009 = vlaneseq
      %v4010 = vshrl.u32 %v4009, 7
      %v4011 = vsub.s32 %v4008, %v4010
      %v4012 = vrot.slane %v3998, %v4011
      %v4013 = vcombine.low %v3989, %v4005
      %v4014 = vcombine.high %v3989, %v4005
      %v4016 = vunpack.c.l.s4 1934713408
      %v4017 = vunpack.c.0.s8 %v4016
      %v4018 = vlaneseq
      %v4019 = vshrl.u32 %v4018, 7
      %v4020 = vsub.s32 %v4017, %v4019
      %v4021 = vrot.slane %v4013, %v4020
      %v4023 = vunpack.c.l.s4 1934713408
      %v4024 = vunpack.c.0.s8 %v4023
      %v4025 = vlaneseq
      %v4026 = vshrl.u32 %v4025, 7
      %v4027 = vsub.s32 %v4024, %v4026
      %v4028 = vrot.slane %v4014, %v4027
      %v4029 = vcombine.low %v3996, %v4012
      %v4030 = vcombine.high %v3996, %v4012
      %v4032 = vunpack.c.l.s4 1934713408
      %v4033 = vunpack.c.0.s8 %v4032
      %v4034 = vlaneseq
      %v4035 = vshrl.u32 %v4034, 7
      %v4036 = vsub.s32 %v4033, %v4035
      %v4037 = vrot.slane %v4029, %v4036
      %v4039 = vunpack.c.l.s4 1934713408
      %v4040 = vunpack.c.0.s8 %v4039
      %v4041 = vlaneseq
      %v4042 = vshrl.u32 %v4041, 7
      %v4043 = vsub.s32 %v4040, %v4042
      %v4044 = vrot.slane %v4030, %v4043
      %v4045 = vcombine.high %v4021, 0.0
      %v4046 = vcombine.high %v4028, 0.0
      %v4047 = vcombine.high %v4037, 0.0
      %v4048 = vcombine.high %v4044, 0.0
      %v4049 = vcombine.low %v1443, %v3870
      %v4050 = vcombine.high %v1443, %v3870
      %v4052 = vunpack.c.l.s4 1983009808
      %v4053 = vunpack.c.0.s8 %v4052
      %v4054 = vlaneseq
      %v4055 = vshrl.u32 %v4054, 7
      %v4056 = vsub.s32 %v4053, %v4055
      %v4057 = vrot.slane %v4049, %v4056
      %v4059 = vunpack.c.l.s4 1983009808
      %v4060 = vunpack.c.0.s8 %v4059
      %v4061 = vlaneseq
      %v4062 = vshrl.u32 %v4061, 7
      %v4063 = vsub.s32 %v4060, %v4062
      %v4064 = vrot.slane %v4050, %v4063
      %v4065 = vcombine.low %v3846, %v3894
      %v4066 = vcombine.high %v3846, %v3894
      %v4068 = vunpack.c.l.s4 1983009808
      %v4069 = vunpack.c.0.s8 %v4068
      %v4070 = vlaneseq
      %v4071 = vshrl.u32 %v4070, 7
      %v4072 = vsub.s32 %v4069, %v4071
      %v4073 = vrot.slane %v4065, %v4072
      %v4075 = vunpack.c.l.s4 1983009808
      %v4076 = vunpack.c.0.s8 %v4075
      %v4077 = vlaneseq
      %v4078 = vshrl.u32 %v4077, 7
      %v4079 = vsub.s32 %v4076, %v4078
      %v4080 = vrot.slane %v4066, %v4079
      %v4081 = vcombine.low %v4057, %v4073
      %v4082 = vcombine.high %v4057, %v4073
      %v4084 = vunpack.c.l.s4 1934713408
      %v4085 = vunpack.c.0.s8 %v4084
      %v4086 = vlaneseq
      %v4087 = vshrl.u32 %v4086, 7
      %v4088 = vsub.s32 %v4085, %v4087
      %v4089 = vrot.slane %v4081, %v4088
      %v4091 = vunpack.c.l.s4 1934713408
      %v4092 = vunpack.c.0.s8 %v4091
      %v4093 = vlaneseq
      %v4094 = vshrl.u32 %v4093, 7
      %v4095 = vsub.s32 %v4092, %v4094
      %v4096 = vrot.slane %v4082, %v4095
      %v4097 = vcombine.low %v4064, %v4080
      %v4098 = vcombine.high %v4064, %v4080
      %v4100 = vunpack.c.l.s4 1934713408
      %v4101 = vunpack.c.0.s8 %v4100
      %v4102 = vlaneseq
      %v4103 = vshrl.u32 %v4102, 7
      %v4104 = vsub.s32 %v4101, %v4103
      %v4105 = vrot.slane %v4097, %v4104
      %v4107 = vunpack.c.l.s4 1934713408
      %v4108 = vunpack.c.0.s8 %v4107
      %v4109 = vlaneseq
      %v4110 = vshrl.u32 %v4109, 7
      %v4111 = vsub.s32 %v4108, %v4110
      %v4112 = vrot.slane %v4098, %v4111
      %v4113 = vcombine.high %v4089, 0.0
      %v4114 = vcombine.high %v4096, 0.0
      %v4115 = vcombine.high %v4105, 0.0
      %v4116 = vcombine.high %v4112, 0.0
      %v4117 = vcombine.low %v1446, %v3872
      %v4118 = vcombine.high %v1446, %v3872
      %v4120 = vunpack.c.l.s4 1983009808
      %v4121 = vunpack.c.0.s8 %v4120
      %v4122 = vlaneseq
      %v4123 = vshrl.u32 %v4122, 7
      %v4124 = vsub.s32 %v4121, %v4123
      %v4125 = vrot.slane %v4117, %v4124
      %v4127 = vunpack.c.l.s4 1983009808
      %v4128 = vunpack.c.0.s8 %v4127
      %v4129 = vlaneseq
      %v4130 = vshrl.u32 %v4129, 7
      %v4131 = vsub.s32 %v4128, %v4130
      %v4132 = vrot.slane %v4118, %v4131
      %v4133 = vcombine.low %v3848, %v3896
      %v4134 = vcombine.high %v3848, %v3896
      %v4136 = vunpack.c.l.s4 1983009808
      %v4137 = vunpack.c.0.s8 %v4136
      %v4138 = vlaneseq
      %v4139 = vshrl.u32 %v4138, 7
      %v4140 = vsub.s32 %v4137, %v4139
      %v4141 = vrot.slane %v4133, %v4140
      %v4143 = vunpack.c.l.s4 1983009808
      %v4144 = vunpack.c.0.s8 %v4143
      %v4145 = vlaneseq
      %v4146 = vshrl.u32 %v4145, 7
      %v4147 = vsub.s32 %v4144, %v4146
      %v4148 = vrot.slane %v4134, %v4147
      %v4149 = vcombine.low %v4125, %v4141
      %v4150 = vcombine.high %v4125, %v4141
      %v4152 = vunpack.c.l.s4 1934713408
      %v4153 = vunpack.c.0.s8 %v4152
      %v4154 = vlaneseq
      %v4155 = vshrl.u32 %v4154, 7
      %v4156 = vsub.s32 %v4153, %v4155
      %v4157 = vrot.slane %v4149, %v4156
      %v4159 = vunpack.c.l.s4 1934713408
      %v4160 = vunpack.c.0.s8 %v4159
      %v4161 = vlaneseq
      %v4162 = vshrl.u32 %v4161, 7
      %v4163 = vsub.s32 %v4160, %v4162
      %v4164 = vrot.slane %v4150, %v4163
      %v4165 = vcombine.low %v4132, %v4148
      %v4166 = vcombine.high %v4132, %v4148
      %v4168 = vunpack.c.l.s4 1934713408
      %v4169 = vunpack.c.0.s8 %v4168
      %v4170 = vlaneseq
      %v4171 = vshrl.u32 %v4170, 7
      %v4172 = vsub.s32 %v4169, %v4171
      %v4173 = vrot.slane %v4165, %v4172
      %v4175 = vunpack.c.l.s4 1934713408
      %v4176 = vunpack.c.0.s8 %v4175
      %v4177 = vlaneseq
      %v4178 = vshrl.u32 %v4177, 7
      %v4179 = vsub.s32 %v4176, %v4178
      %v4180 = vrot.slane %v4166, %v4179
      %v4181 = vcombine.high %v4157, 0.0
      %v4182 = vcombine.high %v4164, 0.0
      %v4183 = vcombine.high %v4173, 0.0
      %v4184 = vcombine.high %v4180, 0.0
      %v4185 = vcombine.low %v1451, %v3874
      %v4186 = vcombine.high %v1451, %v3874
      %v4188 = vunpack.c.l.s4 1983009808
      %v4189 = vunpack.c.0.s8 %v4188
      %v4190 = vlaneseq
      %v4191 = vshrl.u32 %v4190, 7
      %v4192 = vsub.s32 %v4189, %v4191
      %v4193 = vrot.slane %v4185, %v4192
      %v4195 = vunpack.c.l.s4 1983009808
      %v4196 = vunpack.c.0.s8 %v4195
      %v4197 = vlaneseq
      %v4198 = vshrl.u32 %v4197, 7
      %v4199 = vsub.s32 %v4196, %v4198
      %v4200 = vrot.slane %v4186, %v4199
      %v4201 = vcombine.low %v3850, %v3898
      %v4202 = vcombine.high %v3850, %v3898
      %v4204 = vunpack.c.l.s4 1983009808
      %v4205 = vunpack.c.0.s8 %v4204
      %v4206 = vlaneseq
      %v4207 = vshrl.u32 %v4206, 7
      %v4208 = vsub.s32 %v4205, %v4207
      %v4209 = vrot.slane %v4201, %v4208
      %v4211 = vunpack.c.l.s4 1983009808
      %v4212 = vunpack.c.0.s8 %v4211
      %v4213 = vlaneseq
      %v4214 = vshrl.u32 %v4213, 7
      %v4215 = vsub.s32 %v4212, %v4214
      %v4216 = vrot.slane %v4202, %v4215
      %v4217 = vcombine.low %v4193, %v4209
      %v4218 = vcombine.high %v4193, %v4209
      %v4220 = vunpack.c.l.s4 1934713408
      %v4221 = vunpack.c.0.s8 %v4220
      %v4222 = vlaneseq
      %v4223 = vshrl.u32 %v4222, 7
      %v4224 = vsub.s32 %v4221, %v4223
      %v4225 = vrot.slane %v4217, %v4224
      %v4227 = vunpack.c.l.s4 1934713408
      %v4228 = vunpack.c.0.s8 %v4227
      %v4229 = vlaneseq
      %v4230 = vshrl.u32 %v4229, 7
      %v4231 = vsub.s32 %v4228, %v4230
      %v4232 = vrot.slane %v4218, %v4231
      %v4233 = vcombine.low %v4200, %v4216
      %v4234 = vcombine.high %v4200, %v4216
      %v4236 = vunpack.c.l.s4 1934713408
      %v4237 = vunpack.c.0.s8 %v4236
      %v4238 = vlaneseq
      %v4239 = vshrl.u32 %v4238, 7
      %v4240 = vsub.s32 %v4237, %v4239
      %v4241 = vrot.slane %v4233, %v4240
      %v4243 = vunpack.c.l.s4 1934713408
      %v4244 = vunpack.c.0.s8 %v4243
      %v4245 = vlaneseq
      %v4246 = vshrl.u32 %v4245, 7
      %v4247 = vsub.s32 %v4244, %v4246
      %v4248 = vrot.slane %v4234, %v4247
      %v4249 = vcombine.high %v4225, 0.0
      %v4250 = vcombine.high %v4232, 0.0
      %v4251 = vcombine.high %v4241, 0.0
      %v4252 = vcombine.high %v4248, 0.0
      %v4253 = vcombine.low %v1454, %v3876
      %v4254 = vcombine.high %v1454, %v3876
      %v4256 = vunpack.c.l.s4 1983009808
      %v4257 = vunpack.c.0.s8 %v4256
      %v4258 = vlaneseq
      %v4259 = vshrl.u32 %v4258, 7
      %v4260 = vsub.s32 %v4257, %v4259
      %v4261 = vrot.slane %v4253, %v4260
      %v4263 = vunpack.c.l.s4 1983009808
      %v4264 = vunpack.c.0.s8 %v4263
      %v4265 = vlaneseq
      %v4266 = vshrl.u32 %v4265, 7
      %v4267 = vsub.s32 %v4264, %v4266
      %v4268 = vrot.slane %v4254, %v4267
      %v4269 = vcombine.low %v3852, %v3900
      %v4270 = vcombine.high %v3852, %v3900
      %v4272 = vunpack.c.l.s4 1983009808
      %v4273 = vunpack.c.0.s8 %v4272
      %v4274 = vlaneseq
      %v4275 = vshrl.u32 %v4274, 7
      %v4276 = vsub.s32 %v4273, %v4275
      %v4277 = vrot.slane %v4269, %v4276
      %v4279 = vunpack.c.l.s4 1983009808
      %v4280 = vunpack.c.0.s8 %v4279
      %v4281 = vlaneseq
      %v4282 = vshrl.u32 %v4281, 7
      %v4283 = vsub.s32 %v4280, %v4282
      %v4284 = vrot.slane %v4270, %v4283
      %v4285 = vcombine.low %v4261, %v4277
      %v4286 = vcombine.high %v4261, %v4277
      %v4288 = vunpack.c.l.s4 1934713408
      %v4289 = vunpack.c.0.s8 %v4288
      %v4290 = vlaneseq
      %v4291 = vshrl.u32 %v4290, 7
      %v4292 = vsub.s32 %v4289, %v4291
      %v4293 = vrot.slane %v4285, %v4292
      %v4295 = vunpack.c.l.s4 1934713408
      %v4296 = vunpack.c.0.s8 %v4295
      %v4297 = vlaneseq
      %v4298 = vshrl.u32 %v4297, 7
      %v4299 = vsub.s32 %v4296, %v4298
      %v4300 = vrot.slane %v4286, %v4299
      %v4301 = vcombine.low %v4268, %v4284
      %v4302 = vcombine.high %v4268, %v4284
      %v4304 = vunpack.c.l.s4 1934713408
      %v4305 = vunpack.c.0.s8 %v4304
      %v4306 = vlaneseq
      %v4307 = vshrl.u32 %v4306, 7
      %v4308 = vsub.s32 %v4305, %v4307
      %v4309 = vrot.slane %v4301, %v4308
      %v4311 = vunpack.c.l.s4 1934713408
      %v4312 = vunpack.c.0.s8 %v4311
      %v4313 = vlaneseq
      %v4314 = vshrl.u32 %v4313, 7
      %v4315 = vsub.s32 %v4312, %v4314
      %v4316 = vrot.slane %v4302, %v4315
      %v4317 = vcombine.high %v4293, 0.0
      %v4318 = vcombine.high %v4300, 0.0
      %v4319 = vcombine.high %v4309, 0.0
      %v4320 = vcombine.high %v4316, 0.0
      %v4321 = vcombine.low %v1459, %v3878
      %v4322 = vcombine.high %v1459, %v3878
      %v4324 = vunpack.c.l.s4 1983009808
      %v4325 = vunpack.c.0.s8 %v4324
      %v4326 = vlaneseq
      %v4327 = vshrl.u32 %v4326, 7
      %v4328 = vsub.s32 %v4325, %v4327
      %v4329 = vrot.slane %v4321, %v4328
      %v4331 = vunpack.c.l.s4 1983009808
      %v4332 = vunpack.c.0.s8 %v4331
      %v4333 = vlaneseq
      %v4334 = vshrl.u32 %v4333, 7
      %v4335 = vsub.s32 %v4332, %v4334
      %v4336 = vrot.slane %v4322, %v4335
      %v4337 = vcombine.low %v3854, %v3902
      %v4338 = vcombine.high %v3854, %v3902
      %v4340 = vunpack.c.l.s4 1983009808
      %v4341 = vunpack.c.0.s8 %v4340
      %v4342 = vlaneseq
      %v4343 = vshrl.u32 %v4342, 7
      %v4344 = vsub.s32 %v4341, %v4343
      %v4345 = vrot.slane %v4337, %v4344
      %v4347 = vunpack.c.l.s4 1983009808
      %v4348 = vunpack.c.0.s8 %v4347
      %v4349 = vlaneseq
      %v4350 = vshrl.u32 %v4349, 7
      %v4351 = vsub.s32 %v4348, %v4350
      %v4352 = vrot.slane %v4338, %v4351
      %v4353 = vcombine.low %v4329, %v4345
      %v4354 = vcombine.high %v4329, %v4345
      %v4356 = vunpack.c.l.s4 1934713408
      %v4357 = vunpack.c.0.s8 %v4356
      %v4358 = vlaneseq
      %v4359 = vshrl.u32 %v4358, 7
      %v4360 = vsub.s32 %v4357, %v4359
      %v4361 = vrot.slane %v4353, %v4360
      %v4363 = vunpack.c.l.s4 1934713408
      %v4364 = vunpack.c.0.s8 %v4363
      %v4365 = vlaneseq
      %v4366 = vshrl.u32 %v4365, 7
      %v4367 = vsub.s32 %v4364, %v4366
      %v4368 = vrot.slane %v4354, %v4367
      %v4369 = vcombine.low %v4336, %v4352
      %v4370 = vcombine.high %v4336, %v4352
      %v4372 = vunpack.c.l.s4 1934713408
      %v4373 = vunpack.c.0.s8 %v4372
      %v4374 = vlaneseq
      %v4375 = vshrl.u32 %v4374, 7
      %v4376 = vsub.s32 %v4373, %v4375
      %v4377 = vrot.slane %v4369, %v4376
      %v4379 = vunpack.c.l.s4 1934713408
      %v4380 = vunpack.c.0.s8 %v4379
      %v4381 = vlaneseq
      %v4382 = vshrl.u32 %v4381, 7
      %v4383 = vsub.s32 %v4380, %v4382
      %v4384 = vrot.slane %v4370, %v4383
      %v4385 = vcombine.high %v4361, 0.0
      %v4386 = vcombine.high %v4368, 0.0
      %v4387 = vcombine.high %v4377, 0.0
      %v4388 = vcombine.high %v4384, 0.0
      %v4389 = vcombine.low %v1462, %v3880
      %v4390 = vcombine.high %v1462, %v3880
      %v4392 = vunpack.c.l.s4 1983009808
      %v4393 = vunpack.c.0.s8 %v4392
      %v4394 = vlaneseq
      %v4395 = vshrl.u32 %v4394, 7
      %v4396 = vsub.s32 %v4393, %v4395
      %v4397 = vrot.slane %v4389, %v4396
      %v4399 = vunpack.c.l.s4 1983009808
      %v4400 = vunpack.c.0.s8 %v4399
      %v4401 = vlaneseq
      %v4402 = vshrl.u32 %v4401, 7
      %v4403 = vsub.s32 %v4400, %v4402
      %v4404 = vrot.slane %v4390, %v4403
      %v4405 = vcombine.low %v3856, %v3904
      %v4406 = vcombine.high %v3856, %v3904
      %v4408 = vunpack.c.l.s4 1983009808
      %v4409 = vunpack.c.0.s8 %v4408
      %v4410 = vlaneseq
      %v4411 = vshrl.u32 %v4410, 7
      %v4412 = vsub.s32 %v4409, %v4411
      %v4413 = vrot.slane %v4405, %v4412
      %v4415 = vunpack.c.l.s4 1983009808
      %v4416 = vunpack.c.0.s8 %v4415
      %v4417 = vlaneseq
      %v4418 = vshrl.u32 %v4417, 7
      %v4419 = vsub.s32 %v4416, %v4418
      %v4420 = vrot.slane %v4406, %v4419
      %v4421 = vcombine.low %v4397, %v4413
      %v4422 = vcombine.high %v4397, %v4413
      %v4424 = vunpack.c.l.s4 1934713408
      %v4425 = vunpack.c.0.s8 %v4424
      %v4426 = vlaneseq
      %v4427 = vshrl.u32 %v4426, 7
      %v4428 = vsub.s32 %v4425, %v4427
      %v4429 = vrot.slane %v4421, %v4428
      %v4431 = vunpack.c.l.s4 1934713408
      %v4432 = vunpack.c.0.s8 %v4431
      %v4433 = vlaneseq
      %v4434 = vshrl.u32 %v4433, 7
      %v4435 = vsub.s32 %v4432, %v4434
      %v4436 = vrot.slane %v4422, %v4435
      %v4437 = vcombine.low %v4404, %v4420
      %v4438 = vcombine.high %v4404, %v4420
      %v4440 = vunpack.c.l.s4 1934713408
      %v4441 = vunpack.c.0.s8 %v4440
      %v4442 = vlaneseq
      %v4443 = vshrl.u32 %v4442, 7
      %v4444 = vsub.s32 %v4441, %v4443
      %v4445 = vrot.slane %v4437, %v4444
      %v4447 = vunpack.c.l.s4 1934713408
      %v4448 = vunpack.c.0.s8 %v4447
      %v4449 = vlaneseq
      %v4450 = vshrl.u32 %v4449, 7
      %v4451 = vsub.s32 %v4448, %v4450
      %v4452 = vrot.slane %v4438, %v4451
      %v4453 = vcombine.high %v4429, 0.0
      %v4454 = vcombine.high %v4436, 0.0
      %v4455 = vcombine.high %v4445, 0.0
      %v4456 = vcombine.high %v4452, 0.0
      %v4457 = vcombine.low %v3953, %v3960
      %v4459 = vunpack.c.l.s4 1983009808
      %v4460 = vunpack.c.0.s8 %v4459
      %v4461 = vlaneseq
      %v4462 = vshrl.u32 %v4461, 7
      %v4463 = vsub.s32 %v4460, %v4462
      %v4464 = vrot.slane %v4457, %v4463
      %v4465 = vcombine.low %v3977, %v3978
      %v4467 = vunpack.c.l.s4 1983009808
      %v4468 = vunpack.c.0.s8 %v4467
      %v4469 = vlaneseq
      %v4470 = vshrl.u32 %v4469, 7
      %v4471 = vsub.s32 %v4468, %v4470
      %v4472 = vrot.slane %v4465, %v4471
      %v4473 = vcombine.low %v3969, %v3976
      %v4475 = vunpack.c.l.s4 1983009808
      %v4476 = vunpack.c.0.s8 %v4475
      %v4477 = vlaneseq
      %v4478 = vshrl.u32 %v4477, 7
      %v4479 = vsub.s32 %v4476, %v4478
      %v4480 = vrot.slane %v4473, %v4479
      %v4481 = vcombine.low %v3979, %v3980
      %v4483 = vunpack.c.l.s4 1983009808
      %v4484 = vunpack.c.0.s8 %v4483
      %v4485 = vlaneseq
      %v4486 = vshrl.u32 %v4485, 7
      %v4487 = vsub.s32 %v4484, %v4486
      %v4488 = vrot.slane %v4481, %v4487
      %v4489 = vcombine.low %v4464, %v4472
      %v4490 = vcombine.high %v4464, %v4472
      %v4492 = vunpack.c.l.s4 1934713408
      %v4493 = vunpack.c.0.s8 %v4492
      %v4494 = vlaneseq
      %v4495 = vshrl.u32 %v4494, 7
      %v4496 = vsub.s32 %v4493, %v4495
      %v4497 = vrot.slane %v4489, %v4496
      %v4499 = vunpack.c.l.s4 1934713408
      %v4500 = vunpack.c.0.s8 %v4499
      %v4501 = vlaneseq
      %v4502 = vshrl.u32 %v4501, 7
      %v4503 = vsub.s32 %v4500, %v4502
      %v4504 = vrot.slane %v4490, %v4503
      %v4505 = vcombine.low %v4480, %v4488
      %v4506 = vcombine.high %v4480, %v4488
      %v4508 = vunpack.c.l.s4 1934713408
      %v4509 = vunpack.c.0.s8 %v4508
      %v4510 = vlaneseq
      %v4511 = vshrl.u32 %v4510, 7
      %v4512 = vsub.s32 %v4509, %v4511
      %v4513 = vrot.slane %v4505, %v4512
      %v4515 = vunpack.c.l.s4 1934713408
      %v4516 = vunpack.c.0.s8 %v4515
      %v4517 = vlaneseq
      %v4518 = vshrl.u32 %v4517, 7
      %v4519 = vsub.s32 %v4516, %v4518
      %v4520 = vrot.slane %v4506, %v4519
      %v4521 = vcombine.low %v4497, %v4513
      %v4522 = vcombine.high %v4497, %v4513
      %v4523 = vcombine.low %v4504, %v4520
      %v4524 = vcombine.high %v4504, %v4520
      %v4525 = vcombine.low %v4021, %v4028
      %v4527 = vunpack.c.l.s4 1983009808
      %v4528 = vunpack.c.0.s8 %v4527
      %v4529 = vlaneseq
      %v4530 = vshrl.u32 %v4529, 7
      %v4531 = vsub.s32 %v4528, %v4530
      %v4532 = vrot.slane %v4525, %v4531
      %v4533 = vcombine.low %v4045, %v4046
      %v4535 = vunpack.c.l.s4 1983009808
      %v4536 = vunpack.c.0.s8 %v4535
      %v4537 = vlaneseq
      %v4538 = vshrl.u32 %v4537, 7
      %v4539 = vsub.s32 %v4536, %v4538
      %v4540 = vrot.slane %v4533, %v4539
      %v4541 = vcombine.low %v4037, %v4044
      %v4543 = vunpack.c.l.s4 1983009808
      %v4544 = vunpack.c.0.s8 %v4543
      %v4545 = vlaneseq
      %v4546 = vshrl.u32 %v4545, 7
      %v4547 = vsub.s32 %v4544, %v4546
      %v4548 = vrot.slane %v4541, %v4547
      %v4549 = vcombine.low %v4047, %v4048
      %v4551 = vunpack.c.l.s4 1983009808
      %v4552 = vunpack.c.0.s8 %v4551
      %v4553 = vlaneseq
      %v4554 = vshrl.u32 %v4553, 7
      %v4555 = vsub.s32 %v4552, %v4554
      %v4556 = vrot.slane %v4549, %v4555
      %v4557 = vcombine.low %v4532, %v4540
      %v4558 = vcombine.high %v4532, %v4540
      %v4560 = vunpack.c.l.s4 1934713408
      %v4561 = vunpack.c.0.s8 %v4560
      %v4562 = vlaneseq
      %v4563 = vshrl.u32 %v4562, 7
      %v4564 = vsub.s32 %v4561, %v4563
      %v4565 = vrot.slane %v4557, %v4564
      %v4567 = vunpack.c.l.s4 1934713408
      %v4568 = vunpack.c.0.s8 %v4567
      %v4569 = vlaneseq
      %v4570 = vshrl.u32 %v4569, 7
      %v4571 = vsub.s32 %v4568, %v4570
      %v4572 = vrot.slane %v4558, %v4571
      %v4573 = vcombine.low %v4548, %v4556
      %v4574 = vcombine.high %v4548, %v4556
      %v4576 = vunpack.c.l.s4 1934713408
      %v4577 = vunpack.c.0.s8 %v4576
      %v4578 = vlaneseq
      %v4579 = vshrl.u32 %v4578, 7
      %v4580 = vsub.s32 %v4577, %v4579
      %v4581 = vrot.slane %v4573, %v4580
      %v4583 = vunpack.c.l.s4 1934713408
      %v4584 = vunpack.c.0.s8 %v4583
      %v4585 = vlaneseq
      %v4586 = vshrl.u32 %v4585, 7
      %v4587 = vsub.s32 %v4584, %v4586
      %v4588 = vrot.slane %v4574, %v4587
      %v4589 = vcombine.low %v4565, %v4581
      %v4590 = vcombine.high %v4565, %v4581
      %v4591 = vcombine.low %v4572, %v4588
      %v4592 = vcombine.high %v4572, %v4588
      %v4593 = vcombine.low %v4089, %v4096
      %v4595 = vunpack.c.l.s4 1983009808
      %v4596 = vunpack.c.0.s8 %v4595
      %v4597 = vlaneseq
      %v4598 = vshrl.u32 %v4597, 7
      %v4599 = vsub.s32 %v4596, %v4598
      %v4600 = vrot.slane %v4593, %v4599
      %v4601 = vcombine.low %v4113, %v4114
      %v4603 = vunpack.c.l.s4 1983009808
      %v4604 = vunpack.c.0.s8 %v4603
      %v4605 = vlaneseq
      %v4606 = vshrl.u32 %v4605, 7
      %v4607 = vsub.s32 %v4604, %v4606
      %v4608 = vrot.slane %v4601, %v4607
      %v4609 = vcombine.low %v4105, %v4112
      %v4611 = vunpack.c.l.s4 1983009808
      %v4612 = vunpack.c.0.s8 %v4611
      %v4613 = vlaneseq
      %v4614 = vshrl.u32 %v4613, 7
      %v4615 = vsub.s32 %v4612, %v4614
      %v4616 = vrot.slane %v4609, %v4615
      %v4617 = vcombine.low %v4115, %v4116
      %v4619 = vunpack.c.l.s4 1983009808
      %v4620 = vunpack.c.0.s8 %v4619
      %v4621 = vlaneseq
      %v4622 = vshrl.u32 %v4621, 7
      %v4623 = vsub.s32 %v4620, %v4622
      %v4624 = vrot.slane %v4617, %v4623
      %v4625 = vcombine.low %v4600, %v4608
      %v4626 = vcombine.high %v4600, %v4608
      %v4628 = vunpack.c.l.s4 1934713408
      %v4629 = vunpack.c.0.s8 %v4628
      %v4630 = vlaneseq
      %v4631 = vshrl.u32 %v4630, 7
      %v4632 = vsub.s32 %v4629, %v4631
      %v4633 = vrot.slane %v4625, %v4632
      %v4635 = vunpack.c.l.s4 1934713408
      %v4636 = vunpack.c.0.s8 %v4635
      %v4637 = vlaneseq
      %v4638 = vshrl.u32 %v4637, 7
      %v4639 = vsub.s32 %v4636, %v4638
      %v4640 = vrot.slane %v4626, %v4639
      %v4641 = vcombine.low %v4616, %v4624
      %v4642 = vcombine.high %v4616, %v4624
      %v4644 = vunpack.c.l.s4 1934713408
      %v4645 = vunpack.c.0.s8 %v4644
      %v4646 = vlaneseq
      %v4647 = vshrl.u32 %v4646, 7
      %v4648 = vsub.s32 %v4645, %v4647
      %v4649 = vrot.slane %v4641, %v4648
      %v4651 = vunpack.c.l.s4 1934713408
      %v4652 = vunpack.c.0.s8 %v4651
      %v4653 = vlaneseq
      %v4654 = vshrl.u32 %v4653, 7
      %v4655 = vsub.s32 %v4652, %v4654
      %v4656 = vrot.slane %v4642, %v4655
      %v4657 = vcombine.low %v4633, %v4649
      %v4658 = vcombine.high %v4633, %v4649
      %v4659 = vcombine.low %v4640, %v4656
      %v4660 = vcombine.high %v4640, %v4656
      %v4661 = vcombine.low %v4157, %v4164
      %v4663 = vunpack.c.l.s4 1983009808
      %v4664 = vunpack.c.0.s8 %v4663
      %v4665 = vlaneseq
      %v4666 = vshrl.u32 %v4665, 7
      %v4667 = vsub.s32 %v4664, %v4666
      %v4668 = vrot.slane %v4661, %v4667
      %v4669 = vcombine.low %v4181, %v4182
      %v4671 = vunpack.c.l.s4 1983009808
      %v4672 = vunpack.c.0.s8 %v4671
      %v4673 = vlaneseq
      %v4674 = vshrl.u32 %v4673, 7
      %v4675 = vsub.s32 %v4672, %v4674
      %v4676 = vrot.slane %v4669, %v4675
      %v4677 = vcombine.low %v4173, %v4180
      %v4679 = vunpack.c.l.s4 1983009808
      %v4680 = vunpack.c.0.s8 %v4679
      %v4681 = vlaneseq
      %v4682 = vshrl.u32 %v4681, 7
      %v4683 = vsub.s32 %v4680, %v4682
      %v4684 = vrot.slane %v4677, %v4683
      %v4685 = vcombine.low %v4183, %v4184
      %v4687 = vunpack.c.l.s4 1983009808
      %v4688 = vunpack.c.0.s8 %v4687
      %v4689 = vlaneseq
      %v4690 = vshrl.u32 %v4689, 7
      %v4691 = vsub.s32 %v4688, %v4690
      %v4692 = vrot.slane %v4685, %v4691
      %v4693 = vcombine.low %v4668, %v4676
      %v4694 = vcombine.high %v4668, %v4676
      %v4696 = vunpack.c.l.s4 1934713408
      %v4697 = vunpack.c.0.s8 %v4696
      %v4698 = vlaneseq
      %v4699 = vshrl.u32 %v4698, 7
      %v4700 = vsub.s32 %v4697, %v4699
      %v4701 = vrot.slane %v4693, %v4700
      %v4703 = vunpack.c.l.s4 1934713408
      %v4704 = vunpack.c.0.s8 %v4703
      %v4705 = vlaneseq
      %v4706 = vshrl.u32 %v4705, 7
      %v4707 = vsub.s32 %v4704, %v4706
      %v4708 = vrot.slane %v4694, %v4707
      %v4709 = vcombine.low %v4684, %v4692
      %v4710 = vcombine.high %v4684, %v4692
      %v4712 = vunpack.c.l.s4 1934713408
      %v4713 = vunpack.c.0.s8 %v4712
      %v4714 = vlaneseq
      %v4715 = vshrl.u32 %v4714, 7
      %v4716 = vsub.s32 %v4713, %v4715
      %v4717 = vrot.slane %v4709, %v4716
      %v4719 = vunpack.c.l.s4 1934713408
      %v4720 = vunpack.c.0.s8 %v4719
      %v4721 = vlaneseq
      %v4722 = vshrl.u32 %v4721, 7
      %v4723 = vsub.s32 %v4720, %v4722
      %v4724 = vrot.slane %v4710, %v4723
      %v4725 = vcombine.low %v4701, %v4717
      %v4726 = vcombine.high %v4701, %v4717
      %v4727 = vcombine.low %v4708, %v4724
      %v4728 = vcombine.high %v4708, %v4724
      %v4729 = vcombine.low %v4225, %v4232
      %v4731 = vunpack.c.l.s4 1983009808
      %v4732 = vunpack.c.0.s8 %v4731
      %v4733 = vlaneseq
      %v4734 = vshrl.u32 %v4733, 7
      %v4735 = vsub.s32 %v4732, %v4734
      %v4736 = vrot.slane %v4729, %v4735
      %v4737 = vcombine.low %v4249, %v4250
      %v4739 = vunpack.c.l.s4 1983009808
      %v4740 = vunpack.c.0.s8 %v4739
      %v4741 = vlaneseq
      %v4742 = vshrl.u32 %v4741, 7
      %v4743 = vsub.s32 %v4740, %v4742
      %v4744 = vrot.slane %v4737, %v4743
      %v4745 = vcombine.low %v4241, %v4248
      %v4747 = vunpack.c.l.s4 1983009808
      %v4748 = vunpack.c.0.s8 %v4747
      %v4749 = vlaneseq
      %v4750 = vshrl.u32 %v4749, 7
      %v4751 = vsub.s32 %v4748, %v4750
      %v4752 = vrot.slane %v4745, %v4751
      %v4753 = vcombine.low %v4251, %v4252
      %v4755 = vunpack.c.l.s4 1983009808
      %v4756 = vunpack.c.0.s8 %v4755
      %v4757 = vlaneseq
      %v4758 = vshrl.u32 %v4757, 7
      %v4759 = vsub.s32 %v4756, %v4758
      %v4760 = vrot.slane %v4753, %v4759
      %v4761 = vcombine.low %v4736, %v4744
      %v4762 = vcombine.high %v4736, %v4744
      %v4764 = vunpack.c.l.s4 1934713408
      %v4765 = vunpack.c.0.s8 %v4764
      %v4766 = vlaneseq
      %v4767 = vshrl.u32 %v4766, 7
      %v4768 = vsub.s32 %v4765, %v4767
      %v4769 = vrot.slane %v4761, %v4768
      %v4771 = vunpack.c.l.s4 1934713408
      %v4772 = vunpack.c.0.s8 %v4771
      %v4773 = vlaneseq
      %v4774 = vshrl.u32 %v4773, 7
      %v4775 = vsub.s32 %v4772, %v4774
      %v4776 = vrot.slane %v4762, %v4775
      %v4777 = vcombine.low %v4752, %v4760
      %v4778 = vcombine.high %v4752, %v4760
      %v4780 = vunpack.c.l.s4 1934713408
      %v4781 = vunpack.c.0.s8 %v4780
      %v4782 = vlaneseq
      %v4783 = vshrl.u32 %v4782, 7
      %v4784 = vsub.s32 %v4781, %v4783
      %v4785 = vrot.slane %v4777, %v4784
      %v4787 = vunpack.c.l.s4 1934713408
      %v4788 = vunpack.c.0.s8 %v4787
      %v4789 = vlaneseq
      %v4790 = vshrl.u32 %v4789, 7
      %v4791 = vsub.s32 %v4788, %v4790
      %v4792 = vrot.slane %v4778, %v4791
      %v4793 = vcombine.low %v4769, %v4785
      %v4794 = vcombine.high %v4769, %v4785
      %v4795 = vcombine.low %v4776, %v4792
      %v4796 = vcombine.high %v4776, %v4792
      %v4797 = vcombine.low %v4293, %v4300
      %v4799 = vunpack.c.l.s4 1983009808
      %v4800 = vunpack.c.0.s8 %v4799
      %v4801 = vlaneseq
      %v4802 = vshrl.u32 %v4801, 7
      %v4803 = vsub.s32 %v4800, %v4802
      %v4804 = vrot.slane %v4797, %v4803
      %v4805 = vcombine.low %v4317, %v4318
      %v4807 = vunpack.c.l.s4 1983009808
      %v4808 = vunpack.c.0.s8 %v4807
      %v4809 = vlaneseq
      %v4810 = vshrl.u32 %v4809, 7
      %v4811 = vsub.s32 %v4808, %v4810
      %v4812 = vrot.slane %v4805, %v4811
      %v4813 = vcombine.low %v4309, %v4316
      %v4815 = vunpack.c.l.s4 1983009808
      %v4816 = vunpack.c.0.s8 %v4815
      %v4817 = vlaneseq
      %v4818 = vshrl.u32 %v4817, 7
      %v4819 = vsub.s32 %v4816, %v4818
      %v4820 = vrot.slane %v4813, %v4819
      %v4821 = vcombine.low %v4319, %v4320
      %v4823 = vunpack.c.l.s4 1983009808
      %v4824 = vunpack.c.0.s8 %v4823
      %v4825 = vlaneseq
      %v4826 = vshrl.u32 %v4825, 7
      %v4827 = vsub.s32 %v4824, %v4826
      %v4828 = vrot.slane %v4821, %v4827
      %v4829 = vcombine.low %v4804, %v4812
      %v4830 = vcombine.high %v4804, %v4812
      %v4832 = vunpack.c.l.s4 1934713408
      %v4833 = vunpack.c.0.s8 %v4832
      %v4834 = vlaneseq
      %v4835 = vshrl.u32 %v4834, 7
      %v4836 = vsub.s32 %v4833, %v4835
      %v4837 = vrot.slane %v4829, %v4836
      %v4839 = vunpack.c.l.s4 1934713408
      %v4840 = vunpack.c.0.s8 %v4839
      %v4841 = vlaneseq
      %v4842 = vshrl.u32 %v4841, 7
      %v4843 = vsub.s32 %v4840, %v4842
      %v4844 = vrot.slane %v4830, %v4843
      %v4845 = vcombine.low %v4820, %v4828
      %v4846 = vcombine.high %v4820, %v4828
      %v4848 = vunpack.c.l.s4 1934713408
      %v4849 = vunpack.c.0.s8 %v4848
      %v4850 = vlaneseq
      %v4851 = vshrl.u32 %v4850, 7
      %v4852 = vsub.s32 %v4849, %v4851
      %v4853 = vrot.slane %v4845, %v4852
      %v4855 = vunpack.c.l.s4 1934713408
      %v4856 = vunpack.c.0.s8 %v4855
      %v4857 = vlaneseq
      %v4858 = vshrl.u32 %v4857, 7
      %v4859 = vsub.s32 %v4856, %v4858
      %v4860 = vrot.slane %v4846, %v4859
      %v4861 = vcombine.low %v4837, %v4853
      %v4862 = vcombine.high %v4837, %v4853
      %v4863 = vcombine.low %v4844, %v4860
      %v4864 = vcombine.high %v4844, %v4860
      %v4865 = vcombine.low %v4361, %v4368
      %v4867 = vunpack.c.l.s4 1983009808
      %v4868 = vunpack.c.0.s8 %v4867
      %v4869 = vlaneseq
      %v4870 = vshrl.u32 %v4869, 7
      %v4871 = vsub.s32 %v4868, %v4870
      %v4872 = vrot.slane %v4865, %v4871
      %v4873 = vcombine.low %v4385, %v4386
      %v4875 = vunpack.c.l.s4 1983009808
      %v4876 = vunpack.c.0.s8 %v4875
      %v4877 = vlaneseq
      %v4878 = vshrl.u32 %v4877, 7
      %v4879 = vsub.s32 %v4876, %v4878
      %v4880 = vrot.slane %v4873, %v4879
      %v4881 = vcombine.low %v4377, %v4384
      %v4883 = vunpack.c.l.s4 1983009808
      %v4884 = vunpack.c.0.s8 %v4883
      %v4885 = vlaneseq
      %v4886 = vshrl.u32 %v4885, 7
      %v4887 = vsub.s32 %v4884, %v4886
      %v4888 = vrot.slane %v4881, %v4887
      %v4889 = vcombine.low %v4387, %v4388
      %v4891 = vunpack.c.l.s4 1983009808
      %v4892 = vunpack.c.0.s8 %v4891
      %v4893 = vlaneseq
      %v4894 = vshrl.u32 %v4893, 7
      %v4895 = vsub.s32 %v4892, %v4894
      %v4896 = vrot.slane %v4889, %v4895
      %v4897 = vcombine.low %v4872, %v4880
      %v4898 = vcombine.high %v4872, %v4880
      %v4900 = vunpack.c.l.s4 1934713408
      %v4901 = vunpack.c.0.s8 %v4900
      %v4902 = vlaneseq
      %v4903 = vshrl.u32 %v4902, 7
      %v4904 = vsub.s32 %v4901, %v4903
      %v4905 = vrot.slane %v4897, %v4904
      %v4907 = vunpack.c.l.s4 1934713408
      %v4908 = vunpack.c.0.s8 %v4907
      %v4909 = vlaneseq
      %v4910 = vshrl.u32 %v4909, 7
      %v4911 = vsub.s32 %v4908, %v4910
      %v4912 = vrot.slane %v4898, %v4911
      %v4913 = vcombine.low %v4888, %v4896
      %v4914 = vcombine.high %v4888, %v4896
      %v4916 = vunpack.c.l.s4 1934713408
      %v4917 = vunpack.c.0.s8 %v4916
      %v4918 = vlaneseq
      %v4919 = vshrl.u32 %v4918, 7
      %v4920 = vsub.s32 %v4917, %v4919
      %v4921 = vrot.slane %v4913, %v4920
      %v4923 = vunpack.c.l.s4 1934713408
      %v4924 = vunpack.c.0.s8 %v4923
      %v4925 = vlaneseq
      %v4926 = vshrl.u32 %v4925, 7
      %v4927 = vsub.s32 %v4924, %v4926
      %v4928 = vrot.slane %v4914, %v4927
      %v4929 = vcombine.low %v4905, %v4921
      %v4930 = vcombine.high %v4905, %v4921
      %v4931 = vcombine.low %v4912, %v4928
      %v4932 = vcombine.high %v4912, %v4928
      %v4933 = vcombine.low %v4429, %v4436
      %v4935 = vunpack.c.l.s4 1983009808
      %v4936 = vunpack.c.0.s8 %v4935
      %v4937 = vlaneseq
      %v4938 = vshrl.u32 %v4937, 7
      %v4939 = vsub.s32 %v4936, %v4938
      %v4940 = vrot.slane %v4933, %v4939
      %v4941 = vcombine.low %v4453, %v4454
      %v4943 = vunpack.c.l.s4 1983009808
      %v4944 = vunpack.c.0.s8 %v4943
      %v4945 = vlaneseq
      %v4946 = vshrl.u32 %v4945, 7
      %v4947 = vsub.s32 %v4944, %v4946
      %v4948 = vrot.slane %v4941, %v4947
      %v4949 = vcombine.low %v4445, %v4452
      %v4951 = vunpack.c.l.s4 1983009808
      %v4952 = vunpack.c.0.s8 %v4951
      %v4953 = vlaneseq
      %v4954 = vshrl.u32 %v4953, 7
      %v4955 = vsub.s32 %v4952, %v4954
      %v4956 = vrot.slane %v4949, %v4955
      %v4957 = vcombine.low %v4455, %v4456
      %v4959 = vunpack.c.l.s4 1983009808
      %v4960 = vunpack.c.0.s8 %v4959
      %v4961 = vlaneseq
      %v4962 = vshrl.u32 %v4961, 7
      %v4963 = vsub.s32 %v4960, %v4962
      %v4964 = vrot.slane %v4957, %v4963
      %v4965 = vcombine.low %v4940, %v4948
      %v4966 = vcombine.high %v4940, %v4948
      %v4968 = vunpack.c.l.s4 1934713408
      %v4969 = vunpack.c.0.s8 %v4968
      %v4970 = vlaneseq
      %v4971 = vshrl.u32 %v4970, 7
      %v4972 = vsub.s32 %v4969, %v4971
      %v4973 = vrot.slane %v4965, %v4972
      %v4975 = vunpack.c.l.s4 1934713408
      %v4976 = vunpack.c.0.s8 %v4975
      %v4977 = vlaneseq
      %v4978 = vshrl.u32 %v4977, 7
      %v4979 = vsub.s32 %v4976, %v4978
      %v4980 = vrot.slane %v4966, %v4979
      %v4981 = vcombine.low %v4956, %v4964
      %v4982 = vcombine.high %v4956, %v4964
      %v4984 = vunpack.c.l.s4 1934713408
      %v4985 = vunpack.c.0.s8 %v4984
      %v4986 = vlaneseq
      %v4987 = vshrl.u32 %v4986, 7
      %v4988 = vsub.s32 %v4985, %v4987
      %v4989 = vrot.slane %v4981, %v4988
      %v4991 = vunpack.c.l.s4 1934713408
      %v4992 = vunpack.c.0.s8 %v4991
      %v4993 = vlaneseq
      %v4994 = vshrl.u32 %v4993, 7
      %v4995 = vsub.s32 %v4992, %v4994
      %v4996 = vrot.slane %v4982, %v4995
      %v4997 = vcombine.low %v4973, %v4989
      %v4998 = vcombine.high %v4973, %v4989
      %v4999 = vcombine.low %v4980, %v4996
      %v5000 = vcombine.high %v4980, %v4996
      %v5001 = vpack.c.bf16 %v4589, %v4521
      %v5002 = vpack.c.bf16 %v4725, %v4657
      %v5003 = vpack.c.bf16 %v4861, %v4793
      %v5004 = vpack.c.bf16 %v4997, %v4929
      %v5005 = vpack.c.bf16 %v4590, %v4522
      %v5006 = vpack.c.bf16 %v4726, %v4658
      %v5007 = vpack.c.bf16 %v4862, %v4794
      %v5008 = vpack.c.bf16 %v4998, %v4930
      %v5009 = vpack.c.bf16 %v4591, %v4523
      %v5010 = vpack.c.bf16 %v4727, %v4659
      %v5011 = vpack.c.bf16 %v4863, %v4795
      %v5012 = vpack.c.bf16 %v4999, %v4931
      %v5013 = vpack.c.bf16 %v4592, %v4524
      %v5014 = vpack.c.bf16 %v4728, %v4660
      %v5015 = vpack.c.bf16 %v4864, %v4796
      %v5016 = vpack.c.bf16 %v5000, %v4932
      %vm5017 = vcmask 261120
      %v5019 = vsel %vm5017, %v2633, 0
      %v5022 = vsel %vm5017, %v2634, 0
      %v5025 = vsel %vm5017, %v2635, 0
      %v5028 = vsel %vm5017, %v2636, 0
      %v5031 = vsel %vm5017, %v3817, 0
      %v5034 = vsel %vm5017, %v3818, 0
      %v5037 = vsel %vm5017, %v3819, 0
      %v5040 = vsel %vm5017, %v3820, 0
      %5042 = vmatprep.subr.bf16.mxu0 0
      %5043 = vmatpush1.bf16.xpose.msra.mxu0 %v5031
      %5044 = vmatprep.subr.bf16.mxu0 0
      %5045 = vmatpush1.bf16.xpose.msra.mxu0 %v5034
      %5046 = vmatprep.subr.bf16.mxu0 0
      %5047 = vmatpush1.bf16.xpose.msra.mxu0 %v5037
      %5048 = vmatprep.subr.bf16.mxu0 0
      %5049 = vmatpush1.bf16.xpose.msra.mxu0 %v5040
      %5050 = vmatprep.subr.bf16.mxu0 0
      %5051 = vmatpush1.bf16.xpose.msra.mxu0 0
      %5052 = vmatprep.subr.bf16.mxu0 0
      %5053 = vmatpush1.bf16.xpose.msra.mxu0 0
      %5054 = vmatprep.subr.bf16.mxu0 0
      %5055 = vmatpush1.bf16.xpose.msra.mxu0 0
      %5056 = vmatprep.subr.bf16.mxu0 0
      %5057 = vmatpush1.bf16.xpose.msra.mxu0 0
      %5058 = vmatprep.subr.bf16.mxu0 0
      %5059 = vmatpush1.bf16.xpose.msra.mxu0 0
      %5060 = vmatprep.subr.bf16.mxu0 0
      %5061 = vmatpush1.bf16.xpose.msra.mxu0 0
      %5062 = vmatprep.subr.bf16.mxu0 0
      %5063 = vmatpush1.bf16.xpose.msra.mxu0 0
      %5064 = vmatprep.subr.bf16.mxu0 0
      %5065 = vmatpush1.bf16.xpose.msra.mxu0 0
      %5066 = vmatprep.subr.bf16.mxu0 0
      %5067 = vmatpush1.bf16.xpose.msra.mxu0 0
      %5068 = vmatprep.subr.bf16.mxu0 0
      %5069 = vmatpush1.bf16.xpose.msra.mxu0 0
      %5070 = vmatprep.subr.bf16.mxu0 0
      %5071 = vmatpush1.bf16.xpose.msra.mxu0 0
      %5072 = vmatprep.subr.bf16.mxu0 0
      %5073 = vmatpush1.bf16.xpose.msra.mxu0 0
      %5074 = vmatprep.mubr.bf16.mxu0 0
      %5075 = vmatmul.mubr.bf16.gmra.mrb[0].mxu0 %v5019
      %v5076 = vpop.f32.mrb[0].mxu0
      %v5077 = vadd.f32 0.0, %v5076
      %v5078 = vpop.f32.mrb[0].mxu0
      %v5079 = vpop.f32.mrb[0].mxu0
      %v5080 = vadd.f32 0.0, %v5079
      %v5081 = vpop.f32.mrb[0].mxu0
      %5082 = vmatprep.mubr.bf16.mxu0 0
      %5083 = vmatmul.mubr.bf16.gmra.mrb[0].mxu0 %v5022
      %v5084 = vpop.f32.mrb[0].mxu0
      %v5085 = vadd.f32 0.0, %v5084
      %v5086 = vpop.f32.mrb[0].mxu0
      %v5087 = vpop.f32.mrb[0].mxu0
      %v5088 = vadd.f32 0.0, %v5087
      %v5089 = vpop.f32.mrb[0].mxu0
      %5090 = vmatprep.mubr.bf16.mxu0 0
      %5091 = vmatmul.mubr.bf16.gmra.mrb[0].mxu0 %v5025
      %v5092 = vpop.f32.mrb[0].mxu0
      %v5093 = vadd.f32 0.0, %v5092
      %v5094 = vpop.f32.mrb[0].mxu0
      %v5095 = vpop.f32.mrb[0].mxu0
      %v5096 = vadd.f32 0.0, %v5095
      %v5097 = vpop.f32.mrb[0].mxu0
      %5098 = vmatprep.mubr.bf16.mxu0 0
      %5099 = vmatmul.mubr.bf16.gmra.mrb[0].mxu0 %v5028
      %v5100 = vpop.f32.mrb[0].mxu0
      %v5101 = vadd.f32 0.0, %v5100
      %v5102 = vpop.f32.mrb[0].mxu0
      %v5103 = vpop.f32.mrb[0].mxu0
      %v5104 = vadd.f32 0.0, %v5103
      %v5105 = vpop.f32.mrb[0].mxu0
      %5106 = vdwg.mxu0
      %v5108 = vsel %vm5017, %v2637, 0
      %v5111 = vsel %vm5017, %v2638, 0
      %v5114 = vsel %vm5017, %v2639, 0
      %v5117 = vsel %vm5017, %v2640, 0
      %v5120 = vsel %vm5017, %v3821, 0
      %v5123 = vsel %vm5017, %v3822, 0
      %v5126 = vsel %vm5017, %v3823, 0
      %v5129 = vsel %vm5017, %v3824, 0
      %5131 = vmatprep.subr.bf16.mxu0 0
      %5132 = vmatpush1.bf16.xpose.msra.mxu0 %v5120
      %5133 = vmatprep.subr.bf16.mxu0 0
      %5134 = vmatpush1.bf16.xpose.msra.mxu0 %v5123
      %5135 = vmatprep.subr.bf16.mxu0 0
      %5136 = vmatpush1.bf16.xpose.msra.mxu0 %v5126
      %5137 = vmatprep.subr.bf16.mxu0 0
      %5138 = vmatpush1.bf16.xpose.msra.mxu0 %v5129
      %5139 = vmatprep.subr.bf16.mxu0 0
      %5140 = vmatpush1.bf16.xpose.msra.mxu0 0
      %5141 = vmatprep.subr.bf16.mxu0 0
      %5142 = vmatpush1.bf16.xpose.msra.mxu0 0
      %5143 = vmatprep.subr.bf16.mxu0 0
      %5144 = vmatpush1.bf16.xpose.msra.mxu0 0
      %5145 = vmatprep.subr.bf16.mxu0 0
      %5146 = vmatpush1.bf16.xpose.msra.mxu0 0
      %5147 = vmatprep.subr.bf16.mxu0 0
      %5148 = vmatpush1.bf16.xpose.msra.mxu0 0
      %5149 = vmatprep.subr.bf16.mxu0 0
      %5150 = vmatpush1.bf16.xpose.msra.mxu0 0
      %5151 = vmatprep.subr.bf16.mxu0 0
      %5152 = vmatpush1.bf16.xpose.msra.mxu0 0
      %5153 = vmatprep.subr.bf16.mxu0 0
      %5154 = vmatpush1.bf16.xpose.msra.mxu0 0
      %5155 = vmatprep.subr.bf16.mxu0 0
      %5156 = vmatpush1.bf16.xpose.msra.mxu0 0
      %5157 = vmatprep.subr.bf16.mxu0 0
      %5158 = vmatpush1.bf16.xpose.msra.mxu0 0
      %5159 = vmatprep.subr.bf16.mxu0 0
      %5160 = vmatpush1.bf16.xpose.msra.mxu0 0
      %5161 = vmatprep.subr.bf16.mxu0 0
      %5162 = vmatpush1.bf16.xpose.msra.mxu0 0
      %5163 = vmatprep.mubr.bf16.mxu0 0
      %5164 = vmatmul.mubr.bf16.gmra.mrb[0].mxu0 %v5108
      %v5165 = vpop.f32.mrb[0].mxu0
      %v5166 = vadd.f32 0.0, %v5165
      %v5167 = vpop.f32.mrb[0].mxu0
      %v5168 = vpop.f32.mrb[0].mxu0
      %v5169 = vadd.f32 0.0, %v5168
      %v5170 = vpop.f32.mrb[0].mxu0
      %5171 = vmatprep.mubr.bf16.mxu0 0
      %5172 = vmatmul.mubr.bf16.gmra.mrb[0].mxu0 %v5111
      %v5173 = vpop.f32.mrb[0].mxu0
      %v5174 = vadd.f32 0.0, %v5173
      %v5175 = vpop.f32.mrb[0].mxu0
      %v5176 = vpop.f32.mrb[0].mxu0
      %v5177 = vadd.f32 0.0, %v5176
      %v5178 = vpop.f32.mrb[0].mxu0
      %5179 = vmatprep.mubr.bf16.mxu0 0
      %5180 = vmatmul.mubr.bf16.gmra.mrb[0].mxu0 %v5114
      %v5181 = vpop.f32.mrb[0].mxu0
      %v5182 = vadd.f32 0.0, %v5181
      %v5183 = vpop.f32.mrb[0].mxu0
      %v5184 = vpop.f32.mrb[0].mxu0
      %v5185 = vadd.f32 0.0, %v5184
      %v5186 = vpop.f32.mrb[0].mxu0
      %5187 = vmatprep.mubr.bf16.mxu0 0
      %5188 = vmatmul.mubr.bf16.gmra.mrb[0].mxu0 %v5117
      %v5189 = vpop.f32.mrb[0].mxu0
      %v5190 = vadd.f32 0.0, %v5189
      %v5191 = vpop.f32.mrb[0].mxu0
      %v5192 = vpop.f32.mrb[0].mxu0
      %v5193 = vadd.f32 0.0, %v5192
      %v5194 = vpop.f32.mrb[0].mxu0
      %5195 = vdwg.mxu0
      %v5197 = vsel %vm5017, %v2641, 0
      %v5200 = vsel %vm5017, %v2642, 0
      %v5203 = vsel %vm5017, %v2643, 0
      %v5206 = vsel %vm5017, %v2644, 0
      %v5209 = vsel %vm5017, %v3825, 0
      %v5212 = vsel %vm5017, %v3826, 0
      %v5215 = vsel %vm5017, %v3827, 0
      %v5218 = vsel %vm5017, %v3828, 0
      %5220 = vmatprep.subr.bf16.mxu0 0
      %5221 = vmatpush1.bf16.xpose.msra.mxu0 %v5209
      %5222 = vmatprep.subr.bf16.mxu0 0
      %5223 = vmatpush1.bf16.xpose.msra.mxu0 %v5212
      %5224 = vmatprep.subr.bf16.mxu0 0
      %5225 = vmatpush1.bf16.xpose.msra.mxu0 %v5215
      %5226 = vmatprep.subr.bf16.mxu0 0
      %5227 = vmatpush1.bf16.xpose.msra.mxu0 %v5218
      %5228 = vmatprep.subr.bf16.mxu0 0
      %5229 = vmatpush1.bf16.xpose.msra.mxu0 0
      %5230 = vmatprep.subr.bf16.mxu0 0
      %5231 = vmatpush1.bf16.xpose.msra.mxu0 0
      %5232 = vmatprep.subr.bf16.mxu0 0
      %5233 = vmatpush1.bf16.xpose.msra.mxu0 0
      %5234 = vmatprep.subr.bf16.mxu0 0
      %5235 = vmatpush1.bf16.xpose.msra.mxu0 0
      %5236 = vmatprep.subr.bf16.mxu0 0
      %5237 = vmatpush1.bf16.xpose.msra.mxu0 0
      %5238 = vmatprep.subr.bf16.mxu0 0
      %5239 = vmatpush1.bf16.xpose.msra.mxu0 0
      %5240 = vmatprep.subr.bf16.mxu0 0
      %5241 = vmatpush1.bf16.xpose.msra.mxu0 0
      %5242 = vmatprep.subr.bf16.mxu0 0
      %5243 = vmatpush1.bf16.xpose.msra.mxu0 0
      %5244 = vmatprep.subr.bf16.mxu0 0
      %5245 = vmatpush1.bf16.xpose.msra.mxu0 0
      %5246 = vmatprep.subr.bf16.mxu0 0
      %5247 = vmatpush1.bf16.xpose.msra.mxu0 0
      %5248 = vmatprep.subr.bf16.mxu0 0
      %5249 = vmatpush1.bf16.xpose.msra.mxu0 0
      %5250 = vmatprep.subr.bf16.mxu0 0
      %5251 = vmatpush1.bf16.xpose.msra.mxu0 0
      %5252 = vmatprep.mubr.bf16.mxu0 0
      %5253 = vmatmul.mubr.bf16.gmra.mrb[0].mxu0 %v5197
      %v5254 = vpop.f32.mrb[0].mxu0
      %v5255 = vadd.f32 0.0, %v5254
      %v5256 = vpop.f32.mrb[0].mxu0
      %v5257 = vpop.f32.mrb[0].mxu0
      %v5258 = vadd.f32 0.0, %v5257
      %v5259 = vpop.f32.mrb[0].mxu0
      %5260 = vmatprep.mubr.bf16.mxu0 0
      %5261 = vmatmul.mubr.bf16.gmra.mrb[0].mxu0 %v5200
      %v5262 = vpop.f32.mrb[0].mxu0
      %v5263 = vadd.f32 0.0, %v5262
      %v5264 = vpop.f32.mrb[0].mxu0
      %v5265 = vpop.f32.mrb[0].mxu0
      %v5266 = vadd.f32 0.0, %v5265
      %v5267 = vpop.f32.mrb[0].mxu0
      %5268 = vmatprep.mubr.bf16.mxu0 0
      %5269 = vmatmul.mubr.bf16.gmra.mrb[0].mxu0 %v5203
      %v5270 = vpop.f32.mrb[0].mxu0
      %v5271 = vadd.f32 0.0, %v5270
      %v5272 = vpop.f32.mrb[0].mxu0
      %v5273 = vpop.f32.mrb[0].mxu0
      %v5274 = vadd.f32 0.0, %v5273
      %v5275 = vpop.f32.mrb[0].mxu0
      %5276 = vmatprep.mubr.bf16.mxu0 0
      %5277 = vmatmul.mubr.bf16.gmra.mrb[0].mxu0 %v5206
      %v5278 = vpop.f32.mrb[0].mxu0
      %v5279 = vadd.f32 0.0, %v5278
      %v5280 = vpop.f32.mrb[0].mxu0
      %v5281 = vpop.f32.mrb[0].mxu0
      %v5282 = vadd.f32 0.0, %v5281
      %v5283 = vpop.f32.mrb[0].mxu0
      %5284 = vdwg.mxu0
      %v5286 = vsel %vm5017, %v2645, 0
      %v5289 = vsel %vm5017, %v2646, 0
      %v5292 = vsel %vm5017, %v2647, 0
      %v5295 = vsel %vm5017, %v2648, 0
      %v5298 = vsel %vm5017, %v3829, 0
      %v5301 = vsel %vm5017, %v3830, 0
      %v5304 = vsel %vm5017, %v3831, 0
      %v5307 = vsel %vm5017, %v3832, 0
      %5309 = vmatprep.subr.bf16.mxu0 0
      %5310 = vmatpush1.bf16.xpose.msra.mxu0 %v5298
      %5311 = vmatprep.subr.bf16.mxu0 0
      %5312 = vmatpush1.bf16.xpose.msra.mxu0 %v5301
      %5313 = vmatprep.subr.bf16.mxu0 0
      %5314 = vmatpush1.bf16.xpose.msra.mxu0 %v5304
      %5315 = vmatprep.subr.bf16.mxu0 0
      %5316 = vmatpush1.bf16.xpose.msra.mxu0 %v5307
      %5317 = vmatprep.subr.bf16.mxu0 0
      %5318 = vmatpush1.bf16.xpose.msra.mxu0 0
      %5319 = vmatprep.subr.bf16.mxu0 0
      %5320 = vmatpush1.bf16.xpose.msra.mxu0 0
      %5321 = vmatprep.subr.bf16.mxu0 0
      %5322 = vmatpush1.bf16.xpose.msra.mxu0 0
      %5323 = vmatprep.subr.bf16.mxu0 0
      %5324 = vmatpush1.bf16.xpose.msra.mxu0 0
      %5325 = vmatprep.subr.bf16.mxu0 0
      %5326 = vmatpush1.bf16.xpose.msra.mxu0 0
      %5327 = vmatprep.subr.bf16.mxu0 0
      %5328 = vmatpush1.bf16.xpose.msra.mxu0 0
      %5329 = vmatprep.subr.bf16.mxu0 0
      %5330 = vmatpush1.bf16.xpose.msra.mxu0 0
      %5331 = vmatprep.subr.bf16.mxu0 0
      %5332 = vmatpush1.bf16.xpose.msra.mxu0 0
      %5333 = vmatprep.subr.bf16.mxu0 0
      %5334 = vmatpush1.bf16.xpose.msra.mxu0 0
      %5335 = vmatprep.subr.bf16.mxu0 0
      %5336 = vmatpush1.bf16.xpose.msra.mxu0 0
      %5337 = vmatprep.subr.bf16.mxu0 0
      %5338 = vmatpush1.bf16.xpose.msra.mxu0 0
      %5339 = vmatprep.subr.bf16.mxu0 0
      %5340 = vmatpush1.bf16.xpose.msra.mxu0 0
      %5341 = vmatprep.mubr.bf16.mxu0 0
      %5342 = vmatmul.mubr.bf16.gmra.mrb[0].mxu0 %v5286
      %v5343 = vpop.f32.mrb[0].mxu0
      %v5344 = vadd.f32 0.0, %v5343
      %v5345 = vpop.f32.mrb[0].mxu0
      %v5346 = vpop.f32.mrb[0].mxu0
      %v5347 = vadd.f32 0.0, %v5346
      %v5348 = vpop.f32.mrb[0].mxu0
      %5349 = vmatprep.mubr.bf16.mxu0 0
      %5350 = vmatmul.mubr.bf16.gmra.mrb[0].mxu0 %v5289
      %v5351 = vpop.f32.mrb[0].mxu0
      %v5352 = vadd.f32 0.0, %v5351
      %v5353 = vpop.f32.mrb[0].mxu0
      %v5354 = vpop.f32.mrb[0].mxu0
      %v5355 = vadd.f32 0.0, %v5354
      %v5356 = vpop.f32.mrb[0].mxu0
      %5357 = vmatprep.mubr.bf16.mxu0 0
      %5358 = vmatmul.mubr.bf16.gmra.mrb[0].mxu0 %v5292
      %v5359 = vpop.f32.mrb[0].mxu0
      %v5360 = vadd.f32 0.0, %v5359
      %v5361 = vpop.f32.mrb[0].mxu0
      %v5362 = vpop.f32.mrb[0].mxu0
      %v5363 = vadd.f32 0.0, %v5362
      %v5364 = vpop.f32.mrb[0].mxu0
      %5365 = vmatprep.mubr.bf16.mxu0 0
      %5366 = vmatmul.mubr.bf16.gmra.mrb[0].mxu0 %v5295
      %v5367 = vpop.f32.mrb[0].mxu0
      %v5368 = vadd.f32 0.0, %v5367
      %v5369 = vpop.f32.mrb[0].mxu0
      %v5370 = vpop.f32.mrb[0].mxu0
      %v5371 = vadd.f32 0.0, %v5370
      %v5372 = vpop.f32.mrb[0].mxu0
      %5373 = vdwg.mxu0
      %v5374 = vmul.f32 %v5077, 0.17677669
      %v5375 = vmul.f32 %v5080, 0.17677669
      %v5376 = vmul.f32 %v5085, 0.17677669
      %v5377 = vmul.f32 %v5088, 0.17677669
      %v5378 = vmul.f32 %v5093, 0.17677669
      %v5379 = vmul.f32 %v5096, 0.17677669
      %v5380 = vmul.f32 %v5101, 0.17677669
      %v5381 = vmul.f32 %v5104, 0.17677669
      %v5382 = vmul.f32 %v5166, 0.17677669
      %v5383 = vmul.f32 %v5169, 0.17677669
      %v5384 = vmul.f32 %v5174, 0.17677669
      %v5385 = vmul.f32 %v5177, 0.17677669
      %v5386 = vmul.f32 %v5182, 0.17677669
      %v5387 = vmul.f32 %v5185, 0.17677669
      %v5388 = vmul.f32 %v5190, 0.17677669
      %v5389 = vmul.f32 %v5193, 0.17677669
      %v5390 = vmul.f32 %v5255, 0.17677669
      %v5391 = vmul.f32 %v5258, 0.17677669
      %v5392 = vmul.f32 %v5263, 0.17677669
      %v5393 = vmul.f32 %v5266, 0.17677669
      %v5394 = vmul.f32 %v5271, 0.17677669
      %v5395 = vmul.f32 %v5274, 0.17677669
      %v5396 = vmul.f32 %v5279, 0.17677669
      %v5397 = vmul.f32 %v5282, 0.17677669
      %v5398 = vmul.f32 %v5344, 0.17677669
      %v5399 = vmul.f32 %v5347, 0.17677669
      %v5400 = vmul.f32 %v5352, 0.17677669
      %v5401 = vmul.f32 %v5355, 0.17677669
      %v5402 = vmul.f32 %v5360, 0.17677669
      %v5403 = vmul.f32 %v5363, 0.17677669
      %v5404 = vmul.f32 %v5368, 0.17677669
      %v5405 = vmul.f32 %v5371, 0.17677669
      %vm5406 = vcmask 523264
      %v5407 = vsel %vm5406, %v5374, -inf
      %5408 = vmax.xlane.f32.xlu0 %v5407
      %v5409 = vpop.xlane.xlu0 %5408
      %v5410 = vsel %vm5406, %v5375, -inf
      %5411 = vmax.xlane.f32.xlu0 %v5410
      %v5412 = vpop.xlane.xlu0 %5411
      %v5413 = vsel %vm5406, %v5376, -inf
      %5414 = vmax.xlane.f32.xlu0 %v5413
      %v5415 = vpop.xlane.xlu0 %5414
      %v5416 = vsel %vm5406, %v5377, -inf
      %5417 = vmax.xlane.f32.xlu0 %v5416
      %v5418 = vpop.xlane.xlu0 %5417
      %v5419 = vsel %vm5406, %v5378, -inf
      %5420 = vmax.xlane.f32.xlu0 %v5419
      %v5421 = vpop.xlane.xlu0 %5420
      %v5422 = vsel %vm5406, %v5379, -inf
      %5423 = vmax.xlane.f32.xlu0 %v5422
      %v5424 = vpop.xlane.xlu0 %5423
      %v5425 = vsel %vm5406, %v5380, -inf
      %5426 = vmax.xlane.f32.xlu0 %v5425
      %v5427 = vpop.xlane.xlu0 %5426
      %v5428 = vsel %vm5406, %v5381, -inf
      %5429 = vmax.xlane.f32.xlu0 %v5428
      %v5430 = vpop.xlane.xlu0 %5429
      %v5431 = vsel %vm5406, %v5382, -inf
      %5432 = vmax.xlane.f32.xlu0 %v5431
      %v5433 = vpop.xlane.xlu0 %5432
      %v5434 = vsel %vm5406, %v5383, -inf
      %5435 = vmax.xlane.f32.xlu0 %v5434
      %v5436 = vpop.xlane.xlu0 %5435
      %v5437 = vsel %vm5406, %v5384, -inf
      %5438 = vmax.xlane.f32.xlu0 %v5437
      %v5439 = vpop.xlane.xlu0 %5438
      %v5440 = vsel %vm5406, %v5385, -inf
      %5441 = vmax.xlane.f32.xlu0 %v5440
      %v5442 = vpop.xlane.xlu0 %5441
      %v5443 = vsel %vm5406, %v5386, -inf
      %5444 = vmax.xlane.f32.xlu0 %v5443
      %v5445 = vpop.xlane.xlu0 %5444
      %v5446 = vsel %vm5406, %v5387, -inf
      %5447 = vmax.xlane.f32.xlu0 %v5446
      %v5448 = vpop.xlane.xlu0 %5447
      %v5449 = vsel %vm5406, %v5388, -inf
      %5450 = vmax.xlane.f32.xlu0 %v5449
      %v5451 = vpop.xlane.xlu0 %5450
      %v5452 = vsel %vm5406, %v5389, -inf
      %5453 = vmax.xlane.f32.xlu0 %v5452
      %v5454 = vpop.xlane.xlu0 %5453
      %v5455 = vsel %vm5406, %v5390, -inf
      %5456 = vmax.xlane.f32.xlu0 %v5455
      %v5457 = vpop.xlane.xlu0 %5456
      %v5458 = vsel %vm5406, %v5391, -inf
      %5459 = vmax.xlane.f32.xlu0 %v5458
      %v5460 = vpop.xlane.xlu0 %5459
      %v5461 = vsel %vm5406, %v5392, -inf
      %5462 = vmax.xlane.f32.xlu0 %v5461
      %v5463 = vpop.xlane.xlu0 %5462
      %v5464 = vsel %vm5406, %v5393, -inf
      %5465 = vmax.xlane.f32.xlu0 %v5464
      %v5466 = vpop.xlane.xlu0 %5465
      %v5467 = vsel %vm5406, %v5394, -inf
      %5468 = vmax.xlane.f32.xlu0 %v5467
      %v5469 = vpop.xlane.xlu0 %5468
      %v5470 = vsel %vm5406, %v5395, -inf
      %5471 = vmax.xlane.f32.xlu0 %v5470
      %v5472 = vpop.xlane.xlu0 %5471
      %v5473 = vsel %vm5406, %v5396, -inf
      %5474 = vmax.xlane.f32.xlu0 %v5473
      %v5475 = vpop.xlane.xlu0 %5474
      %v5476 = vsel %vm5406, %v5397, -inf
      %5477 = vmax.xlane.f32.xlu0 %v5476
      %v5478 = vpop.xlane.xlu0 %5477
      %v5479 = vsel %vm5406, %v5398, -inf
      %5480 = vmax.xlane.f32.xlu0 %v5479
      %v5481 = vpop.xlane.xlu0 %5480
      %v5482 = vsel %vm5406, %v5399, -inf
      %5483 = vmax.xlane.f32.xlu0 %v5482
      %v5484 = vpop.xlane.xlu0 %5483
      %v5485 = vsel %vm5406, %v5400, -inf
      %5486 = vmax.xlane.f32.xlu0 %v5485
      %v5487 = vpop.xlane.xlu0 %5486
      %v5488 = vsel %vm5406, %v5401, -inf
      %5489 = vmax.xlane.f32.xlu0 %v5488
      %v5490 = vpop.xlane.xlu0 %5489
      %v5491 = vsel %vm5406, %v5402, -inf
      %5492 = vmax.xlane.f32.xlu0 %v5491
      %v5493 = vpop.xlane.xlu0 %5492
      %v5494 = vsel %vm5406, %v5403, -inf
      %5495 = vmax.xlane.f32.xlu0 %v5494
      %v5496 = vpop.xlane.xlu0 %5495
      %v5497 = vsel %vm5406, %v5404, -inf
      %5498 = vmax.xlane.f32.xlu0 %v5497
      %v5499 = vpop.xlane.xlu0 %5498
      %v5500 = vsel %vm5406, %v5405, -inf
      %5501 = vmax.xlane.f32.xlu0 %v5500
      %v5502 = vpop.xlane.xlu0 %5501
      %v5503 = vsub.f32 %v5374, %v5409
      %v5504 = vsub.f32 %v5375, %v5412
      %v5505 = vsub.f32 %v5376, %v5415
      %v5506 = vsub.f32 %v5377, %v5418
      %v5507 = vsub.f32 %v5378, %v5421
      %v5508 = vsub.f32 %v5379, %v5424
      %v5509 = vsub.f32 %v5380, %v5427
      %v5510 = vsub.f32 %v5381, %v5430
      %v5511 = vsub.f32 %v5382, %v5433
      %v5512 = vsub.f32 %v5383, %v5436
      %v5513 = vsub.f32 %v5384, %v5439
      %v5514 = vsub.f32 %v5385, %v5442
      %v5515 = vsub.f32 %v5386, %v5445
      %v5516 = vsub.f32 %v5387, %v5448
      %v5517 = vsub.f32 %v5388, %v5451
      %v5518 = vsub.f32 %v5389, %v5454
      %v5519 = vsub.f32 %v5390, %v5457
      %v5520 = vsub.f32 %v5391, %v5460
      %v5521 = vsub.f32 %v5392, %v5463
      %v5522 = vsub.f32 %v5393, %v5466
      %v5523 = vsub.f32 %v5394, %v5469
      %v5524 = vsub.f32 %v5395, %v5472
      %v5525 = vsub.f32 %v5396, %v5475
      %v5526 = vsub.f32 %v5397, %v5478
      %v5527 = vsub.f32 %v5398, %v5481
      %v5528 = vsub.f32 %v5399, %v5484
      %v5529 = vsub.f32 %v5400, %v5487
      %v5530 = vsub.f32 %v5401, %v5490
      %v5531 = vsub.f32 %v5402, %v5493
      %v5532 = vsub.f32 %v5403, %v5496
      %v5533 = vsub.f32 %v5404, %v5499
      %v5534 = vsub.f32 %v5405, %v5502
      %v5535 = vmul.f32 %v5503, 1.442695
      %v5536 = vpow.pop %v5535
      %v5537 = vmul.f32 %v5504, 1.442695
      %v5538 = vpow.pop %v5537
      %v5539 = vmul.f32 %v5505, 1.442695
      %v5540 = vpow.pop %v5539
      %v5541 = vmul.f32 %v5506, 1.442695
      %v5542 = vpow.pop %v5541
      %v5543 = vmul.f32 %v5507, 1.442695
      %v5544 = vpow.pop %v5543
      %v5545 = vmul.f32 %v5508, 1.442695
      %v5546 = vpow.pop %v5545
      %v5547 = vmul.f32 %v5509, 1.442695
      %v5548 = vpow.pop %v5547
      %v5549 = vmul.f32 %v5510, 1.442695
      %v5550 = vpow.pop %v5549
      %v5551 = vmul.f32 %v5511, 1.442695
      %v5552 = vpow.pop %v5551
      %v5553 = vmul.f32 %v5512, 1.442695
      %v5554 = vpow.pop %v5553
      %v5555 = vmul.f32 %v5513, 1.442695
      %v5556 = vpow.pop %v5555
      %v5557 = vmul.f32 %v5514, 1.442695
      %v5558 = vpow.pop %v5557
      %v5559 = vmul.f32 %v5515, 1.442695
      %v5560 = vpow.pop %v5559
      %v5561 = vmul.f32 %v5516, 1.442695
      %v5562 = vpow.pop %v5561
      %v5563 = vmul.f32 %v5517, 1.442695
      %v5564 = vpow.pop %v5563
      %v5565 = vmul.f32 %v5518, 1.442695
      %v5566 = vpow.pop %v5565
      %v5567 = vmul.f32 %v5519, 1.442695
      %v5568 = vpow.pop %v5567
      %v5569 = vmul.f32 %v5520, 1.442695
      %v5570 = vpow.pop %v5569
      %v5571 = vmul.f32 %v5521, 1.442695
      %v5572 = vpow.pop %v5571
      %v5573 = vmul.f32 %v5522, 1.442695
      %v5574 = vpow.pop %v5573
      %v5575 = vmul.f32 %v5523, 1.442695
      %v5576 = vpow.pop %v5575
      %v5577 = vmul.f32 %v5524, 1.442695
      %v5578 = vpow.pop %v5577
      %v5579 = vmul.f32 %v5525, 1.442695
      %v5580 = vpow.pop %v5579
      %v5581 = vmul.f32 %v5526, 1.442695
      %v5582 = vpow.pop %v5581
      %v5583 = vmul.f32 %v5527, 1.442695
      %v5584 = vpow.pop %v5583
      %v5585 = vmul.f32 %v5528, 1.442695
      %v5586 = vpow.pop %v5585
      %v5587 = vmul.f32 %v5529, 1.442695
      %v5588 = vpow.pop %v5587
      %v5589 = vmul.f32 %v5530, 1.442695
      %v5590 = vpow.pop %v5589
      %v5591 = vmul.f32 %v5531, 1.442695
      %v5592 = vpow.pop %v5591
      %v5593 = vmul.f32 %v5532, 1.442695
      %v5594 = vpow.pop %v5593
      %v5595 = vmul.f32 %v5533, 1.442695
      %v5596 = vpow.pop %v5595
      %v5597 = vmul.f32 %v5534, 1.442695
      %v5598 = vpow.pop %v5597
      %v5599 = vsel %vm5406, %v5536, 0.0
      %5600 = vadd.xlane.f32.xlu0 %v5599
      %v5601 = vpop.xlane.xlu0 %5600
      %v5602 = vsel %vm5406, %v5538, 0.0
      %5603 = vadd.xlane.f32.xlu0 %v5602
      %v5604 = vpop.xlane.xlu0 %5603
      %v5605 = vsel %vm5406, %v5540, 0.0
      %5606 = vadd.xlane.f32.xlu0 %v5605
      %v5607 = vpop.xlane.xlu0 %5606
      %v5608 = vsel %vm5406, %v5542, 0.0
      %5609 = vadd.xlane.f32.xlu0 %v5608
      %v5610 = vpop.xlane.xlu0 %5609
      %v5611 = vsel %vm5406, %v5544, 0.0
      %5612 = vadd.xlane.f32.xlu0 %v5611
      %v5613 = vpop.xlane.xlu0 %5612
      %v5614 = vsel %vm5406, %v5546, 0.0
      %5615 = vadd.xlane.f32.xlu0 %v5614
      %v5616 = vpop.xlane.xlu0 %5615
      %v5617 = vsel %vm5406, %v5548, 0.0
      %5618 = vadd.xlane.f32.xlu0 %v5617
      %v5619 = vpop.xlane.xlu0 %5618
      %v5620 = vsel %vm5406, %v5550, 0.0
      %5621 = vadd.xlane.f32.xlu0 %v5620
      %v5622 = vpop.xlane.xlu0 %5621
      %v5623 = vsel %vm5406, %v5552, 0.0
      %5624 = vadd.xlane.f32.xlu0 %v5623
      %v5625 = vpop.xlane.xlu0 %5624
      %v5626 = vsel %vm5406, %v5554, 0.0
      %5627 = vadd.xlane.f32.xlu0 %v5626
      %v5628 = vpop.xlane.xlu0 %5627
      %v5629 = vsel %vm5406, %v5556, 0.0
      %5630 = vadd.xlane.f32.xlu0 %v5629
      %v5631 = vpop.xlane.xlu0 %5630
      %v5632 = vsel %vm5406, %v5558, 0.0
      %5633 = vadd.xlane.f32.xlu0 %v5632
      %v5634 = vpop.xlane.xlu0 %5633
      %v5635 = vsel %vm5406, %v5560, 0.0
      %5636 = vadd.xlane.f32.xlu0 %v5635
      %v5637 = vpop.xlane.xlu0 %5636
      %v5638 = vsel %vm5406, %v5562, 0.0
      %5639 = vadd.xlane.f32.xlu0 %v5638
      %v5640 = vpop.xlane.xlu0 %5639
      %v5641 = vsel %vm5406, %v5564, 0.0
      %5642 = vadd.xlane.f32.xlu0 %v5641
      %v5643 = vpop.xlane.xlu0 %5642
      %v5644 = vsel %vm5406, %v5566, 0.0
      %5645 = vadd.xlane.f32.xlu0 %v5644
      %v5646 = vpop.xlane.xlu0 %5645
      %v5647 = vsel %vm5406, %v5568, 0.0
      %5648 = vadd.xlane.f32.xlu0 %v5647
      %v5649 = vpop.xlane.xlu0 %5648
      %v5650 = vsel %vm5406, %v5570, 0.0
      %5651 = vadd.xlane.f32.xlu0 %v5650
      %v5652 = vpop.xlane.xlu0 %5651
      %v5653 = vsel %vm5406, %v5572, 0.0
      %5654 = vadd.xlane.f32.xlu0 %v5653
      %v5655 = vpop.xlane.xlu0 %5654
      %v5656 = vsel %vm5406, %v5574, 0.0
      %5657 = vadd.xlane.f32.xlu0 %v5656
      %v5658 = vpop.xlane.xlu0 %5657
      %v5659 = vsel %vm5406, %v5576, 0.0
      %5660 = vadd.xlane.f32.xlu0 %v5659
      %v5661 = vpop.xlane.xlu0 %5660
      %v5662 = vsel %vm5406, %v5578, 0.0
      %5663 = vadd.xlane.f32.xlu0 %v5662
      %v5664 = vpop.xlane.xlu0 %5663
      %v5665 = vsel %vm5406, %v5580, 0.0
      %5666 = vadd.xlane.f32.xlu0 %v5665
      %v5667 = vpop.xlane.xlu0 %5666
      %v5668 = vsel %vm5406, %v5582, 0.0
      %5669 = vadd.xlane.f32.xlu0 %v5668
      %v5670 = vpop.xlane.xlu0 %5669
      %v5671 = vsel %vm5406, %v5584, 0.0
      %5672 = vadd.xlane.f32.xlu0 %v5671
      %v5673 = vpop.xlane.xlu0 %5672
      %v5674 = vsel %vm5406, %v5586, 0.0
      %5675 = vadd.xlane.f32.xlu0 %v5674
      %v5676 = vpop.xlane.xlu0 %5675
      %v5677 = vsel %vm5406, %v5588, 0.0
      %5678 = vadd.xlane.f32.xlu0 %v5677
      %v5679 = vpop.xlane.xlu0 %5678
      %v5680 = vsel %vm5406, %v5590, 0.0
      %5681 = vadd.xlane.f32.xlu0 %v5680
      %v5682 = vpop.xlane.xlu0 %5681
      %v5683 = vsel %vm5406, %v5592, 0.0
      %5684 = vadd.xlane.f32.xlu0 %v5683
      %v5685 = vpop.xlane.xlu0 %5684
      %v5686 = vsel %vm5406, %v5594, 0.0
      %5687 = vadd.xlane.f32.xlu0 %v5686
      %v5688 = vpop.xlane.xlu0 %5687
      %v5689 = vsel %vm5406, %v5596, 0.0
      %5690 = vadd.xlane.f32.xlu0 %v5689
      %v5691 = vpop.xlane.xlu0 %5690
      %v5692 = vsel %vm5406, %v5598, 0.0
      %5693 = vadd.xlane.f32.xlu0 %v5692
      %v5694 = vpop.xlane.xlu0 %5693
      %v5695 = vrcp.pop %v5601
      %v5696 = vrcp.pop %v5604
      %v5697 = vrcp.pop %v5607
      %v5698 = vrcp.pop %v5610
      %v5699 = vrcp.pop %v5613
      %v5700 = vrcp.pop %v5616
      %v5701 = vrcp.pop %v5619
      %v5702 = vrcp.pop %v5622
      %v5703 = vrcp.pop %v5625
      %v5704 = vrcp.pop %v5628
      %v5705 = vrcp.pop %v5631
      %v5706 = vrcp.pop %v5634
      %v5707 = vrcp.pop %v5637
      %v5708 = vrcp.pop %v5640
      %v5709 = vrcp.pop %v5643
      %v5710 = vrcp.pop %v5646
      %v5711 = vrcp.pop %v5649
      %v5712 = vrcp.pop %v5652
      %v5713 = vrcp.pop %v5655
      %v5714 = vrcp.pop %v5658
      %v5715 = vrcp.pop %v5661
      %v5716 = vrcp.pop %v5664
      %v5717 = vrcp.pop %v5667
      %v5718 = vrcp.pop %v5670
      %v5719 = vrcp.pop %v5673
      %v5720 = vrcp.pop %v5676
      %v5721 = vrcp.pop %v5679
      %v5722 = vrcp.pop %v5682
      %v5723 = vrcp.pop %v5685
      %v5724 = vrcp.pop %v5688
      %v5725 = vrcp.pop %v5691
      %v5726 = vrcp.pop %v5694
      %v5727 = vmul.f32 %v5536, %v5695
      %v5728 = vmul.f32 %v5538, %v5696
      %v5729 = vmul.f32 %v5540, %v5697
      %v5730 = vmul.f32 %v5542, %v5698
      %v5731 = vmul.f32 %v5544, %v5699
      %v5732 = vmul.f32 %v5546, %v5700
      %v5733 = vmul.f32 %v5548, %v5701
      %v5734 = vmul.f32 %v5550, %v5702
      %v5735 = vmul.f32 %v5552, %v5703
      %v5736 = vmul.f32 %v5554, %v5704
      %v5737 = vmul.f32 %v5556, %v5705
      %v5738 = vmul.f32 %v5558, %v5706
      %v5739 = vmul.f32 %v5560, %v5707
      %v5740 = vmul.f32 %v5562, %v5708
      %v5741 = vmul.f32 %v5564, %v5709
      %v5742 = vmul.f32 %v5566, %v5710
      %v5743 = vmul.f32 %v5568, %v5711
      %v5744 = vmul.f32 %v5570, %v5712
      %v5745 = vmul.f32 %v5572, %v5713
      %v5746 = vmul.f32 %v5574, %v5714
      %v5747 = vmul.f32 %v5576, %v5715
      %v5748 = vmul.f32 %v5578, %v5716
      %v5749 = vmul.f32 %v5580, %v5717
      %v5750 = vmul.f32 %v5582, %v5718
      %v5751 = vmul.f32 %v5584, %v5719
      %v5752 = vmul.f32 %v5586, %v5720
      %v5753 = vmul.f32 %v5588, %v5721
      %v5754 = vmul.f32 %v5590, %v5722
      %v5755 = vmul.f32 %v5592, %v5723
      %v5756 = vmul.f32 %v5594, %v5724
      %v5757 = vmul.f32 %v5596, %v5725
      %v5758 = vmul.f32 %v5598, %v5726
      %v5759 = vpack.c.bf16 %v5728, %v5727
      %v5760 = vpack.c.bf16 %v5730, %v5729
      %v5761 = vpack.c.bf16 %v5732, %v5731
      %v5762 = vpack.c.bf16 %v5734, %v5733
      %v5763 = vpack.c.bf16 %v5736, %v5735
      %v5764 = vpack.c.bf16 %v5738, %v5737
      %v5765 = vpack.c.bf16 %v5740, %v5739
      %v5766 = vpack.c.bf16 %v5742, %v5741
      %v5767 = vpack.c.bf16 %v5744, %v5743
      %v5768 = vpack.c.bf16 %v5746, %v5745
      %v5769 = vpack.c.bf16 %v5748, %v5747
      %v5770 = vpack.c.bf16 %v5750, %v5749
      %v5771 = vpack.c.bf16 %v5752, %v5751
      %v5772 = vpack.c.bf16 %v5754, %v5753
      %v5773 = vpack.c.bf16 %v5756, %v5755
      %v5774 = vpack.c.bf16 %v5758, %v5757
      %v5776 = vsel %vm5406, %v5759, 0
      %v5779 = vsel %vm5406, %v5760, 0
      %v5782 = vsel %vm5406, %v5761, 0
      %v5785 = vsel %vm5406, %v5762, 0
      %5787 = vmatprep.subr.bf16.mxu0 0
      %5788 = vmatpush1.bf16.msra.mxu0 %v5001
      %5789 = vmatprep.subr.bf16.mxu0 0
      %5790 = vmatpush1.bf16.msra.mxu0 %v5002
      %5791 = vmatprep.subr.bf16.mxu0 0
      %5792 = vmatpush1.bf16.msra.mxu0 %v5003
      %5793 = vmatprep.subr.bf16.mxu0 0
      %5794 = vmatpush1.bf16.msra.mxu0 %v5004
      %5795 = vmatprep.subr.bf16.mxu0 0
      %5796 = vmatpush1.bf16.msra.mxu0 0
      %5797 = vmatprep.subr.bf16.mxu0 0
      %5798 = vmatpush1.bf16.msra.mxu0 0
      %5799 = vmatprep.subr.bf16.mxu0 0
      %5800 = vmatpush1.bf16.msra.mxu0 0
      %5801 = vmatprep.subr.bf16.mxu0 0
      %5802 = vmatpush1.bf16.msra.mxu0 0
      %5803 = vmatprep.subr.bf16.mxu0 0
      %5804 = vmatpush1.bf16.msra.mxu0 0
      %5805 = vmatprep.subr.bf16.mxu0 0
      %5806 = vmatpush1.bf16.msra.mxu0 0
      %5807 = vmatprep.subr.bf16.mxu0 0
      %5808 = vmatpush1.bf16.msra.mxu0 0
      %5809 = vmatprep.subr.bf16.mxu0 0
      %5810 = vmatpush1.bf16.msra.mxu0 0
      %5811 = vmatprep.subr.bf16.mxu0 0
      %5812 = vmatpush1.bf16.msra.mxu0 0
      %5813 = vmatprep.subr.bf16.mxu0 0
      %5814 = vmatpush1.bf16.msra.mxu0 0
      %5815 = vmatprep.subr.bf16.mxu0 0
      %5816 = vmatpush1.bf16.msra.mxu0 0
      %5817 = vmatprep.subr.bf16.mxu0 0
      %5818 = vmatpush1.bf16.msra.mxu0 0
      %5819 = vmatprep.mubr.bf16.mxu0 0
      %5820 = vmatmul.mubr.bf16.gmra.mrb[0].mxu0 %v5776
      %v5821 = vpop.f32.mrb[0].mxu0
      %v5822 = vadd.f32 0.0, %v5821
      %v5823 = vpop.f32.mrb[0].mxu0
      %v5824 = vpop.f32.mrb[0].mxu0
      %v5825 = vadd.f32 0.0, %v5824
      %v5826 = vpop.f32.mrb[0].mxu0
      %5827 = vmatprep.mubr.bf16.mxu0 0
      %5828 = vmatmul.mubr.bf16.gmra.mrb[0].mxu0 %v5779
      %v5829 = vpop.f32.mrb[0].mxu0
      %v5830 = vadd.f32 0.0, %v5829
      %v5831 = vpop.f32.mrb[0].mxu0
      %v5832 = vpop.f32.mrb[0].mxu0
      %v5833 = vadd.f32 0.0, %v5832
      %v5834 = vpop.f32.mrb[0].mxu0
      %5835 = vmatprep.mubr.bf16.mxu0 0
      %5836 = vmatmul.mubr.bf16.gmra.mrb[0].mxu0 %v5782
      %v5837 = vpop.f32.mrb[0].mxu0
      %v5838 = vadd.f32 0.0, %v5837
      %v5839 = vpop.f32.mrb[0].mxu0
      %v5840 = vpop.f32.mrb[0].mxu0
      %v5841 = vadd.f32 0.0, %v5840
      %v5842 = vpop.f32.mrb[0].mxu0
      %5843 = vmatprep.mubr.bf16.mxu0 0
      %5844 = vmatmul.mubr.bf16.gmra.mrb[0].mxu0 %v5785
      %v5845 = vpop.f32.mrb[0].mxu0
      %v5846 = vadd.f32 0.0, %v5845
      %v5847 = vpop.f32.mrb[0].mxu0
      %v5848 = vpop.f32.mrb[0].mxu0
      %v5849 = vadd.f32 0.0, %v5848
      %v5850 = vpop.f32.mrb[0].mxu0
      %5851 = vdwg.mxu0
      %v5853 = vsel %vm5406, %v5763, 0
      %v5856 = vsel %vm5406, %v5764, 0
      %v5859 = vsel %vm5406, %v5765, 0
      %v5862 = vsel %vm5406, %v5766, 0
      %5864 = vmatprep.subr.bf16.mxu0 0
      %5865 = vmatpush1.bf16.msra.mxu0 %v5005
      %5866 = vmatprep.subr.bf16.mxu0 0
      %5867 = vmatpush1.bf16.msra.mxu0 %v5006
      %5868 = vmatprep.subr.bf16.mxu0 0
      %5869 = vmatpush1.bf16.msra.mxu0 %v5007
      %5870 = vmatprep.subr.bf16.mxu0 0
      %5871 = vmatpush1.bf16.msra.mxu0 %v5008
      %5872 = vmatprep.subr.bf16.mxu0 0
      %5873 = vmatpush1.bf16.msra.mxu0 0
      %5874 = vmatprep.subr.bf16.mxu0 0
      %5875 = vmatpush1.bf16.msra.mxu0 0
      %5876 = vmatprep.subr.bf16.mxu0 0
      %5877 = vmatpush1.bf16.msra.mxu0 0
      %5878 = vmatprep.subr.bf16.mxu0 0
      %5879 = vmatpush1.bf16.msra.mxu0 0
      %5880 = vmatprep.subr.bf16.mxu0 0
      %5881 = vmatpush1.bf16.msra.mxu0 0
      %5882 = vmatprep.subr.bf16.mxu0 0
      %5883 = vmatpush1.bf16.msra.mxu0 0
      %5884 = vmatprep.subr.bf16.mxu0 0
      %5885 = vmatpush1.bf16.msra.mxu0 0
      %5886 = vmatprep.subr.bf16.mxu0 0
      %5887 = vmatpush1.bf16.msra.mxu0 0
      %5888 = vmatprep.subr.bf16.mxu0 0
      %5889 = vmatpush1.bf16.msra.mxu0 0
      %5890 = vmatprep.subr.bf16.mxu0 0
      %5891 = vmatpush1.bf16.msra.mxu0 0
      %5892 = vmatprep.subr.bf16.mxu0 0
      %5893 = vmatpush1.bf16.msra.mxu0 0
      %5894 = vmatprep.subr.bf16.mxu0 0
      %5895 = vmatpush1.bf16.msra.mxu0 0
      %5896 = vmatprep.mubr.bf16.mxu0 0
      %5897 = vmatmul.mubr.bf16.gmra.mrb[0].mxu0 %v5853
      %v5898 = vpop.f32.mrb[0].mxu0
      %v5899 = vadd.f32 0.0, %v5898
      %v5900 = vpop.f32.mrb[0].mxu0
      %v5901 = vpop.f32.mrb[0].mxu0
      %v5902 = vadd.f32 0.0, %v5901
      %v5903 = vpop.f32.mrb[0].mxu0
      %5904 = vmatprep.mubr.bf16.mxu0 0
      %5905 = vmatmul.mubr.bf16.gmra.mrb[0].mxu0 %v5856
      %v5906 = vpop.f32.mrb[0].mxu0
      %v5907 = vadd.f32 0.0, %v5906
      %v5908 = vpop.f32.mrb[0].mxu0
      %v5909 = vpop.f32.mrb[0].mxu0
      %v5910 = vadd.f32 0.0, %v5909
      %v5911 = vpop.f32.mrb[0].mxu0
      %5912 = vmatprep.mubr.bf16.mxu0 0
      %5913 = vmatmul.mubr.bf16.gmra.mrb[0].mxu0 %v5859
      %v5914 = vpop.f32.mrb[0].mxu0
      %v5915 = vadd.f32 0.0, %v5914
      %v5916 = vpop.f32.mrb[0].mxu0
      %v5917 = vpop.f32.mrb[0].mxu0
      %v5918 = vadd.f32 0.0, %v5917
      %v5919 = vpop.f32.mrb[0].mxu0
      %5920 = vmatprep.mubr.bf16.mxu0 0
      %5921 = vmatmul.mubr.bf16.gmra.mrb[0].mxu0 %v5862
      %v5922 = vpop.f32.mrb[0].mxu0
      %v5923 = vadd.f32 0.0, %v5922
      %v5924 = vpop.f32.mrb[0].mxu0
      %v5925 = vpop.f32.mrb[0].mxu0
      %v5926 = vadd.f32 0.0, %v5925
      %v5927 = vpop.f32.mrb[0].mxu0
      %5928 = vdwg.mxu0
      %v5930 = vsel %vm5406, %v5767, 0
      %v5933 = vsel %vm5406, %v5768, 0
      %v5936 = vsel %vm5406, %v5769, 0
      %v5939 = vsel %vm5406, %v5770, 0
      %5941 = vmatprep.subr.bf16.mxu0 0
      %5942 = vmatpush1.bf16.msra.mxu0 %v5009
      %5943 = vmatprep.subr.bf16.mxu0 0
      %5944 = vmatpush1.bf16.msra.mxu0 %v5010
      %5945 = vmatprep.subr.bf16.mxu0 0
      %5946 = vmatpush1.bf16.msra.mxu0 %v5011
      %5947 = vmatprep.subr.bf16.mxu0 0
      %5948 = vmatpush1.bf16.msra.mxu0 %v5012
      %5949 = vmatprep.subr.bf16.mxu0 0
      %5950 = vmatpush1.bf16.msra.mxu0 0
      %5951 = vmatprep.subr.bf16.mxu0 0
      %5952 = vmatpush1.bf16.msra.mxu0 0
      %5953 = vmatprep.subr.bf16.mxu0 0
      %5954 = vmatpush1.bf16.msra.mxu0 0
      %5955 = vmatprep.subr.bf16.mxu0 0
      %5956 = vmatpush1.bf16.msra.mxu0 0
      %5957 = vmatprep.subr.bf16.mxu0 0
      %5958 = vmatpush1.bf16.msra.mxu0 0
      %5959 = vmatprep.subr.bf16.mxu0 0
      %5960 = vmatpush1.bf16.msra.mxu0 0
      %5961 = vmatprep.subr.bf16.mxu0 0
      %5962 = vmatpush1.bf16.msra.mxu0 0
      %5963 = vmatprep.subr.bf16.mxu0 0
      %5964 = vmatpush1.bf16.msra.mxu0 0
      %5965 = vmatprep.subr.bf16.mxu0 0
      %5966 = vmatpush1.bf16.msra.mxu0 0
      %5967 = vmatprep.subr.bf16.mxu0 0
      %5968 = vmatpush1.bf16.msra.mxu0 0
      %5969 = vmatprep.subr.bf16.mxu0 0
      %5970 = vmatpush1.bf16.msra.mxu0 0
      %5971 = vmatprep.subr.bf16.mxu0 0
      %5972 = vmatpush1.bf16.msra.mxu0 0
      %5973 = vmatprep.mubr.bf16.mxu0 0
      %5974 = vmatmul.mubr.bf16.gmra.mrb[0].mxu0 %v5930
      %v5975 = vpop.f32.mrb[0].mxu0
      %v5976 = vadd.f32 0.0, %v5975
      %v5977 = vpop.f32.mrb[0].mxu0
      %v5978 = vpop.f32.mrb[0].mxu0
      %v5979 = vadd.f32 0.0, %v5978
      %v5980 = vpop.f32.mrb[0].mxu0
      %5981 = vmatprep.mubr.bf16.mxu0 0
      %5982 = vmatmul.mubr.bf16.gmra.mrb[0].mxu0 %v5933
      %v5983 = vpop.f32.mrb[0].mxu0
      %v5984 = vadd.f32 0.0, %v5983
      %v5985 = vpop.f32.mrb[0].mxu0
      %v5986 = vpop.f32.mrb[0].mxu0
      %v5987 = vadd.f32 0.0, %v5986
      %v5988 = vpop.f32.mrb[0].mxu0
      %5989 = vmatprep.mubr.bf16.mxu0 0
      %5990 = vmatmul.mubr.bf16.gmra.mrb[0].mxu0 %v5936
      %v5991 = vpop.f32.mrb[0].mxu0
      %v5992 = vadd.f32 0.0, %v5991
      %v5993 = vpop.f32.mrb[0].mxu0
      %v5994 = vpop.f32.mrb[0].mxu0
      %v5995 = vadd.f32 0.0, %v5994
      %v5996 = vpop.f32.mrb[0].mxu0
      %5997 = vmatprep.mubr.bf16.mxu0 0
      %5998 = vmatmul.mubr.bf16.gmra.mrb[0].mxu0 %v5939
      %v5999 = vpop.f32.mrb[0].mxu0
      %v6000 = vadd.f32 0.0, %v5999
      %v6001 = vpop.f32.mrb[0].mxu0
      %v6002 = vpop.f32.mrb[0].mxu0
      %v6003 = vadd.f32 0.0, %v6002
      %v6004 = vpop.f32.mrb[0].mxu0
      %6005 = vdwg.mxu0
      %v6007 = vsel %vm5406, %v5771, 0
      %v6010 = vsel %vm5406, %v5772, 0
      %v6013 = vsel %vm5406, %v5773, 0
      %v6016 = vsel %vm5406, %v5774, 0
      %6018 = vmatprep.subr.bf16.mxu0 0
      %6019 = vmatpush1.bf16.msra.mxu0 %v5013
      %6020 = vmatprep.subr.bf16.mxu0 0
      %6021 = vmatpush1.bf16.msra.mxu0 %v5014
      %6022 = vmatprep.subr.bf16.mxu0 0
      %6023 = vmatpush1.bf16.msra.mxu0 %v5015
      %6024 = vmatprep.subr.bf16.mxu0 0
      %6025 = vmatpush1.bf16.msra.mxu0 %v5016
      %6026 = vmatprep.subr.bf16.mxu0 0
      %6027 = vmatpush1.bf16.msra.mxu0 0
      %6028 = vmatprep.subr.bf16.mxu0 0
      %6029 = vmatpush1.bf16.msra.mxu0 0
      %6030 = vmatprep.subr.bf16.mxu0 0
      %6031 = vmatpush1.bf16.msra.mxu0 0
      %6032 = vmatprep.subr.bf16.mxu0 0
      %6033 = vmatpush1.bf16.msra.mxu0 0
      %6034 = vmatprep.subr.bf16.mxu0 0
      %6035 = vmatpush1.bf16.msra.mxu0 0
      %6036 = vmatprep.subr.bf16.mxu0 0
      %6037 = vmatpush1.bf16.msra.mxu0 0
      %6038 = vmatprep.subr.bf16.mxu0 0
      %6039 = vmatpush1.bf16.msra.mxu0 0
      %6040 = vmatprep.subr.bf16.mxu0 0
      %6041 = vmatpush1.bf16.msra.mxu0 0
      %6042 = vmatprep.subr.bf16.mxu0 0
      %6043 = vmatpush1.bf16.msra.mxu0 0
      %6044 = vmatprep.subr.bf16.mxu0 0
      %6045 = vmatpush1.bf16.msra.mxu0 0
      %6046 = vmatprep.subr.bf16.mxu0 0
      %6047 = vmatpush1.bf16.msra.mxu0 0
      %6048 = vmatprep.subr.bf16.mxu0 0
      %6049 = vmatpush1.bf16.msra.mxu0 0
      %6050 = vmatprep.mubr.bf16.mxu0 0
      %6051 = vmatmul.mubr.bf16.gmra.mrb[0].mxu0 %v6007
      %v6052 = vpop.f32.mrb[0].mxu0
      %v6053 = vadd.f32 0.0, %v6052
      %v6054 = vpop.f32.mrb[0].mxu0
      %v6055 = vpop.f32.mrb[0].mxu0
      %v6056 = vadd.f32 0.0, %v6055
      %v6057 = vpop.f32.mrb[0].mxu0
      %6058 = vmatprep.mubr.bf16.mxu0 0
      %6059 = vmatmul.mubr.bf16.gmra.mrb[0].mxu0 %v6010
      %v6060 = vpop.f32.mrb[0].mxu0
      %v6061 = vadd.f32 0.0, %v6060
      %v6062 = vpop.f32.mrb[0].mxu0
      %v6063 = vpop.f32.mrb[0].mxu0
      %v6064 = vadd.f32 0.0, %v6063
      %v6065 = vpop.f32.mrb[0].mxu0
      %6066 = vmatprep.mubr.bf16.mxu0 0
      %6067 = vmatmul.mubr.bf16.gmra.mrb[0].mxu0 %v6013
      %v6068 = vpop.f32.mrb[0].mxu0
      %v6069 = vadd.f32 0.0, %v6068
      %v6070 = vpop.f32.mrb[0].mxu0
      %v6071 = vpop.f32.mrb[0].mxu0
      %v6072 = vadd.f32 0.0, %v6071
      %v6073 = vpop.f32.mrb[0].mxu0
      %6074 = vmatprep.mubr.bf16.mxu0 0
      %6075 = vmatmul.mubr.bf16.gmra.mrb[0].mxu0 %v6016
      %v6076 = vpop.f32.mrb[0].mxu0
      %v6077 = vadd.f32 0.0, %v6076
      %v6078 = vpop.f32.mrb[0].mxu0
      %v6079 = vpop.f32.mrb[0].mxu0
      %v6080 = vadd.f32 0.0, %v6079
      %v6081 = vpop.f32.mrb[0].mxu0
      %6082 = vdwg.mxu0
      %v6083 = vcombine.low %v5822, %v5976
      %v6084 = vcombine.high %v5822, %v5976
      %v6086 = vunpack.c.l.s4 1983009808
      %v6087 = vunpack.c.0.s8 %v6086
      %v6088 = vlaneseq
      %v6089 = vshrl.u32 %v6088, 7
      %v6090 = vsub.s32 %v6087, %v6089
      %v6091 = vrot.slane %v6083, %v6090
      %v6093 = vunpack.c.l.s4 1983009808
      %v6094 = vunpack.c.0.s8 %v6093
      %v6095 = vlaneseq
      %v6096 = vshrl.u32 %v6095, 7
      %v6097 = vsub.s32 %v6094, %v6096
      %v6098 = vrot.slane %v6084, %v6097
      %v6099 = vcombine.low %v5899, %v6053
      %v6100 = vcombine.high %v5899, %v6053
      %v6102 = vunpack.c.l.s4 1983009808
      %v6103 = vunpack.c.0.s8 %v6102
      %v6104 = vlaneseq
      %v6105 = vshrl.u32 %v6104, 7
      %v6106 = vsub.s32 %v6103, %v6105
      %v6107 = vrot.slane %v6099, %v6106
      %v6109 = vunpack.c.l.s4 1983009808
      %v6110 = vunpack.c.0.s8 %v6109
      %v6111 = vlaneseq
      %v6112 = vshrl.u32 %v6111, 7
      %v6113 = vsub.s32 %v6110, %v6112
      %v6114 = vrot.slane %v6100, %v6113
      %v6115 = vcombine.low %v6091, %v6107
      %v6116 = vcombine.high %v6091, %v6107
      %v6118 = vunpack.c.l.s4 1934713408
      %v6119 = vunpack.c.0.s8 %v6118
      %v6120 = vlaneseq
      %v6121 = vshrl.u32 %v6120, 7
      %v6122 = vsub.s32 %v6119, %v6121
      %v6123 = vrot.slane %v6115, %v6122
      %v6125 = vunpack.c.l.s4 1934713408
      %v6126 = vunpack.c.0.s8 %v6125
      %v6127 = vlaneseq
      %v6128 = vshrl.u32 %v6127, 7
      %v6129 = vsub.s32 %v6126, %v6128
      %v6130 = vrot.slane %v6116, %v6129
      %v6131 = vcombine.low %v6098, %v6114
      %v6132 = vcombine.high %v6098, %v6114
      %v6134 = vunpack.c.l.s4 1934713408
      %v6135 = vunpack.c.0.s8 %v6134
      %v6136 = vlaneseq
      %v6137 = vshrl.u32 %v6136, 7
      %v6138 = vsub.s32 %v6135, %v6137
      %v6139 = vrot.slane %v6131, %v6138
      %v6141 = vunpack.c.l.s4 1934713408
      %v6142 = vunpack.c.0.s8 %v6141
      %v6143 = vlaneseq
      %v6144 = vshrl.u32 %v6143, 7
      %v6145 = vsub.s32 %v6142, %v6144
      %v6146 = vrot.slane %v6132, %v6145
      %v6147 = vcombine.high %v6123, 0.0
      %v6148 = vcombine.high %v6130, 0.0
      %v6149 = vcombine.high %v6139, 0.0
      %v6150 = vcombine.high %v6146, 0.0
      %v6151 = vcombine.low %v5825, %v5979
      %v6152 = vcombine.high %v5825, %v5979
      %v6154 = vunpack.c.l.s4 1983009808
      %v6155 = vunpack.c.0.s8 %v6154
      %v6156 = vlaneseq
      %v6157 = vshrl.u32 %v6156, 7
      %v6158 = vsub.s32 %v6155, %v6157
      %v6159 = vrot.slane %v6151, %v6158
      %v6161 = vunpack.c.l.s4 1983009808
      %v6162 = vunpack.c.0.s8 %v6161
      %v6163 = vlaneseq
      %v6164 = vshrl.u32 %v6163, 7
      %v6165 = vsub.s32 %v6162, %v6164
      %v6166 = vrot.slane %v6152, %v6165
      %v6167 = vcombine.low %v5902, %v6056
      %v6168 = vcombine.high %v5902, %v6056
      %v6170 = vunpack.c.l.s4 1983009808
      %v6171 = vunpack.c.0.s8 %v6170
      %v6172 = vlaneseq
      %v6173 = vshrl.u32 %v6172, 7
      %v6174 = vsub.s32 %v6171, %v6173
      %v6175 = vrot.slane %v6167, %v6174
      %v6177 = vunpack.c.l.s4 1983009808
      %v6178 = vunpack.c.0.s8 %v6177
      %v6179 = vlaneseq
      %v6180 = vshrl.u32 %v6179, 7
      %v6181 = vsub.s32 %v6178, %v6180
      %v6182 = vrot.slane %v6168, %v6181
      %v6183 = vcombine.low %v6159, %v6175
      %v6184 = vcombine.high %v6159, %v6175
      %v6186 = vunpack.c.l.s4 1934713408
      %v6187 = vunpack.c.0.s8 %v6186
      %v6188 = vlaneseq
      %v6189 = vshrl.u32 %v6188, 7
      %v6190 = vsub.s32 %v6187, %v6189
      %v6191 = vrot.slane %v6183, %v6190
      %v6193 = vunpack.c.l.s4 1934713408
      %v6194 = vunpack.c.0.s8 %v6193
      %v6195 = vlaneseq
      %v6196 = vshrl.u32 %v6195, 7
      %v6197 = vsub.s32 %v6194, %v6196
      %v6198 = vrot.slane %v6184, %v6197
      %v6199 = vcombine.low %v6166, %v6182
      %v6200 = vcombine.high %v6166, %v6182
      %v6202 = vunpack.c.l.s4 1934713408
      %v6203 = vunpack.c.0.s8 %v6202
      %v6204 = vlaneseq
      %v6205 = vshrl.u32 %v6204, 7
      %v6206 = vsub.s32 %v6203, %v6205
      %v6207 = vrot.slane %v6199, %v6206
      %v6209 = vunpack.c.l.s4 1934713408
      %v6210 = vunpack.c.0.s8 %v6209
      %v6211 = vlaneseq
      %v6212 = vshrl.u32 %v6211, 7
      %v6213 = vsub.s32 %v6210, %v6212
      %v6214 = vrot.slane %v6200, %v6213
      %v6215 = vcombine.high %v6191, 0.0
      %v6216 = vcombine.high %v6198, 0.0
      %v6217 = vcombine.high %v6207, 0.0
      %v6218 = vcombine.high %v6214, 0.0
      %v6219 = vcombine.low %v5830, %v5984
      %v6220 = vcombine.high %v5830, %v5984
      %v6222 = vunpack.c.l.s4 1983009808
      %v6223 = vunpack.c.0.s8 %v6222
      %v6224 = vlaneseq
      %v6225 = vshrl.u32 %v6224, 7
      %v6226 = vsub.s32 %v6223, %v6225
      %v6227 = vrot.slane %v6219, %v6226
      %v6229 = vunpack.c.l.s4 1983009808
      %v6230 = vunpack.c.0.s8 %v6229
      %v6231 = vlaneseq
      %v6232 = vshrl.u32 %v6231, 7
      %v6233 = vsub.s32 %v6230, %v6232
      %v6234 = vrot.slane %v6220, %v6233
      %v6235 = vcombine.low %v5907, %v6061
      %v6236 = vcombine.high %v5907, %v6061
      %v6238 = vunpack.c.l.s4 1983009808
      %v6239 = vunpack.c.0.s8 %v6238
      %v6240 = vlaneseq
      %v6241 = vshrl.u32 %v6240, 7
      %v6242 = vsub.s32 %v6239, %v6241
      %v6243 = vrot.slane %v6235, %v6242
      %v6245 = vunpack.c.l.s4 1983009808
      %v6246 = vunpack.c.0.s8 %v6245
      %v6247 = vlaneseq
      %v6248 = vshrl.u32 %v6247, 7
      %v6249 = vsub.s32 %v6246, %v6248
      %v6250 = vrot.slane %v6236, %v6249
      %v6251 = vcombine.low %v6227, %v6243
      %v6252 = vcombine.high %v6227, %v6243
      %v6254 = vunpack.c.l.s4 1934713408
      %v6255 = vunpack.c.0.s8 %v6254
      %v6256 = vlaneseq
      %v6257 = vshrl.u32 %v6256, 7
      %v6258 = vsub.s32 %v6255, %v6257
      %v6259 = vrot.slane %v6251, %v6258
      %v6261 = vunpack.c.l.s4 1934713408
      %v6262 = vunpack.c.0.s8 %v6261
      %v6263 = vlaneseq
      %v6264 = vshrl.u32 %v6263, 7
      %v6265 = vsub.s32 %v6262, %v6264
      %v6266 = vrot.slane %v6252, %v6265
      %v6267 = vcombine.low %v6234, %v6250
      %v6268 = vcombine.high %v6234, %v6250
      %v6270 = vunpack.c.l.s4 1934713408
      %v6271 = vunpack.c.0.s8 %v6270
      %v6272 = vlaneseq
      %v6273 = vshrl.u32 %v6272, 7
      %v6274 = vsub.s32 %v6271, %v6273
      %v6275 = vrot.slane %v6267, %v6274
      %v6277 = vunpack.c.l.s4 1934713408
      %v6278 = vunpack.c.0.s8 %v6277
      %v6279 = vlaneseq
      %v6280 = vshrl.u32 %v6279, 7
      %v6281 = vsub.s32 %v6278, %v6280
      %v6282 = vrot.slane %v6268, %v6281
      %v6283 = vcombine.high %v6259, 0.0
      %v6284 = vcombine.high %v6266, 0.0
      %v6285 = vcombine.high %v6275, 0.0
      %v6286 = vcombine.high %v6282, 0.0
      %v6287 = vcombine.low %v5833, %v5987
      %v6288 = vcombine.high %v5833, %v5987
      %v6290 = vunpack.c.l.s4 1983009808
      %v6291 = vunpack.c.0.s8 %v6290
      %v6292 = vlaneseq
      %v6293 = vshrl.u32 %v6292, 7
      %v6294 = vsub.s32 %v6291, %v6293
      %v6295 = vrot.slane %v6287, %v6294
      %v6297 = vunpack.c.l.s4 1983009808
      %v6298 = vunpack.c.0.s8 %v6297
      %v6299 = vlaneseq
      %v6300 = vshrl.u32 %v6299, 7
      %v6301 = vsub.s32 %v6298, %v6300
      %v6302 = vrot.slane %v6288, %v6301
      %v6303 = vcombine.low %v5910, %v6064
      %v6304 = vcombine.high %v5910, %v6064
      %v6306 = vunpack.c.l.s4 1983009808
      %v6307 = vunpack.c.0.s8 %v6306
      %v6308 = vlaneseq
      %v6309 = vshrl.u32 %v6308, 7
      %v6310 = vsub.s32 %v6307, %v6309
      %v6311 = vrot.slane %v6303, %v6310
      %v6313 = vunpack.c.l.s4 1983009808
      %v6314 = vunpack.c.0.s8 %v6313
      %v6315 = vlaneseq
      %v6316 = vshrl.u32 %v6315, 7
      %v6317 = vsub.s32 %v6314, %v6316
      %v6318 = vrot.slane %v6304, %v6317
      %v6319 = vcombine.low %v6295, %v6311
      %v6320 = vcombine.high %v6295, %v6311
      %v6322 = vunpack.c.l.s4 1934713408
      %v6323 = vunpack.c.0.s8 %v6322
      %v6324 = vlaneseq
      %v6325 = vshrl.u32 %v6324, 7
      %v6326 = vsub.s32 %v6323, %v6325
      %v6327 = vrot.slane %v6319, %v6326
      %v6329 = vunpack.c.l.s4 1934713408
      %v6330 = vunpack.c.0.s8 %v6329
      %v6331 = vlaneseq
      %v6332 = vshrl.u32 %v6331, 7
      %v6333 = vsub.s32 %v6330, %v6332
      %v6334 = vrot.slane %v6320, %v6333
      %v6335 = vcombine.low %v6302, %v6318
      %v6336 = vcombine.high %v6302, %v6318
      %v6338 = vunpack.c.l.s4 1934713408
      %v6339 = vunpack.c.0.s8 %v6338
      %v6340 = vlaneseq
      %v6341 = vshrl.u32 %v6340, 7
      %v6342 = vsub.s32 %v6339, %v6341
      %v6343 = vrot.slane %v6335, %v6342
      %v6345 = vunpack.c.l.s4 1934713408
      %v6346 = vunpack.c.0.s8 %v6345
      %v6347 = vlaneseq
      %v6348 = vshrl.u32 %v6347, 7
      %v6349 = vsub.s32 %v6346, %v6348
      %v6350 = vrot.slane %v6336, %v6349
      %v6351 = vcombine.high %v6327, 0.0
      %v6352 = vcombine.high %v6334, 0.0
      %v6353 = vcombine.high %v6343, 0.0
      %v6354 = vcombine.high %v6350, 0.0
      %v6355 = vcombine.low %v5838, %v5992
      %v6356 = vcombine.high %v5838, %v5992
      %v6358 = vunpack.c.l.s4 1983009808
      %v6359 = vunpack.c.0.s8 %v6358
      %v6360 = vlaneseq
      %v6361 = vshrl.u32 %v6360, 7
      %v6362 = vsub.s32 %v6359, %v6361
      %v6363 = vrot.slane %v6355, %v6362
      %v6365 = vunpack.c.l.s4 1983009808
      %v6366 = vunpack.c.0.s8 %v6365
      %v6367 = vlaneseq
      %v6368 = vshrl.u32 %v6367, 7
      %v6369 = vsub.s32 %v6366, %v6368
      %v6370 = vrot.slane %v6356, %v6369
      %v6371 = vcombine.low %v5915, %v6069
      %v6372 = vcombine.high %v5915, %v6069
      %v6374 = vunpack.c.l.s4 1983009808
      %v6375 = vunpack.c.0.s8 %v6374
      %v6376 = vlaneseq
      %v6377 = vshrl.u32 %v6376, 7
      %v6378 = vsub.s32 %v6375, %v6377
      %v6379 = vrot.slane %v6371, %v6378
      %v6381 = vunpack.c.l.s4 1983009808
      %v6382 = vunpack.c.0.s8 %v6381
      %v6383 = vlaneseq
      %v6384 = vshrl.u32 %v6383, 7
      %v6385 = vsub.s32 %v6382, %v6384
      %v6386 = vrot.slane %v6372, %v6385
      %v6387 = vcombine.low %v6363, %v6379
      %v6388 = vcombine.high %v6363, %v6379
      %v6390 = vunpack.c.l.s4 1934713408
      %v6391 = vunpack.c.0.s8 %v6390
      %v6392 = vlaneseq
      %v6393 = vshrl.u32 %v6392, 7
      %v6394 = vsub.s32 %v6391, %v6393
      %v6395 = vrot.slane %v6387, %v6394
      %v6397 = vunpack.c.l.s4 1934713408
      %v6398 = vunpack.c.0.s8 %v6397
      %v6399 = vlaneseq
      %v6400 = vshrl.u32 %v6399, 7
      %v6401 = vsub.s32 %v6398, %v6400
      %v6402 = vrot.slane %v6388, %v6401
      %v6403 = vcombine.low %v6370, %v6386
      %v6404 = vcombine.high %v6370, %v6386
      %v6406 = vunpack.c.l.s4 1934713408
      %v6407 = vunpack.c.0.s8 %v6406
      %v6408 = vlaneseq
      %v6409 = vshrl.u32 %v6408, 7
      %v6410 = vsub.s32 %v6407, %v6409
      %v6411 = vrot.slane %v6403, %v6410
      %v6413 = vunpack.c.l.s4 1934713408
      %v6414 = vunpack.c.0.s8 %v6413
      %v6415 = vlaneseq
      %v6416 = vshrl.u32 %v6415, 7
      %v6417 = vsub.s32 %v6414, %v6416
      %v6418 = vrot.slane %v6404, %v6417
      %v6419 = vcombine.high %v6395, 0.0
      %v6420 = vcombine.high %v6402, 0.0
      %v6421 = vcombine.high %v6411, 0.0
      %v6422 = vcombine.high %v6418, 0.0
      %v6423 = vcombine.low %v5841, %v5995
      %v6424 = vcombine.high %v5841, %v5995
      %v6426 = vunpack.c.l.s4 1983009808
      %v6427 = vunpack.c.0.s8 %v6426
      %v6428 = vlaneseq
      %v6429 = vshrl.u32 %v6428, 7
      %v6430 = vsub.s32 %v6427, %v6429
      %v6431 = vrot.slane %v6423, %v6430
      %v6433 = vunpack.c.l.s4 1983009808
      %v6434 = vunpack.c.0.s8 %v6433
      %v6435 = vlaneseq
      %v6436 = vshrl.u32 %v6435, 7
      %v6437 = vsub.s32 %v6434, %v6436
      %v6438 = vrot.slane %v6424, %v6437
      %v6439 = vcombine.low %v5918, %v6072
      %v6440 = vcombine.high %v5918, %v6072
      %v6442 = vunpack.c.l.s4 1983009808
      %v6443 = vunpack.c.0.s8 %v6442
      %v6444 = vlaneseq
      %v6445 = vshrl.u32 %v6444, 7
      %v6446 = vsub.s32 %v6443, %v6445
      %v6447 = vrot.slane %v6439, %v6446
      %v6449 = vunpack.c.l.s4 1983009808
      %v6450 = vunpack.c.0.s8 %v6449
      %v6451 = vlaneseq
      %v6452 = vshrl.u32 %v6451, 7
      %v6453 = vsub.s32 %v6450, %v6452
      %v6454 = vrot.slane %v6440, %v6453
      %v6455 = vcombine.low %v6431, %v6447
      %v6456 = vcombine.high %v6431, %v6447
      %v6458 = vunpack.c.l.s4 1934713408
      %v6459 = vunpack.c.0.s8 %v6458
      %v6460 = vlaneseq
      %v6461 = vshrl.u32 %v6460, 7
      %v6462 = vsub.s32 %v6459, %v6461
      %v6463 = vrot.slane %v6455, %v6462
      %v6465 = vunpack.c.l.s4 1934713408
      %v6466 = vunpack.c.0.s8 %v6465
      %v6467 = vlaneseq
      %v6468 = vshrl.u32 %v6467, 7
      %v6469 = vsub.s32 %v6466, %v6468
      %v6470 = vrot.slane %v6456, %v6469
      %v6471 = vcombine.low %v6438, %v6454
      %v6472 = vcombine.high %v6438, %v6454
      %v6474 = vunpack.c.l.s4 1934713408
      %v6475 = vunpack.c.0.s8 %v6474
      %v6476 = vlaneseq
      %v6477 = vshrl.u32 %v6476, 7
      %v6478 = vsub.s32 %v6475, %v6477
      %v6479 = vrot.slane %v6471, %v6478
      %v6481 = vunpack.c.l.s4 1934713408
      %v6482 = vunpack.c.0.s8 %v6481
      %v6483 = vlaneseq
      %v6484 = vshrl.u32 %v6483, 7
      %v6485 = vsub.s32 %v6482, %v6484
      %v6486 = vrot.slane %v6472, %v6485
      %v6487 = vcombine.high %v6463, 0.0
      %v6488 = vcombine.high %v6470, 0.0
      %v6489 = vcombine.high %v6479, 0.0
      %v6490 = vcombine.high %v6486, 0.0
      %v6491 = vcombine.low %v5846, %v6000
      %v6492 = vcombine.high %v5846, %v6000
      %v6494 = vunpack.c.l.s4 1983009808
      %v6495 = vunpack.c.0.s8 %v6494
      %v6496 = vlaneseq
      %v6497 = vshrl.u32 %v6496, 7
      %v6498 = vsub.s32 %v6495, %v6497
      %v6499 = vrot.slane %v6491, %v6498
      %v6501 = vunpack.c.l.s4 1983009808
      %v6502 = vunpack.c.0.s8 %v6501
      %v6503 = vlaneseq
      %v6504 = vshrl.u32 %v6503, 7
      %v6505 = vsub.s32 %v6502, %v6504
      %v6506 = vrot.slane %v6492, %v6505
      %v6507 = vcombine.low %v5923, %v6077
      %v6508 = vcombine.high %v5923, %v6077
      %v6510 = vunpack.c.l.s4 1983009808
      %v6511 = vunpack.c.0.s8 %v6510
      %v6512 = vlaneseq
      %v6513 = vshrl.u32 %v6512, 7
      %v6514 = vsub.s32 %v6511, %v6513
      %v6515 = vrot.slane %v6507, %v6514
      %v6517 = vunpack.c.l.s4 1983009808
      %v6518 = vunpack.c.0.s8 %v6517
      %v6519 = vlaneseq
      %v6520 = vshrl.u32 %v6519, 7
      %v6521 = vsub.s32 %v6518, %v6520
      %v6522 = vrot.slane %v6508, %v6521
      %v6523 = vcombine.low %v6499, %v6515
      %v6524 = vcombine.high %v6499, %v6515
      %v6526 = vunpack.c.l.s4 1934713408
      %v6527 = vunpack.c.0.s8 %v6526
      %v6528 = vlaneseq
      %v6529 = vshrl.u32 %v6528, 7
      %v6530 = vsub.s32 %v6527, %v6529
      %v6531 = vrot.slane %v6523, %v6530
      %v6533 = vunpack.c.l.s4 1934713408
      %v6534 = vunpack.c.0.s8 %v6533
      %v6535 = vlaneseq
      %v6536 = vshrl.u32 %v6535, 7
      %v6537 = vsub.s32 %v6534, %v6536
      %v6538 = vrot.slane %v6524, %v6537
      %v6539 = vcombine.low %v6506, %v6522
      %v6540 = vcombine.high %v6506, %v6522
      %v6542 = vunpack.c.l.s4 1934713408
      %v6543 = vunpack.c.0.s8 %v6542
      %v6544 = vlaneseq
      %v6545 = vshrl.u32 %v6544, 7
      %v6546 = vsub.s32 %v6543, %v6545
      %v6547 = vrot.slane %v6539, %v6546
      %v6549 = vunpack.c.l.s4 1934713408
      %v6550 = vunpack.c.0.s8 %v6549
      %v6551 = vlaneseq
      %v6552 = vshrl.u32 %v6551, 7
      %v6553 = vsub.s32 %v6550, %v6552
      %v6554 = vrot.slane %v6540, %v6553
      %v6555 = vcombine.high %v6531, 0.0
      %v6556 = vcombine.high %v6538, 0.0
      %v6557 = vcombine.high %v6547, 0.0
      %v6558 = vcombine.high %v6554, 0.0
      %v6559 = vcombine.low %v5849, %v6003
      %v6560 = vcombine.high %v5849, %v6003
      %v6562 = vunpack.c.l.s4 1983009808
      %v6563 = vunpack.c.0.s8 %v6562
      %v6564 = vlaneseq
      %v6565 = vshrl.u32 %v6564, 7
      %v6566 = vsub.s32 %v6563, %v6565
      %v6567 = vrot.slane %v6559, %v6566
      %v6569 = vunpack.c.l.s4 1983009808
      %v6570 = vunpack.c.0.s8 %v6569
      %v6571 = vlaneseq
      %v6572 = vshrl.u32 %v6571, 7
      %v6573 = vsub.s32 %v6570, %v6572
      %v6574 = vrot.slane %v6560, %v6573
      %v6575 = vcombine.low %v5926, %v6080
      %v6576 = vcombine.high %v5926, %v6080
      %v6578 = vunpack.c.l.s4 1983009808
      %v6579 = vunpack.c.0.s8 %v6578
      %v6580 = vlaneseq
      %v6581 = vshrl.u32 %v6580, 7
      %v6582 = vsub.s32 %v6579, %v6581
      %v6583 = vrot.slane %v6575, %v6582
      %v6585 = vunpack.c.l.s4 1983009808
      %v6586 = vunpack.c.0.s8 %v6585
      %v6587 = vlaneseq
      %v6588 = vshrl.u32 %v6587, 7
      %v6589 = vsub.s32 %v6586, %v6588
      %v6590 = vrot.slane %v6576, %v6589
      %v6591 = vcombine.low %v6567, %v6583
      %v6592 = vcombine.high %v6567, %v6583
      %v6594 = vunpack.c.l.s4 1934713408
      %v6595 = vunpack.c.0.s8 %v6594
      %v6596 = vlaneseq
      %v6597 = vshrl.u32 %v6596, 7
      %v6598 = vsub.s32 %v6595, %v6597
      %v6599 = vrot.slane %v6591, %v6598
      %v6601 = vunpack.c.l.s4 1934713408
      %v6602 = vunpack.c.0.s8 %v6601
      %v6603 = vlaneseq
      %v6604 = vshrl.u32 %v6603, 7
      %v6605 = vsub.s32 %v6602, %v6604
      %v6606 = vrot.slane %v6592, %v6605
      %v6607 = vcombine.low %v6574, %v6590
      %v6608 = vcombine.high %v6574, %v6590
      %v6610 = vunpack.c.l.s4 1934713408
      %v6611 = vunpack.c.0.s8 %v6610
      %v6612 = vlaneseq
      %v6613 = vshrl.u32 %v6612, 7
      %v6614 = vsub.s32 %v6611, %v6613
      %v6615 = vrot.slane %v6607, %v6614
      %v6617 = vunpack.c.l.s4 1934713408
      %v6618 = vunpack.c.0.s8 %v6617
      %v6619 = vlaneseq
      %v6620 = vshrl.u32 %v6619, 7
      %v6621 = vsub.s32 %v6618, %v6620
      %v6622 = vrot.slane %v6608, %v6621
      %v6623 = vcombine.high %v6599, 0.0
      %v6624 = vcombine.high %v6606, 0.0
      %v6625 = vcombine.high %v6615, 0.0
      %v6626 = vcombine.high %v6622, 0.0
      %v6627 = vcombine.low %v6123, %v6130
      %v6629 = vunpack.c.l.s4 1983009808
      %v6630 = vunpack.c.0.s8 %v6629
      %v6631 = vlaneseq
      %v6632 = vshrl.u32 %v6631, 7
      %v6633 = vsub.s32 %v6630, %v6632
      %v6634 = vrot.slane %v6627, %v6633
      %v6635 = vcombine.low %v6147, %v6148
      %v6637 = vunpack.c.l.s4 1983009808
      %v6638 = vunpack.c.0.s8 %v6637
      %v6639 = vlaneseq
      %v6640 = vshrl.u32 %v6639, 7
      %v6641 = vsub.s32 %v6638, %v6640
      %v6642 = vrot.slane %v6635, %v6641
      %v6643 = vcombine.low %v6139, %v6146
      %v6645 = vunpack.c.l.s4 1983009808
      %v6646 = vunpack.c.0.s8 %v6645
      %v6647 = vlaneseq
      %v6648 = vshrl.u32 %v6647, 7
      %v6649 = vsub.s32 %v6646, %v6648
      %v6650 = vrot.slane %v6643, %v6649
      %v6651 = vcombine.low %v6149, %v6150
      %v6653 = vunpack.c.l.s4 1983009808
      %v6654 = vunpack.c.0.s8 %v6653
      %v6655 = vlaneseq
      %v6656 = vshrl.u32 %v6655, 7
      %v6657 = vsub.s32 %v6654, %v6656
      %v6658 = vrot.slane %v6651, %v6657
      %v6659 = vcombine.low %v6634, %v6642
      %v6660 = vcombine.high %v6634, %v6642
      %v6662 = vunpack.c.l.s4 1934713408
      %v6663 = vunpack.c.0.s8 %v6662
      %v6664 = vlaneseq
      %v6665 = vshrl.u32 %v6664, 7
      %v6666 = vsub.s32 %v6663, %v6665
      %v6667 = vrot.slane %v6659, %v6666
      %v6669 = vunpack.c.l.s4 1934713408
      %v6670 = vunpack.c.0.s8 %v6669
      %v6671 = vlaneseq
      %v6672 = vshrl.u32 %v6671, 7
      %v6673 = vsub.s32 %v6670, %v6672
      %v6674 = vrot.slane %v6660, %v6673
      %v6675 = vcombine.low %v6650, %v6658
      %v6676 = vcombine.high %v6650, %v6658
      %v6678 = vunpack.c.l.s4 1934713408
      %v6679 = vunpack.c.0.s8 %v6678
      %v6680 = vlaneseq
      %v6681 = vshrl.u32 %v6680, 7
      %v6682 = vsub.s32 %v6679, %v6681
      %v6683 = vrot.slane %v6675, %v6682
      %v6685 = vunpack.c.l.s4 1934713408
      %v6686 = vunpack.c.0.s8 %v6685
      %v6687 = vlaneseq
      %v6688 = vshrl.u32 %v6687, 7
      %v6689 = vsub.s32 %v6686, %v6688
      %v6690 = vrot.slane %v6676, %v6689
      %v6691 = vcombine.low %v6667, %v6683
      %v6692 = vcombine.high %v6667, %v6683
      %v6693 = vcombine.low %v6674, %v6690
      %v6694 = vcombine.high %v6674, %v6690
      %v6695 = vcombine.low %v6191, %v6198
      %v6697 = vunpack.c.l.s4 1983009808
      %v6698 = vunpack.c.0.s8 %v6697
      %v6699 = vlaneseq
      %v6700 = vshrl.u32 %v6699, 7
      %v6701 = vsub.s32 %v6698, %v6700
      %v6702 = vrot.slane %v6695, %v6701
      %v6703 = vcombine.low %v6215, %v6216
      %v6705 = vunpack.c.l.s4 1983009808
      %v6706 = vunpack.c.0.s8 %v6705
      %v6707 = vlaneseq
      %v6708 = vshrl.u32 %v6707, 7
      %v6709 = vsub.s32 %v6706, %v6708
      %v6710 = vrot.slane %v6703, %v6709
      %v6711 = vcombine.low %v6207, %v6214
      %v6713 = vunpack.c.l.s4 1983009808
      %v6714 = vunpack.c.0.s8 %v6713
      %v6715 = vlaneseq
      %v6716 = vshrl.u32 %v6715, 7
      %v6717 = vsub.s32 %v6714, %v6716
      %v6718 = vrot.slane %v6711, %v6717
      %v6719 = vcombine.low %v6217, %v6218
      %v6721 = vunpack.c.l.s4 1983009808
      %v6722 = vunpack.c.0.s8 %v6721
      %v6723 = vlaneseq
      %v6724 = vshrl.u32 %v6723, 7
      %v6725 = vsub.s32 %v6722, %v6724
      %v6726 = vrot.slane %v6719, %v6725
      %v6727 = vcombine.low %v6702, %v6710
      %v6728 = vcombine.high %v6702, %v6710
      %v6730 = vunpack.c.l.s4 1934713408
      %v6731 = vunpack.c.0.s8 %v6730
      %v6732 = vlaneseq
      %v6733 = vshrl.u32 %v6732, 7
      %v6734 = vsub.s32 %v6731, %v6733
      %v6735 = vrot.slane %v6727, %v6734
      %v6737 = vunpack.c.l.s4 1934713408
      %v6738 = vunpack.c.0.s8 %v6737
      %v6739 = vlaneseq
      %v6740 = vshrl.u32 %v6739, 7
      %v6741 = vsub.s32 %v6738, %v6740
      %v6742 = vrot.slane %v6728, %v6741
      %v6743 = vcombine.low %v6718, %v6726
      %v6744 = vcombine.high %v6718, %v6726
      %v6746 = vunpack.c.l.s4 1934713408
      %v6747 = vunpack.c.0.s8 %v6746
      %v6748 = vlaneseq
      %v6749 = vshrl.u32 %v6748, 7
      %v6750 = vsub.s32 %v6747, %v6749
      %v6751 = vrot.slane %v6743, %v6750
      %v6753 = vunpack.c.l.s4 1934713408
      %v6754 = vunpack.c.0.s8 %v6753
      %v6755 = vlaneseq
      %v6756 = vshrl.u32 %v6755, 7
      %v6757 = vsub.s32 %v6754, %v6756
      %v6758 = vrot.slane %v6744, %v6757
      %v6759 = vcombine.low %v6735, %v6751
      %v6760 = vcombine.high %v6735, %v6751
      %v6761 = vcombine.low %v6742, %v6758
      %v6762 = vcombine.high %v6742, %v6758
      %v6763 = vcombine.low %v6259, %v6266
      %v6765 = vunpack.c.l.s4 1983009808
      %v6766 = vunpack.c.0.s8 %v6765
      %v6767 = vlaneseq
      %v6768 = vshrl.u32 %v6767, 7
      %v6769 = vsub.s32 %v6766, %v6768
      %v6770 = vrot.slane %v6763, %v6769
      %v6771 = vcombine.low %v6283, %v6284
      %v6773 = vunpack.c.l.s4 1983009808
      %v6774 = vunpack.c.0.s8 %v6773
      %v6775 = vlaneseq
      %v6776 = vshrl.u32 %v6775, 7
      %v6777 = vsub.s32 %v6774, %v6776
      %v6778 = vrot.slane %v6771, %v6777
      %v6779 = vcombine.low %v6275, %v6282
      %v6781 = vunpack.c.l.s4 1983009808
      %v6782 = vunpack.c.0.s8 %v6781
      %v6783 = vlaneseq
      %v6784 = vshrl.u32 %v6783, 7
      %v6785 = vsub.s32 %v6782, %v6784
      %v6786 = vrot.slane %v6779, %v6785
      %v6787 = vcombine.low %v6285, %v6286
      %v6789 = vunpack.c.l.s4 1983009808
      %v6790 = vunpack.c.0.s8 %v6789
      %v6791 = vlaneseq
      %v6792 = vshrl.u32 %v6791, 7
      %v6793 = vsub.s32 %v6790, %v6792
      %v6794 = vrot.slane %v6787, %v6793
      %v6795 = vcombine.low %v6770, %v6778
      %v6796 = vcombine.high %v6770, %v6778
      %v6798 = vunpack.c.l.s4 1934713408
      %v6799 = vunpack.c.0.s8 %v6798
      %v6800 = vlaneseq
      %v6801 = vshrl.u32 %v6800, 7
      %v6802 = vsub.s32 %v6799, %v6801
      %v6803 = vrot.slane %v6795, %v6802
      %v6805 = vunpack.c.l.s4 1934713408
      %v6806 = vunpack.c.0.s8 %v6805
      %v6807 = vlaneseq
      %v6808 = vshrl.u32 %v6807, 7
      %v6809 = vsub.s32 %v6806, %v6808
      %v6810 = vrot.slane %v6796, %v6809
      %v6811 = vcombine.low %v6786, %v6794
      %v6812 = vcombine.high %v6786, %v6794
      %v6814 = vunpack.c.l.s4 1934713408
      %v6815 = vunpack.c.0.s8 %v6814
      %v6816 = vlaneseq
      %v6817 = vshrl.u32 %v6816, 7
      %v6818 = vsub.s32 %v6815, %v6817
      %v6819 = vrot.slane %v6811, %v6818
      %v6821 = vunpack.c.l.s4 1934713408
      %v6822 = vunpack.c.0.s8 %v6821
      %v6823 = vlaneseq
      %v6824 = vshrl.u32 %v6823, 7
      %v6825 = vsub.s32 %v6822, %v6824
      %v6826 = vrot.slane %v6812, %v6825
      %v6827 = vcombine.low %v6803, %v6819
      %v6828 = vcombine.high %v6803, %v6819
      %v6829 = vcombine.low %v6810, %v6826
      %v6830 = vcombine.high %v6810, %v6826
      %v6831 = vcombine.low %v6327, %v6334
      %v6833 = vunpack.c.l.s4 1983009808
      %v6834 = vunpack.c.0.s8 %v6833
      %v6835 = vlaneseq
      %v6836 = vshrl.u32 %v6835, 7
      %v6837 = vsub.s32 %v6834, %v6836
      %v6838 = vrot.slane %v6831, %v6837
      %v6839 = vcombine.low %v6351, %v6352
      %v6841 = vunpack.c.l.s4 1983009808
      %v6842 = vunpack.c.0.s8 %v6841
      %v6843 = vlaneseq
      %v6844 = vshrl.u32 %v6843, 7
      %v6845 = vsub.s32 %v6842, %v6844
      %v6846 = vrot.slane %v6839, %v6845
      %v6847 = vcombine.low %v6343, %v6350
      %v6849 = vunpack.c.l.s4 1983009808
      %v6850 = vunpack.c.0.s8 %v6849
      %v6851 = vlaneseq
      %v6852 = vshrl.u32 %v6851, 7
      %v6853 = vsub.s32 %v6850, %v6852
      %v6854 = vrot.slane %v6847, %v6853
      %v6855 = vcombine.low %v6353, %v6354
      %v6857 = vunpack.c.l.s4 1983009808
      %v6858 = vunpack.c.0.s8 %v6857
      %v6859 = vlaneseq
      %v6860 = vshrl.u32 %v6859, 7
      %v6861 = vsub.s32 %v6858, %v6860
      %v6862 = vrot.slane %v6855, %v6861
      %v6863 = vcombine.low %v6838, %v6846
      %v6864 = vcombine.high %v6838, %v6846
      %v6866 = vunpack.c.l.s4 1934713408
      %v6867 = vunpack.c.0.s8 %v6866
      %v6868 = vlaneseq
      %v6869 = vshrl.u32 %v6868, 7
      %v6870 = vsub.s32 %v6867, %v6869
      %v6871 = vrot.slane %v6863, %v6870
      %v6873 = vunpack.c.l.s4 1934713408
      %v6874 = vunpack.c.0.s8 %v6873
      %v6875 = vlaneseq
      %v6876 = vshrl.u32 %v6875, 7
      %v6877 = vsub.s32 %v6874, %v6876
      %v6878 = vrot.slane %v6864, %v6877
      %v6879 = vcombine.low %v6854, %v6862
      %v6880 = vcombine.high %v6854, %v6862
      %v6882 = vunpack.c.l.s4 1934713408
      %v6883 = vunpack.c.0.s8 %v6882
      %v6884 = vlaneseq
      %v6885 = vshrl.u32 %v6884, 7
      %v6886 = vsub.s32 %v6883, %v6885
      %v6887 = vrot.slane %v6879, %v6886
      %v6889 = vunpack.c.l.s4 1934713408
      %v6890 = vunpack.c.0.s8 %v6889
      %v6891 = vlaneseq
      %v6892 = vshrl.u32 %v6891, 7
      %v6893 = vsub.s32 %v6890, %v6892
      %v6894 = vrot.slane %v6880, %v6893
      %v6895 = vcombine.low %v6871, %v6887
      %v6896 = vcombine.high %v6871, %v6887
      %v6897 = vcombine.low %v6878, %v6894
      %v6898 = vcombine.high %v6878, %v6894
      %v6899 = vcombine.low %v6395, %v6402
      %v6901 = vunpack.c.l.s4 1983009808
      %v6902 = vunpack.c.0.s8 %v6901
      %v6903 = vlaneseq
      %v6904 = vshrl.u32 %v6903, 7
      %v6905 = vsub.s32 %v6902, %v6904
      %v6906 = vrot.slane %v6899, %v6905
      %v6907 = vcombine.low %v6419, %v6420
      %v6909 = vunpack.c.l.s4 1983009808
      %v6910 = vunpack.c.0.s8 %v6909
      %v6911 = vlaneseq
      %v6912 = vshrl.u32 %v6911, 7
      %v6913 = vsub.s32 %v6910, %v6912
      %v6914 = vrot.slane %v6907, %v6913
      %v6915 = vcombine.low %v6411, %v6418
      %v6917 = vunpack.c.l.s4 1983009808
      %v6918 = vunpack.c.0.s8 %v6917
      %v6919 = vlaneseq
      %v6920 = vshrl.u32 %v6919, 7
      %v6921 = vsub.s32 %v6918, %v6920
      %v6922 = vrot.slane %v6915, %v6921
      %v6923 = vcombine.low %v6421, %v6422
      %v6925 = vunpack.c.l.s4 1983009808
      %v6926 = vunpack.c.0.s8 %v6925
      %v6927 = vlaneseq
      %v6928 = vshrl.u32 %v6927, 7
      %v6929 = vsub.s32 %v6926, %v6928
      %v6930 = vrot.slane %v6923, %v6929
      %v6931 = vcombine.low %v6906, %v6914
      %v6932 = vcombine.high %v6906, %v6914
      %v6934 = vunpack.c.l.s4 1934713408
      %v6935 = vunpack.c.0.s8 %v6934
      %v6936 = vlaneseq
      %v6937 = vshrl.u32 %v6936, 7
      %v6938 = vsub.s32 %v6935, %v6937
      %v6939 = vrot.slane %v6931, %v6938
      %v6941 = vunpack.c.l.s4 1934713408
      %v6942 = vunpack.c.0.s8 %v6941
      %v6943 = vlaneseq
      %v6944 = vshrl.u32 %v6943, 7
      %v6945 = vsub.s32 %v6942, %v6944
      %v6946 = vrot.slane %v6932, %v6945
      %v6947 = vcombine.low %v6922, %v6930
      %v6948 = vcombine.high %v6922, %v6930
      %v6950 = vunpack.c.l.s4 1934713408
      %v6951 = vunpack.c.0.s8 %v6950
      %v6952 = vlaneseq
      %v6953 = vshrl.u32 %v6952, 7
      %v6954 = vsub.s32 %v6951, %v6953
      %v6955 = vrot.slane %v6947, %v6954
      %v6957 = vunpack.c.l.s4 1934713408
      %v6958 = vunpack.c.0.s8 %v6957
      %v6959 = vlaneseq
      %v6960 = vshrl.u32 %v6959, 7
      %v6961 = vsub.s32 %v6958, %v6960
      %v6962 = vrot.slane %v6948, %v6961
      %v6963 = vcombine.low %v6939, %v6955
      %v6964 = vcombine.high %v6939, %v6955
      %v6965 = vcombine.low %v6946, %v6962
      %v6966 = vcombine.high %v6946, %v6962
      %v6967 = vcombine.low %v6463, %v6470
      %v6969 = vunpack.c.l.s4 1983009808
      %v6970 = vunpack.c.0.s8 %v6969
      %v6971 = vlaneseq
      %v6972 = vshrl.u32 %v6971, 7
      %v6973 = vsub.s32 %v6970, %v6972
      %v6974 = vrot.slane %v6967, %v6973
      %v6975 = vcombine.low %v6487, %v6488
      %v6977 = vunpack.c.l.s4 1983009808
      %v6978 = vunpack.c.0.s8 %v6977
      %v6979 = vlaneseq
      %v6980 = vshrl.u32 %v6979, 7
      %v6981 = vsub.s32 %v6978, %v6980
      %v6982 = vrot.slane %v6975, %v6981
      %v6983 = vcombine.low %v6479, %v6486
      %v6985 = vunpack.c.l.s4 1983009808
      %v6986 = vunpack.c.0.s8 %v6985
      %v6987 = vlaneseq
      %v6988 = vshrl.u32 %v6987, 7
      %v6989 = vsub.s32 %v6986, %v6988
      %v6990 = vrot.slane %v6983, %v6989
      %v6991 = vcombine.low %v6489, %v6490
      %v6993 = vunpack.c.l.s4 1983009808
      %v6994 = vunpack.c.0.s8 %v6993
      %v6995 = vlaneseq
      %v6996 = vshrl.u32 %v6995, 7
      %v6997 = vsub.s32 %v6994, %v6996
      %v6998 = vrot.slane %v6991, %v6997
      %v6999 = vcombine.low %v6974, %v6982
      %v7000 = vcombine.high %v6974, %v6982
      %v7002 = vunpack.c.l.s4 1934713408
      %v7003 = vunpack.c.0.s8 %v7002
      %v7004 = vlaneseq
      %v7005 = vshrl.u32 %v7004, 7
      %v7006 = vsub.s32 %v7003, %v7005
      %v7007 = vrot.slane %v6999, %v7006
      %v7009 = vunpack.c.l.s4 1934713408
      %v7010 = vunpack.c.0.s8 %v7009
      %v7011 = vlaneseq
      %v7012 = vshrl.u32 %v7011, 7
      %v7013 = vsub.s32 %v7010, %v7012
      %v7014 = vrot.slane %v7000, %v7013
      %v7015 = vcombine.low %v6990, %v6998
      %v7016 = vcombine.high %v6990, %v6998
      %v7018 = vunpack.c.l.s4 1934713408
      %v7019 = vunpack.c.0.s8 %v7018
      %v7020 = vlaneseq
      %v7021 = vshrl.u32 %v7020, 7
      %v7022 = vsub.s32 %v7019, %v7021
      %v7023 = vrot.slane %v7015, %v7022
      %v7025 = vunpack.c.l.s4 1934713408
      %v7026 = vunpack.c.0.s8 %v7025
      %v7027 = vlaneseq
      %v7028 = vshrl.u32 %v7027, 7
      %v7029 = vsub.s32 %v7026, %v7028
      %v7030 = vrot.slane %v7016, %v7029
      %v7031 = vcombine.low %v7007, %v7023
      %v7032 = vcombine.high %v7007, %v7023
      %v7033 = vcombine.low %v7014, %v7030
      %v7034 = vcombine.high %v7014, %v7030
      %v7035 = vcombine.low %v6531, %v6538
      %v7037 = vunpack.c.l.s4 1983009808
      %v7038 = vunpack.c.0.s8 %v7037
      %v7039 = vlaneseq
      %v7040 = vshrl.u32 %v7039, 7
      %v7041 = vsub.s32 %v7038, %v7040
      %v7042 = vrot.slane %v7035, %v7041
      %v7043 = vcombine.low %v6555, %v6556
      %v7045 = vunpack.c.l.s4 1983009808
      %v7046 = vunpack.c.0.s8 %v7045
      %v7047 = vlaneseq
      %v7048 = vshrl.u32 %v7047, 7
      %v7049 = vsub.s32 %v7046, %v7048
      %v7050 = vrot.slane %v7043, %v7049
      %v7051 = vcombine.low %v6547, %v6554
      %v7053 = vunpack.c.l.s4 1983009808
      %v7054 = vunpack.c.0.s8 %v7053
      %v7055 = vlaneseq
      %v7056 = vshrl.u32 %v7055, 7
      %v7057 = vsub.s32 %v7054, %v7056
      %v7058 = vrot.slane %v7051, %v7057
      %v7059 = vcombine.low %v6557, %v6558
      %v7061 = vunpack.c.l.s4 1983009808
      %v7062 = vunpack.c.0.s8 %v7061
      %v7063 = vlaneseq
      %v7064 = vshrl.u32 %v7063, 7
      %v7065 = vsub.s32 %v7062, %v7064
      %v7066 = vrot.slane %v7059, %v7065
      %v7067 = vcombine.low %v7042, %v7050
      %v7068 = vcombine.high %v7042, %v7050
      %v7070 = vunpack.c.l.s4 1934713408
      %v7071 = vunpack.c.0.s8 %v7070
      %v7072 = vlaneseq
      %v7073 = vshrl.u32 %v7072, 7
      %v7074 = vsub.s32 %v7071, %v7073
      %v7075 = vrot.slane %v7067, %v7074
      %v7077 = vunpack.c.l.s4 1934713408
      %v7078 = vunpack.c.0.s8 %v7077
      %v7079 = vlaneseq
      %v7080 = vshrl.u32 %v7079, 7
      %v7081 = vsub.s32 %v7078, %v7080
      %v7082 = vrot.slane %v7068, %v7081
      %v7083 = vcombine.low %v7058, %v7066
      %v7084 = vcombine.high %v7058, %v7066
      %v7086 = vunpack.c.l.s4 1934713408
      %v7087 = vunpack.c.0.s8 %v7086
      %v7088 = vlaneseq
      %v7089 = vshrl.u32 %v7088, 7
      %v7090 = vsub.s32 %v7087, %v7089
      %v7091 = vrot.slane %v7083, %v7090
      %v7093 = vunpack.c.l.s4 1934713408
      %v7094 = vunpack.c.0.s8 %v7093
      %v7095 = vlaneseq
      %v7096 = vshrl.u32 %v7095, 7
      %v7097 = vsub.s32 %v7094, %v7096
      %v7098 = vrot.slane %v7084, %v7097
      %v7099 = vcombine.low %v7075, %v7091
      %v7100 = vcombine.high %v7075, %v7091
      %v7101 = vcombine.low %v7082, %v7098
      %v7102 = vcombine.high %v7082, %v7098
      %v7103 = vcombine.low %v6599, %v6606
      %v7105 = vunpack.c.l.s4 1983009808
      %v7106 = vunpack.c.0.s8 %v7105
      %v7107 = vlaneseq
      %v7108 = vshrl.u32 %v7107, 7
      %v7109 = vsub.s32 %v7106, %v7108
      %v7110 = vrot.slane %v7103, %v7109
      %v7111 = vcombine.low %v6623, %v6624
      %v7113 = vunpack.c.l.s4 1983009808
      %v7114 = vunpack.c.0.s8 %v7113
      %v7115 = vlaneseq
      %v7116 = vshrl.u32 %v7115, 7
      %v7117 = vsub.s32 %v7114, %v7116
      %v7118 = vrot.slane %v7111, %v7117
      %v7119 = vcombine.low %v6615, %v6622
      %v7121 = vunpack.c.l.s4 1983009808
      %v7122 = vunpack.c.0.s8 %v7121
      %v7123 = vlaneseq
      %v7124 = vshrl.u32 %v7123, 7
      %v7125 = vsub.s32 %v7122, %v7124
      %v7126 = vrot.slane %v7119, %v7125
      %v7127 = vcombine.low %v6625, %v6626
      %v7129 = vunpack.c.l.s4 1983009808
      %v7130 = vunpack.c.0.s8 %v7129
      %v7131 = vlaneseq
      %v7132 = vshrl.u32 %v7131, 7
      %v7133 = vsub.s32 %v7130, %v7132
      %v7134 = vrot.slane %v7127, %v7133
      %v7135 = vcombine.low %v7110, %v7118
      %v7136 = vcombine.high %v7110, %v7118
      %v7138 = vunpack.c.l.s4 1934713408
      %v7139 = vunpack.c.0.s8 %v7138
      %v7140 = vlaneseq
      %v7141 = vshrl.u32 %v7140, 7
      %v7142 = vsub.s32 %v7139, %v7141
      %v7143 = vrot.slane %v7135, %v7142
      %v7145 = vunpack.c.l.s4 1934713408
      %v7146 = vunpack.c.0.s8 %v7145
      %v7147 = vlaneseq
      %v7148 = vshrl.u32 %v7147, 7
      %v7149 = vsub.s32 %v7146, %v7148
      %v7150 = vrot.slane %v7136, %v7149
      %v7151 = vcombine.low %v7126, %v7134
      %v7152 = vcombine.high %v7126, %v7134
      %v7154 = vunpack.c.l.s4 1934713408
      %v7155 = vunpack.c.0.s8 %v7154
      %v7156 = vlaneseq
      %v7157 = vshrl.u32 %v7156, 7
      %v7158 = vsub.s32 %v7155, %v7157
      %v7159 = vrot.slane %v7151, %v7158
      %v7161 = vunpack.c.l.s4 1934713408
      %v7162 = vunpack.c.0.s8 %v7161
      %v7163 = vlaneseq
      %v7164 = vshrl.u32 %v7163, 7
      %v7165 = vsub.s32 %v7162, %v7164
      %v7166 = vrot.slane %v7152, %v7165
      %v7167 = vcombine.low %v7143, %v7159
      %v7168 = vcombine.high %v7143, %v7159
      %v7169 = vcombine.low %v7150, %v7166
      %v7170 = vcombine.high %v7150, %v7166
      %7179 = vrot.lane.b32.xlu0 %v6692, 32
      %v7180 = vpop.permute.xlu0 %7179
      %7181 = vrot.lane.b32.xlu0 %v6760, 32
      %v7182 = vpop.permute.xlu0 %7181
      %7183 = vrot.lane.b32.xlu0 %v6828, 32
      %v7184 = vpop.permute.xlu0 %7183
      %7185 = vrot.lane.b32.xlu0 %v6896, 32
      %v7186 = vpop.permute.xlu0 %7185
      %7187 = vrot.lane.b32.xlu0 %v6964, 32
      %v7188 = vpop.permute.xlu0 %7187
      %7189 = vrot.lane.b32.xlu0 %v7032, 32
      %v7190 = vpop.permute.xlu0 %7189
      %7191 = vrot.lane.b32.xlu0 %v7100, 32
      %v7192 = vpop.permute.xlu0 %7191
      %7193 = vrot.lane.b32.xlu0 %v7168, 32
      %v7194 = vpop.permute.xlu0 %7193
      %7211 = vrot.lane.b32.xlu0 %v6693, 64
      %v7212 = vpop.permute.xlu0 %7211
      %7213 = vrot.lane.b32.xlu0 %v6761, 64
      %v7214 = vpop.permute.xlu0 %7213
      %7215 = vrot.lane.b32.xlu0 %v6829, 64
      %v7216 = vpop.permute.xlu0 %7215
      %7217 = vrot.lane.b32.xlu0 %v6897, 64
      %v7218 = vpop.permute.xlu0 %7217
      %7219 = vrot.lane.b32.xlu0 %v6965, 64
      %v7220 = vpop.permute.xlu0 %7219
      %7221 = vrot.lane.b32.xlu0 %v7033, 64
      %v7222 = vpop.permute.xlu0 %7221
      %7223 = vrot.lane.b32.xlu0 %v7101, 64
      %v7224 = vpop.permute.xlu0 %7223
      %7225 = vrot.lane.b32.xlu0 %v7169, 64
      %v7226 = vpop.permute.xlu0 %7225
      %7243 = vrot.lane.b32.xlu0 %v6694, 96
      %v7244 = vpop.permute.xlu0 %7243
      %7245 = vrot.lane.b32.xlu0 %v6762, 96
      %v7246 = vpop.permute.xlu0 %7245
      %7247 = vrot.lane.b32.xlu0 %v6830, 96
      %v7248 = vpop.permute.xlu0 %7247
      %7249 = vrot.lane.b32.xlu0 %v6898, 96
      %v7250 = vpop.permute.xlu0 %7249
      %7251 = vrot.lane.b32.xlu0 %v6966, 96
      %v7252 = vpop.permute.xlu0 %7251
      %7253 = vrot.lane.b32.xlu0 %v7034, 96
      %v7254 = vpop.permute.xlu0 %7253
      %7255 = vrot.lane.b32.xlu0 %v7102, 96
      %v7256 = vpop.permute.xlu0 %7255
      %7257 = vrot.lane.b32.xlu0 %v7170, 96
      %v7258 = vpop.permute.xlu0 %7257
      %v7267 = vsel %vm5017, %v6691, %v7180
      %v7268 = vsel %vm5017, %v6759, %v7182
      %v7269 = vsel %vm5017, %v6827, %v7184
      %v7270 = vsel %vm5017, %v6895, %v7186
      %v7271 = vsel %vm5017, %v6963, %v7188
      %v7272 = vsel %vm5017, %v7031, %v7190
      %v7273 = vsel %vm5017, %v7099, %v7192
      %v7274 = vsel %vm5017, %v7167, %v7194
      %v7275 = vsel %vm5406, %v7267, %v7212
      %v7276 = vsel %vm5406, %v7268, %v7214
      %v7277 = vsel %vm5406, %v7269, %v7216
      %v7278 = vsel %vm5406, %v7270, %v7218
      %v7279 = vsel %vm5406, %v7271, %v7220
      %v7280 = vsel %vm5406, %v7272, %v7222
      %v7281 = vsel %vm5406, %v7273, %v7224
      %v7282 = vsel %vm5406, %v7274, %v7226
      %vm7283 = vcmask 785408
      %v7284 = vsel %vm7283, %v7275, %v7244
      %v7285 = vsel %vm7283, %v7276, %v7246
      %v7286 = vsel %vm7283, %v7277, %v7248
      %v7287 = vsel %vm7283, %v7278, %v7250
      %v7288 = vsel %vm7283, %v7279, %v7252
      %v7289 = vsel %vm7283, %v7280, %v7254
      %v7290 = vsel %vm7283, %v7281, %v7256
      %v7291 = vsel %vm7283, %v7282, %v7258
      %v7292 = vpack.c.bf16 %v7285, %v7284
      %v7293 = vpack.c.bf16 %v7287, %v7286
      %v7294 = vpack.c.bf16 %v7289, %v7288
      %v7295 = vpack.c.bf16 %v7291, %v7290
      %v7296 = vld [vmem:[%s706] sm:$0xf]
      %v7297 = vld [vmem:[%s706 + $0x4] sm:$0xf]
      %v7298 = vld [vmem:[%s706 + $0x8] sm:$0xf]
      %v7299 = vld [vmem:[%s706 + $0xc] sm:$0xf]
      %v7300 = vld [vmem:[%s706 + $0x10] sm:$0xf]
      %v7301 = vld [vmem:[%s706 + $0x14] sm:$0xf]
      %v7302 = vld [vmem:[%s706 + $0x18] sm:$0xf]
      %v7303 = vld [vmem:[%s706 + $0x1c] sm:$0xf]
      %v7304 = vld [vmem:[%s706 + $0x20] sm:$0xf]
      %v7305 = vld [vmem:[%s706 + $0x24] sm:$0xf]
      %v7306 = vld [vmem:[%s706 + $0x28] sm:$0xf]
      %v7307 = vld [vmem:[%s706 + $0x2c] sm:$0xf]
      %v7308 = vld [vmem:[%s706 + $0x30] sm:$0xf]
      %v7309 = vld [vmem:[%s706 + $0x34] sm:$0xf]
      %v7310 = vld [vmem:[%s706 + $0x38] sm:$0xf]
      %v7311 = vld [vmem:[%s706 + $0x3c] sm:$0xf]
      %v7312 = vld [vmem:[%s709] sm:$0x1]
      %v7314 = vlaneseq
      %v7315 = vshrl.u32 %v7314, 7
      %v7316 = vsub.s32 0, %v7315
      %v7317 = vrot.slane %v7312, %v7316
      %v7335 = vunpack.c.l.b16 %v7296
      %v7336 = vunpack.c.l.b16 %v7297
      %v7337 = vunpack.c.l.b16 %v7298
      %v7338 = vunpack.c.l.b16 %v7299
      %v7339 = vunpack.c.l.b16 %v7300
      %v7340 = vunpack.c.l.b16 %v7301
      %v7341 = vunpack.c.l.b16 %v7302
      %v7342 = vunpack.c.l.b16 %v7303
      %v7343 = vunpack.c.l.b16 %v7304
      %v7344 = vunpack.c.l.b16 %v7305
      %v7345 = vunpack.c.l.b16 %v7306
      %v7346 = vunpack.c.l.b16 %v7307
      %v7347 = vunpack.c.l.b16 %v7308
      %v7348 = vunpack.c.l.b16 %v7309
      %v7349 = vunpack.c.l.b16 %v7310
      %v7350 = vunpack.c.l.b16 %v7311
      %v7351 = vpack.c.b16 %v7336, %v7335
      %v7352 = vpack.c.b16 %v7338, %v7337
      %v7353 = vpack.c.b16 %v7340, %v7339
      %v7354 = vpack.c.b16 %v7342, %v7341
      %v7355 = vpack.c.b16 %v7344, %v7343
      %v7356 = vpack.c.b16 %v7346, %v7345
      %v7357 = vpack.c.b16 %v7348, %v7347
      %v7358 = vpack.c.b16 %v7350, %v7349
      %7367 = vmatprep.subr.bf16.mxu0 0
      %7368 = vmatpush1.bf16.msra.mxu0 %v7351
      %7369 = vmatprep.subr.bf16.mxu0 0
      %7370 = vmatpush1.bf16.msra.mxu0 %v7352
      %7371 = vmatprep.subr.bf16.mxu0 0
      %7372 = vmatpush1.bf16.msra.mxu0 %v7353
      %7373 = vmatprep.subr.bf16.mxu0 0
      %7374 = vmatpush1.bf16.msra.mxu0 %v7354
      %7375 = vmatprep.subr.bf16.mxu0 0
      %7376 = vmatpush1.bf16.msra.mxu0 %v7355
      %7377 = vmatprep.subr.bf16.mxu0 0
      %7378 = vmatpush1.bf16.msra.mxu0 %v7356
      %7379 = vmatprep.subr.bf16.mxu0 0
      %7380 = vmatpush1.bf16.msra.mxu0 %v7357
      %7381 = vmatprep.subr.bf16.mxu0 0
      %7382 = vmatpush1.bf16.msra.mxu0 %v7358
      %7383 = vmatprep.subr.bf16.mxu0 0
      %7384 = vmatpush1.bf16.msra.mxu0 0
      %7385 = vmatprep.subr.bf16.mxu0 0
      %7386 = vmatpush1.bf16.msra.mxu0 0
      %7387 = vmatprep.subr.bf16.mxu0 0
      %7388 = vmatpush1.bf16.msra.mxu0 0
      %7389 = vmatprep.subr.bf16.mxu0 0
      %7390 = vmatpush1.bf16.msra.mxu0 0
      %7391 = vmatprep.subr.bf16.mxu0 0
      %7392 = vmatpush1.bf16.msra.mxu0 0
      %7393 = vmatprep.subr.bf16.mxu0 0
      %7394 = vmatpush1.bf16.msra.mxu0 0
      %7395 = vmatprep.subr.bf16.mxu0 0
      %7396 = vmatpush1.bf16.msra.mxu0 0
      %7397 = vmatprep.subr.bf16.mxu0 0
      %7398 = vmatpush1.bf16.msra.mxu0 0
      %7399 = vmatprep.mubr.bf16.mxu0 0
      %7400 = vmatmul.mubr.bf16.gmra.mrb[0].mxu0 %v7292
      %v7401 = vpop.f32.mrb[0].mxu0
      %v7402 = vadd.f32 %v7317, %v7401
      %v7403 = vpop.f32.mrb[0].mxu0
      %v7404 = vpop.f32.mrb[0].mxu0
      %v7405 = vadd.f32 %v7317, %v7404
      %v7406 = vpop.f32.mrb[0].mxu0
      %7407 = vmatprep.mubr.bf16.mxu0 0
      %7408 = vmatmul.mubr.bf16.gmra.mrb[0].mxu0 %v7293
      %v7409 = vpop.f32.mrb[0].mxu0
      %v7410 = vadd.f32 %v7317, %v7409
      %v7411 = vpop.f32.mrb[0].mxu0
      %v7412 = vpop.f32.mrb[0].mxu0
      %v7413 = vadd.f32 %v7317, %v7412
      %v7414 = vpop.f32.mrb[0].mxu0
      %7415 = vmatprep.mubr.bf16.mxu0 0
      %7416 = vmatmul.mubr.bf16.gmra.mrb[0].mxu0 %v7294
      %v7417 = vpop.f32.mrb[0].mxu0
      %v7418 = vadd.f32 %v7317, %v7417
      %v7419 = vpop.f32.mrb[0].mxu0
      %v7420 = vpop.f32.mrb[0].mxu0
      %v7421 = vadd.f32 %v7317, %v7420
      %v7422 = vpop.f32.mrb[0].mxu0
      %7423 = vmatprep.mubr.bf16.mxu0 0
      %7424 = vmatmul.mubr.bf16.gmra.mrb[0].mxu0 %v7295
      %v7425 = vpop.f32.mrb[0].mxu0
      %v7426 = vadd.f32 %v7317, %v7425
      %v7427 = vpop.f32.mrb[0].mxu0
      %v7428 = vpop.f32.mrb[0].mxu0
      %v7429 = vadd.f32 %v7317, %v7428
      %v7430 = vpop.f32.mrb[0].mxu0
      %7431 = vdwg.mxu0
      %v7432 = vadd.f32 %v1019, %v7402
      %v7433 = vadd.f32 %v1020, %v7405
      %v7434 = vadd.f32 %v1021, %v7410
      %v7435 = vadd.f32 %v1022, %v7413
      %v7436 = vadd.f32 %v1023, %v7418
      %v7437 = vadd.f32 %v1024, %v7421
      %v7438 = vadd.f32 %v1025, %v7426
      %v7439 = vadd.f32 %v1026, %v7429
      %v7440 = vld [vmem:[%s712] sm:$0x1]
      %v7441 = vld [vmem:[%s715] sm:$0x1]
      %7442 = vadd.xlane.f32.xlu0 %v7432
      %v7443 = vpop.xlane.xlu0 %7442
      %7444 = vadd.xlane.f32.xlu0 %v7433
      %v7445 = vpop.xlane.xlu0 %7444
      %7446 = vadd.xlane.f32.xlu0 %v7434
      %v7447 = vpop.xlane.xlu0 %7446
      %7448 = vadd.xlane.f32.xlu0 %v7435
      %v7449 = vpop.xlane.xlu0 %7448
      %7450 = vadd.xlane.f32.xlu0 %v7436
      %v7451 = vpop.xlane.xlu0 %7450
      %7452 = vadd.xlane.f32.xlu0 %v7437
      %v7453 = vpop.xlane.xlu0 %7452
      %7454 = vadd.xlane.f32.xlu0 %v7438
      %v7455 = vpop.xlane.xlu0 %7454
      %7456 = vadd.xlane.f32.xlu0 %v7439
      %v7457 = vpop.xlane.xlu0 %7456
      %v7458 = vmul.f32 %v7443, %v1045
      %v7459 = vmul.f32 %v7445, %v1045
      %v7460 = vmul.f32 %v7447, %v1045
      %v7461 = vmul.f32 %v7449, %v1045
      %v7462 = vmul.f32 %v7451, %v1045
      %v7463 = vmul.f32 %v7453, %v1045
      %v7464 = vmul.f32 %v7455, %v1045
      %v7465 = vmul.f32 %v7457, %v1045
      %v7466 = vsub.f32 %v7432, %v7458
      %v7467 = vsub.f32 %v7433, %v7459
      %v7468 = vsub.f32 %v7434, %v7460
      %v7469 = vsub.f32 %v7435, %v7461
      %v7470 = vsub.f32 %v7436, %v7462
      %v7471 = vsub.f32 %v7437, %v7463
      %v7472 = vsub.f32 %v7438, %v7464
      %v7473 = vsub.f32 %v7439, %v7465
      %v7474 = vmul.f32 %v7466, %v7466
      %v7475 = vmul.f32 %v7467, %v7467
      %v7476 = vmul.f32 %v7468, %v7468
      %v7477 = vmul.f32 %v7469, %v7469
      %v7478 = vmul.f32 %v7470, %v7470
      %v7479 = vmul.f32 %v7471, %v7471
      %v7480 = vmul.f32 %v7472, %v7472
      %v7481 = vmul.f32 %v7473, %v7473
      %7482 = vadd.xlane.f32.xlu0 %v7474
      %v7483 = vpop.xlane.xlu0 %7482
      %7484 = vadd.xlane.f32.xlu0 %v7475
      %v7485 = vpop.xlane.xlu0 %7484
      %7486 = vadd.xlane.f32.xlu0 %v7476
      %v7487 = vpop.xlane.xlu0 %7486
      %7488 = vadd.xlane.f32.xlu0 %v7477
      %v7489 = vpop.xlane.xlu0 %7488
      %7490 = vadd.xlane.f32.xlu0 %v7478
      %v7491 = vpop.xlane.xlu0 %7490
      %7492 = vadd.xlane.f32.xlu0 %v7479
      %v7493 = vpop.xlane.xlu0 %7492
      %7494 = vadd.xlane.f32.xlu0 %v7480
      %v7495 = vpop.xlane.xlu0 %7494
      %7496 = vadd.xlane.f32.xlu0 %v7481
      %v7497 = vpop.xlane.xlu0 %7496
      %v7498 = vmul.f32 %v7483, %v1045
      %v7499 = vmul.f32 %v7485, %v1045
      %v7500 = vmul.f32 %v7487, %v1045
      %v7501 = vmul.f32 %v7489, %v1045
      %v7502 = vmul.f32 %v7491, %v1045
      %v7503 = vmul.f32 %v7493, %v1045
      %v7504 = vmul.f32 %v7495, %v1045
      %v7505 = vmul.f32 %v7497, %v1045
      %v7506 = vadd.f32 %v7498, 1e-06
      %v7507 = vadd.f32 %v7499, 1e-06
      %v7508 = vadd.f32 %v7500, 1e-06
      %v7509 = vadd.f32 %v7501, 1e-06
      %v7510 = vadd.f32 %v7502, 1e-06
      %v7511 = vadd.f32 %v7503, 1e-06
      %v7512 = vadd.f32 %v7504, 1e-06
      %v7513 = vadd.f32 %v7505, 1e-06
      %v7514 = vrsqrt.pop %v7506
      %v7515 = vrsqrt.pop %v7507
      %v7516 = vrsqrt.pop %v7508
      %v7517 = vrsqrt.pop %v7509
      %v7518 = vrsqrt.pop %v7510
      %v7519 = vrsqrt.pop %v7511
      %v7520 = vrsqrt.pop %v7512
      %v7521 = vrsqrt.pop %v7513
      %v7522 = vmul.f32 %v7466, %v7514
      %v7523 = vmul.f32 %v7467, %v7515
      %v7524 = vmul.f32 %v7468, %v7516
      %v7525 = vmul.f32 %v7469, %v7517
      %v7526 = vmul.f32 %v7470, %v7518
      %v7527 = vmul.f32 %v7471, %v7519
      %v7528 = vmul.f32 %v7472, %v7520
      %v7529 = vmul.f32 %v7473, %v7521
      %v7531 = vlaneseq
      %v7532 = vshrl.u32 %v7531, 7
      %v7533 = vsub.s32 0, %v7532
      %v7534 = vrot.slane %v7440, %v7533
      %v7536 = vmul.f32 %v7522, %v7534
      %v7537 = vmul.f32 %v7523, %v7534
      %v7538 = vmul.f32 %v7524, %v7534
      %v7539 = vmul.f32 %v7525, %v7534
      %v7540 = vmul.f32 %v7526, %v7534
      %v7541 = vmul.f32 %v7527, %v7534
      %v7542 = vmul.f32 %v7528, %v7534
      %v7543 = vmul.f32 %v7529, %v7534
      %v7545 = vlaneseq
      %v7546 = vshrl.u32 %v7545, 7
      %v7547 = vsub.s32 0, %v7546
      %v7548 = vrot.slane %v7441, %v7547
      %v7550 = vadd.f32 %v7536, %v7548
      %v7551 = vadd.f32 %v7537, %v7548
      %v7552 = vadd.f32 %v7538, %v7548
      %v7553 = vadd.f32 %v7539, %v7548
      %v7554 = vadd.f32 %v7540, %v7548
      %v7555 = vadd.f32 %v7541, %v7548
      %v7556 = vadd.f32 %v7542, %v7548
      %v7557 = vadd.f32 %v7543, %v7548
      %v7558 = vpack.c.bf16 %v7551, %v7550
      %v7559 = vpack.c.bf16 %v7553, %v7552
      %v7560 = vpack.c.bf16 %v7555, %v7554
      %v7561 = vpack.c.bf16 %v7557, %v7556
      %v7562 = vld [vmem:[%s720] sm:$0xff]
      %v7563 = vld [vmem:[%s720 + $0x20] sm:$0xff]
      %v7564 = vld [vmem:[%s720 + $0x40] sm:$0xff]
      %v7565 = vld [vmem:[%s720 + $0x60] sm:$0xff]
      %v7566 = vld [vmem:[%s720 + $0x80] sm:$0xff]
      %v7567 = vld [vmem:[%s720 + $0xa0] sm:$0xff]
      %v7568 = vld [vmem:[%s720 + $0xc0] sm:$0xff]
      %v7569 = vld [vmem:[%s720 + $0xe0] sm:$0xff]
      %v7570 = vld [vmem:[%s720 + $0x100] sm:$0xff]
      %v7571 = vld [vmem:[%s720 + $0x120] sm:$0xff]
      %v7572 = vld [vmem:[%s720 + $0x140] sm:$0xff]
      %v7573 = vld [vmem:[%s720 + $0x160] sm:$0xff]
      %v7574 = vld [vmem:[%s720 + $0x180] sm:$0xff]
      %v7575 = vld [vmem:[%s720 + $0x1a0] sm:$0xff]
      %v7576 = vld [vmem:[%s720 + $0x1c0] sm:$0xff]
      %v7577 = vld [vmem:[%s720 + $0x1e0] sm:$0xff]
      %v7578 = vld [vmem:[%s724] sm:$0x3]
      %v7580 = vlaneseq
      %v7581 = vshrl.u32 %v7580, 7
      %v7582 = vsub.s32 0, %v7581
      %v7583 = vrot.slane %v7578, %v7582
      %v7584 = vlaneseq
      %v7585 = vshrl.u32 %v7584, 7
      %v7586 = vsub.s32 1, %v7585
      %v7587 = vrot.slane %v7578, %v7586
      %v7606 = vunpack.c.l.b16 %v7562
      %v7607 = vunpack.c.h.b16 %v7562
      %v7608 = vunpack.c.l.b16 %v7563
      %v7609 = vunpack.c.h.b16 %v7563
      %v7610 = vunpack.c.l.b16 %v7564
      %v7611 = vunpack.c.h.b16 %v7564
      %v7612 = vunpack.c.l.b16 %v7565
      %v7613 = vunpack.c.h.b16 %v7565
      %v7614 = vunpack.c.l.b16 %v7566
      %v7615 = vunpack.c.h.b16 %v7566
      %v7616 = vunpack.c.l.b16 %v7567
      %v7617 = vunpack.c.h.b16 %v7567
      %v7618 = vunpack.c.l.b16 %v7568
      %v7619 = vunpack.c.h.b16 %v7568
      %v7620 = vunpack.c.l.b16 %v7569
      %v7621 = vunpack.c.h.b16 %v7569
      %v7622 = vunpack.c.l.b16 %v7570
      %v7623 = vunpack.c.h.b16 %v7570
      %v7624 = vunpack.c.l.b16 %v7571
      %v7625 = vunpack.c.h.b16 %v7571
      %v7626 = vunpack.c.l.b16 %v7572
      %v7627 = vunpack.c.h.b16 %v7572
      %v7628 = vunpack.c.l.b16 %v7573
      %v7629 = vunpack.c.h.b16 %v7573
      %v7630 = vunpack.c.l.b16 %v7574
      %v7631 = vunpack.c.h.b16 %v7574
      %v7632 = vunpack.c.l.b16 %v7575
      %v7633 = vunpack.c.h.b16 %v7575
      %v7634 = vunpack.c.l.b16 %v7576
      %v7635 = vunpack.c.h.b16 %v7576
      %v7636 = vunpack.c.l.b16 %v7577
      %v7637 = vunpack.c.h.b16 %v7577
      %v7638 = vpack.c.b16 %v7608, %v7606
      %v7639 = vpack.c.b16 %v7609, %v7607
      %v7640 = vpack.c.b16 %v7612, %v7610
      %v7641 = vpack.c.b16 %v7613, %v7611
      %v7642 = vpack.c.b16 %v7616, %v7614
      %v7643 = vpack.c.b16 %v7617, %v7615
      %v7644 = vpack.c.b16 %v7620, %v7618
      %v7645 = vpack.c.b16 %v7621, %v7619
      %v7646 = vpack.c.b16 %v7624, %v7622
      %v7647 = vpack.c.b16 %v7625, %v7623
      %v7648 = vpack.c.b16 %v7628, %v7626
      %v7649 = vpack.c.b16 %v7629, %v7627
      %v7650 = vpack.c.b16 %v7632, %v7630
      %v7651 = vpack.c.b16 %v7633, %v7631
      %v7652 = vpack.c.b16 %v7636, %v7634
      %v7653 = vpack.c.b16 %v7637, %v7635
      %7670 = vmatprep.subr.bf16.mxu0 %v7639
      %7671 = vmatpush1.bf16.msra.mxu0 %v7638
      %7672 = vmatprep.subr.bf16.mxu0 %v7641
      %7673 = vmatpush1.bf16.msra.mxu0 %v7640
      %7674 = vmatprep.subr.bf16.mxu0 %v7643
      %7675 = vmatpush1.bf16.msra.mxu0 %v7642
      %7676 = vmatprep.subr.bf16.mxu0 %v7645
      %7677 = vmatpush1.bf16.msra.mxu0 %v7644
      %7678 = vmatprep.subr.bf16.mxu0 %v7647
      %7679 = vmatpush1.bf16.msra.mxu0 %v7646
      %7680 = vmatprep.subr.bf16.mxu0 %v7649
      %7681 = vmatpush1.bf16.msra.mxu0 %v7648
      %7682 = vmatprep.subr.bf16.mxu0 %v7651
      %7683 = vmatpush1.bf16.msra.mxu0 %v7650
      %7684 = vmatprep.subr.bf16.mxu0 %v7653
      %7685 = vmatpush1.bf16.msra.mxu0 %v7652
      %7686 = vmatprep.subr.bf16.mxu0 0
      %7687 = vmatpush1.bf16.msra.mxu0 0
      %7688 = vmatprep.subr.bf16.mxu0 0
      %7689 = vmatpush1.bf16.msra.mxu0 0
      %7690 = vmatprep.subr.bf16.mxu0 0
      %7691 = vmatpush1.bf16.msra.mxu0 0
      %7692 = vmatprep.subr.bf16.mxu0 0
      %7693 = vmatpush1.bf16.msra.mxu0 0
      %7694 = vmatprep.subr.bf16.mxu0 0
      %7695 = vmatpush1.bf16.msra.mxu0 0
      %7696 = vmatprep.subr.bf16.mxu0 0
      %7697 = vmatpush1.bf16.msra.mxu0 0
      %7698 = vmatprep.subr.bf16.mxu0 0
      %7699 = vmatpush1.bf16.msra.mxu0 0
      %7700 = vmatprep.subr.bf16.mxu0 0
      %7701 = vmatpush1.bf16.msra.mxu0 0
      %7702 = vmatprep.mubr.bf16.mxu0 0
      %7703 = vmatmul.mubr.bf16.gmra.mrb[0].mxu0 %v7558
      %v7704 = vpop.f32.mrb[0].mxu0
      %v7705 = vadd.f32 %v7583, %v7704
      %v7706 = vpop.f32.mrb[0].mxu0
      %v7707 = vadd.f32 %v7587, %v7706
      %v7708 = vpop.f32.mrb[0].mxu0
      %v7709 = vadd.f32 %v7583, %v7708
      %v7710 = vpop.f32.mrb[0].mxu0
      %v7711 = vadd.f32 %v7587, %v7710
      %7712 = vmatprep.mubr.bf16.mxu0 0
      %7713 = vmatmul.mubr.bf16.gmra.mrb[0].mxu0 %v7559
      %v7714 = vpop.f32.mrb[0].mxu0
      %v7715 = vadd.f32 %v7583, %v7714
      %v7716 = vpop.f32.mrb[0].mxu0
      %v7717 = vadd.f32 %v7587, %v7716
      %v7718 = vpop.f32.mrb[0].mxu0
      %v7719 = vadd.f32 %v7583, %v7718
      %v7720 = vpop.f32.mrb[0].mxu0
      %v7721 = vadd.f32 %v7587, %v7720
      %7722 = vmatprep.mubr.bf16.mxu0 0
      %7723 = vmatmul.mubr.bf16.gmra.mrb[0].mxu0 %v7560
      %v7724 = vpop.f32.mrb[0].mxu0
      %v7725 = vadd.f32 %v7583, %v7724
      %v7726 = vpop.f32.mrb[0].mxu0
      %v7727 = vadd.f32 %v7587, %v7726
      %v7728 = vpop.f32.mrb[0].mxu0
      %v7729 = vadd.f32 %v7583, %v7728
      %v7730 = vpop.f32.mrb[0].mxu0
      %v7731 = vadd.f32 %v7587, %v7730
      %7732 = vmatprep.mubr.bf16.mxu0 0
      %7733 = vmatmul.mubr.bf16.gmra.mrb[0].mxu0 %v7561
      %v7734 = vpop.f32.mrb[0].mxu0
      %v7735 = vadd.f32 %v7583, %v7734
      %v7736 = vpop.f32.mrb[0].mxu0
      %v7737 = vadd.f32 %v7587, %v7736
      %v7738 = vpop.f32.mrb[0].mxu0
      %v7739 = vadd.f32 %v7583, %v7738
      %v7740 = vpop.f32.mrb[0].mxu0
      %v7741 = vadd.f32 %v7587, %v7740
      %7742 = vdwg.mxu0
      %v7743 = vmax.f32 %v7705, 0.0
      %v7744 = vmax.f32 %v7707, 0.0
      %v7745 = vmax.f32 %v7709, 0.0
      %v7746 = vmax.f32 %v7711, 0.0
      %v7747 = vmax.f32 %v7715, 0.0
      %v7748 = vmax.f32 %v7717, 0.0
      %v7749 = vmax.f32 %v7719, 0.0
      %v7750 = vmax.f32 %v7721, 0.0
      %v7751 = vmax.f32 %v7725, 0.0
      %v7752 = vmax.f32 %v7727, 0.0
      %v7753 = vmax.f32 %v7729, 0.0
      %v7754 = vmax.f32 %v7731, 0.0
      %v7755 = vmax.f32 %v7735, 0.0
      %v7756 = vmax.f32 %v7737, 0.0
      %v7757 = vmax.f32 %v7739, 0.0
      %v7758 = vmax.f32 %v7741, 0.0
      %v7759 = vpack.c.bf16 %v7745, %v7743
      %v7760 = vpack.c.bf16 %v7746, %v7744
      %v7761 = vpack.c.bf16 %v7749, %v7747
      %v7762 = vpack.c.bf16 %v7750, %v7748
      %v7763 = vpack.c.bf16 %v7753, %v7751
      %v7764 = vpack.c.bf16 %v7754, %v7752
      %v7765 = vpack.c.bf16 %v7757, %v7755
      %v7766 = vpack.c.bf16 %v7758, %v7756
      %v7767 = vld [vmem:[%s729] sm:$0xf]
      %v7768 = vld [vmem:[%s729 + $0x4] sm:$0xf]
      %v7769 = vld [vmem:[%s729 + $0x8] sm:$0xf]
      %v7770 = vld [vmem:[%s729 + $0xc] sm:$0xf]
      %v7771 = vld [vmem:[%s729 + $0x10] sm:$0xf]
      %v7772 = vld [vmem:[%s729 + $0x14] sm:$0xf]
      %v7773 = vld [vmem:[%s729 + $0x18] sm:$0xf]
      %v7774 = vld [vmem:[%s729 + $0x1c] sm:$0xf]
      %v7775 = vld [vmem:[%s729 + $0x20] sm:$0xf]
      %v7776 = vld [vmem:[%s729 + $0x24] sm:$0xf]
      %v7777 = vld [vmem:[%s729 + $0x28] sm:$0xf]
      %v7778 = vld [vmem:[%s729 + $0x2c] sm:$0xf]
      %v7779 = vld [vmem:[%s729 + $0x30] sm:$0xf]
      %v7780 = vld [vmem:[%s729 + $0x34] sm:$0xf]
      %v7781 = vld [vmem:[%s729 + $0x38] sm:$0xf]
      %v7782 = vld [vmem:[%s729 + $0x3c] sm:$0xf]
      %v7783 = vld [vmem:[%s729 + $0x40] sm:$0xf]
      %v7784 = vld [vmem:[%s729 + $0x44] sm:$0xf]
      %v7785 = vld [vmem:[%s729 + $0x48] sm:$0xf]
      %v7786 = vld [vmem:[%s729 + $0x4c] sm:$0xf]
      %v7787 = vld [vmem:[%s729 + $0x50] sm:$0xf]
      %v7788 = vld [vmem:[%s729 + $0x54] sm:$0xf]
      %v7789 = vld [vmem:[%s729 + $0x58] sm:$0xf]
      %v7790 = vld [vmem:[%s729 + $0x5c] sm:$0xf]
      %v7791 = vld [vmem:[%s729 + $0x60] sm:$0xf]
      %v7792 = vld [vmem:[%s729 + $0x64] sm:$0xf]
      %v7793 = vld [vmem:[%s729 + $0x68] sm:$0xf]
      %v7794 = vld [vmem:[%s729 + $0x6c] sm:$0xf]
      %v7795 = vld [vmem:[%s729 + $0x70] sm:$0xf]
      %v7796 = vld [vmem:[%s729 + $0x74] sm:$0xf]
      %v7797 = vld [vmem:[%s729 + $0x78] sm:$0xf]
      %v7798 = vld [vmem:[%s729 + $0x7c] sm:$0xf]
      %v7799 = vld [vmem:[%s720 + $0x8] sm:$0xff]
      %v7800 = vld [vmem:[%s720 + $0x28] sm:$0xff]
      %v7801 = vld [vmem:[%s720 + $0x48] sm:$0xff]
      %v7802 = vld [vmem:[%s720 + $0x68] sm:$0xff]
      %v7803 = vld [vmem:[%s720 + $0x88] sm:$0xff]
      %v7804 = vld [vmem:[%s720 + $0xa8] sm:$0xff]
      %v7805 = vld [vmem:[%s720 + $0xc8] sm:$0xff]
      %v7806 = vld [vmem:[%s720 + $0xe8] sm:$0xff]
      %v7807 = vld [vmem:[%s720 + $0x108] sm:$0xff]
      %v7808 = vld [vmem:[%s720 + $0x128] sm:$0xff]
      %v7809 = vld [vmem:[%s720 + $0x148] sm:$0xff]
      %v7810 = vld [vmem:[%s720 + $0x168] sm:$0xff]
      %v7811 = vld [vmem:[%s720 + $0x188] sm:$0xff]
      %v7812 = vld [vmem:[%s720 + $0x1a8] sm:$0xff]
      %v7813 = vld [vmem:[%s720 + $0x1c8] sm:$0xff]
      %v7814 = vld [vmem:[%s720 + $0x1e8] sm:$0xff]
      %v7815 = vld [vmem:[%s724 + $0x2] sm:$0x3]
      %v7817 = vlaneseq
      %v7818 = vshrl.u32 %v7817, 7
      %v7819 = vsub.s32 0, %v7818
      %v7820 = vrot.slane %v7815, %v7819
      %v7821 = vlaneseq
      %v7822 = vshrl.u32 %v7821, 7
      %v7823 = vsub.s32 1, %v7822
      %v7824 = vrot.slane %v7815, %v7823
      %v7843 = vunpack.c.l.b16 %v7799
      %v7844 = vunpack.c.h.b16 %v7799
      %v7845 = vunpack.c.l.b16 %v7800
      %v7846 = vunpack.c.h.b16 %v7800
      %v7847 = vunpack.c.l.b16 %v7801
      %v7848 = vunpack.c.h.b16 %v7801
      %v7849 = vunpack.c.l.b16 %v7802
      %v7850 = vunpack.c.h.b16 %v7802
      %v7851 = vunpack.c.l.b16 %v7803
      %v7852 = vunpack.c.h.b16 %v7803
      %v7853 = vunpack.c.l.b16 %v7804
      %v7854 = vunpack.c.h.b16 %v7804
      %v7855 = vunpack.c.l.b16 %v7805
      %v7856 = vunpack.c.h.b16 %v7805
      %v7857 = vunpack.c.l.b16 %v7806
      %v7858 = vunpack.c.h.b16 %v7806
      %v7859 = vunpack.c.l.b16 %v7807
      %v7860 = vunpack.c.h.b16 %v7807
      %v7861 = vunpack.c.l.b16 %v7808
      %v7862 = vunpack.c.h.b16 %v7808
      %v7863 = vunpack.c.l.b16 %v7809
      %v7864 = vunpack.c.h.b16 %v7809
      %v7865 = vunpack.c.l.b16 %v7810
      %v7866 = vunpack.c.h.b16 %v7810
      %v7867 = vunpack.c.l.b16 %v7811
      %v7868 = vunpack.c.h.b16 %v7811
      %v7869 = vunpack.c.l.b16 %v7812
      %v7870 = vunpack.c.h.b16 %v7812
      %v7871 = vunpack.c.l.b16 %v7813
      %v7872 = vunpack.c.h.b16 %v7813
      %v7873 = vunpack.c.l.b16 %v7814
      %v7874 = vunpack.c.h.b16 %v7814
      %v7875 = vpack.c.b16 %v7845, %v7843
      %v7876 = vpack.c.b16 %v7846, %v7844
      %v7877 = vpack.c.b16 %v7849, %v7847
      %v7878 = vpack.c.b16 %v7850, %v7848
      %v7879 = vpack.c.b16 %v7853, %v7851
      %v7880 = vpack.c.b16 %v7854, %v7852
      %v7881 = vpack.c.b16 %v7857, %v7855
      %v7882 = vpack.c.b16 %v7858, %v7856
      %v7883 = vpack.c.b16 %v7861, %v7859
      %v7884 = vpack.c.b16 %v7862, %v7860
      %v7885 = vpack.c.b16 %v7865, %v7863
      %v7886 = vpack.c.b16 %v7866, %v7864
      %v7887 = vpack.c.b16 %v7869, %v7867
      %v7888 = vpack.c.b16 %v7870, %v7868
      %v7889 = vpack.c.b16 %v7873, %v7871
      %v7890 = vpack.c.b16 %v7874, %v7872
      %7907 = vmatprep.subr.bf16.mxu0 %v7876
      %7908 = vmatpush1.bf16.msra.mxu0 %v7875
      %7909 = vmatprep.subr.bf16.mxu0 %v7878
      %7910 = vmatpush1.bf16.msra.mxu0 %v7877
      %7911 = vmatprep.subr.bf16.mxu0 %v7880
      %7912 = vmatpush1.bf16.msra.mxu0 %v7879
      %7913 = vmatprep.subr.bf16.mxu0 %v7882
      %7914 = vmatpush1.bf16.msra.mxu0 %v7881
      %7915 = vmatprep.subr.bf16.mxu0 %v7884
      %7916 = vmatpush1.bf16.msra.mxu0 %v7883
      %7917 = vmatprep.subr.bf16.mxu0 %v7886
      %7918 = vmatpush1.bf16.msra.mxu0 %v7885
      %7919 = vmatprep.subr.bf16.mxu0 %v7888
      %7920 = vmatpush1.bf16.msra.mxu0 %v7887
      %7921 = vmatprep.subr.bf16.mxu0 %v7890
      %7922 = vmatpush1.bf16.msra.mxu0 %v7889
      %7923 = vmatprep.subr.bf16.mxu0 0
      %7924 = vmatpush1.bf16.msra.mxu0 0
      %7925 = vmatprep.subr.bf16.mxu0 0
      %7926 = vmatpush1.bf16.msra.mxu0 0
      %7927 = vmatprep.subr.bf16.mxu0 0
      %7928 = vmatpush1.bf16.msra.mxu0 0
      %7929 = vmatprep.subr.bf16.mxu0 0
      %7930 = vmatpush1.bf16.msra.mxu0 0
      %7931 = vmatprep.subr.bf16.mxu0 0
      %7932 = vmatpush1.bf16.msra.mxu0 0
      %7933 = vmatprep.subr.bf16.mxu0 0
      %7934 = vmatpush1.bf16.msra.mxu0 0
      %7935 = vmatprep.subr.bf16.mxu0 0
      %7936 = vmatpush1.bf16.msra.mxu0 0
      %7937 = vmatprep.subr.bf16.mxu0 0
      %7938 = vmatpush1.bf16.msra.mxu0 0
      %7939 = vmatprep.mubr.bf16.mxu0 0
      %7940 = vmatmul.mubr.bf16.gmra.mrb[0].mxu0 %v7558
      %v7941 = vpop.f32.mrb[0].mxu0
      %v7942 = vadd.f32 %v7820, %v7941
      %v7943 = vpop.f32.mrb[0].mxu0
      %v7944 = vadd.f32 %v7824, %v7943
      %v7945 = vpop.f32.mrb[0].mxu0
      %v7946 = vadd.f32 %v7820, %v7945
      %v7947 = vpop.f32.mrb[0].mxu0
      %v7948 = vadd.f32 %v7824, %v7947
      %7949 = vmatprep.mubr.bf16.mxu0 0
      %7950 = vmatmul.mubr.bf16.gmra.mrb[0].mxu0 %v7559
      %v7951 = vpop.f32.mrb[0].mxu0
      %v7952 = vadd.f32 %v7820, %v7951
      %v7953 = vpop.f32.mrb[0].mxu0
      %v7954 = vadd.f32 %v7824, %v7953
      %v7955 = vpop.f32.mrb[0].mxu0
      %v7956 = vadd.f32 %v7820, %v7955
      %v7957 = vpop.f32.mrb[0].mxu0
      %v7958 = vadd.f32 %v7824, %v7957
      %7959 = vmatprep.mubr.bf16.mxu0 0
      %7960 = vmatmul.mubr.bf16.gmra.mrb[0].mxu0 %v7560
      %v7961 = vpop.f32.mrb[0].mxu0
      %v7962 = vadd.f32 %v7820, %v7961
      %v7963 = vpop.f32.mrb[0].mxu0
      %v7964 = vadd.f32 %v7824, %v7963
      %v7965 = vpop.f32.mrb[0].mxu0
      %v7966 = vadd.f32 %v7820, %v7965
      %v7967 = vpop.f32.mrb[0].mxu0
      %v7968 = vadd.f32 %v7824, %v7967
      %7969 = vmatprep.mubr.bf16.mxu0 0
      %7970 = vmatmul.mubr.bf16.gmra.mrb[0].mxu0 %v7561
      %v7971 = vpop.f32.mrb[0].mxu0
      %v7972 = vadd.f32 %v7820, %v7971
      %v7973 = vpop.f32.mrb[0].mxu0
      %v7974 = vadd.f32 %v7824, %v7973
      %v7975 = vpop.f32.mrb[0].mxu0
      %v7976 = vadd.f32 %v7820, %v7975
      %v7977 = vpop.f32.mrb[0].mxu0
      %v7978 = vadd.f32 %v7824, %v7977
      %7979 = vdwg.mxu0
      %v7980 = vmax.f32 %v7942, 0.0
      %v7981 = vmax.f32 %v7944, 0.0
      %v7982 = vmax.f32 %v7946, 0.0
      %v7983 = vmax.f32 %v7948, 0.0
      %v7984 = vmax.f32 %v7952, 0.0
      %v7985 = vmax.f32 %v7954, 0.0
      %v7986 = vmax.f32 %v7956, 0.0
      %v7987 = vmax.f32 %v7958, 0.0
      %v7988 = vmax.f32 %v7962, 0.0
      %v7989 = vmax.f32 %v7964, 0.0
      %v7990 = vmax.f32 %v7966, 0.0
      %v7991 = vmax.f32 %v7968, 0.0
      %v7992 = vmax.f32 %v7972, 0.0
      %v7993 = vmax.f32 %v7974, 0.0
      %v7994 = vmax.f32 %v7976, 0.0
      %v7995 = vmax.f32 %v7978, 0.0
      %v7996 = vpack.c.bf16 %v7982, %v7980
      %v7997 = vpack.c.bf16 %v7983, %v7981
      %v7998 = vpack.c.bf16 %v7986, %v7984
      %v7999 = vpack.c.bf16 %v7987, %v7985
      %v8000 = vpack.c.bf16 %v7990, %v7988
      %v8001 = vpack.c.bf16 %v7991, %v7989
      %v8002 = vpack.c.bf16 %v7994, %v7992
      %v8003 = vpack.c.bf16 %v7995, %v7993
      %v8004 = vld [vmem:[%s729 + $0x80] sm:$0xf]
      %v8005 = vld [vmem:[%s729 + $0x84] sm:$0xf]
      %v8006 = vld [vmem:[%s729 + $0x88] sm:$0xf]
      %v8007 = vld [vmem:[%s729 + $0x8c] sm:$0xf]
      %v8008 = vld [vmem:[%s729 + $0x90] sm:$0xf]
      %v8009 = vld [vmem:[%s729 + $0x94] sm:$0xf]
      %v8010 = vld [vmem:[%s729 + $0x98] sm:$0xf]
      %v8011 = vld [vmem:[%s729 + $0x9c] sm:$0xf]
      %v8012 = vld [vmem:[%s729 + $0xa0] sm:$0xf]
      %v8013 = vld [vmem:[%s729 + $0xa4] sm:$0xf]
      %v8014 = vld [vmem:[%s729 + $0xa8] sm:$0xf]
      %v8015 = vld [vmem:[%s729 + $0xac] sm:$0xf]
      %v8016 = vld [vmem:[%s729 + $0xb0] sm:$0xf]
      %v8017 = vld [vmem:[%s729 + $0xb4] sm:$0xf]
      %v8018 = vld [vmem:[%s729 + $0xb8] sm:$0xf]
      %v8019 = vld [vmem:[%s729 + $0xbc] sm:$0xf]
      %v8020 = vld [vmem:[%s729 + $0xc0] sm:$0xf]
      %v8021 = vld [vmem:[%s729 + $0xc4] sm:$0xf]
      %v8022 = vld [vmem:[%s729 + $0xc8] sm:$0xf]
      %v8023 = vld [vmem:[%s729 + $0xcc] sm:$0xf]
      %v8024 = vld [vmem:[%s729 + $0xd0] sm:$0xf]
      %v8025 = vld [vmem:[%s729 + $0xd4] sm:$0xf]
      %v8026 = vld [vmem:[%s729 + $0xd8] sm:$0xf]
      %v8027 = vld [vmem:[%s729 + $0xdc] sm:$0xf]
      %v8028 = vld [vmem:[%s729 + $0xe0] sm:$0xf]
      %v8029 = vld [vmem:[%s729 + $0xe4] sm:$0xf]
      %v8030 = vld [vmem:[%s729 + $0xe8] sm:$0xf]
      %v8031 = vld [vmem:[%s729 + $0xec] sm:$0xf]
      %v8032 = vld [vmem:[%s729 + $0xf0] sm:$0xf]
      %v8033 = vld [vmem:[%s729 + $0xf4] sm:$0xf]
      %v8034 = vld [vmem:[%s729 + $0xf8] sm:$0xf]
      %v8035 = vld [vmem:[%s729 + $0xfc] sm:$0xf]
      %v8068 = vunpack.c.l.b16 %v8004
      %v8069 = vunpack.c.l.b16 %v8005
      %v8070 = vunpack.c.l.b16 %v8006
      %v8071 = vunpack.c.l.b16 %v8007
      %v8072 = vunpack.c.l.b16 %v8008
      %v8073 = vunpack.c.l.b16 %v8009
      %v8074 = vunpack.c.l.b16 %v8010
      %v8075 = vunpack.c.l.b16 %v8011
      %v8076 = vunpack.c.l.b16 %v8012
      %v8077 = vunpack.c.l.b16 %v8013
      %v8078 = vunpack.c.l.b16 %v8014
      %v8079 = vunpack.c.l.b16 %v8015
      %v8080 = vunpack.c.l.b16 %v8016
      %v8081 = vunpack.c.l.b16 %v8017
      %v8082 = vunpack.c.l.b16 %v8018
      %v8083 = vunpack.c.l.b16 %v8019
      %v8084 = vunpack.c.l.b16 %v8020
      %v8085 = vunpack.c.l.b16 %v8021
      %v8086 = vunpack.c.l.b16 %v8022
      %v8087 = vunpack.c.l.b16 %v8023
      %v8088 = vunpack.c.l.b16 %v8024
      %v8089 = vunpack.c.l.b16 %v8025
      %v8090 = vunpack.c.l.b16 %v8026
      %v8091 = vunpack.c.l.b16 %v8027
      %v8092 = vunpack.c.l.b16 %v8028
      %v8093 = vunpack.c.l.b16 %v8029
      %v8094 = vunpack.c.l.b16 %v8030
      %v8095 = vunpack.c.l.b16 %v8031
      %v8096 = vunpack.c.l.b16 %v8032
      %v8097 = vunpack.c.l.b16 %v8033
      %v8098 = vunpack.c.l.b16 %v8034
      %v8099 = vunpack.c.l.b16 %v8035
      %v8100 = vpack.c.b16 %v8069, %v8068
      %v8101 = vpack.c.b16 %v8071, %v8070
      %v8102 = vpack.c.b16 %v8073, %v8072
      %v8103 = vpack.c.b16 %v8075, %v8074
      %v8104 = vpack.c.b16 %v8077, %v8076
      %v8105 = vpack.c.b16 %v8079, %v8078
      %v8106 = vpack.c.b16 %v8081, %v8080
      %v8107 = vpack.c.b16 %v8083, %v8082
      %v8108 = vpack.c.b16 %v8085, %v8084
      %v8109 = vpack.c.b16 %v8087, %v8086
      %v8110 = vpack.c.b16 %v8089, %v8088
      %v8111 = vpack.c.b16 %v8091, %v8090
      %v8112 = vpack.c.b16 %v8093, %v8092
      %v8113 = vpack.c.b16 %v8095, %v8094
      %v8114 = vpack.c.b16 %v8097, %v8096
      %v8115 = vpack.c.b16 %v8099, %v8098
      %8132 = vmatprep.subr.bf16.mxu0 0
      %8133 = vmatpush1.bf16.msra.mxu0 %v8100
      %8134 = vmatprep.subr.bf16.mxu0 0
      %8135 = vmatpush1.bf16.msra.mxu0 %v8101
      %8136 = vmatprep.subr.bf16.mxu0 0
      %8137 = vmatpush1.bf16.msra.mxu0 %v8102
      %8138 = vmatprep.subr.bf16.mxu0 0
      %8139 = vmatpush1.bf16.msra.mxu0 %v8103
      %8140 = vmatprep.subr.bf16.mxu0 0
      %8141 = vmatpush1.bf16.msra.mxu0 %v8104
      %8142 = vmatprep.subr.bf16.mxu0 0
      %8143 = vmatpush1.bf16.msra.mxu0 %v8105
      %8144 = vmatprep.subr.bf16.mxu0 0
      %8145 = vmatpush1.bf16.msra.mxu0 %v8106
      %8146 = vmatprep.subr.bf16.mxu0 0
      %8147 = vmatpush1.bf16.msra.mxu0 %v8107
      %8148 = vmatprep.subr.bf16.mxu0 0
      %8149 = vmatpush1.bf16.msra.mxu0 %v8108
      %8150 = vmatprep.subr.bf16.mxu0 0
      %8151 = vmatpush1.bf16.msra.mxu0 %v8109
      %8152 = vmatprep.subr.bf16.mxu0 0
      %8153 = vmatpush1.bf16.msra.mxu0 %v8110
      %8154 = vmatprep.subr.bf16.mxu0 0
      %8155 = vmatpush1.bf16.msra.mxu0 %v8111
      %8156 = vmatprep.subr.bf16.mxu0 0
      %8157 = vmatpush1.bf16.msra.mxu0 %v8112
      %8158 = vmatprep.subr.bf16.mxu0 0
      %8159 = vmatpush1.bf16.msra.mxu0 %v8113
      %8160 = vmatprep.subr.bf16.mxu0 0
      %8161 = vmatpush1.bf16.msra.mxu0 %v8114
      %8162 = vmatprep.subr.bf16.mxu0 0
      %8163 = vmatpush1.bf16.msra.mxu0 %v8115
      %8164 = vmatprep.mubr.bf16.mxu0 %v7997
      %8165 = vmatmul.mubr.bf16.gmra.mrb[0].mxu0 %v7996
      %v8166 = vpop.f32.mrb[0].mxu0
      %v8167 = vadd.f32 0.0, %v8166
      %v8168 = vpop.f32.mrb[0].mxu0
      %v8169 = vpop.f32.mrb[0].mxu0
      %v8170 = vadd.f32 0.0, %v8169
      %v8171 = vpop.f32.mrb[0].mxu0
      %8172 = vmatprep.mubr.bf16.mxu0 %v7999
      %8173 = vmatmul.mubr.bf16.gmra.mrb[0].mxu0 %v7998
      %v8174 = vpop.f32.mrb[0].mxu0
      %v8175 = vadd.f32 0.0, %v8174
      %v8176 = vpop.f32.mrb[0].mxu0
      %v8177 = vpop.f32.mrb[0].mxu0
      %v8178 = vadd.f32 0.0, %v8177
      %v8179 = vpop.f32.mrb[0].mxu0
      %8180 = vmatprep.mubr.bf16.mxu0 %v8001
      %8181 = vmatmul.mubr.bf16.gmra.mrb[0].mxu0 %v8000
      %v8182 = vpop.f32.mrb[0].mxu0
      %v8183 = vadd.f32 0.0, %v8182
      %v8184 = vpop.f32.mrb[0].mxu0
      %v8185 = vpop.f32.mrb[0].mxu0
      %v8186 = vadd.f32 0.0, %v8185
      %v8187 = vpop.f32.mrb[0].mxu0
      %8188 = vmatprep.mubr.bf16.mxu0 %v8003
      %8189 = vmatmul.mubr.bf16.gmra.mrb[0].mxu0 %v8002
      %v8190 = vpop.f32.mrb[0].mxu0
      %v8191 = vadd.f32 0.0, %v8190
      %v8192 = vpop.f32.mrb[0].mxu0
      %v8193 = vpop.f32.mrb[0].mxu0
      %v8194 = vadd.f32 0.0, %v8193
      %v8195 = vpop.f32.mrb[0].mxu0
      %8196 = vdwg.mxu0
      %v8229 = vunpack.c.l.b16 %v7767
      %v8230 = vunpack.c.l.b16 %v7768
      %v8231 = vunpack.c.l.b16 %v7769
      %v8232 = vunpack.c.l.b16 %v7770
      %v8233 = vunpack.c.l.b16 %v7771
      %v8234 = vunpack.c.l.b16 %v7772
      %v8235 = vunpack.c.l.b16 %v7773
      %v8236 = vunpack.c.l.b16 %v7774
      %v8237 = vunpack.c.l.b16 %v7775
      %v8238 = vunpack.c.l.b16 %v7776
      %v8239 = vunpack.c.l.b16 %v7777
      %v8240 = vunpack.c.l.b16 %v7778
      %v8241 = vunpack.c.l.b16 %v7779
      %v8242 = vunpack.c.l.b16 %v7780
      %v8243 = vunpack.c.l.b16 %v7781
      %v8244 = vunpack.c.l.b16 %v7782
      %v8245 = vunpack.c.l.b16 %v7783
      %v8246 = vunpack.c.l.b16 %v7784
      %v8247 = vunpack.c.l.b16 %v7785
      %v8248 = vunpack.c.l.b16 %v7786
      %v8249 = vunpack.c.l.b16 %v7787
      %v8250 = vunpack.c.l.b16 %v7788
      %v8251 = vunpack.c.l.b16 %v7789
      %v8252 = vunpack.c.l.b16 %v7790
      %v8253 = vunpack.c.l.b16 %v7791
      %v8254 = vunpack.c.l.b16 %v7792
      %v8255 = vunpack.c.l.b16 %v7793
      %v8256 = vunpack.c.l.b16 %v7794
      %v8257 = vunpack.c.l.b16 %v7795
      %v8258 = vunpack.c.l.b16 %v7796
      %v8259 = vunpack.c.l.b16 %v7797
      %v8260 = vunpack.c.l.b16 %v7798
      %v8261 = vpack.c.b16 %v8230, %v8229
      %v8262 = vpack.c.b16 %v8232, %v8231
      %v8263 = vpack.c.b16 %v8234, %v8233
      %v8264 = vpack.c.b16 %v8236, %v8235
      %v8265 = vpack.c.b16 %v8238, %v8237
      %v8266 = vpack.c.b16 %v8240, %v8239
      %v8267 = vpack.c.b16 %v8242, %v8241
      %v8268 = vpack.c.b16 %v8244, %v8243
      %v8269 = vpack.c.b16 %v8246, %v8245
      %v8270 = vpack.c.b16 %v8248, %v8247
      %v8271 = vpack.c.b16 %v8250, %v8249
      %v8272 = vpack.c.b16 %v8252, %v8251
      %v8273 = vpack.c.b16 %v8254, %v8253
      %v8274 = vpack.c.b16 %v8256, %v8255
      %v8275 = vpack.c.b16 %v8258, %v8257
      %v8276 = vpack.c.b16 %v8260, %v8259
      %8293 = vmatprep.subr.bf16.mxu0 0
      %8294 = vmatpush1.bf16.msra.mxu0 %v8261
      %8295 = vmatprep.subr.bf16.mxu0 0
      %8296 = vmatpush1.bf16.msra.mxu0 %v8262
      %8297 = vmatprep.subr.bf16.mxu0 0
      %8298 = vmatpush1.bf16.msra.mxu0 %v8263
      %8299 = vmatprep.subr.bf16.mxu0 0
      %8300 = vmatpush1.bf16.msra.mxu0 %v8264
      %8301 = vmatprep.subr.bf16.mxu0 0
      %8302 = vmatpush1.bf16.msra.mxu0 %v8265
      %8303 = vmatprep.subr.bf16.mxu0 0
      %8304 = vmatpush1.bf16.msra.mxu0 %v8266
      %8305 = vmatprep.subr.bf16.mxu0 0
      %8306 = vmatpush1.bf16.msra.mxu0 %v8267
      %8307 = vmatprep.subr.bf16.mxu0 0
      %8308 = vmatpush1.bf16.msra.mxu0 %v8268
      %8309 = vmatprep.subr.bf16.mxu0 0
      %8310 = vmatpush1.bf16.msra.mxu0 %v8269
      %8311 = vmatprep.subr.bf16.mxu0 0
      %8312 = vmatpush1.bf16.msra.mxu0 %v8270
      %8313 = vmatprep.subr.bf16.mxu0 0
      %8314 = vmatpush1.bf16.msra.mxu0 %v8271
      %8315 = vmatprep.subr.bf16.mxu0 0
      %8316 = vmatpush1.bf16.msra.mxu0 %v8272
      %8317 = vmatprep.subr.bf16.mxu0 0
      %8318 = vmatpush1.bf16.msra.mxu0 %v8273
      %8319 = vmatprep.subr.bf16.mxu0 0
      %8320 = vmatpush1.bf16.msra.mxu0 %v8274
      %8321 = vmatprep.subr.bf16.mxu0 0
      %8322 = vmatpush1.bf16.msra.mxu0 %v8275
      %8323 = vmatprep.subr.bf16.mxu0 0
      %8324 = vmatpush1.bf16.msra.mxu0 %v8276
      %8325 = vmatprep.mubr.bf16.mxu0 %v7760
      %8326 = vmatmul.mubr.bf16.gmra.mrb[0].mxu0 %v7759
      %v8327 = vpop.f32.mrb[0].mxu0
      %v8328 = vadd.f32 %v8167, %v8327
      %v8329 = vpop.f32.mrb[0].mxu0
      %v8330 = vpop.f32.mrb[0].mxu0
      %v8331 = vadd.f32 %v8170, %v8330
      %v8332 = vpop.f32.mrb[0].mxu0
      %8333 = vmatprep.mubr.bf16.mxu0 %v7762
      %8334 = vmatmul.mubr.bf16.gmra.mrb[0].mxu0 %v7761
      %v8335 = vpop.f32.mrb[0].mxu0
      %v8336 = vadd.f32 %v8175, %v8335
      %v8337 = vpop.f32.mrb[0].mxu0
      %v8338 = vpop.f32.mrb[0].mxu0
      %v8339 = vadd.f32 %v8178, %v8338
      %v8340 = vpop.f32.mrb[0].mxu0
      %8341 = vmatprep.mubr.bf16.mxu0 %v7764
      %8342 = vmatmul.mubr.bf16.gmra.mrb[0].mxu0 %v7763
      %v8343 = vpop.f32.mrb[0].mxu0
      %v8344 = vadd.f32 %v8183, %v8343
      %v8345 = vpop.f32.mrb[0].mxu0
      %v8346 = vpop.f32.mrb[0].mxu0
      %v8347 = vadd.f32 %v8186, %v8346
      %v8348 = vpop.f32.mrb[0].mxu0
      %8349 = vmatprep.mubr.bf16.mxu0 %v7766
      %8350 = vmatmul.mubr.bf16.gmra.mrb[0].mxu0 %v7765
      %v8351 = vpop.f32.mrb[0].mxu0
      %v8352 = vadd.f32 %v8191, %v8351
      %v8353 = vpop.f32.mrb[0].mxu0
      %v8354 = vpop.f32.mrb[0].mxu0
      %v8355 = vadd.f32 %v8194, %v8354
      %v8356 = vpop.f32.mrb[0].mxu0
      %8357 = vdwg.mxu0
      %v8358 = vld [vmem:[%s720 + $0x10] sm:$0xff]
      %v8359 = vld [vmem:[%s720 + $0x30] sm:$0xff]
      %v8360 = vld [vmem:[%s720 + $0x50] sm:$0xff]
      %v8361 = vld [vmem:[%s720 + $0x70] sm:$0xff]
      %v8362 = vld [vmem:[%s720 + $0x90] sm:$0xff]
      %v8363 = vld [vmem:[%s720 + $0xb0] sm:$0xff]
      %v8364 = vld [vmem:[%s720 + $0xd0] sm:$0xff]
      %v8365 = vld [vmem:[%s720 + $0xf0] sm:$0xff]
      %v8366 = vld [vmem:[%s720 + $0x110] sm:$0xff]
      %v8367 = vld [vmem:[%s720 + $0x130] sm:$0xff]
      %v8368 = vld [vmem:[%s720 + $0x150] sm:$0xff]
      %v8369 = vld [vmem:[%s720 + $0x170] sm:$0xff]
      %v8370 = vld [vmem:[%s720 + $0x190] sm:$0xff]
      %v8371 = vld [vmem:[%s720 + $0x1b0] sm:$0xff]
      %v8372 = vld [vmem:[%s720 + $0x1d0] sm:$0xff]
      %v8373 = vld [vmem:[%s720 + $0x1f0] sm:$0xff]
      %v8374 = vld [vmem:[%s724 + $0x4] sm:$0x3]
      %v8376 = vlaneseq
      %v8377 = vshrl.u32 %v8376, 7
      %v8378 = vsub.s32 0, %v8377
      %v8379 = vrot.slane %v8374, %v8378
      %v8380 = vlaneseq
      %v8381 = vshrl.u32 %v8380, 7
      %v8382 = vsub.s32 1, %v8381
      %v8383 = vrot.slane %v8374, %v8382
      %v8402 = vunpack.c.l.b16 %v8358
      %v8403 = vunpack.c.h.b16 %v8358
      %v8404 = vunpack.c.l.b16 %v8359
      %v8405 = vunpack.c.h.b16 %v8359
      %v8406 = vunpack.c.l.b16 %v8360
      %v8407 = vunpack.c.h.b16 %v8360
      %v8408 = vunpack.c.l.b16 %v8361
      %v8409 = vunpack.c.h.b16 %v8361
      %v8410 = vunpack.c.l.b16 %v8362
      %v8411 = vunpack.c.h.b16 %v8362
      %v8412 = vunpack.c.l.b16 %v8363
      %v8413 = vunpack.c.h.b16 %v8363
      %v8414 = vunpack.c.l.b16 %v8364
      %v8415 = vunpack.c.h.b16 %v8364
      %v8416 = vunpack.c.l.b16 %v8365
      %v8417 = vunpack.c.h.b16 %v8365
      %v8418 = vunpack.c.l.b16 %v8366
      %v8419 = vunpack.c.h.b16 %v8366
      %v8420 = vunpack.c.l.b16 %v8367
      %v8421 = vunpack.c.h.b16 %v8367
      %v8422 = vunpack.c.l.b16 %v8368
      %v8423 = vunpack.c.h.b16 %v8368
      %v8424 = vunpack.c.l.b16 %v8369
      %v8425 = vunpack.c.h.b16 %v8369
      %v8426 = vunpack.c.l.b16 %v8370
      %v8427 = vunpack.c.h.b16 %v8370
      %v8428 = vunpack.c.l.b16 %v8371
      %v8429 = vunpack.c.h.b16 %v8371
      %v8430 = vunpack.c.l.b16 %v8372
      %v8431 = vunpack.c.h.b16 %v8372
      %v8432 = vunpack.c.l.b16 %v8373
      %v8433 = vunpack.c.h.b16 %v8373
      %v8434 = vpack.c.b16 %v8404, %v8402
      %v8435 = vpack.c.b16 %v8405, %v8403
      %v8436 = vpack.c.b16 %v8408, %v8406
      %v8437 = vpack.c.b16 %v8409, %v8407
      %v8438 = vpack.c.b16 %v8412, %v8410
      %v8439 = vpack.c.b16 %v8413, %v8411
      %v8440 = vpack.c.b16 %v8416, %v8414
      %v8441 = vpack.c.b16 %v8417, %v8415
      %v8442 = vpack.c.b16 %v8420, %v8418
      %v8443 = vpack.c.b16 %v8421, %v8419
      %v8444 = vpack.c.b16 %v8424, %v8422
      %v8445 = vpack.c.b16 %v8425, %v8423
      %v8446 = vpack.c.b16 %v8428, %v8426
      %v8447 = vpack.c.b16 %v8429, %v8427
      %v8448 = vpack.c.b16 %v8432, %v8430
      %v8449 = vpack.c.b16 %v8433, %v8431
      %8466 = vmatprep.subr.bf16.mxu0 %v8435
      %8467 = vmatpush1.bf16.msra.mxu0 %v8434
      %8468 = vmatprep.subr.bf16.mxu0 %v8437
      %8469 = vmatpush1.bf16.msra.mxu0 %v8436
      %8470 = vmatprep.subr.bf16.mxu0 %v8439
      %8471 = vmatpush1.bf16.msra.mxu0 %v8438
      %8472 = vmatprep.subr.bf16.mxu0 %v8441
      %8473 = vmatpush1.bf16.msra.mxu0 %v8440
      %8474 = vmatprep.subr.bf16.mxu0 %v8443
      %8475 = vmatpush1.bf16.msra.mxu0 %v8442
      %8476 = vmatprep.subr.bf16.mxu0 %v8445
      %8477 = vmatpush1.bf16.msra.mxu0 %v8444
      %8478 = vmatprep.subr.bf16.mxu0 %v8447
      %8479 = vmatpush1.bf16.msra.mxu0 %v8446
      %8480 = vmatprep.subr.bf16.mxu0 %v8449
      %8481 = vmatpush1.bf16.msra.mxu0 %v8448
      %8482 = vmatprep.subr.bf16.mxu0 0
      %8483 = vmatpush1.bf16.msra.mxu0 0
      %8484 = vmatprep.subr.bf16.mxu0 0
      %8485 = vmatpush1.bf16.msra.mxu0 0
      %8486 = vmatprep.subr.bf16.mxu0 0
      %8487 = vmatpush1.bf16.msra.mxu0 0
      %8488 = vmatprep.subr.bf16.mxu0 0
      %8489 = vmatpush1.bf16.msra.mxu0 0
      %8490 = vmatprep.subr.bf16.mxu0 0
      %8491 = vmatpush1.bf16.msra.mxu0 0
      %8492 = vmatprep.subr.bf16.mxu0 0
      %8493 = vmatpush1.bf16.msra.mxu0 0
      %8494 = vmatprep.subr.bf16.mxu0 0
      %8495 = vmatpush1.bf16.msra.mxu0 0
      %8496 = vmatprep.subr.bf16.mxu0 0
      %8497 = vmatpush1.bf16.msra.mxu0 0
      %8498 = vmatprep.mubr.bf16.mxu0 0
      %8499 = vmatmul.mubr.bf16.gmra.mrb[0].mxu0 %v7558
      %v8500 = vpop.f32.mrb[0].mxu0
      %v8501 = vadd.f32 %v8379, %v8500
      %v8502 = vpop.f32.mrb[0].mxu0
      %v8503 = vadd.f32 %v8383, %v8502
      %v8504 = vpop.f32.mrb[0].mxu0
      %v8505 = vadd.f32 %v8379, %v8504
      %v8506 = vpop.f32.mrb[0].mxu0
      %v8507 = vadd.f32 %v8383, %v8506
      %8508 = vmatprep.mubr.bf16.mxu0 0
      %8509 = vmatmul.mubr.bf16.gmra.mrb[0].mxu0 %v7559
      %v8510 = vpop.f32.mrb[0].mxu0
      %v8511 = vadd.f32 %v8379, %v8510
      %v8512 = vpop.f32.mrb[0].mxu0
      %v8513 = vadd.f32 %v8383, %v8512
      %v8514 = vpop.f32.mrb[0].mxu0
      %v8515 = vadd.f32 %v8379, %v8514
      %v8516 = vpop.f32.mrb[0].mxu0
      %v8517 = vadd.f32 %v8383, %v8516
      %8518 = vmatprep.mubr.bf16.mxu0 0
      %8519 = vmatmul.mubr.bf16.gmra.mrb[0].mxu0 %v7560
      %v8520 = vpop.f32.mrb[0].mxu0
      %v8521 = vadd.f32 %v8379, %v8520
      %v8522 = vpop.f32.mrb[0].mxu0
      %v8523 = vadd.f32 %v8383, %v8522
      %v8524 = vpop.f32.mrb[0].mxu0
      %v8525 = vadd.f32 %v8379, %v8524
      %v8526 = vpop.f32.mrb[0].mxu0
      %v8527 = vadd.f32 %v8383, %v8526
      %8528 = vmatprep.mubr.bf16.mxu0 0
      %8529 = vmatmul.mubr.bf16.gmra.mrb[0].mxu0 %v7561
      %v8530 = vpop.f32.mrb[0].mxu0
      %v8531 = vadd.f32 %v8379, %v8530
      %v8532 = vpop.f32.mrb[0].mxu0
      %v8533 = vadd.f32 %v8383, %v8532
      %v8534 = vpop.f32.mrb[0].mxu0
      %v8535 = vadd.f32 %v8379, %v8534
      %v8536 = vpop.f32.mrb[0].mxu0
      %v8537 = vadd.f32 %v8383, %v8536
      %8538 = vdwg.mxu0
      %v8539 = vmax.f32 %v8501, 0.0
      %v8540 = vmax.f32 %v8503, 0.0
      %v8541 = vmax.f32 %v8505, 0.0
      %v8542 = vmax.f32 %v8507, 0.0
      %v8543 = vmax.f32 %v8511, 0.0
      %v8544 = vmax.f32 %v8513, 0.0
      %v8545 = vmax.f32 %v8515, 0.0
      %v8546 = vmax.f32 %v8517, 0.0
      %v8547 = vmax.f32 %v8521, 0.0
      %v8548 = vmax.f32 %v8523, 0.0
      %v8549 = vmax.f32 %v8525, 0.0
      %v8550 = vmax.f32 %v8527, 0.0
      %v8551 = vmax.f32 %v8531, 0.0
      %v8552 = vmax.f32 %v8533, 0.0
      %v8553 = vmax.f32 %v8535, 0.0
      %v8554 = vmax.f32 %v8537, 0.0
      %v8555 = vpack.c.bf16 %v8541, %v8539
      %v8556 = vpack.c.bf16 %v8542, %v8540
      %v8557 = vpack.c.bf16 %v8545, %v8543
      %v8558 = vpack.c.bf16 %v8546, %v8544
      %v8559 = vpack.c.bf16 %v8549, %v8547
      %v8560 = vpack.c.bf16 %v8550, %v8548
      %v8561 = vpack.c.bf16 %v8553, %v8551
      %v8562 = vpack.c.bf16 %v8554, %v8552
      %v8563 = vld [vmem:[%s729 + $0x100] sm:$0xf]
      %v8564 = vld [vmem:[%s729 + $0x104] sm:$0xf]
      %v8565 = vld [vmem:[%s729 + $0x108] sm:$0xf]
      %v8566 = vld [vmem:[%s729 + $0x10c] sm:$0xf]
      %v8567 = vld [vmem:[%s729 + $0x110] sm:$0xf]
      %v8568 = vld [vmem:[%s729 + $0x114] sm:$0xf]
      %v8569 = vld [vmem:[%s729 + $0x118] sm:$0xf]
      %v8570 = vld [vmem:[%s729 + $0x11c] sm:$0xf]
      %v8571 = vld [vmem:[%s729 + $0x120] sm:$0xf]
      %v8572 = vld [vmem:[%s729 + $0x124] sm:$0xf]
      %v8573 = vld [vmem:[%s729 + $0x128] sm:$0xf]
      %v8574 = vld [vmem:[%s729 + $0x12c] sm:$0xf]
      %v8575 = vld [vmem:[%s729 + $0x130] sm:$0xf]
      %v8576 = vld [vmem:[%s729 + $0x134] sm:$0xf]
      %v8577 = vld [vmem:[%s729 + $0x138] sm:$0xf]
      %v8578 = vld [vmem:[%s729 + $0x13c] sm:$0xf]
      %v8579 = vld [vmem:[%s729 + $0x140] sm:$0xf]
      %v8580 = vld [vmem:[%s729 + $0x144] sm:$0xf]
      %v8581 = vld [vmem:[%s729 + $0x148] sm:$0xf]
      %v8582 = vld [vmem:[%s729 + $0x14c] sm:$0xf]
      %v8583 = vld [vmem:[%s729 + $0x150] sm:$0xf]
      %v8584 = vld [vmem:[%s729 + $0x154] sm:$0xf]
      %v8585 = vld [vmem:[%s729 + $0x158] sm:$0xf]
      %v8586 = vld [vmem:[%s729 + $0x15c] sm:$0xf]
      %v8587 = vld [vmem:[%s729 + $0x160] sm:$0xf]
      %v8588 = vld [vmem:[%s729 + $0x164] sm:$0xf]
      %v8589 = vld [vmem:[%s729 + $0x168] sm:$0xf]
      %v8590 = vld [vmem:[%s729 + $0x16c] sm:$0xf]
      %v8591 = vld [vmem:[%s729 + $0x170] sm:$0xf]
      %v8592 = vld [vmem:[%s729 + $0x174] sm:$0xf]
      %v8593 = vld [vmem:[%s729 + $0x178] sm:$0xf]
      %v8594 = vld [vmem:[%s729 + $0x17c] sm:$0xf]
      %v8627 = vunpack.c.l.b16 %v8563
      %v8628 = vunpack.c.l.b16 %v8564
      %v8629 = vunpack.c.l.b16 %v8565
      %v8630 = vunpack.c.l.b16 %v8566
      %v8631 = vunpack.c.l.b16 %v8567
      %v8632 = vunpack.c.l.b16 %v8568
      %v8633 = vunpack.c.l.b16 %v8569
      %v8634 = vunpack.c.l.b16 %v8570
      %v8635 = vunpack.c.l.b16 %v8571
      %v8636 = vunpack.c.l.b16 %v8572
      %v8637 = vunpack.c.l.b16 %v8573
      %v8638 = vunpack.c.l.b16 %v8574
      %v8639 = vunpack.c.l.b16 %v8575
      %v8640 = vunpack.c.l.b16 %v8576
      %v8641 = vunpack.c.l.b16 %v8577
      %v8642 = vunpack.c.l.b16 %v8578
      %v8643 = vunpack.c.l.b16 %v8579
      %v8644 = vunpack.c.l.b16 %v8580
      %v8645 = vunpack.c.l.b16 %v8581
      %v8646 = vunpack.c.l.b16 %v8582
      %v8647 = vunpack.c.l.b16 %v8583
      %v8648 = vunpack.c.l.b16 %v8584
      %v8649 = vunpack.c.l.b16 %v8585
      %v8650 = vunpack.c.l.b16 %v8586
      %v8651 = vunpack.c.l.b16 %v8587
      %v8652 = vunpack.c.l.b16 %v8588
      %v8653 = vunpack.c.l.b16 %v8589
      %v8654 = vunpack.c.l.b16 %v8590
      %v8655 = vunpack.c.l.b16 %v8591
      %v8656 = vunpack.c.l.b16 %v8592
      %v8657 = vunpack.c.l.b16 %v8593
      %v8658 = vunpack.c.l.b16 %v8594
      %v8659 = vpack.c.b16 %v8628, %v8627
      %v8660 = vpack.c.b16 %v8630, %v8629
      %v8661 = vpack.c.b16 %v8632, %v8631
      %v8662 = vpack.c.b16 %v8634, %v8633
      %v8663 = vpack.c.b16 %v8636, %v8635
      %v8664 = vpack.c.b16 %v8638, %v8637
      %v8665 = vpack.c.b16 %v8640, %v8639
      %v8666 = vpack.c.b16 %v8642, %v8641
      %v8667 = vpack.c.b16 %v8644, %v8643
      %v8668 = vpack.c.b16 %v8646, %v8645
      %v8669 = vpack.c.b16 %v8648, %v8647
      %v8670 = vpack.c.b16 %v8650, %v8649
      %v8671 = vpack.c.b16 %v8652, %v8651
      %v8672 = vpack.c.b16 %v8654, %v8653
      %v8673 = vpack.c.b16 %v8656, %v8655
      %v8674 = vpack.c.b16 %v8658, %v8657
      %8691 = vmatprep.subr.bf16.mxu0 0
      %8692 = vmatpush1.bf16.msra.mxu0 %v8659
      %8693 = vmatprep.subr.bf16.mxu0 0
      %8694 = vmatpush1.bf16.msra.mxu0 %v8660
      %8695 = vmatprep.subr.bf16.mxu0 0
      %8696 = vmatpush1.bf16.msra.mxu0 %v8661
      %8697 = vmatprep.subr.bf16.mxu0 0
      %8698 = vmatpush1.bf16.msra.mxu0 %v8662
      %8699 = vmatprep.subr.bf16.mxu0 0
      %8700 = vmatpush1.bf16.msra.mxu0 %v8663
      %8701 = vmatprep.subr.bf16.mxu0 0
      %8702 = vmatpush1.bf16.msra.mxu0 %v8664
      %8703 = vmatprep.subr.bf16.mxu0 0
      %8704 = vmatpush1.bf16.msra.mxu0 %v8665
      %8705 = vmatprep.subr.bf16.mxu0 0
      %8706 = vmatpush1.bf16.msra.mxu0 %v8666
      %8707 = vmatprep.subr.bf16.mxu0 0
      %8708 = vmatpush1.bf16.msra.mxu0 %v8667
      %8709 = vmatprep.subr.bf16.mxu0 0
      %8710 = vmatpush1.bf16.msra.mxu0 %v8668
      %8711 = vmatprep.subr.bf16.mxu0 0
      %8712 = vmatpush1.bf16.msra.mxu0 %v8669
      %8713 = vmatprep.subr.bf16.mxu0 0
      %8714 = vmatpush1.bf16.msra.mxu0 %v8670
      %8715 = vmatprep.subr.bf16.mxu0 0
      %8716 = vmatpush1.bf16.msra.mxu0 %v8671
      %8717 = vmatprep.subr.bf16.mxu0 0
      %8718 = vmatpush1.bf16.msra.mxu0 %v8672
      %8719 = vmatprep.subr.bf16.mxu0 0
      %8720 = vmatpush1.bf16.msra.mxu0 %v8673
      %8721 = vmatprep.subr.bf16.mxu0 0
      %8722 = vmatpush1.bf16.msra.mxu0 %v8674
      %8723 = vmatprep.mubr.bf16.mxu0 %v8556
      %8724 = vmatmul.mubr.bf16.gmra.mrb[0].mxu0 %v8555
      %v8725 = vpop.f32.mrb[0].mxu0
      %v8726 = vadd.f32 0.0, %v8725
      %v8727 = vpop.f32.mrb[0].mxu0
      %v8728 = vpop.f32.mrb[0].mxu0
      %v8729 = vadd.f32 0.0, %v8728
      %v8730 = vpop.f32.mrb[0].mxu0
      %8731 = vmatprep.mubr.bf16.mxu0 %v8558
      %8732 = vmatmul.mubr.bf16.gmra.mrb[0].mxu0 %v8557
      %v8733 = vpop.f32.mrb[0].mxu0
      %v8734 = vadd.f32 0.0, %v8733
      %v8735 = vpop.f32.mrb[0].mxu0
      %v8736 = vpop.f32.mrb[0].mxu0
      %v8737 = vadd.f32 0.0, %v8736
      %v8738 = vpop.f32.mrb[0].mxu0
      %8739 = vmatprep.mubr.bf16.mxu0 %v8560
      %8740 = vmatmul.mubr.bf16.gmra.mrb[0].mxu0 %v8559
      %v8741 = vpop.f32.mrb[0].mxu0
      %v8742 = vadd.f32 0.0, %v8741
      %v8743 = vpop.f32.mrb[0].mxu0
      %v8744 = vpop.f32.mrb[0].mxu0
      %v8745 = vadd.f32 0.0, %v8744
      %v8746 = vpop.f32.mrb[0].mxu0
      %8747 = vmatprep.mubr.bf16.mxu0 %v8562
      %8748 = vmatmul.mubr.bf16.gmra.mrb[0].mxu0 %v8561
      %v8749 = vpop.f32.mrb[0].mxu0
      %v8750 = vadd.f32 0.0, %v8749
      %v8751 = vpop.f32.mrb[0].mxu0
      %v8752 = vpop.f32.mrb[0].mxu0
      %v8753 = vadd.f32 0.0, %v8752
      %v8754 = vpop.f32.mrb[0].mxu0
      %8755 = vdwg.mxu0
      %v8756 = vadd.f32 %v8328, %v8726
      %v8757 = vadd.f32 %v8331, %v8729
      %v8758 = vadd.f32 %v8336, %v8734
      %v8759 = vadd.f32 %v8339, %v8737
      %v8760 = vadd.f32 %v8344, %v8742
      %v8761 = vadd.f32 %v8347, %v8745
      %v8762 = vadd.f32 %v8352, %v8750
      %v8763 = vadd.f32 %v8355, %v8753
      %v8764 = vld [vmem:[%s720 + $0x18] sm:$0xff]
      %v8765 = vld [vmem:[%s720 + $0x38] sm:$0xff]
      %v8766 = vld [vmem:[%s720 + $0x58] sm:$0xff]
      %v8767 = vld [vmem:[%s720 + $0x78] sm:$0xff]
      %v8768 = vld [vmem:[%s720 + $0x98] sm:$0xff]
      %v8769 = vld [vmem:[%s720 + $0xb8] sm:$0xff]
      %v8770 = vld [vmem:[%s720 + $0xd8] sm:$0xff]
      %v8771 = vld [vmem:[%s720 + $0xf8] sm:$0xff]
      %v8772 = vld [vmem:[%s720 + $0x118] sm:$0xff]
      %v8773 = vld [vmem:[%s720 + $0x138] sm:$0xff]
      %v8774 = vld [vmem:[%s720 + $0x158] sm:$0xff]
      %v8775 = vld [vmem:[%s720 + $0x178] sm:$0xff]
      %v8776 = vld [vmem:[%s720 + $0x198] sm:$0xff]
      %v8777 = vld [vmem:[%s720 + $0x1b8] sm:$0xff]
      %v8778 = vld [vmem:[%s720 + $0x1d8] sm:$0xff]
      %v8779 = vld [vmem:[%s720 + $0x1f8] sm:$0xff]
      %v8780 = vld [vmem:[%s724 + $0x6] sm:$0x3]
      %v8782 = vlaneseq
      %v8783 = vshrl.u32 %v8782, 7
      %v8784 = vsub.s32 0, %v8783
      %v8785 = vrot.slane %v8780, %v8784
      %v8786 = vlaneseq
      %v8787 = vshrl.u32 %v8786, 7
      %v8788 = vsub.s32 1, %v8787
      %v8789 = vrot.slane %v8780, %v8788
      %v8808 = vunpack.c.l.b16 %v8764
      %v8809 = vunpack.c.h.b16 %v8764
      %v8810 = vunpack.c.l.b16 %v8765
      %v8811 = vunpack.c.h.b16 %v8765
      %v8812 = vunpack.c.l.b16 %v8766
      %v8813 = vunpack.c.h.b16 %v8766
      %v8814 = vunpack.c.l.b16 %v8767
      %v8815 = vunpack.c.h.b16 %v8767
      %v8816 = vunpack.c.l.b16 %v8768
      %v8817 = vunpack.c.h.b16 %v8768
      %v8818 = vunpack.c.l.b16 %v8769
      %v8819 = vunpack.c.h.b16 %v8769
      %v8820 = vunpack.c.l.b16 %v8770
      %v8821 = vunpack.c.h.b16 %v8770
      %v8822 = vunpack.c.l.b16 %v8771
      %v8823 = vunpack.c.h.b16 %v8771
      %v8824 = vunpack.c.l.b16 %v8772
      %v8825 = vunpack.c.h.b16 %v8772
      %v8826 = vunpack.c.l.b16 %v8773
      %v8827 = vunpack.c.h.b16 %v8773
      %v8828 = vunpack.c.l.b16 %v8774
      %v8829 = vunpack.c.h.b16 %v8774
      %v8830 = vunpack.c.l.b16 %v8775
      %v8831 = vunpack.c.h.b16 %v8775
      %v8832 = vunpack.c.l.b16 %v8776
      %v8833 = vunpack.c.h.b16 %v8776
      %v8834 = vunpack.c.l.b16 %v8777
      %v8835 = vunpack.c.h.b16 %v8777
      %v8836 = vunpack.c.l.b16 %v8778
      %v8837 = vunpack.c.h.b16 %v8778
      %v8838 = vunpack.c.l.b16 %v8779
      %v8839 = vunpack.c.h.b16 %v8779
      %v8840 = vpack.c.b16 %v8810, %v8808
      %v8841 = vpack.c.b16 %v8811, %v8809
      %v8842 = vpack.c.b16 %v8814, %v8812
      %v8843 = vpack.c.b16 %v8815, %v8813
      %v8844 = vpack.c.b16 %v8818, %v8816
      %v8845 = vpack.c.b16 %v8819, %v8817
      %v8846 = vpack.c.b16 %v8822, %v8820
      %v8847 = vpack.c.b16 %v8823, %v8821
      %v8848 = vpack.c.b16 %v8826, %v8824
      %v8849 = vpack.c.b16 %v8827, %v8825
      %v8850 = vpack.c.b16 %v8830, %v8828
      %v8851 = vpack.c.b16 %v8831, %v8829
      %v8852 = vpack.c.b16 %v8834, %v8832
      %v8853 = vpack.c.b16 %v8835, %v8833
      %v8854 = vpack.c.b16 %v8838, %v8836
      %v8855 = vpack.c.b16 %v8839, %v8837
      %8872 = vmatprep.subr.bf16.mxu0 %v8841
      %8873 = vmatpush1.bf16.msra.mxu0 %v8840
      %8874 = vmatprep.subr.bf16.mxu0 %v8843
      %8875 = vmatpush1.bf16.msra.mxu0 %v8842
      %8876 = vmatprep.subr.bf16.mxu0 %v8845
      %8877 = vmatpush1.bf16.msra.mxu0 %v8844
      %8878 = vmatprep.subr.bf16.mxu0 %v8847
      %8879 = vmatpush1.bf16.msra.mxu0 %v8846
      %8880 = vmatprep.subr.bf16.mxu0 %v8849
      %8881 = vmatpush1.bf16.msra.mxu0 %v8848
      %8882 = vmatprep.subr.bf16.mxu0 %v8851
      %8883 = vmatpush1.bf16.msra.mxu0 %v8850
      %8884 = vmatprep.subr.bf16.mxu0 %v8853
      %8885 = vmatpush1.bf16.msra.mxu0 %v8852
      %8886 = vmatprep.subr.bf16.mxu0 %v8855
      %8887 = vmatpush1.bf16.msra.mxu0 %v8854
      %8888 = vmatprep.subr.bf16.mxu0 0
      %8889 = vmatpush1.bf16.msra.mxu0 0
      %8890 = vmatprep.subr.bf16.mxu0 0
      %8891 = vmatpush1.bf16.msra.mxu0 0
      %8892 = vmatprep.subr.bf16.mxu0 0
      %8893 = vmatpush1.bf16.msra.mxu0 0
      %8894 = vmatprep.subr.bf16.mxu0 0
      %8895 = vmatpush1.bf16.msra.mxu0 0
      %8896 = vmatprep.subr.bf16.mxu0 0
      %8897 = vmatpush1.bf16.msra.mxu0 0
      %8898 = vmatprep.subr.bf16.mxu0 0
      %8899 = vmatpush1.bf16.msra.mxu0 0
      %8900 = vmatprep.subr.bf16.mxu0 0
      %8901 = vmatpush1.bf16.msra.mxu0 0
      %8902 = vmatprep.subr.bf16.mxu0 0
      %8903 = vmatpush1.bf16.msra.mxu0 0
      %8904 = vmatprep.mubr.bf16.mxu0 0
      %8905 = vmatmul.mubr.bf16.gmra.mrb[0].mxu0 %v7558
      %v8906 = vpop.f32.mrb[0].mxu0
      %v8907 = vadd.f32 %v8785, %v8906
      %v8908 = vpop.f32.mrb[0].mxu0
      %v8909 = vadd.f32 %v8789, %v8908
      %v8910 = vpop.f32.mrb[0].mxu0
      %v8911 = vadd.f32 %v8785, %v8910
      %v8912 = vpop.f32.mrb[0].mxu0
      %v8913 = vadd.f32 %v8789, %v8912
      %8914 = vmatprep.mubr.bf16.mxu0 0
      %8915 = vmatmul.mubr.bf16.gmra.mrb[0].mxu0 %v7559
      %v8916 = vpop.f32.mrb[0].mxu0
      %v8917 = vadd.f32 %v8785, %v8916
      %v8918 = vpop.f32.mrb[0].mxu0
      %v8919 = vadd.f32 %v8789, %v8918
      %v8920 = vpop.f32.mrb[0].mxu0
      %v8921 = vadd.f32 %v8785, %v8920
      %v8922 = vpop.f32.mrb[0].mxu0
      %v8923 = vadd.f32 %v8789, %v8922
      %8924 = vmatprep.mubr.bf16.mxu0 0
      %8925 = vmatmul.mubr.bf16.gmra.mrb[0].mxu0 %v7560
      %v8926 = vpop.f32.mrb[0].mxu0
      %v8927 = vadd.f32 %v8785, %v8926
      %v8928 = vpop.f32.mrb[0].mxu0
      %v8929 = vadd.f32 %v8789, %v8928
      %v8930 = vpop.f32.mrb[0].mxu0
      %v8931 = vadd.f32 %v8785, %v8930
      %v8932 = vpop.f32.mrb[0].mxu0
      %v8933 = vadd.f32 %v8789, %v8932
      %8934 = vmatprep.mubr.bf16.mxu0 0
      %8935 = vmatmul.mubr.bf16.gmra.mrb[0].mxu0 %v7561
      %v8936 = vpop.f32.mrb[0].mxu0
      %v8937 = vadd.f32 %v8785, %v8936
      %v8938 = vpop.f32.mrb[0].mxu0
      %v8939 = vadd.f32 %v8789, %v8938
      %v8940 = vpop.f32.mrb[0].mxu0
      %v8941 = vadd.f32 %v8785, %v8940
      %v8942 = vpop.f32.mrb[0].mxu0
      %v8943 = vadd.f32 %v8789, %v8942
      %8944 = vdwg.mxu0
      %v8945 = vmax.f32 %v8907, 0.0
      %v8946 = vmax.f32 %v8909, 0.0
      %v8947 = vmax.f32 %v8911, 0.0
      %v8948 = vmax.f32 %v8913, 0.0
      %v8949 = vmax.f32 %v8917, 0.0
      %v8950 = vmax.f32 %v8919, 0.0
      %v8951 = vmax.f32 %v8921, 0.0
      %v8952 = vmax.f32 %v8923, 0.0
      %v8953 = vmax.f32 %v8927, 0.0
      %v8954 = vmax.f32 %v8929, 0.0
      %v8955 = vmax.f32 %v8931, 0.0
      %v8956 = vmax.f32 %v8933, 0.0
      %v8957 = vmax.f32 %v8937, 0.0
      %v8958 = vmax.f32 %v8939, 0.0
      %v8959 = vmax.f32 %v8941, 0.0
      %v8960 = vmax.f32 %v8943, 0.0
      %v8961 = vpack.c.bf16 %v8947, %v8945
      %v8962 = vpack.c.bf16 %v8948, %v8946
      %v8963 = vpack.c.bf16 %v8951, %v8949
      %v8964 = vpack.c.bf16 %v8952, %v8950
      %v8965 = vpack.c.bf16 %v8955, %v8953
      %v8966 = vpack.c.bf16 %v8956, %v8954
      %v8967 = vpack.c.bf16 %v8959, %v8957
      %v8968 = vpack.c.bf16 %v8960, %v8958
      %v8969 = vld [vmem:[%s729 + $0x180] sm:$0xf]
      %v8970 = vld [vmem:[%s729 + $0x184] sm:$0xf]
      %v8971 = vld [vmem:[%s729 + $0x188] sm:$0xf]
      %v8972 = vld [vmem:[%s729 + $0x18c] sm:$0xf]
      %v8973 = vld [vmem:[%s729 + $0x190] sm:$0xf]
      %v8974 = vld [vmem:[%s729 + $0x194] sm:$0xf]
      %v8975 = vld [vmem:[%s729 + $0x198] sm:$0xf]
      %v8976 = vld [vmem:[%s729 + $0x19c] sm:$0xf]
      %v8977 = vld [vmem:[%s729 + $0x1a0] sm:$0xf]
      %v8978 = vld [vmem:[%s729 + $0x1a4] sm:$0xf]
      %v8979 = vld [vmem:[%s729 + $0x1a8] sm:$0xf]
      %v8980 = vld [vmem:[%s729 + $0x1ac] sm:$0xf]
      %v8981 = vld [vmem:[%s729 + $0x1b0] sm:$0xf]
      %v8982 = vld [vmem:[%s729 + $0x1b4] sm:$0xf]
      %v8983 = vld [vmem:[%s729 + $0x1b8] sm:$0xf]
      %v8984 = vld [vmem:[%s729 + $0x1bc] sm:$0xf]
      %v8985 = vld [vmem:[%s729 + $0x1c0] sm:$0xf]
      %v8986 = vld [vmem:[%s729 + $0x1c4] sm:$0xf]
      %v8987 = vld [vmem:[%s729 + $0x1c8] sm:$0xf]
      %v8988 = vld [vmem:[%s729 + $0x1cc] sm:$0xf]
      %v8989 = vld [vmem:[%s729 + $0x1d0] sm:$0xf]
      %v8990 = vld [vmem:[%s729 + $0x1d4] sm:$0xf]
      %v8991 = vld [vmem:[%s729 + $0x1d8] sm:$0xf]
      %v8992 = vld [vmem:[%s729 + $0x1dc] sm:$0xf]
      %v8993 = vld [vmem:[%s729 + $0x1e0] sm:$0xf]
      %v8994 = vld [vmem:[%s729 + $0x1e4] sm:$0xf]
      %v8995 = vld [vmem:[%s729 + $0x1e8] sm:$0xf]
      %v8996 = vld [vmem:[%s729 + $0x1ec] sm:$0xf]
      %v8997 = vld [vmem:[%s729 + $0x1f0] sm:$0xf]
      %v8998 = vld [vmem:[%s729 + $0x1f4] sm:$0xf]
      %v8999 = vld [vmem:[%s729 + $0x1f8] sm:$0xf]
      %v9000 = vld [vmem:[%s729 + $0x1fc] sm:$0xf]
      %v9033 = vunpack.c.l.b16 %v8969
      %v9034 = vunpack.c.l.b16 %v8970
      %v9035 = vunpack.c.l.b16 %v8971
      %v9036 = vunpack.c.l.b16 %v8972
      %v9037 = vunpack.c.l.b16 %v8973
      %v9038 = vunpack.c.l.b16 %v8974
      %v9039 = vunpack.c.l.b16 %v8975
      %v9040 = vunpack.c.l.b16 %v8976
      %v9041 = vunpack.c.l.b16 %v8977
      %v9042 = vunpack.c.l.b16 %v8978
      %v9043 = vunpack.c.l.b16 %v8979
      %v9044 = vunpack.c.l.b16 %v8980
      %v9045 = vunpack.c.l.b16 %v8981
      %v9046 = vunpack.c.l.b16 %v8982
      %v9047 = vunpack.c.l.b16 %v8983
      %v9048 = vunpack.c.l.b16 %v8984
      %v9049 = vunpack.c.l.b16 %v8985
      %v9050 = vunpack.c.l.b16 %v8986
      %v9051 = vunpack.c.l.b16 %v8987
      %v9052 = vunpack.c.l.b16 %v8988
      %v9053 = vunpack.c.l.b16 %v8989
      %v9054 = vunpack.c.l.b16 %v8990
      %v9055 = vunpack.c.l.b16 %v8991
      %v9056 = vunpack.c.l.b16 %v8992
      %v9057 = vunpack.c.l.b16 %v8993
      %v9058 = vunpack.c.l.b16 %v8994
      %v9059 = vunpack.c.l.b16 %v8995
      %v9060 = vunpack.c.l.b16 %v8996
      %v9061 = vunpack.c.l.b16 %v8997
      %v9062 = vunpack.c.l.b16 %v8998
      %v9063 = vunpack.c.l.b16 %v8999
      %v9064 = vunpack.c.l.b16 %v9000
      %v9065 = vpack.c.b16 %v9034, %v9033
      %v9066 = vpack.c.b16 %v9036, %v9035
      %v9067 = vpack.c.b16 %v9038, %v9037
      %v9068 = vpack.c.b16 %v9040, %v9039
      %v9069 = vpack.c.b16 %v9042, %v9041
      %v9070 = vpack.c.b16 %v9044, %v9043
      %v9071 = vpack.c.b16 %v9046, %v9045
      %v9072 = vpack.c.b16 %v9048, %v9047
      %v9073 = vpack.c.b16 %v9050, %v9049
      %v9074 = vpack.c.b16 %v9052, %v9051
      %v9075 = vpack.c.b16 %v9054, %v9053
      %v9076 = vpack.c.b16 %v9056, %v9055
      %v9077 = vpack.c.b16 %v9058, %v9057
      %v9078 = vpack.c.b16 %v9060, %v9059
      %v9079 = vpack.c.b16 %v9062, %v9061
      %v9080 = vpack.c.b16 %v9064, %v9063
      %9097 = vmatprep.subr.bf16.mxu0 0
      %9098 = vmatpush1.bf16.msra.mxu0 %v9065
      %9099 = vmatprep.subr.bf16.mxu0 0
      %9100 = vmatpush1.bf16.msra.mxu0 %v9066
      %9101 = vmatprep.subr.bf16.mxu0 0
      %9102 = vmatpush1.bf16.msra.mxu0 %v9067
      %9103 = vmatprep.subr.bf16.mxu0 0
      %9104 = vmatpush1.bf16.msra.mxu0 %v9068
      %9105 = vmatprep.subr.bf16.mxu0 0
      %9106 = vmatpush1.bf16.msra.mxu0 %v9069
      %9107 = vmatprep.subr.bf16.mxu0 0
      %9108 = vmatpush1.bf16.msra.mxu0 %v9070
      %9109 = vmatprep.subr.bf16.mxu0 0
      %9110 = vmatpush1.bf16.msra.mxu0 %v9071
      %9111 = vmatprep.subr.bf16.mxu0 0
      %9112 = vmatpush1.bf16.msra.mxu0 %v9072
      %9113 = vmatprep.subr.bf16.mxu0 0
      %9114 = vmatpush1.bf16.msra.mxu0 %v9073
      %9115 = vmatprep.subr.bf16.mxu0 0
      %9116 = vmatpush1.bf16.msra.mxu0 %v9074
      %9117 = vmatprep.subr.bf16.mxu0 0
      %9118 = vmatpush1.bf16.msra.mxu0 %v9075
      %9119 = vmatprep.subr.bf16.mxu0 0
      %9120 = vmatpush1.bf16.msra.mxu0 %v9076
      %9121 = vmatprep.subr.bf16.mxu0 0
      %9122 = vmatpush1.bf16.msra.mxu0 %v9077
      %9123 = vmatprep.subr.bf16.mxu0 0
      %9124 = vmatpush1.bf16.msra.mxu0 %v9078
      %9125 = vmatprep.subr.bf16.mxu0 0
      %9126 = vmatpush1.bf16.msra.mxu0 %v9079
      %9127 = vmatprep.subr.bf16.mxu0 0
      %9128 = vmatpush1.bf16.msra.mxu0 %v9080
      %9129 = vmatprep.mubr.bf16.mxu0 %v8962
      %9130 = vmatmul.mubr.bf16.gmra.mrb[0].mxu0 %v8961
      %v9131 = vpop.f32.mrb[0].mxu0
      %v9132 = vadd.f32 0.0, %v9131
      %v9133 = vpop.f32.mrb[0].mxu0
      %v9134 = vpop.f32.mrb[0].mxu0
      %v9135 = vadd.f32 0.0, %v9134
      %v9136 = vpop.f32.mrb[0].mxu0
      %9137 = vmatprep.mubr.bf16.mxu0 %v8964
      %9138 = vmatmul.mubr.bf16.gmra.mrb[0].mxu0 %v8963
      %v9139 = vpop.f32.mrb[0].mxu0
      %v9140 = vadd.f32 0.0, %v9139
      %v9141 = vpop.f32.mrb[0].mxu0
      %v9142 = vpop.f32.mrb[0].mxu0
      %v9143 = vadd.f32 0.0, %v9142
      %v9144 = vpop.f32.mrb[0].mxu0
      %9145 = vmatprep.mubr.bf16.mxu0 %v8966
      %9146 = vmatmul.mubr.bf16.gmra.mrb[0].mxu0 %v8965
      %v9147 = vpop.f32.mrb[0].mxu0
      %v9148 = vadd.f32 0.0, %v9147
      %v9149 = vpop.f32.mrb[0].mxu0
      %v9150 = vpop.f32.mrb[0].mxu0
      %v9151 = vadd.f32 0.0, %v9150
      %v9152 = vpop.f32.mrb[0].mxu0
      %9153 = vmatprep.mubr.bf16.mxu0 %v8968
      %9154 = vmatmul.mubr.bf16.gmra.mrb[0].mxu0 %v8967
      %v9155 = vpop.f32.mrb[0].mxu0
      %v9156 = vadd.f32 0.0, %v9155
      %v9157 = vpop.f32.mrb[0].mxu0
      %v9158 = vpop.f32.mrb[0].mxu0
      %v9159 = vadd.f32 0.0, %v9158
      %v9160 = vpop.f32.mrb[0].mxu0
      %9161 = vdwg.mxu0
      %v9162 = vadd.f32 %v8756, %v9132
      %v9163 = vadd.f32 %v8757, %v9135
      %v9164 = vadd.f32 %v8758, %v9140
      %v9165 = vadd.f32 %v8759, %v9143
      %v9166 = vadd.f32 %v8760, %v9148
      %v9167 = vadd.f32 %v8761, %v9151
      %v9168 = vadd.f32 %v8762, %v9156
      %v9169 = vadd.f32 %v8763, %v9159
      %v9170 = vadd.f32 %v7432, %v9162
      %v9171 = vadd.f32 %v7433, %v9163
      %v9172 = vadd.f32 %v7434, %v9164
      %v9173 = vadd.f32 %v7435, %v9165
      %v9174 = vadd.f32 %v7436, %v9166
      %v9175 = vadd.f32 %v7437, %v9167
      %v9176 = vadd.f32 %v7438, %v9168
      %v9177 = vadd.f32 %v7439, %v9169
      %v9178 = vld [vmem:[%s732] sm:$0x1]
      %v9180 = vlaneseq
      %v9181 = vshrl.u32 %v9180, 7
      %v9182 = vsub.s32 0, %v9181
      %v9183 = vrot.slane %v9178, %v9182
      %v9185 = vadd.f32 %v9170, %v9183
      %v9186 = vadd.f32 %v9171, %v9183
      %v9187 = vadd.f32 %v9172, %v9183
      %v9188 = vadd.f32 %v9173, %v9183
      %v9189 = vadd.f32 %v9174, %v9183
      %v9190 = vadd.f32 %v9175, %v9183
      %v9191 = vadd.f32 %v9176, %v9183
      %v9192 = vadd.f32 %v9177, %v9183
      %9193 = vst [vmem:[#allocation2] sm:$0xff] %v9185
      %9194 = vst [vmem:[#allocation2 + $0x8] sm:$0xff] %v9186
      %9195 = vst [vmem:[#allocation2 + $0x10] sm:$0xff] %v9187
      %9196 = vst [vmem:[#allocation2 + $0x18] sm:$0xff] %v9188
      %9197 = vst [vmem:[#allocation2 + $0x20] sm:$0xff] %v9189
      %9198 = vst [vmem:[#allocation2 + $0x28] sm:$0xff] %v9190
      %9199 = vst [vmem:[#allocation2 + $0x30] sm:$0xff] %v9191
      %9200 = vst [vmem:[#allocation2 + $0x38] sm:$0xff] %v9192
      %9201 = vst [vmem:[%s741] sm:$0xff] %v9185
      %9202 = vst [vmem:[%s741 + $0x8] sm:$0xff] %v9186
      %9203 = vst [vmem:[%s741 + $0x10] sm:$0xff] %v9187
      %9204 = vst [vmem:[%s741 + $0x18] sm:$0xff] %v9188
      %9205 = vst [vmem:[%s741 + $0x20] sm:$0xff] %v9189
      %9206 = vst [vmem:[%s741 + $0x28] sm:$0xff] %v9190
      %9207 = vst [vmem:[%s741 + $0x30] sm:$0xff] %v9191
      %9208 = vst [vmem:[%s741 + $0x38] sm:$0xff] %v9192
      %p9209 = scmp.lt.s32.totalorder %s32, 1
      %s9210 = scalar_select %p9209, %s32, 1
      %p9211 = scmp.lt.s32.totalorder %s31, 1
      %s9212 = scalar_select %p9211, %s31, 1
      %s9213 = smul.addr %s9212, 8
      %s9214 = smul.addr %s9210, 16
      %s9215 = sadd.s32 %s9213, %s9214
      %s9216 = smul.addr %s9215, 8
      %s9217 = scalar_lea.vmem %s16, %s9216
      // Predicated region
      $region89: #{transformer_forward.1} parent=83 // pred_check
        %p9218 = pneg %p460
      $region90: #{transformer_forward.1} parent=83 // pred_check_branch
        %9220 = sbr.rel (%p9218) target = $region92
      $region91: #{transformer_forward.1} parent=83 // pred_region
        _
      $region92: #{transformer_forward.1} parent=83 // pred_fallthru
        _
    $region84: #{transformer_forward.1} parent=5 // pred_fallthru
      _
    %p9221 = scmp.le.s32.totalorder 2, %s22
    // Predicated region
    $region93: #{transformer_forward.1} parent=5 // pred_check
      %p9222 = pneg %p9221
    $region94: #{transformer_forward.1} parent=5 // pred_check_branch
      %9224 = sbr.rel (%p9222) target = $region96
    $region95: #{transformer_forward.1} parent=5 // pred_region
      %s9225 = ssub.s32 %s22, 2
      // Predicated region
      $region97: #{transformer_forward.1} parent=95 // pred_check
        %p9226 = pneg %p466
      $region98: #{transformer_forward.1} parent=95 // pred_check_branch
        %9228 = sbr.rel (%p9226) target = $region100
      $region99: #{transformer_forward.1} parent=95 // pred_region
        %p9229 = scmp.lt.s32.totalorder %s34, 1
        %s9230 = scalar_select %p9229, %s34, 1
        %p9231 = scmp.lt.s32.totalorder %s33, 1
        %s9232 = scalar_select %p9231, %s33, 1
        %s9233 = smul.addr %s9232, 8
        %s9234 = smul.addr %s9230, 16
        %s9235 = sadd.s32 %s9233, %s9234
        %s9236 = smul.addr %s9235, 8
        %s9237 = scalar_lea.vmem %s16, %s9236
      $region100: #{transformer_forward.1} parent=95 // pred_fallthru
        _
    $region96: #{transformer_forward.1} parent=5 // pred_fallthru
      _
  $region6: #{transformer_forward.1} parent=0 // loop_footer
    %s26 = sadd.s32 1, %s22
  $region7: #{transformer_forward.1} parent=0 // loop_footer_branch
    %21 = sbr.rel target = $region3
  $region8: #{transformer_forward.1} parent=0 // loop_exit
    _

</llo_original>
